<compile_context>
chip_gen: v7x
topology: tpu7x:2x2x1
jax: 0.10.0
libtpu: 0.0.40
codegen_flags: <defaults>
</compile_context>

<pallas_src>
import functools

import jax
import jax.numpy as jnp
from jax import lax
from jax.experimental import pallas as pl
from jax.experimental.pallas import tpu as pltpu

# -------------------- config (small but faithful to the module) ------------
N_EMBD = 384          # module global n_embd
NUM_HEADS = 6
HEAD_SIZE = 64        # head_size * num_heads == n_embd
BATCH = 2
SEQ = 128             # T <= block_size (256)


def _mha_kernel(x_ref, wqkv_ref, wproj_ref, bp_ref, o_ref, cat_ref,
                *, num_heads, head_size):
    """One grid point = one batch element. All heads computed in-kernel."""
    x = x_ref[0]                                   # (T, C), compute dtype
    T, C = x.shape
    cdt = cat_ref.dtype

    # Fused QKV projection: one lane-dense (T, C) x (C, 3C) MXU matmul,
    # f32 accumulation, then a single cast to the compute dtype so the
    # per-head score / PV matmuls also get fast-rate (bf16) MXU inputs and
    # the staged (T, 3C) value is half the size in bf16 mode.
    qkv = jnp.dot(x, wqkv_ref[...], preferred_element_type=jnp.float32)
    qkv_c = qkv.astype(cdt)                        # (T, 3C)

    # Hoisted additive causal bias (f32, 0 / -1e30). Cheaper on vregs than
    # keeping an int32 iota mask + jnp.where live inside the head loop.
    row = lax.broadcasted_iota(jnp.int32, (T, T), 0)
    col = lax.broadcasted_iota(jnp.int32, (T, T), 1)
    causal_bias = jnp.where(col <= row, 0.0, -1e30).astype(jnp.float32)

    def attend(h):
        lo = h * head_size
        hi = lo + head_size
        q = qkv_c[:, lo:hi]                        # (T, hs)
        k = qkv_c[:, C + lo:C + hi]                # (T, hs)
        v = qkv_c[:, 2 * C + lo:2 * C + hi]        # (T, hs)

        # q @ k^T without an explicit transpose: contract the last dims.
        # The C**(-0.5) scale is pre-folded into the Q weight columns.
        wei = lax.dot_general(q, k, (((1,), (1,)), ((), ())),
                              preferred_element_type=jnp.float32)
        wei = wei + causal_bias                    # (T, T) f32, finite mask

        # f32 softmax. Diagonal is always unmasked, so after max-subtraction
        # the row sum s >= 1 and approx reciprocal + one Newton step is safe.
        m = jnp.max(wei, axis=-1, keepdims=True)
        p = jnp.exp(wei - m)
        s = jnp.sum(p, axis=-1, keepdims=True)
        inv = pl.reciprocal(s, approx=True)        # EUP slot (otherwise idle)
        inv = inv * (2.0 - s * inv)                # Newton step -> full f32
        p = (p * inv).astype(cdt)                  # compute-dtype PV input

        return jnp.dot(p, v, preferred_element_type=jnp.float32)  # (T, hs) f32

    # Stage concat(heads): compute heads in pairs so cat_ref stores are
    # lane-dense (T, 2*hs) = (T, 128) unmasked full-vreg stores.
    h = 0
    while h + 1 < num_heads:                       # static unroll
        pair = jnp.concatenate([attend(h), attend(h + 1)], axis=-1)
        cat_ref[:, h * head_size:(h + 2) * head_size] = pair.astype(cdt)
        h += 2
    if h < num_heads:                              # odd head-count fallback
        cat_ref[:, h * head_size:(h + 1) * head_size] = attend(h).astype(cdt)

    # Single lane-dense output projection + bias (bias kept in f32).
    proj = jnp.dot(cat_ref[...], wproj_ref[...], preferred_element_type=jnp.float32)
    o_ref[0] = (proj + bp_ref[...]).astype(o_ref.dtype)


def multi_head_attention(x, wq, wk, wv, wproj, bproj, *,
                         compute_dtype=jnp.bfloat16, out_dtype=None):
    """x: (B, T, C); wq/wk/wv: (H, C, hs); wproj: (H, hs, C); bproj: (1, C).

    compute_dtype: matmul-input dtype (default bfloat16 — native MXU rate on
    v5e/v6e/v7x); accumulation, softmax, mask and bias add stay f32.
    out_dtype: output dtype (defaults to x.dtype).
    """
    B, T, C = x.shape
    H, _, hs = wq.shape
    cdt = jnp.dtype(compute_dtype)
    odt = jnp.dtype(out_dtype) if out_dtype is not None else x.dtype

    scale = float(C) ** -0.5                       # microGPT scales by n_embd (C)

    # --- layout plumbing + weight folding in the wrapper (one-time, f32) ----
    # (H, C, hs) -> (C, H*hs) with head h occupying columns [h*hs:(h+1)*hs].
    # Softmax scale folded into the Q weight (weight folding, not input scaling).
    w_q2d = jnp.transpose(wq, (1, 0, 2)).reshape(C, H * hs) * scale
    w_k2d = jnp.transpose(wk, (1, 0, 2)).reshape(C, H * hs)
    w_v2d = jnp.transpose(wv, (1, 0, 2)).reshape(C, H * hs)
    w_qkv = jnp.concatenate([w_q2d, w_k2d, w_v2d], axis=1).astype(cdt)  # (C, 3*H*hs)
    w_out = wproj.reshape(H * hs, C).astype(cdt)                        # (H*hs, C)
    b_out = bproj.reshape(1, C).astype(jnp.float32)
    xc = x.astype(cdt)

    kernel = functools.partial(_mha_kernel, num_heads=H, head_size=hs)

    isz = cdt.itemsize
    flops = 2 * B * (T * C * (3 * H * hs)          # fused QKV projection
                     + 2 * H * T * T * hs          # scores + PV per head
                     + T * (H * hs) * C)           # output projection
    bytes_accessed = (B * T * C * isz              # x
                      + (C * 3 * H * hs + H * hs * C) * isz   # weights
                      + C * 4                      # bias (f32)
                      + B * T * C * odt.itemsize)  # output
    cost = pl.CostEstimate(flops=flops,
                           transcendentals=B * H * T * T,
                           bytes_accessed=bytes_accessed)

    return pl.pallas_call(
        kernel,
        out_shape=jax.ShapeDtypeStruct((B, T, C), odt),
        grid_spec=pltpu.PrefetchScalarGridSpec(
            num_scalar_prefetch=0,
            grid=(B,),
            in_specs=[
                pl.BlockSpec((1, T, C), lambda b: (b, 0, 0)),        # x[b]
                # constant block indices -> weights stay VMEM-resident across b
                pl.BlockSpec((C, 3 * H * hs), lambda b: (0, 0)),     # fused Wqkv
                pl.BlockSpec((H * hs, C), lambda b: (0, 0)),         # Wproj
                pl.BlockSpec((1, C), lambda b: (0, 0)),              # proj bias
            ],
            out_specs=pl.BlockSpec((1, T, C), lambda b: (b, 0, 0)),
            scratch_shapes=[pltpu.VMEM((T, H * hs), cdt)],           # concat(heads)
        ),
        compiler_params=pltpu.CompilerParams(
            dimension_semantics=("parallel",),     # v7x: one batch per TensorCore
        ),
        cost_estimate=cost,
    )(xc, w_qkv, w_out, b_out)


def reference(x, wq, wk, wv, wproj, bproj):
    """Pure-JAX reference matching the PyTorch forward (eval mode)."""
    C = x.shape[-1]
    T = x.shape[1]
    q = jnp.einsum("btc,hcs->bhts", x, wq)
    k = jnp.einsum("btc,hcs->bhts", x, wk)
    v = jnp.einsum("btc,hcs->bhts", x, wv)
    wei = jnp.einsum("bhts,bhus->bhtu", q, k) * (C ** -0.5)
    mask = jnp.tril(jnp.ones((T, T), dtype=bool))
    wei = jnp.where(mask, wei, -jnp.inf)
    p = jax.nn.softmax(wei, axis=-1)
    oh = jnp.einsum("bhtu,bhus->bhts", p, v)
    return jnp.einsum("bhts,hsc->btc", oh, wproj) + bproj


if __name__ == "__main__":
    key = jax.random.PRNGKey(0)
    kx, kq, kk, kv, kp, kb = jax.random.split(key, 6)

    x = jax.random.normal(kx, (BATCH, SEQ, N_EMBD), dtype=jnp.float32)

    # Deterministic synthetic parameters (nn.Linear-like scale 1/sqrt(fan_in)).
    wq = jax.random.normal(kq, (NUM_HEADS, N_EMBD, HEAD_SIZE), jnp.float32) * (N_EMBD ** -0.5)
    wk = jax.random.normal(kk, (NUM_HEADS, N_EMBD, HEAD_SIZE), jnp.float32) * (N_EMBD ** -0.5)
    wv = jax.random.normal(kv, (NUM_HEADS, N_EMBD, HEAD_SIZE), jnp.float32) * (N_EMBD ** -0.5)
    # nn.Linear(head_size*num_heads, n_embd): weight (n_embd, H*hs); stored here
    # transposed & split per head as (H, hs, n_embd).
    wproj = jax.random.normal(kp, (NUM_HEADS, HEAD_SIZE, N_EMBD), jnp.float32) * ((NUM_HEADS * HEAD_SIZE) ** -0.5)
    bproj = (jax.random.normal(kb, (1, N_EMBD), jnp.float32) * ((NUM_HEADS * HEAD_SIZE) ** -0.5))

    ref = reference(x, wq, wk, wv, wproj, bproj)

    # f32 compute path: strict check.
    out_f32 = multi_head_attention(x, wq, wk, wv, wproj, bproj,
                                   compute_dtype=jnp.float32)
    out_f32 = jax.block_until_ready(out_f32)
    assert out_f32.shape == (BATCH, SEQ, N_EMBD)
    assert jnp.allclose(out_f32, ref, atol=2e-4, rtol=2e-4), \
        float(jnp.max(jnp.abs(out_f32 - ref)))

    # Default path (bf16 matmul inputs, f32 softmax/accum): loose tolerance.
    out_bf16 = multi_head_attention(x, wq, wk, wv, wproj, bproj)
    out_bf16 = jax.block_until_ready(out_bf16)
    assert out_bf16.shape == (BATCH, SEQ, N_EMBD)
    assert jnp.allclose(out_bf16.astype(jnp.float32), ref, atol=5e-2, rtol=5e-2), \
        float(jnp.max(jnp.abs(out_bf16.astype(jnp.float32) - ref)))

    print("KERNEL_OK")
</pallas_src>

<mosaic_0001>
module attributes {stable_mosaic.version = 11 : i64} {
  func.func @_mha_kernel(%arg0: i32, %arg1: memref<1x128x384xf32, #tpu.memory_space<vmem>>, %arg2: memref<384x1152xf32, #tpu.memory_space<vmem>>, %arg3: memref<384x384xf32, #tpu.memory_space<vmem>>, %arg4: memref<1x384xf32, #tpu.memory_space<vmem>>, %arg5: memref<1x128x384xf32, #tpu.memory_space<vmem>>, %arg6: memref<128x384xf32, #tpu.memory_space<vmem>>) attributes {dimension_semantics = [#tpu.dimension_semantics<parallel>], iteration_bounds = array<i64: 2>, scalar_prefetch = 0 : i64, scratch_operands = 1 : i64, tpu.core_type = #tpu.core_type<tc>, window_params = [{transform_indices = @transform_0, window_bounds = array<i64: 1, 128, 384>}, {pipeline_mode = #tpu.pipeline_mode<synchronous>, transform_indices = @transform_1, window_bounds = array<i64: 384, 1152>}, {pipeline_mode = #tpu.pipeline_mode<synchronous>, transform_indices = @transform_2, window_bounds = array<i64: 384, 384>}, {pipeline_mode = #tpu.pipeline_mode<synchronous>, transform_indices = @transform_3, window_bounds = array<i64: 1, 384>}, {transform_indices = @transform_4, window_bounds = array<i64: 1, 128, 384>}]} {
    %c0 = arith.constant 0 : index
    %c0_0 = arith.constant 0 : index
    %c0_1 = arith.constant 0 : index
    %0 = vector.load %arg1[%c0, %c0_0, %c0_1] : memref<1x128x384xf32, #tpu.memory_space<vmem>>, vector<1x128x384xf32>
    %1 = vector.shape_cast %0 : vector<1x128x384xf32> to vector<128x384xf32>
    %c0_2 = arith.constant 0 : index
    %c0_3 = arith.constant 0 : index
    %2 = vector.load %arg2[%c0_2, %c0_3] : memref<384x1152xf32, #tpu.memory_space<vmem>>, vector<384x1152xf32>
    %cst = arith.constant dense<0.000000e+00> : vector<128x1152xf32>
    %3 = tpu.matmul %1, %2, %cst {dimension_numbers = #tpu.dot_dimension_numbers<[1], [0], [0], [1], [0, 0, 1, 1], [], []>} : vector<128x384xf32>, vector<384x1152xf32>, vector<128x1152xf32> -> vector<128x1152xf32>
    %4 = tpu.iota {dimensions = array<i32: 0>} : vector<128x128xi32>
    %5 = tpu.iota {dimensions = array<i32: 1>} : vector<128x128xi32>
    %6 = arith.cmpi sle, %5, %4 : vector<128x128xi32>
    %cst_4 = arith.constant 0.000000e+00 : f32
    %cst_5 = arith.constant -1.000000e+30 : f32
    %7 = vector.broadcast %cst_4 : f32 to vector<128x128xf32>
    %8 = vector.broadcast %cst_5 : f32 to vector<128x128xf32>
    %9 = arith.select %6, %7, %8 : vector<128x128xi1>, vector<128x128xf32>
    %10 = vector.extract_strided_slice %3 {offsets = [0, 0], sizes = [128, 64], strides = [1, 1]} : vector<128x1152xf32> to vector<128x64xf32>
    %11 = vector.extract_strided_slice %3 {offsets = [0, 384], sizes = [128, 64], strides = [1, 1]} : vector<128x1152xf32> to vector<128x64xf32>
    %12 = vector.extract_strided_slice %3 {offsets = [0, 768], sizes = [128, 64], strides = [1, 1]} : vector<128x1152xf32> to vector<128x64xf32>
    %cst_6 = arith.constant dense<0.000000e+00> : vector<128x128xf32>
    %13 = tpu.matmul %10, %11, %cst_6 {dimension_numbers = #tpu.dot_dimension_numbers<[1], [1], [0], [0], [0, 0, 1, 0], [], []>} : vector<128x64xf32>, vector<128x64xf32>, vector<128x128xf32> -> vector<128x128xf32>
    %14 = arith.addf %13, %9 : vector<128x128xf32>
    %cst_7 = arith.constant dense<0xFF800000> : vector<128xf32>
    %15 = vector.multi_reduction <maximumf>, %14, %cst_7 [1] : vector<128x128xf32> to vector<128xf32>
    %16 = vector.shape_cast %15 : vector<128xf32> to vector<128x1xf32>
    %17 = vector.broadcast %16 : vector<128x1xf32> to vector<128x128xf32>
    %18 = arith.subf %14, %17 : vector<128x128xf32>
    %19 = math.exp %18 : vector<128x128xf32>
    %cst_8 = arith.constant dense<0.000000e+00> : vector<128xf32>
    %20 = vector.multi_reduction <add>, %19, %cst_8 [1] : vector<128x128xf32> to vector<128xf32>
    %21 = vector.shape_cast %20 : vector<128xf32> to vector<128x1xf32>
    %22 = tpu.reciprocal %21 {approx = true} : vector<128x1xf32> -> vector<128x1xf32>
    %23 = arith.mulf %21, %22 : vector<128x1xf32>
    %cst_9 = arith.constant 2.000000e+00 : f32
    %24 = vector.broadcast %cst_9 : f32 to vector<128x1xf32>
    %25 = arith.subf %24, %23 : vector<128x1xf32>
    %26 = arith.mulf %22, %25 : vector<128x1xf32>
    %27 = vector.broadcast %26 : vector<128x1xf32> to vector<128x128xf32>
    %28 = arith.mulf %19, %27 : vector<128x128xf32>
    %cst_10 = arith.constant dense<0.000000e+00> : vector<128x64xf32>
    %29 = tpu.matmul %28, %12, %cst_10 {dimension_numbers = #tpu.dot_dimension_numbers<[1], [0], [0], [1], [0, 0, 1, 1], [], []>} : vector<128x128xf32>, vector<128x64xf32>, vector<128x64xf32> -> vector<128x64xf32>
    %30 = vector.extract_strided_slice %3 {offsets = [0, 64], sizes = [128, 64], strides = [1, 1]} : vector<128x1152xf32> to vector<128x64xf32>
    %31 = vector.extract_strided_slice %3 {offsets = [0, 448], sizes = [128, 64], strides = [1, 1]} : vector<128x1152xf32> to vector<128x64xf32>
    %32 = vector.extract_strided_slice %3 {offsets = [0, 832], sizes = [128, 64], strides = [1, 1]} : vector<128x1152xf32> to vector<128x64xf32>
    %cst_11 = arith.constant dense<0.000000e+00> : vector<128x128xf32>
    %33 = tpu.matmul %30, %31, %cst_11 {dimension_numbers = #tpu.dot_dimension_numbers<[1], [1], [0], [0], [0, 0, 1, 0], [], []>} : vector<128x64xf32>, vector<128x64xf32>, vector<128x128xf32> -> vector<128x128xf32>
    %34 = arith.addf %33, %9 : vector<128x128xf32>
    %cst_12 = arith.constant dense<0xFF800000> : vector<128xf32>
    %35 = vector.multi_reduction <maximumf>, %34, %cst_12 [1] : vector<128x128xf32> to vector<128xf32>
    %36 = vector.shape_cast %35 : vector<128xf32> to vector<128x1xf32>
    %37 = vector.broadcast %36 : vector<128x1xf32> to vector<128x128xf32>
    %38 = arith.subf %34, %37 : vector<128x128xf32>
    %39 = math.exp %38 : vector<128x128xf32>
    %cst_13 = arith.constant dense<0.000000e+00> : vector<128xf32>
    %40 = vector.multi_reduction <add>, %39, %cst_13 [1] : vector<128x128xf32> to vector<128xf32>
    %41 = vector.shape_cast %40 : vector<128xf32> to vector<128x1xf32>
    %42 = tpu.reciprocal %41 {approx = true} : vector<128x1xf32> -> vector<128x1xf32>
    %43 = arith.mulf %41, %42 : vector<128x1xf32>
    %cst_14 = arith.constant 2.000000e+00 : f32
    %44 = vector.broadcast %cst_14 : f32 to vector<128x1xf32>
    %45 = arith.subf %44, %43 : vector<128x1xf32>
    %46 = arith.mulf %42, %45 : vector<128x1xf32>
    %47 = vector.broadcast %46 : vector<128x1xf32> to vector<128x128xf32>
    %48 = arith.mulf %39, %47 : vector<128x128xf32>
    %cst_15 = arith.constant dense<0.000000e+00> : vector<128x64xf32>
    %49 = tpu.matmul %48, %32, %cst_15 {dimension_numbers = #tpu.dot_dimension_numbers<[1], [0], [0], [1], [0, 0, 1, 1], [], []>} : vector<128x128xf32>, vector<128x64xf32>, vector<128x64xf32> -> vector<128x64xf32>
    %50 = tpu.concatenate %29, %49 in 1 : vector<128x64xf32>, vector<128x64xf32> -> vector<128x128xf32>
    %c0_16 = arith.constant 0 : index
    %c0_17 = arith.constant 0 : index
    %51 = vector.load %arg6[%c0_16, %c0_17] : memref<128x384xf32, #tpu.memory_space<vmem>>, vector<128x128xf32>
    tpu.vector_store %arg6[%c0_16, %c0_17], %50 {strides = array<i32>} : memref<128x384xf32, #tpu.memory_space<vmem>>, vector<128x128xf32>,
    %52 = vector.extract_strided_slice %3 {offsets = [0, 128], sizes = [128, 64], strides = [1, 1]} : vector<128x1152xf32> to vector<128x64xf32>
    %53 = vector.extract_strided_slice %3 {offsets = [0, 512], sizes = [128, 64], strides = [1, 1]} : vector<128x1152xf32> to vector<128x64xf32>
    %54 = vector.extract_strided_slice %3 {offsets = [0, 896], sizes = [128, 64], strides = [1, 1]} : vector<128x1152xf32> to vector<128x64xf32>
    %cst_18 = arith.constant dense<0.000000e+00> : vector<128x128xf32>
    %55 = tpu.matmul %52, %53, %cst_18 {dimension_numbers = #tpu.dot_dimension_numbers<[1], [1], [0], [0], [0, 0, 1, 0], [], []>} : vector<128x64xf32>, vector<128x64xf32>, vector<128x128xf32> -> vector<128x128xf32>
    %56 = arith.addf %55, %9 : vector<128x128xf32>
    %cst_19 = arith.constant dense<0xFF800000> : vector<128xf32>
    %57 = vector.multi_reduction <maximumf>, %56, %cst_19 [1] : vector<128x128xf32> to vector<128xf32>
    %58 = vector.shape_cast %57 : vector<128xf32> to vector<128x1xf32>
    %59 = vector.broadcast %58 : vector<128x1xf32> to vector<128x128xf32>
    %60 = arith.subf %56, %59 : vector<128x128xf32>
    %61 = math.exp %60 : vector<128x128xf32>
    %cst_20 = arith.constant dense<0.000000e+00> : vector<128xf32>
    %62 = vector.multi_reduction <add>, %61, %cst_20 [1] : vector<128x128xf32> to vector<128xf32>
    %63 = vector.shape_cast %62 : vector<128xf32> to vector<128x1xf32>
    %64 = tpu.reciprocal %63 {approx = true} : vector<128x1xf32> -> vector<128x1xf32>
    %65 = arith.mulf %63, %64 : vector<128x1xf32>
    %cst_21 = arith.constant 2.000000e+00 : f32
    %66 = vector.broadcast %cst_21 : f32 to vector<128x1xf32>
    %67 = arith.subf %66, %65 : vector<128x1xf32>
    %68 = arith.mulf %64, %67 : vector<128x1xf32>
    %69 = vector.broadcast %68 : vector<128x1xf32> to vector<128x128xf32>
    %70 = arith.mulf %61, %69 : vector<128x128xf32>
    %cst_22 = arith.constant dense<0.000000e+00> : vector<128x64xf32>
    %71 = tpu.matmul %70, %54, %cst_22 {dimension_numbers = #tpu.dot_dimension_numbers<[1], [0], [0], [1], [0, 0, 1, 1], [], []>} : vector<128x128xf32>, vector<128x64xf32>, vector<128x64xf32> -> vector<128x64xf32>
    %72 = vector.extract_strided_slice %3 {offsets = [0, 192], sizes = [128, 64], strides = [1, 1]} : vector<128x1152xf32> to vector<128x64xf32>
    %73 = vector.extract_strided_slice %3 {offsets = [0, 576], sizes = [128, 64], strides = [1, 1]} : vector<128x1152xf32> to vector<128x64xf32>
    %74 = vector.extract_strided_slice %3 {offsets = [0, 960], sizes = [128, 64], strides = [1, 1]} : vector<128x1152xf32> to vector<128x64xf32>
    %cst_23 = arith.constant dense<0.000000e+00> : vector<128x128xf32>
    %75 = tpu.matmul %72, %73, %cst_23 {dimension_numbers = #tpu.dot_dimension_numbers<[1], [1], [0], [0], [0, 0, 1, 0], [], []>} : vector<128x64xf32>, vector<128x64xf32>, vector<128x128xf32> -> vector<128x128xf32>
    %76 = arith.addf %75, %9 : vector<128x128xf32>
    %cst_24 = arith.constant dense<0xFF800000> : vector<128xf32>
    %77 = vector.multi_reduction <maximumf>, %76, %cst_24 [1] : vector<128x128xf32> to vector<128xf32>
    %78 = vector.shape_cast %77 : vector<128xf32> to vector<128x1xf32>
    %79 = vector.broadcast %78 : vector<128x1xf32> to vector<128x128xf32>
    %80 = arith.subf %76, %79 : vector<128x128xf32>
    %81 = math.exp %80 : vector<128x128xf32>
    %cst_25 = arith.constant dense<0.000000e+00> : vector<128xf32>
    %82 = vector.multi_reduction <add>, %81, %cst_25 [1] : vector<128x128xf32> to vector<128xf32>
    %83 = vector.shape_cast %82 : vector<128xf32> to vector<128x1xf32>
    %84 = tpu.reciprocal %83 {approx = true} : vector<128x1xf32> -> vector<128x1xf32>
    %85 = arith.mulf %83, %84 : vector<128x1xf32>
    %cst_26 = arith.constant 2.000000e+00 : f32
    %86 = vector.broadcast %cst_26 : f32 to vector<128x1xf32>
    %87 = arith.subf %86, %85 : vector<128x1xf32>
    %88 = arith.mulf %84, %87 : vector<128x1xf32>
    %89 = vector.broadcast %88 : vector<128x1xf32> to vector<128x128xf32>
    %90 = arith.mulf %81, %89 : vector<128x128xf32>
    %cst_27 = arith.constant dense<0.000000e+00> : vector<128x64xf32>
    %91 = tpu.matmul %90, %74, %cst_27 {dimension_numbers = #tpu.dot_dimension_numbers<[1], [0], [0], [1], [0, 0, 1, 1], [], []>} : vector<128x128xf32>, vector<128x64xf32>, vector<128x64xf32> -> vector<128x64xf32>
    %92 = tpu.concatenate %71, %91 in 1 : vector<128x64xf32>, vector<128x64xf32> -> vector<128x128xf32>
    %c0_28 = arith.constant 0 : index
    %c128 = arith.constant 128 : index
    %93 = vector.load %arg6[%c0_28, %c128] : memref<128x384xf32, #tpu.memory_space<vmem>>, vector<128x128xf32>
    tpu.vector_store %arg6[%c0_28, %c128], %92 {strides = array<i32>} : memref<128x384xf32, #tpu.memory_space<vmem>>, vector<128x128xf32>,
    %94 = vector.extract_strided_slice %3 {offsets = [0, 256], sizes = [128, 64], strides = [1, 1]} : vector<128x1152xf32> to vector<128x64xf32>
    %95 = vector.extract_strided_slice %3 {offsets = [0, 640], sizes = [128, 64], strides = [1, 1]} : vector<128x1152xf32> to vector<128x64xf32>
    %96 = vector.extract_strided_slice %3 {offsets = [0, 1024], sizes = [128, 64], strides = [1, 1]} : vector<128x1152xf32> to vector<128x64xf32>
    %cst_29 = arith.constant dense<0.000000e+00> : vector<128x128xf32>
    %97 = tpu.matmul %94, %95, %cst_29 {dimension_numbers = #tpu.dot_dimension_numbers<[1], [1], [0], [0], [0, 0, 1, 0], [], []>} : vector<128x64xf32>, vector<128x64xf32>, vector<128x128xf32> -> vector<128x128xf32>
    %98 = arith.addf %97, %9 : vector<128x128xf32>
    %cst_30 = arith.constant dense<0xFF800000> : vector<128xf32>
    %99 = vector.multi_reduction <maximumf>, %98, %cst_30 [1] : vector<128x128xf32> to vector<128xf32>
    %100 = vector.shape_cast %99 : vector<128xf32> to vector<128x1xf32>
    %101 = vector.broadcast %100 : vector<128x1xf32> to vector<128x128xf32>
    %102 = arith.subf %98, %101 : vector<128x128xf32>
    %103 = math.exp %102 : vector<128x128xf32>
    %cst_31 = arith.constant dense<0.000000e+00> : vector<128xf32>
    %104 = vector.multi_reduction <add>, %103, %cst_31 [1] : vector<128x128xf32> to vector<128xf32>
    %105 = vector.shape_cast %104 : vector<128xf32> to vector<128x1xf32>
    %106 = tpu.reciprocal %105 {approx = true} : vector<128x1xf32> -> vector<128x1xf32>
    %107 = arith.mulf %105, %106 : vector<128x1xf32>
    %cst_32 = arith.constant 2.000000e+00 : f32
    %108 = vector.broadcast %cst_32 : f32 to vector<128x1xf32>
    %109 = arith.subf %108, %107 : vector<128x1xf32>
    %110 = arith.mulf %106, %109 : vector<128x1xf32>
    %111 = vector.broadcast %110 : vector<128x1xf32> to vector<128x128xf32>
    %112 = arith.mulf %103, %111 : vector<128x128xf32>
    %cst_33 = arith.constant dense<0.000000e+00> : vector<128x64xf32>
    %113 = tpu.matmul %112, %96, %cst_33 {dimension_numbers = #tpu.dot_dimension_numbers<[1], [0], [0], [1], [0, 0, 1, 1], [], []>} : vector<128x128xf32>, vector<128x64xf32>, vector<128x64xf32> -> vector<128x64xf32>
    %114 = vector.extract_strided_slice %3 {offsets = [0, 320], sizes = [128, 64], strides = [1, 1]} : vector<128x1152xf32> to vector<128x64xf32>
    %115 = vector.extract_strided_slice %3 {offsets = [0, 704], sizes = [128, 64], strides = [1, 1]} : vector<128x1152xf32> to vector<128x64xf32>
    %116 = vector.extract_strided_slice %3 {offsets = [0, 1088], sizes = [128, 64], strides = [1, 1]} : vector<128x1152xf32> to vector<128x64xf32>
    %cst_34 = arith.constant dense<0.000000e+00> : vector<128x128xf32>
    %117 = tpu.matmul %114, %115, %cst_34 {dimension_numbers = #tpu.dot_dimension_numbers<[1], [1], [0], [0], [0, 0, 1, 0], [], []>} : vector<128x64xf32>, vector<128x64xf32>, vector<128x128xf32> -> vector<128x128xf32>
    %118 = arith.addf %117, %9 : vector<128x128xf32>
    %cst_35 = arith.constant dense<0xFF800000> : vector<128xf32>
    %119 = vector.multi_reduction <maximumf>, %118, %cst_35 [1] : vector<128x128xf32> to vector<128xf32>
    %120 = vector.shape_cast %119 : vector<128xf32> to vector<128x1xf32>
    %121 = vector.broadcast %120 : vector<128x1xf32> to vector<128x128xf32>
    %122 = arith.subf %118, %121 : vector<128x128xf32>
    %123 = math.exp %122 : vector<128x128xf32>
    %cst_36 = arith.constant dense<0.000000e+00> : vector<128xf32>
    %124 = vector.multi_reduction <add>, %123, %cst_36 [1] : vector<128x128xf32> to vector<128xf32>
    %125 = vector.shape_cast %124 : vector<128xf32> to vector<128x1xf32>
    %126 = tpu.reciprocal %125 {approx = true} : vector<128x1xf32> -> vector<128x1xf32>
    %127 = arith.mulf %125, %126 : vector<128x1xf32>
    %cst_37 = arith.constant 2.000000e+00 : f32
    %128 = vector.broadcast %cst_37 : f32 to vector<128x1xf32>
    %129 = arith.subf %128, %127 : vector<128x1xf32>
    %130 = arith.mulf %126, %129 : vector<128x1xf32>
    %131 = vector.broadcast %130 : vector<128x1xf32> to vector<128x128xf32>
    %132 = arith.mulf %123, %131 : vector<128x128xf32>
    %cst_38 = arith.constant dense<0.000000e+00> : vector<128x64xf32>
    %133 = tpu.matmul %132, %116, %cst_38 {dimension_numbers = #tpu.dot_dimension_numbers<[1], [0], [0], [1], [0, 0, 1, 1], [], []>} : vector<128x128xf32>, vector<128x64xf32>, vector<128x64xf32> -> vector<128x64xf32>
    %134 = tpu.concatenate %113, %133 in 1 : vector<128x64xf32>, vector<128x64xf32> -> vector<128x128xf32>
    %c0_39 = arith.constant 0 : index
    %c256 = arith.constant 256 : index
    %135 = vector.load %arg6[%c0_39, %c256] : memref<128x384xf32, #tpu.memory_space<vmem>>, vector<128x128xf32>
    tpu.vector_store %arg6[%c0_39, %c256], %134 {strides = array<i32>} : memref<128x384xf32, #tpu.memory_space<vmem>>, vector<128x128xf32>,
    %c0_40 = arith.constant 0 : index
    %c0_41 = arith.constant 0 : index
    %136 = vector.load %arg6[%c0_40, %c0_41] : memref<128x384xf32, #tpu.memory_space<vmem>>, vector<128x384xf32>
    %c0_42 = arith.constant 0 : index
    %c0_43 = arith.constant 0 : index
    %137 = vector.load %arg3[%c0_42, %c0_43] : memref<384x384xf32, #tpu.memory_space<vmem>>, vector<384x384xf32>
    %cst_44 = arith.constant dense<0.000000e+00> : vector<128x384xf32>
    %138 = tpu.matmul %136, %137, %cst_44 {dimension_numbers = #tpu.dot_dimension_numbers<[1], [0], [0], [1], [0, 0, 1, 1], [], []>} : vector<128x384xf32>, vector<384x384xf32>, vector<128x384xf32> -> vector<128x384xf32>
    %c0_45 = arith.constant 0 : index
    %c0_46 = arith.constant 0 : index
    %139 = vector.load %arg4[%c0_45, %c0_46] : memref<1x384xf32, #tpu.memory_space<vmem>>, vector<1x384xf32>
    %140 = vector.broadcast %139 : vector<1x384xf32> to vector<128x384xf32>
    %141 = arith.addf %138, %140 : vector<128x384xf32>
    %c0_47 = arith.constant 0 : index
    %c0_48 = arith.constant 0 : index
    %c0_49 = arith.constant 0 : index
    %142 = vector.load %arg5[%c0_47, %c0_48, %c0_49] : memref<1x128x384xf32, #tpu.memory_space<vmem>>, vector<1x128x384xf32>
    %143 = vector.shape_cast %142 : vector<1x128x384xf32> to vector<128x384xf32>
    %144 = vector.shape_cast %141 : vector<128x384xf32> to vector<1x128x384xf32>
    tpu.vector_store %arg5[%c0_47, %c0_48, %c0_49], %144 {strides = array<i32>} : memref<1x128x384xf32, #tpu.memory_space<vmem>>, vector<1x128x384xf32>,
    return
  }
  func.func @transform_0(%arg0: i32) -> (i32, i32, i32) {
    %c0_i32 = arith.constant 0 : i32
    %c0_i32_0 = arith.constant 0 : i32
    %c0_i32_1 = arith.constant 0 : i32
    return %arg0, %c0_i32, %c0_i32_0 : i32, i32, i32
  }
  func.func @transform_1(%arg0: i32) -> (i32, i32) {
    %c0_i32 = arith.constant 0 : i32
    %c0_i32_0 = arith.constant 0 : i32
    %c0_i32_1 = arith.constant 0 : i32
    return %c0_i32, %c0_i32_0 : i32, i32
  }
  func.func @transform_2(%arg0: i32) -> (i32, i32) {
    %c0_i32 = arith.constant 0 : i32
    %c0_i32_0 = arith.constant 0 : i32
    %c0_i32_1 = arith.constant 0 : i32
    return %c0_i32, %c0_i32_0 : i32, i32
  }
  func.func @transform_3(%arg0: i32) -> (i32, i32) {
    %c0_i32 = arith.constant 0 : i32
    %c0_i32_0 = arith.constant 0 : i32
    %c0_i32_1 = arith.constant 0 : i32
    return %c0_i32, %c0_i32_0 : i32, i32
  }
  func.func @transform_4(%arg0: i32) -> (i32, i32, i32) {
    %c0_i32 = arith.constant 0 : i32
    %c0_i32_0 = arith.constant 0 : i32
    %c0_i32_1 = arith.constant 0 : i32
    return %arg0, %c0_i32, %c0_i32_0 : i32, i32, i32
  }
}

</mosaic_0001>

<llo_original>
// kernel: tpu_custom_call.1
$region0: #{tpu_custom_call.1}
  #allocation0 [shape = 'u32[]', space=smem, size = 0x4, offset = 0x4, fixed_abs, tag = 'smem constant byte address 0x4 - core index']
  #allocation1 [shape = 'u32[144,128]{1,0:T(1,128)}', space=vmem, size = 0x12000, scoped, tag = 'internal scratch']
  #allocation2 [shape = 'f32[128,384]{1,0:T(8,128)}', space=vmem, size = 0x30000, scoped, tag = 'scratch operand']
  %s0 = inlined_call_operand.hbm [shape: f32[2,128,384], index: 0, kind: input, shape index: {}]
  %s1 = inlined_call_operand.hbm [shape: f32[384,1152], index: 1, kind: input, shape index: {}]
  %s2 = inlined_call_operand.hbm [shape: f32[384,384], index: 2, kind: input, shape index: {}]
  %s3 = inlined_call_operand.hbm [shape: f32[1,384], index: 3, kind: input, shape index: {}]
  %s4 = inlined_call_operand.hbm [shape: f32[2,128,384], index: 4, kind: output, shape index: {}]
  %s5 = sld [smem:[#allocation0]]
  $region65: #{tpu_custom_call.1} parent=0
    _
  %s7 = ssub.s32 1, %s5
  %s8 = scalar_select 0, %s7, %s5
  $region1: #{tpu_custom_call.1} parent=0
    #allocation3 [shape = 'u8[393216]{0}', space=vmem, size = 0x60000, scoped, tag = 'input window, operand 0']
    #allocation4 [shape = 's32[2]{0}', space=sflag, size = 0x8, scoped, tag = 'scoped memory for tpu_custom_call.1']
    #allocation5 [shape = 's32[2]{0}', space=sflag, size = 0x8, scoped, tag = 'scoped memory for tpu_custom_call.1']
    #allocation6 [shape = 'u8[1769472]{0}', space=vmem, size = 0x1b0000, scoped, tag = 'input window, operand 1, single buffered']
    #allocation7 [shape = 's32[1]{0}', space=sflag, size = 0x4, scoped, tag = 'scoped memory for tpu_custom_call.1']
    #allocation8 [shape = 'u8[589824]{0}', space=vmem, size = 0x90000, scoped, tag = 'input window, operand 2, single buffered']
    #allocation9 [shape = 'u8[1536]{0}', space=vmem, size = 0x800, scoped, tag = 'input window, operand 3, single buffered']
    #allocation10 [shape = 's32[1]{0}', space=sflag, size = 0x4, scoped, tag = 'scoped memory for tpu_custom_call.1']
    #allocation11 [shape = 'u8[393216]{0}', space=vmem, size = 0x60000, scoped, tag = 'output window, operand 0']
    %9 = vsyncpa [#allocation4], 0
    %s10 = scalar_lea.sflag [#allocation4], 1
    %11 = vsyncpa %s10, 0
    %12 = vsyncpa [#allocation7], 0
    %13 = vsyncpa [#allocation10], 0
    %14 = vsyncpa [#allocation5], 0
    %s15 = scalar_lea.sflag [#allocation5], 1
    %16 = vsyncpa %s15, 0
    loop: start=0, step=1, limit=4
    $region2: #{tpu_custom_call.1} parent=1 // loop_pre_header
      _
    $region3: #{tpu_custom_call.1} parent=1 // loop_header
      %s18 = sphi 0, %s22
      %p19 = scmp.ge.s32.totalorder %s18, 4
      %s28 = sphi 0, %s30
      %s31 = sphi 0, %s28
      %s32 = sphi 0, %s31
      %s48 = sphi 0, %s32
      %s52 = sphi 0, %s52
      %s54 = sphi 0, %s52
      %s55 = sphi 0, %s54
      %s69 = sphi 0, %s55
      %s73 = sphi 0, %s73
      %s75 = sphi 0, %s73
      %s76 = sphi 0, %s75
      %s90 = sphi 0, %s76
      %s94 = sphi 0, %s94
      %s96 = sphi 0, %s94
      %s97 = sphi 0, %s96
      %s111 = sphi 0, %s97
      %s117 = sphi 0, %s119
      %s120 = sphi 0, %s117
      %s121 = sphi 0, %s120
      %s137 = sphi 0, %s121
    $region4: #{tpu_custom_call.1} parent=1 // loop_header_branch
      %21 = sbr.rel (%p19) target = $region8
    $region5: #{tpu_custom_call.1} parent=1 // loop_body
      %s23 = ssub.s32 %s18, 1
      %s24 = ssub.s32 %s18, 2
      %s25 = sadd.s32 %s18, 1
      %s26 = ssub.s32 %s18, %s25
      %p27 = scmp.eq.s32.totalorder %s26, 0
      %s29 = sadd.s32 %s28, 1
      %s30 = scalar_select %p27, %s28, %s29
      %p33 = pneg %p27
      %p34 = scmp.eq.s32.totalorder %s18, 1
      %p35 = por %p33, %p34
      %p36 = scmp.ne.s32.totalorder %s28, %s31
      %p37 = scmp.eq.s32.totalorder %s18, 0
      %p38 = por %p36, %p37
      %p39 = scmp.ne.s32.totalorder %s28, %s31
      %p40 = scmp.eq.s32.totalorder %s23, 1
      %p41 = por %p39, %p40
      %p42 = scmp.ne.s32.totalorder %s31, %s32
      %p43 = scmp.eq.s32.totalorder %s23, 0
      %p44 = por %p42, %p43
      %p45 = scmp.ne.s32.totalorder %s31, %s32
      %p46 = scmp.eq.s32.totalorder %s24, 1
      %p47 = por %p45, %p46
      %p49 = scmp.ne.s32.totalorder %s32, %s48
      %p50 = scmp.eq.s32.totalorder %s24, 0
      %p51 = por %p49, %p50
      %s53 = sadd.s32 %s52, 1
      %p56 = scmp.eq.s32.totalorder %s18, 1
      %p57 = scmp.ne.s32.totalorder %s52, %s54
      %p58 = scmp.eq.s32.totalorder %s18, 0
      %p59 = por %p57, %p58
      %p60 = scmp.ne.s32.totalorder %s52, %s54
      %p61 = scmp.eq.s32.totalorder %s23, 1
      %p62 = por %p60, %p61
      %p63 = scmp.ne.s32.totalorder %s54, %s55
      %p64 = scmp.eq.s32.totalorder %s23, 0
      %p65 = por %p63, %p64
      %p66 = scmp.ne.s32.totalorder %s54, %s55
      %p67 = scmp.eq.s32.totalorder %s24, 1
      %p68 = por %p66, %p67
      %p70 = scmp.ne.s32.totalorder %s55, %s69
      %p71 = scmp.eq.s32.totalorder %s24, 0
      %p72 = por %p70, %p71
      %s74 = sadd.s32 %s73, 1
      %p77 = scmp.eq.s32.totalorder %s18, 1
      %p78 = scmp.ne.s32.totalorder %s73, %s75
      %p79 = scmp.eq.s32.totalorder %s18, 0
      %p80 = por %p78, %p79
      %p81 = scmp.ne.s32.totalorder %s73, %s75
      %p82 = scmp.eq.s32.totalorder %s23, 1
      %p83 = por %p81, %p82
      %p84 = scmp.ne.s32.totalorder %s75, %s76
      %p85 = scmp.eq.s32.totalorder %s23, 0
      %p86 = por %p84, %p85
      %p87 = scmp.ne.s32.totalorder %s75, %s76
      %p88 = scmp.eq.s32.totalorder %s24, 1
      %p89 = por %p87, %p88
      %p91 = scmp.ne.s32.totalorder %s76, %s90
      %p92 = scmp.eq.s32.totalorder %s24, 0
      %p93 = por %p91, %p92
      %s95 = sadd.s32 %s94, 1
      %p98 = scmp.eq.s32.totalorder %s18, 1
      %p99 = scmp.ne.s32.totalorder %s94, %s96
      %p100 = scmp.eq.s32.totalorder %s18, 0
      %p101 = por %p99, %p100
      %p102 = scmp.ne.s32.totalorder %s94, %s96
      %p103 = scmp.eq.s32.totalorder %s23, 1
      %p104 = por %p102, %p103
      %p105 = scmp.ne.s32.totalorder %s96, %s97
      %p106 = scmp.eq.s32.totalorder %s23, 0
      %p107 = por %p105, %p106
      %p108 = scmp.ne.s32.totalorder %s96, %s97
      %p109 = scmp.eq.s32.totalorder %s24, 1
      %p110 = por %p108, %p109
      %p112 = scmp.ne.s32.totalorder %s97, %s111
      %p113 = scmp.eq.s32.totalorder %s24, 0
      %p114 = por %p112, %p113
      %s115 = ssub.s32 %s18, %s25
      %p116 = scmp.eq.s32.totalorder %s115, 0
      %s118 = sadd.s32 %s117, 1
      %s119 = scalar_select %p116, %s117, %s118
      %p122 = pneg %p116
      %p123 = scmp.eq.s32.totalorder %s18, 1
      %p124 = por %p122, %p123
      %p125 = scmp.ne.s32.totalorder %s117, %s120
      %p126 = scmp.eq.s32.totalorder %s18, 0
      %p127 = por %p125, %p126
      %p128 = scmp.ne.s32.totalorder %s117, %s120
      %p129 = scmp.eq.s32.totalorder %s23, 1
      %p130 = por %p128, %p129
      %p131 = scmp.ne.s32.totalorder %s120, %s121
      %p132 = scmp.eq.s32.totalorder %s23, 0
      %p133 = por %p131, %p132
      %p134 = scmp.ne.s32.totalorder %s120, %s121
      %p135 = scmp.eq.s32.totalorder %s24, 1
      %p136 = por %p134, %p135
      %p138 = scmp.ne.s32.totalorder %s121, %s137
      %p139 = scmp.eq.s32.totalorder %s24, 0
      %p140 = por %p138, %p139
      %p141 = scmp.le.s32.totalorder 1, %s18
      %p142 = scmp.lt.s32.totalorder %s18, 3
      %p143 = pnand %p141, %p142
      %p144 = pneg %p143
      // Predicated region
      $region9: #{tpu_custom_call.1} parent=5 // pred_check
        _
      $region10: #{tpu_custom_call.1} parent=5 // pred_check_branch
        %146 = sbr.rel (%p143) target = $region12
      $region11: #{tpu_custom_call.1} parent=5 // pred_region
        %s147 = ssub.s32 %s18, 1
        // Predicated region
        $region13: #{tpu_custom_call.1} parent=11 // pred_check
          %p148 = pneg %p65
        $region14: #{tpu_custom_call.1} parent=11 // pred_check_branch
          %150 = sbr.rel (%p148) target = $region16
        $region15: #{tpu_custom_call.1} parent=11 // pred_region
          %s152 = ssub.s32 55296, 55296
          %153 = vsyncadd [#allocation7], %s152
          %s154 = sshll.u32 [#allocation6], 4
          %s155 = int_to_ptr.vmem [resolvable:$true] %s154
          %160 = dma.hbm_to_vmem [thread:$0]  %s1, 55296, %s155, [#allocation7], 1152, 1152, 72
        $region16: #{tpu_custom_call.1} parent=11 // pred_fallthru
          _
        // Predicated region
        $region17: #{tpu_custom_call.1} parent=11 // pred_check
          %p161 = pneg %p86
        $region18: #{tpu_custom_call.1} parent=11 // pred_check_branch
          %163 = sbr.rel (%p161) target = $region20
        $region19: #{tpu_custom_call.1} parent=11 // pred_region
          %s165 = ssub.s32 18432, 18432
          %166 = vsyncadd [#allocation7], %s165
          %s167 = sshll.u32 [#allocation8], 4
          %s168 = int_to_ptr.vmem [resolvable:$true] %s167
          %173 = dma.hbm_to_vmem [thread:$0]  %s2, 18432, %s168, [#allocation7], 384, 384, 24
        $region20: #{tpu_custom_call.1} parent=11 // pred_fallthru
          _
        // Predicated region
        $region21: #{tpu_custom_call.1} parent=11 // pred_check
          %p174 = pneg %p107
        $region22: #{tpu_custom_call.1} parent=11 // pred_check_branch
          %176 = sbr.rel (%p174) target = $region24
        $region23: #{tpu_custom_call.1} parent=11 // pred_region
          %s178 = ssub.s32 48, 48
          %179 = vsyncadd [#allocation10], %s178
          %s181 = sshll.u32 [#allocation9], 4
          %s182 = int_to_ptr.vmem [resolvable:$true] %s181
          %184 = dma.hbm_to_vmem [thread:$0]  %s3, 48, %s182, [#allocation10]
        $region24: #{tpu_custom_call.1} parent=11 // pred_fallthru
          _
      $region12: #{tpu_custom_call.1} parent=5 // pred_fallthru
        _
      %p185 = scmp.lt.s32.totalorder %s18, 2
      // Predicated region
      $region25: #{tpu_custom_call.1} parent=5 // pred_check
        %p186 = pneg %p185
      $region26: #{tpu_custom_call.1} parent=5 // pred_check_branch
        %188 = sbr.rel (%p186) target = $region28
      $region27: #{tpu_custom_call.1} parent=5 // pred_region
        // Predicated region
        $region29: #{tpu_custom_call.1} parent=27 // pred_check
          %p189 = pneg %p38
        $region30: #{tpu_custom_call.1} parent=27 // pred_check_branch
          %191 = sbr.rel (%p189) target = $region32
        $region31: #{tpu_custom_call.1} parent=27 // pred_region
          %s192 = sand.u32 %s28, 1
          %s193 = scalar_lea.sflag [#allocation4], %s192
          %s194 = sand.u32 %s28, 1
          %s195 = smul.addr %s194, 384
          %s196 = scalar_lea.vmem [#allocation3], %s195
          %s198 = ssub.s32 6144, 6144
          %199 = vsyncadd %s193, %s198
          %s200 = smul.addr %s18, 48
          %s201 = smul.addr %s200, 128
          %s202 = scalar_lea.hbm %s0, %s201
          %s203 = sshll.u32 %s196, 4
          %s204 = int_to_ptr.vmem [resolvable:$true] %s203
          %209 = dma.hbm_to_vmem [thread:$0]  %s202, 6144, %s204, %s193, 384, 384, 24
        $region32: #{tpu_custom_call.1} parent=27 // pred_fallthru
          _
      $region28: #{tpu_custom_call.1} parent=5 // pred_fallthru
        _
      %p210 = scmp.le.s32.totalorder 1, %s18
      %p211 = scmp.lt.s32.totalorder %s18, 3
      %p212 = pnand %p210, %p211
      %p213 = pneg %p212
      // Predicated region
      $region33: #{tpu_custom_call.1} parent=5 // pred_check
        _
      $region34: #{tpu_custom_call.1} parent=5 // pred_check_branch
        %215 = sbr.rel (%p212) target = $region36
      $region35: #{tpu_custom_call.1} parent=5 // pred_region
        %s216 = ssub.s32 %s18, 1
        %s217 = sand.u32 %s31, 1
        %s218 = scalar_lea.sflag [#allocation4], %s217
        %s219 = sand.u32 %s31, 1
        %s220 = smul.addr %s219, 384
        %s221 = scalar_lea.vmem [#allocation3], %s220
        // Predicated region
        $region37: #{tpu_custom_call.1} parent=35 // pred_check
          %p222 = pneg %p44
        $region38: #{tpu_custom_call.1} parent=35 // pred_check_branch
          %224 = sbr.rel (%p222) target = $region40
        $region39: #{tpu_custom_call.1} parent=35 // pred_region
          %225 = dma.done %s218, 6144
        $region40: #{tpu_custom_call.1} parent=35 // pred_fallthru
          _
        // Predicated region
        $region41: #{tpu_custom_call.1} parent=35 // pred_check
          %p226 = pneg %p65
        $region42: #{tpu_custom_call.1} parent=35 // pred_check_branch
          %228 = sbr.rel (%p226) target = $region44
        $region43: #{tpu_custom_call.1} parent=35 // pred_region
          %229 = dma.done [#allocation7], 55296
        $region44: #{tpu_custom_call.1} parent=35 // pred_fallthru
          _
        // Predicated region
        $region45: #{tpu_custom_call.1} parent=35 // pred_check
          %p230 = pneg %p86
        $region46: #{tpu_custom_call.1} parent=35 // pred_check_branch
          %232 = sbr.rel (%p230) target = $region48
        $region47: #{tpu_custom_call.1} parent=35 // pred_region
          %233 = dma.done [#allocation7], 18432
        $region48: #{tpu_custom_call.1} parent=35 // pred_fallthru
          _
        // Predicated region
        $region49: #{tpu_custom_call.1} parent=35 // pred_check
          %p234 = pneg %p107
        $region50: #{tpu_custom_call.1} parent=35 // pred_check_branch
          %236 = sbr.rel (%p234) target = $region52
        $region51: #{tpu_custom_call.1} parent=35 // pred_region
          %237 = dma.done [#allocation10], 48
        $region52: #{tpu_custom_call.1} parent=35 // pred_fallthru
          _
        %s238 = sand.u32 %s31, 1
        %s239 = scalar_lea.sflag [#allocation4], %s238
        %s240 = sand.u32 %s31, 1
        %s241 = smul.addr %s240, 384
        %s242 = scalar_lea.vmem [#allocation3], %s241
        %p243 = pneg %p44
        %p244 = pneg %p41
        %p245 = pneg %p65
        %p246 = pneg %p62
        %p247 = pneg %p86
        %p248 = pneg %p83
        %p249 = pneg %p107
        %p250 = pneg %p104
        %p251 = pneg %p133
        %p252 = pneg %p130
        %s253 = sand.u32 %s120, 1
        %s254 = scalar_lea.sflag [#allocation5], %s253
        %s255 = sand.u32 %s120, 1
        %s256 = smul.addr %s255, 384
        %s257 = scalar_lea.vmem [#allocation11], %s256
        %v258 = vld [vmem:[%s221] sm:$0xff]
        %v259 = vld [vmem:[%s221 + $0x8] sm:$0xff]
        %v260 = vld [vmem:[%s221 + $0x10] sm:$0xff]
        %v261 = vld [vmem:[%s221 + $0x18] sm:$0xff]
        %v262 = vld [vmem:[%s221 + $0x20] sm:$0xff]
        %v263 = vld [vmem:[%s221 + $0x28] sm:$0xff]
        %v264 = vld [vmem:[%s221 + $0x30] sm:$0xff]
        %v265 = vld [vmem:[%s221 + $0x38] sm:$0xff]
        %v266 = vld [vmem:[%s221 + $0x40] sm:$0xff]
        %v267 = vld [vmem:[%s221 + $0x48] sm:$0xff]
        %v268 = vld [vmem:[%s221 + $0x50] sm:$0xff]
        %v269 = vld [vmem:[%s221 + $0x58] sm:$0xff]
        %v270 = vld [vmem:[%s221 + $0x60] sm:$0xff]
        %v271 = vld [vmem:[%s221 + $0x68] sm:$0xff]
        %v272 = vld [vmem:[%s221 + $0x70] sm:$0xff]
        %v273 = vld [vmem:[%s221 + $0x78] sm:$0xff]
        %v274 = vld [vmem:[%s221 + $0x80] sm:$0xff]
        %v275 = vld [vmem:[%s221 + $0x88] sm:$0xff]
        %v276 = vld [vmem:[%s221 + $0x90] sm:$0xff]
        %v277 = vld [vmem:[%s221 + $0x98] sm:$0xff]
        %v278 = vld [vmem:[%s221 + $0xa0] sm:$0xff]
        %v279 = vld [vmem:[%s221 + $0xa8] sm:$0xff]
        %v280 = vld [vmem:[%s221 + $0xb0] sm:$0xff]
        %v281 = vld [vmem:[%s221 + $0xb8] sm:$0xff]
        %v282 = vld [vmem:[%s221 + $0xc0] sm:$0xff]
        %v283 = vld [vmem:[%s221 + $0xc8] sm:$0xff]
        %v284 = vld [vmem:[%s221 + $0xd0] sm:$0xff]
        %v285 = vld [vmem:[%s221 + $0xd8] sm:$0xff]
        %v286 = vld [vmem:[%s221 + $0xe0] sm:$0xff]
        %v287 = vld [vmem:[%s221 + $0xe8] sm:$0xff]
        %v288 = vld [vmem:[%s221 + $0xf0] sm:$0xff]
        %v289 = vld [vmem:[%s221 + $0xf8] sm:$0xff]
        %v290 = vld [vmem:[%s221 + $0x100] sm:$0xff]
        %v291 = vld [vmem:[%s221 + $0x108] sm:$0xff]
        %v292 = vld [vmem:[%s221 + $0x110] sm:$0xff]
        %v293 = vld [vmem:[%s221 + $0x118] sm:$0xff]
        %v294 = vld [vmem:[%s221 + $0x120] sm:$0xff]
        %v295 = vld [vmem:[%s221 + $0x128] sm:$0xff]
        %v296 = vld [vmem:[%s221 + $0x130] sm:$0xff]
        %v297 = vld [vmem:[%s221 + $0x138] sm:$0xff]
        %v298 = vld [vmem:[%s221 + $0x140] sm:$0xff]
        %v299 = vld [vmem:[%s221 + $0x148] sm:$0xff]
        %v300 = vld [vmem:[%s221 + $0x150] sm:$0xff]
        %v301 = vld [vmem:[%s221 + $0x158] sm:$0xff]
        %v302 = vld [vmem:[%s221 + $0x160] sm:$0xff]
        %v303 = vld [vmem:[%s221 + $0x168] sm:$0xff]
        %v304 = vld [vmem:[%s221 + $0x170] sm:$0xff]
        %v305 = vld [vmem:[%s221 + $0x178] sm:$0xff]
        %v306 = vld [vmem:[#allocation6] sm:$0xff]
        %v307 = vld [vmem:[#allocation6 + $0x8] sm:$0xff]
        %v308 = vld [vmem:[#allocation6 + $0x10] sm:$0xff]
        %v309 = vld [vmem:[#allocation6 + $0x18] sm:$0xff]
        %v310 = vld [vmem:[#allocation6 + $0x20] sm:$0xff]
        %v311 = vld [vmem:[#allocation6 + $0x28] sm:$0xff]
        %v312 = vld [vmem:[#allocation6 + $0x30] sm:$0xff]
        %v313 = vld [vmem:[#allocation6 + $0x38] sm:$0xff]
        %v314 = vld [vmem:[#allocation6 + $0x40] sm:$0xff]
        %v315 = vld [vmem:[#allocation6 + $0x48] sm:$0xff]
        %v316 = vld [vmem:[#allocation6 + $0x50] sm:$0xff]
        %v317 = vld [vmem:[#allocation6 + $0x58] sm:$0xff]
        %v318 = vld [vmem:[#allocation6 + $0x60] sm:$0xff]
        %v319 = vld [vmem:[#allocation6 + $0x68] sm:$0xff]
        %v320 = vld [vmem:[#allocation6 + $0x70] sm:$0xff]
        %v321 = vld [vmem:[#allocation6 + $0x78] sm:$0xff]
        %v322 = vld [vmem:[#allocation6 + $0x80] sm:$0xff]
        %v323 = vld [vmem:[#allocation6 + $0x88] sm:$0xff]
        %v324 = vld [vmem:[#allocation6 + $0x90] sm:$0xff]
        %v325 = vld [vmem:[#allocation6 + $0x98] sm:$0xff]
        %v326 = vld [vmem:[#allocation6 + $0xa0] sm:$0xff]
        %v327 = vld [vmem:[#allocation6 + $0xa8] sm:$0xff]
        %v328 = vld [vmem:[#allocation6 + $0xb0] sm:$0xff]
        %v329 = vld [vmem:[#allocation6 + $0xb8] sm:$0xff]
        %v330 = vld [vmem:[#allocation6 + $0xc0] sm:$0xff]
        %v331 = vld [vmem:[#allocation6 + $0xc8] sm:$0xff]
        %v332 = vld [vmem:[#allocation6 + $0xd0] sm:$0xff]
        %v333 = vld [vmem:[#allocation6 + $0xd8] sm:$0xff]
        %v334 = vld [vmem:[#allocation6 + $0xe0] sm:$0xff]
        %v335 = vld [vmem:[#allocation6 + $0xe8] sm:$0xff]
        %v336 = vld [vmem:[#allocation6 + $0xf0] sm:$0xff]
        %v337 = vld [vmem:[#allocation6 + $0xf8] sm:$0xff]
        %v338 = vld [vmem:[#allocation6 + $0x100] sm:$0xff]
        %v339 = vld [vmem:[#allocation6 + $0x108] sm:$0xff]
        %v340 = vld [vmem:[#allocation6 + $0x110] sm:$0xff]
        %v341 = vld [vmem:[#allocation6 + $0x118] sm:$0xff]
        %v342 = vld [vmem:[#allocation6 + $0x120] sm:$0xff]
        %v343 = vld [vmem:[#allocation6 + $0x128] sm:$0xff]
        %v344 = vld [vmem:[#allocation6 + $0x130] sm:$0xff]
        %v345 = vld [vmem:[#allocation6 + $0x138] sm:$0xff]
        %v346 = vld [vmem:[#allocation6 + $0x140] sm:$0xff]
        %v347 = vld [vmem:[#allocation6 + $0x148] sm:$0xff]
        %v348 = vld [vmem:[#allocation6 + $0x150] sm:$0xff]
        %v349 = vld [vmem:[#allocation6 + $0x158] sm:$0xff]
        %v350 = vld [vmem:[#allocation6 + $0x160] sm:$0xff]
        %v351 = vld [vmem:[#allocation6 + $0x168] sm:$0xff]
        %v352 = vld [vmem:[#allocation6 + $0x170] sm:$0xff]
        %v353 = vld [vmem:[#allocation6 + $0x178] sm:$0xff]
        %v354 = vld [vmem:[#allocation6 + $0x180] sm:$0xff]
        %v355 = vld [vmem:[#allocation6 + $0x188] sm:$0xff]
        %v356 = vld [vmem:[#allocation6 + $0x190] sm:$0xff]
        %v357 = vld [vmem:[#allocation6 + $0x198] sm:$0xff]
        %v358 = vld [vmem:[#allocation6 + $0x1a0] sm:$0xff]
        %v359 = vld [vmem:[#allocation6 + $0x1a8] sm:$0xff]
        %v360 = vld [vmem:[#allocation6 + $0x1b0] sm:$0xff]
        %v361 = vld [vmem:[#allocation6 + $0x1b8] sm:$0xff]
        %v362 = vld [vmem:[#allocation6 + $0x1c0] sm:$0xff]
        %v363 = vld [vmem:[#allocation6 + $0x1c8] sm:$0xff]
        %v364 = vld [vmem:[#allocation6 + $0x1d0] sm:$0xff]
        %v365 = vld [vmem:[#allocation6 + $0x1d8] sm:$0xff]
        %v366 = vld [vmem:[#allocation6 + $0x1e0] sm:$0xff]
        %v367 = vld [vmem:[#allocation6 + $0x1e8] sm:$0xff]
        %v368 = vld [vmem:[#allocation6 + $0x1f0] sm:$0xff]
        %v369 = vld [vmem:[#allocation6 + $0x1f8] sm:$0xff]
        %v370 = vld [vmem:[#allocation6 + $0x200] sm:$0xff]
        %v371 = vld [vmem:[#allocation6 + $0x208] sm:$0xff]
        %v372 = vld [vmem:[#allocation6 + $0x210] sm:$0xff]
        %v373 = vld [vmem:[#allocation6 + $0x218] sm:$0xff]
        %v374 = vld [vmem:[#allocation6 + $0x220] sm:$0xff]
        %v375 = vld [vmem:[#allocation6 + $0x228] sm:$0xff]
        %v376 = vld [vmem:[#allocation6 + $0x230] sm:$0xff]
        %v377 = vld [vmem:[#allocation6 + $0x238] sm:$0xff]
        %v378 = vld [vmem:[#allocation6 + $0x240] sm:$0xff]
        %v379 = vld [vmem:[#allocation6 + $0x248] sm:$0xff]
        %v380 = vld [vmem:[#allocation6 + $0x250] sm:$0xff]
        %v381 = vld [vmem:[#allocation6 + $0x258] sm:$0xff]
        %v382 = vld [vmem:[#allocation6 + $0x260] sm:$0xff]
        %v383 = vld [vmem:[#allocation6 + $0x268] sm:$0xff]
        %v384 = vld [vmem:[#allocation6 + $0x270] sm:$0xff]
        %v385 = vld [vmem:[#allocation6 + $0x278] sm:$0xff]
        %v386 = vld [vmem:[#allocation6 + $0x280] sm:$0xff]
        %v387 = vld [vmem:[#allocation6 + $0x288] sm:$0xff]
        %v388 = vld [vmem:[#allocation6 + $0x290] sm:$0xff]
        %v389 = vld [vmem:[#allocation6 + $0x298] sm:$0xff]
        %v390 = vld [vmem:[#allocation6 + $0x2a0] sm:$0xff]
        %v391 = vld [vmem:[#allocation6 + $0x2a8] sm:$0xff]
        %v392 = vld [vmem:[#allocation6 + $0x2b0] sm:$0xff]
        %v393 = vld [vmem:[#allocation6 + $0x2b8] sm:$0xff]
        %v394 = vld [vmem:[#allocation6 + $0x2c0] sm:$0xff]
        %v395 = vld [vmem:[#allocation6 + $0x2c8] sm:$0xff]
        %v396 = vld [vmem:[#allocation6 + $0x2d0] sm:$0xff]
        %v397 = vld [vmem:[#allocation6 + $0x2d8] sm:$0xff]
        %v398 = vld [vmem:[#allocation6 + $0x2e0] sm:$0xff]
        %v399 = vld [vmem:[#allocation6 + $0x2e8] sm:$0xff]
        %v400 = vld [vmem:[#allocation6 + $0x2f0] sm:$0xff]
        %v401 = vld [vmem:[#allocation6 + $0x2f8] sm:$0xff]
        %v402 = vld [vmem:[#allocation6 + $0x300] sm:$0xff]
        %v403 = vld [vmem:[#allocation6 + $0x308] sm:$0xff]
        %v404 = vld [vmem:[#allocation6 + $0x310] sm:$0xff]
        %v405 = vld [vmem:[#allocation6 + $0x318] sm:$0xff]
        %v406 = vld [vmem:[#allocation6 + $0x320] sm:$0xff]
        %v407 = vld [vmem:[#allocation6 + $0x328] sm:$0xff]
        %v408 = vld [vmem:[#allocation6 + $0x330] sm:$0xff]
        %v409 = vld [vmem:[#allocation6 + $0x338] sm:$0xff]
        %v410 = vld [vmem:[#allocation6 + $0x340] sm:$0xff]
        %v411 = vld [vmem:[#allocation6 + $0x348] sm:$0xff]
        %v412 = vld [vmem:[#allocation6 + $0x350] sm:$0xff]
        %v413 = vld [vmem:[#allocation6 + $0x358] sm:$0xff]
        %v414 = vld [vmem:[#allocation6 + $0x360] sm:$0xff]
        %v415 = vld [vmem:[#allocation6 + $0x368] sm:$0xff]
        %v416 = vld [vmem:[#allocation6 + $0x370] sm:$0xff]
        %v417 = vld [vmem:[#allocation6 + $0x378] sm:$0xff]
        %v418 = vld [vmem:[#allocation6 + $0x380] sm:$0xff]
        %v419 = vld [vmem:[#allocation6 + $0x388] sm:$0xff]
        %v420 = vld [vmem:[#allocation6 + $0x390] sm:$0xff]
        %v421 = vld [vmem:[#allocation6 + $0x398] sm:$0xff]
        %v422 = vld [vmem:[#allocation6 + $0x3a0] sm:$0xff]
        %v423 = vld [vmem:[#allocation6 + $0x3a8] sm:$0xff]
        %v424 = vld [vmem:[#allocation6 + $0x3b0] sm:$0xff]
        %v425 = vld [vmem:[#allocation6 + $0x3b8] sm:$0xff]
        %v426 = vld [vmem:[#allocation6 + $0x3c0] sm:$0xff]
        %v427 = vld [vmem:[#allocation6 + $0x3c8] sm:$0xff]
        %v428 = vld [vmem:[#allocation6 + $0x3d0] sm:$0xff]
        %v429 = vld [vmem:[#allocation6 + $0x3d8] sm:$0xff]
        %v430 = vld [vmem:[#allocation6 + $0x3e0] sm:$0xff]
        %v431 = vld [vmem:[#allocation6 + $0x3e8] sm:$0xff]
        %v432 = vld [vmem:[#allocation6 + $0x3f0] sm:$0xff]
        %v433 = vld [vmem:[#allocation6 + $0x3f8] sm:$0xff]
        %v434 = vld [vmem:[#allocation6 + $0x400] sm:$0xff]
        %v435 = vld [vmem:[#allocation6 + $0x408] sm:$0xff]
        %v436 = vld [vmem:[#allocation6 + $0x410] sm:$0xff]
        %v437 = vld [vmem:[#allocation6 + $0x418] sm:$0xff]
        %v438 = vld [vmem:[#allocation6 + $0x420] sm:$0xff]
        %v439 = vld [vmem:[#allocation6 + $0x428] sm:$0xff]
        %v440 = vld [vmem:[#allocation6 + $0x430] sm:$0xff]
        %v441 = vld [vmem:[#allocation6 + $0x438] sm:$0xff]
        %v442 = vld [vmem:[#allocation6 + $0x440] sm:$0xff]
        %v443 = vld [vmem:[#allocation6 + $0x448] sm:$0xff]
        %v444 = vld [vmem:[#allocation6 + $0x450] sm:$0xff]
        %v445 = vld [vmem:[#allocation6 + $0x458] sm:$0xff]
        %v446 = vld [vmem:[#allocation6 + $0x460] sm:$0xff]
        %v447 = vld [vmem:[#allocation6 + $0x468] sm:$0xff]
        %v448 = vld [vmem:[#allocation6 + $0x470] sm:$0xff]
        %v449 = vld [vmem:[#allocation6 + $0x478] sm:$0xff]
        %v450 = vld [vmem:[#allocation6 + $0x480] sm:$0xff]
        %v451 = vld [vmem:[#allocation6 + $0x488] sm:$0xff]
        %v452 = vld [vmem:[#allocation6 + $0x490] sm:$0xff]
        %v453 = vld [vmem:[#allocation6 + $0x498] sm:$0xff]
        %v454 = vld [vmem:[#allocation6 + $0x4a0] sm:$0xff]
        %v455 = vld [vmem:[#allocation6 + $0x4a8] sm:$0xff]
        %v456 = vld [vmem:[#allocation6 + $0x4b0] sm:$0xff]
        %v457 = vld [vmem:[#allocation6 + $0x4b8] sm:$0xff]
        %v458 = vld [vmem:[#allocation6 + $0x4c0] sm:$0xff]
        %v459 = vld [vmem:[#allocation6 + $0x4c8] sm:$0xff]
        %v460 = vld [vmem:[#allocation6 + $0x4d0] sm:$0xff]
        %v461 = vld [vmem:[#allocation6 + $0x4d8] sm:$0xff]
        %v462 = vld [vmem:[#allocation6 + $0x4e0] sm:$0xff]
        %v463 = vld [vmem:[#allocation6 + $0x4e8] sm:$0xff]
        %v464 = vld [vmem:[#allocation6 + $0x4f0] sm:$0xff]
        %v465 = vld [vmem:[#allocation6 + $0x4f8] sm:$0xff]
        %v466 = vld [vmem:[#allocation6 + $0x500] sm:$0xff]
        %v467 = vld [vmem:[#allocation6 + $0x508] sm:$0xff]
        %v468 = vld [vmem:[#allocation6 + $0x510] sm:$0xff]
        %v469 = vld [vmem:[#allocation6 + $0x518] sm:$0xff]
        %v470 = vld [vmem:[#allocation6 + $0x520] sm:$0xff]
        %v471 = vld [vmem:[#allocation6 + $0x528] sm:$0xff]
        %v472 = vld [vmem:[#allocation6 + $0x530] sm:$0xff]
        %v473 = vld [vmem:[#allocation6 + $0x538] sm:$0xff]
        %v474 = vld [vmem:[#allocation6 + $0x540] sm:$0xff]
        %v475 = vld [vmem:[#allocation6 + $0x548] sm:$0xff]
        %v476 = vld [vmem:[#allocation6 + $0x550] sm:$0xff]
        %v477 = vld [vmem:[#allocation6 + $0x558] sm:$0xff]
        %v478 = vld [vmem:[#allocation6 + $0x560] sm:$0xff]
        %v479 = vld [vmem:[#allocation6 + $0x568] sm:$0xff]
        %v480 = vld [vmem:[#allocation6 + $0x570] sm:$0xff]
        %v481 = vld [vmem:[#allocation6 + $0x578] sm:$0xff]
        %v482 = vld [vmem:[#allocation6 + $0x580] sm:$0xff]
        %v483 = vld [vmem:[#allocation6 + $0x588] sm:$0xff]
        %v484 = vld [vmem:[#allocation6 + $0x590] sm:$0xff]
        %v485 = vld [vmem:[#allocation6 + $0x598] sm:$0xff]
        %v486 = vld [vmem:[#allocation6 + $0x5a0] sm:$0xff]
        %v487 = vld [vmem:[#allocation6 + $0x5a8] sm:$0xff]
        %v488 = vld [vmem:[#allocation6 + $0x5b0] sm:$0xff]
        %v489 = vld [vmem:[#allocation6 + $0x5b8] sm:$0xff]
        %v490 = vld [vmem:[#allocation6 + $0x5c0] sm:$0xff]
        %v491 = vld [vmem:[#allocation6 + $0x5c8] sm:$0xff]
        %v492 = vld [vmem:[#allocation6 + $0x5d0] sm:$0xff]
        %v493 = vld [vmem:[#allocation6 + $0x5d8] sm:$0xff]
        %v494 = vld [vmem:[#allocation6 + $0x5e0] sm:$0xff]
        %v495 = vld [vmem:[#allocation6 + $0x5e8] sm:$0xff]
        %v496 = vld [vmem:[#allocation6 + $0x5f0] sm:$0xff]
        %v497 = vld [vmem:[#allocation6 + $0x5f8] sm:$0xff]
        %v498 = vld [vmem:[#allocation6 + $0x600] sm:$0xff]
        %v499 = vld [vmem:[#allocation6 + $0x608] sm:$0xff]
        %v500 = vld [vmem:[#allocation6 + $0x610] sm:$0xff]
        %v501 = vld [vmem:[#allocation6 + $0x618] sm:$0xff]
        %v502 = vld [vmem:[#allocation6 + $0x620] sm:$0xff]
        %v503 = vld [vmem:[#allocation6 + $0x628] sm:$0xff]
        %v504 = vld [vmem:[#allocation6 + $0x630] sm:$0xff]
        %v505 = vld [vmem:[#allocation6 + $0x638] sm:$0xff]
        %v506 = vld [vmem:[#allocation6 + $0x640] sm:$0xff]
        %v507 = vld [vmem:[#allocation6 + $0x648] sm:$0xff]
        %v508 = vld [vmem:[#allocation6 + $0x650] sm:$0xff]
        %v509 = vld [vmem:[#allocation6 + $0x658] sm:$0xff]
        %v510 = vld [vmem:[#allocation6 + $0x660] sm:$0xff]
        %v511 = vld [vmem:[#allocation6 + $0x668] sm:$0xff]
        %v512 = vld [vmem:[#allocation6 + $0x670] sm:$0xff]
        %v513 = vld [vmem:[#allocation6 + $0x678] sm:$0xff]
        %v514 = vld [vmem:[#allocation6 + $0x680] sm:$0xff]
        %v515 = vld [vmem:[#allocation6 + $0x688] sm:$0xff]
        %v516 = vld [vmem:[#allocation6 + $0x690] sm:$0xff]
        %v517 = vld [vmem:[#allocation6 + $0x698] sm:$0xff]
        %v518 = vld [vmem:[#allocation6 + $0x6a0] sm:$0xff]
        %v519 = vld [vmem:[#allocation6 + $0x6a8] sm:$0xff]
        %v520 = vld [vmem:[#allocation6 + $0x6b0] sm:$0xff]
        %v521 = vld [vmem:[#allocation6 + $0x6b8] sm:$0xff]
        %v522 = vld [vmem:[#allocation6 + $0x6c0] sm:$0xff]
        %v523 = vld [vmem:[#allocation6 + $0x6c8] sm:$0xff]
        %v524 = vld [vmem:[#allocation6 + $0x6d0] sm:$0xff]
        %v525 = vld [vmem:[#allocation6 + $0x6d8] sm:$0xff]
        %v526 = vld [vmem:[#allocation6 + $0x6e0] sm:$0xff]
        %v527 = vld [vmem:[#allocation6 + $0x6e8] sm:$0xff]
        %v528 = vld [vmem:[#allocation6 + $0x6f0] sm:$0xff]
        %v529 = vld [vmem:[#allocation6 + $0x6f8] sm:$0xff]
        %v530 = vld [vmem:[#allocation6 + $0x700] sm:$0xff]
        %v531 = vld [vmem:[#allocation6 + $0x708] sm:$0xff]
        %v532 = vld [vmem:[#allocation6 + $0x710] sm:$0xff]
        %v533 = vld [vmem:[#allocation6 + $0x718] sm:$0xff]
        %v534 = vld [vmem:[#allocation6 + $0x720] sm:$0xff]
        %v535 = vld [vmem:[#allocation6 + $0x728] sm:$0xff]
        %v536 = vld [vmem:[#allocation6 + $0x730] sm:$0xff]
        %v537 = vld [vmem:[#allocation6 + $0x738] sm:$0xff]
        %v538 = vld [vmem:[#allocation6 + $0x740] sm:$0xff]
        %v539 = vld [vmem:[#allocation6 + $0x748] sm:$0xff]
        %v540 = vld [vmem:[#allocation6 + $0x750] sm:$0xff]
        %v541 = vld [vmem:[#allocation6 + $0x758] sm:$0xff]
        %v542 = vld [vmem:[#allocation6 + $0x760] sm:$0xff]
        %v543 = vld [vmem:[#allocation6 + $0x768] sm:$0xff]
        %v544 = vld [vmem:[#allocation6 + $0x770] sm:$0xff]
        %v545 = vld [vmem:[#allocation6 + $0x778] sm:$0xff]
        %v546 = vld [vmem:[#allocation6 + $0x780] sm:$0xff]
        %v547 = vld [vmem:[#allocation6 + $0x788] sm:$0xff]
        %v548 = vld [vmem:[#allocation6 + $0x790] sm:$0xff]
        %v549 = vld [vmem:[#allocation6 + $0x798] sm:$0xff]
        %v550 = vld [vmem:[#allocation6 + $0x7a0] sm:$0xff]
        %v551 = vld [vmem:[#allocation6 + $0x7a8] sm:$0xff]
        %v552 = vld [vmem:[#allocation6 + $0x7b0] sm:$0xff]
        %v553 = vld [vmem:[#allocation6 + $0x7b8] sm:$0xff]
        %v554 = vld [vmem:[#allocation6 + $0x7c0] sm:$0xff]
        %v555 = vld [vmem:[#allocation6 + $0x7c8] sm:$0xff]
        %v556 = vld [vmem:[#allocation6 + $0x7d0] sm:$0xff]
        %v557 = vld [vmem:[#allocation6 + $0x7d8] sm:$0xff]
        %v558 = vld [vmem:[#allocation6 + $0x7e0] sm:$0xff]
        %v559 = vld [vmem:[#allocation6 + $0x7e8] sm:$0xff]
        %v560 = vld [vmem:[#allocation6 + $0x7f0] sm:$0xff]
        %v561 = vld [vmem:[#allocation6 + $0x7f8] sm:$0xff]
        %v562 = vld [vmem:[#allocation6 + $0x800] sm:$0xff]
        %v563 = vld [vmem:[#allocation6 + $0x808] sm:$0xff]
        %v564 = vld [vmem:[#allocation6 + $0x810] sm:$0xff]
        %v565 = vld [vmem:[#allocation6 + $0x818] sm:$0xff]
        %v566 = vld [vmem:[#allocation6 + $0x820] sm:$0xff]
        %v567 = vld [vmem:[#allocation6 + $0x828] sm:$0xff]
        %v568 = vld [vmem:[#allocation6 + $0x830] sm:$0xff]
        %v569 = vld [vmem:[#allocation6 + $0x838] sm:$0xff]
        %v570 = vld [vmem:[#allocation6 + $0x840] sm:$0xff]
        %v571 = vld [vmem:[#allocation6 + $0x848] sm:$0xff]
        %v572 = vld [vmem:[#allocation6 + $0x850] sm:$0xff]
        %v573 = vld [vmem:[#allocation6 + $0x858] sm:$0xff]
        %v574 = vld [vmem:[#allocation6 + $0x860] sm:$0xff]
        %v575 = vld [vmem:[#allocation6 + $0x868] sm:$0xff]
        %v576 = vld [vmem:[#allocation6 + $0x870] sm:$0xff]
        %v577 = vld [vmem:[#allocation6 + $0x878] sm:$0xff]
        %v578 = vld [vmem:[#allocation6 + $0x880] sm:$0xff]
        %v579 = vld [vmem:[#allocation6 + $0x888] sm:$0xff]
        %v580 = vld [vmem:[#allocation6 + $0x890] sm:$0xff]
        %v581 = vld [vmem:[#allocation6 + $0x898] sm:$0xff]
        %v582 = vld [vmem:[#allocation6 + $0x8a0] sm:$0xff]
        %v583 = vld [vmem:[#allocation6 + $0x8a8] sm:$0xff]
        %v584 = vld [vmem:[#allocation6 + $0x8b0] sm:$0xff]
        %v585 = vld [vmem:[#allocation6 + $0x8b8] sm:$0xff]
        %v586 = vld [vmem:[#allocation6 + $0x8c0] sm:$0xff]
        %v587 = vld [vmem:[#allocation6 + $0x8c8] sm:$0xff]
        %v588 = vld [vmem:[#allocation6 + $0x8d0] sm:$0xff]
        %v589 = vld [vmem:[#allocation6 + $0x8d8] sm:$0xff]
        %v590 = vld [vmem:[#allocation6 + $0x8e0] sm:$0xff]
        %v591 = vld [vmem:[#allocation6 + $0x8e8] sm:$0xff]
        %v592 = vld [vmem:[#allocation6 + $0x8f0] sm:$0xff]
        %v593 = vld [vmem:[#allocation6 + $0x8f8] sm:$0xff]
        %v594 = vld [vmem:[#allocation6 + $0x900] sm:$0xff]
        %v595 = vld [vmem:[#allocation6 + $0x908] sm:$0xff]
        %v596 = vld [vmem:[#allocation6 + $0x910] sm:$0xff]
        %v597 = vld [vmem:[#allocation6 + $0x918] sm:$0xff]
        %v598 = vld [vmem:[#allocation6 + $0x920] sm:$0xff]
        %v599 = vld [vmem:[#allocation6 + $0x928] sm:$0xff]
        %v600 = vld [vmem:[#allocation6 + $0x930] sm:$0xff]
        %v601 = vld [vmem:[#allocation6 + $0x938] sm:$0xff]
        %v602 = vld [vmem:[#allocation6 + $0x940] sm:$0xff]
        %v603 = vld [vmem:[#allocation6 + $0x948] sm:$0xff]
        %v604 = vld [vmem:[#allocation6 + $0x950] sm:$0xff]
        %v605 = vld [vmem:[#allocation6 + $0x958] sm:$0xff]
        %v606 = vld [vmem:[#allocation6 + $0x960] sm:$0xff]
        %v607 = vld [vmem:[#allocation6 + $0x968] sm:$0xff]
        %v608 = vld [vmem:[#allocation6 + $0x970] sm:$0xff]
        %v609 = vld [vmem:[#allocation6 + $0x978] sm:$0xff]
        %v610 = vld [vmem:[#allocation6 + $0x980] sm:$0xff]
        %v611 = vld [vmem:[#allocation6 + $0x988] sm:$0xff]
        %v612 = vld [vmem:[#allocation6 + $0x990] sm:$0xff]
        %v613 = vld [vmem:[#allocation6 + $0x998] sm:$0xff]
        %v614 = vld [vmem:[#allocation6 + $0x9a0] sm:$0xff]
        %v615 = vld [vmem:[#allocation6 + $0x9a8] sm:$0xff]
        %v616 = vld [vmem:[#allocation6 + $0x9b0] sm:$0xff]
        %v617 = vld [vmem:[#allocation6 + $0x9b8] sm:$0xff]
        %v618 = vld [vmem:[#allocation6 + $0x9c0] sm:$0xff]
        %v619 = vld [vmem:[#allocation6 + $0x9c8] sm:$0xff]
        %v620 = vld [vmem:[#allocation6 + $0x9d0] sm:$0xff]
        %v621 = vld [vmem:[#allocation6 + $0x9d8] sm:$0xff]
        %v622 = vld [vmem:[#allocation6 + $0x9e0] sm:$0xff]
        %v623 = vld [vmem:[#allocation6 + $0x9e8] sm:$0xff]
        %v624 = vld [vmem:[#allocation6 + $0x9f0] sm:$0xff]
        %v625 = vld [vmem:[#allocation6 + $0x9f8] sm:$0xff]
        %v626 = vld [vmem:[#allocation6 + $0xa00] sm:$0xff]
        %v627 = vld [vmem:[#allocation6 + $0xa08] sm:$0xff]
        %v628 = vld [vmem:[#allocation6 + $0xa10] sm:$0xff]
        %v629 = vld [vmem:[#allocation6 + $0xa18] sm:$0xff]
        %v630 = vld [vmem:[#allocation6 + $0xa20] sm:$0xff]
        %v631 = vld [vmem:[#allocation6 + $0xa28] sm:$0xff]
        %v632 = vld [vmem:[#allocation6 + $0xa30] sm:$0xff]
        %v633 = vld [vmem:[#allocation6 + $0xa38] sm:$0xff]
        %v634 = vld [vmem:[#allocation6 + $0xa40] sm:$0xff]
        %v635 = vld [vmem:[#allocation6 + $0xa48] sm:$0xff]
        %v636 = vld [vmem:[#allocation6 + $0xa50] sm:$0xff]
        %v637 = vld [vmem:[#allocation6 + $0xa58] sm:$0xff]
        %v638 = vld [vmem:[#allocation6 + $0xa60] sm:$0xff]
        %v639 = vld [vmem:[#allocation6 + $0xa68] sm:$0xff]
        %v640 = vld [vmem:[#allocation6 + $0xa70] sm:$0xff]
        %v641 = vld [vmem:[#allocation6 + $0xa78] sm:$0xff]
        %v642 = vld [vmem:[#allocation6 + $0xa80] sm:$0xff]
        %v643 = vld [vmem:[#allocation6 + $0xa88] sm:$0xff]
        %v644 = vld [vmem:[#allocation6 + $0xa90] sm:$0xff]
        %v645 = vld [vmem:[#allocation6 + $0xa98] sm:$0xff]
        %v646 = vld [vmem:[#allocation6 + $0xaa0] sm:$0xff]
        %v647 = vld [vmem:[#allocation6 + $0xaa8] sm:$0xff]
        %v648 = vld [vmem:[#allocation6 + $0xab0] sm:$0xff]
        %v649 = vld [vmem:[#allocation6 + $0xab8] sm:$0xff]
        %v650 = vld [vmem:[#allocation6 + $0xac0] sm:$0xff]
        %v651 = vld [vmem:[#allocation6 + $0xac8] sm:$0xff]
        %v652 = vld [vmem:[#allocation6 + $0xad0] sm:$0xff]
        %v653 = vld [vmem:[#allocation6 + $0xad8] sm:$0xff]
        %v654 = vld [vmem:[#allocation6 + $0xae0] sm:$0xff]
        %v655 = vld [vmem:[#allocation6 + $0xae8] sm:$0xff]
        %v656 = vld [vmem:[#allocation6 + $0xaf0] sm:$0xff]
        %v657 = vld [vmem:[#allocation6 + $0xaf8] sm:$0xff]
        %v658 = vld [vmem:[#allocation6 + $0xb00] sm:$0xff]
        %v659 = vld [vmem:[#allocation6 + $0xb08] sm:$0xff]
        %v660 = vld [vmem:[#allocation6 + $0xb10] sm:$0xff]
        %v661 = vld [vmem:[#allocation6 + $0xb18] sm:$0xff]
        %v662 = vld [vmem:[#allocation6 + $0xb20] sm:$0xff]
        %v663 = vld [vmem:[#allocation6 + $0xb28] sm:$0xff]
        %v664 = vld [vmem:[#allocation6 + $0xb30] sm:$0xff]
        %v665 = vld [vmem:[#allocation6 + $0xb38] sm:$0xff]
        %v666 = vld [vmem:[#allocation6 + $0xb40] sm:$0xff]
        %v667 = vld [vmem:[#allocation6 + $0xb48] sm:$0xff]
        %v668 = vld [vmem:[#allocation6 + $0xb50] sm:$0xff]
        %v669 = vld [vmem:[#allocation6 + $0xb58] sm:$0xff]
        %v670 = vld [vmem:[#allocation6 + $0xb60] sm:$0xff]
        %v671 = vld [vmem:[#allocation6 + $0xb68] sm:$0xff]
        %v672 = vld [vmem:[#allocation6 + $0xb70] sm:$0xff]
        %v673 = vld [vmem:[#allocation6 + $0xb78] sm:$0xff]
        %v674 = vld [vmem:[#allocation6 + $0xb80] sm:$0xff]
        %v675 = vld [vmem:[#allocation6 + $0xb88] sm:$0xff]
        %v676 = vld [vmem:[#allocation6 + $0xb90] sm:$0xff]
        %v677 = vld [vmem:[#allocation6 + $0xb98] sm:$0xff]
        %v678 = vld [vmem:[#allocation6 + $0xba0] sm:$0xff]
        %v679 = vld [vmem:[#allocation6 + $0xba8] sm:$0xff]
        %v680 = vld [vmem:[#allocation6 + $0xbb0] sm:$0xff]
        %v681 = vld [vmem:[#allocation6 + $0xbb8] sm:$0xff]
        %v682 = vld [vmem:[#allocation6 + $0xbc0] sm:$0xff]
        %v683 = vld [vmem:[#allocation6 + $0xbc8] sm:$0xff]
        %v684 = vld [vmem:[#allocation6 + $0xbd0] sm:$0xff]
        %v685 = vld [vmem:[#allocation6 + $0xbd8] sm:$0xff]
        %v686 = vld [vmem:[#allocation6 + $0xbe0] sm:$0xff]
        %v687 = vld [vmem:[#allocation6 + $0xbe8] sm:$0xff]
        %v688 = vld [vmem:[#allocation6 + $0xbf0] sm:$0xff]
        %v689 = vld [vmem:[#allocation6 + $0xbf8] sm:$0xff]
        %v690 = vld [vmem:[#allocation6 + $0xc00] sm:$0xff]
        %v691 = vld [vmem:[#allocation6 + $0xc08] sm:$0xff]
        %v692 = vld [vmem:[#allocation6 + $0xc10] sm:$0xff]
        %v693 = vld [vmem:[#allocation6 + $0xc18] sm:$0xff]
        %v694 = vld [vmem:[#allocation6 + $0xc20] sm:$0xff]
        %v695 = vld [vmem:[#allocation6 + $0xc28] sm:$0xff]
        %v696 = vld [vmem:[#allocation6 + $0xc30] sm:$0xff]
        %v697 = vld [vmem:[#allocation6 + $0xc38] sm:$0xff]
        %v698 = vld [vmem:[#allocation6 + $0xc40] sm:$0xff]
        %v699 = vld [vmem:[#allocation6 + $0xc48] sm:$0xff]
        %v700 = vld [vmem:[#allocation6 + $0xc50] sm:$0xff]
        %v701 = vld [vmem:[#allocation6 + $0xc58] sm:$0xff]
        %v702 = vld [vmem:[#allocation6 + $0xc60] sm:$0xff]
        %v703 = vld [vmem:[#allocation6 + $0xc68] sm:$0xff]
        %v704 = vld [vmem:[#allocation6 + $0xc70] sm:$0xff]
        %v705 = vld [vmem:[#allocation6 + $0xc78] sm:$0xff]
        %v706 = vld [vmem:[#allocation6 + $0xc80] sm:$0xff]
        %v707 = vld [vmem:[#allocation6 + $0xc88] sm:$0xff]
        %v708 = vld [vmem:[#allocation6 + $0xc90] sm:$0xff]
        %v709 = vld [vmem:[#allocation6 + $0xc98] sm:$0xff]
        %v710 = vld [vmem:[#allocation6 + $0xca0] sm:$0xff]
        %v711 = vld [vmem:[#allocation6 + $0xca8] sm:$0xff]
        %v712 = vld [vmem:[#allocation6 + $0xcb0] sm:$0xff]
        %v713 = vld [vmem:[#allocation6 + $0xcb8] sm:$0xff]
        %v714 = vld [vmem:[#allocation6 + $0xcc0] sm:$0xff]
        %v715 = vld [vmem:[#allocation6 + $0xcc8] sm:$0xff]
        %v716 = vld [vmem:[#allocation6 + $0xcd0] sm:$0xff]
        %v717 = vld [vmem:[#allocation6 + $0xcd8] sm:$0xff]
        %v718 = vld [vmem:[#allocation6 + $0xce0] sm:$0xff]
        %v719 = vld [vmem:[#allocation6 + $0xce8] sm:$0xff]
        %v720 = vld [vmem:[#allocation6 + $0xcf0] sm:$0xff]
        %v721 = vld [vmem:[#allocation6 + $0xcf8] sm:$0xff]
        %v722 = vld [vmem:[#allocation6 + $0xd00] sm:$0xff]
        %v723 = vld [vmem:[#allocation6 + $0xd08] sm:$0xff]
        %v724 = vld [vmem:[#allocation6 + $0xd10] sm:$0xff]
        %v725 = vld [vmem:[#allocation6 + $0xd18] sm:$0xff]
        %v726 = vld [vmem:[#allocation6 + $0xd20] sm:$0xff]
        %v727 = vld [vmem:[#allocation6 + $0xd28] sm:$0xff]
        %v728 = vld [vmem:[#allocation6 + $0xd30] sm:$0xff]
        %v729 = vld [vmem:[#allocation6 + $0xd38] sm:$0xff]
        %v730 = vld [vmem:[#allocation6 + $0xd40] sm:$0xff]
        %v731 = vld [vmem:[#allocation6 + $0xd48] sm:$0xff]
        %v732 = vld [vmem:[#allocation6 + $0xd50] sm:$0xff]
        %v733 = vld [vmem:[#allocation6 + $0xd58] sm:$0xff]
        %v734 = vld [vmem:[#allocation6 + $0xd60] sm:$0xff]
        %v735 = vld [vmem:[#allocation6 + $0xd68] sm:$0xff]
        %v736 = vld [vmem:[#allocation6 + $0xd70] sm:$0xff]
        %v737 = vld [vmem:[#allocation6 + $0xd78] sm:$0xff]
        %738 = vmatprep.subr.mxu0 %v307
        %739 = vmatpush1.msra.mxu0 %v306
        %740 = vmatprep.subr.mxu0 %v316
        %741 = vmatpush1.msra.mxu0 %v315
        %742 = vmatprep.subr.mxu0 %v325
        %743 = vmatpush1.msra.mxu0 %v324
        %744 = vmatprep.subr.mxu0 %v334
        %745 = vmatpush1.msra.mxu0 %v333
        %746 = vmatprep.subr.mxu0 %v343
        %747 = vmatpush1.msra.mxu0 %v342
        %748 = vmatprep.subr.mxu0 %v352
        %749 = vmatpush1.msra.mxu0 %v351
        %750 = vmatprep.subr.mxu0 %v361
        %751 = vmatpush1.msra.mxu0 %v360
        %752 = vmatprep.subr.mxu0 %v370
        %753 = vmatpush1.msra.mxu0 %v369
        %754 = vmatprep.subr.mxu0 %v379
        %755 = vmatpush1.msra.mxu0 %v378
        %756 = vmatprep.subr.mxu0 %v388
        %757 = vmatpush1.msra.mxu0 %v387
        %758 = vmatprep.subr.mxu0 %v397
        %759 = vmatpush1.msra.mxu0 %v396
        %760 = vmatprep.subr.mxu0 %v406
        %761 = vmatpush1.msra.mxu0 %v405
        %762 = vmatprep.subr.mxu0 %v415
        %763 = vmatpush1.msra.mxu0 %v414
        %764 = vmatprep.subr.mxu0 %v424
        %765 = vmatpush1.msra.mxu0 %v423
        %766 = vmatprep.subr.mxu0 %v433
        %767 = vmatpush1.msra.mxu0 %v432
        %768 = vmatprep.subr.mxu0 %v442
        %769 = vmatpush1.msra.mxu0 %v441
        %770 = vmatprep.subr.mxu0 %v451
        %771 = vmatpush1.msra.mxu0 %v450
        %772 = vmatprep.subr.mxu0 %v460
        %773 = vmatpush1.msra.mxu0 %v459
        %774 = vmatprep.subr.mxu0 %v469
        %775 = vmatpush1.msra.mxu0 %v468
        %776 = vmatprep.subr.mxu0 %v478
        %777 = vmatpush1.msra.mxu0 %v477
        %778 = vmatprep.subr.mxu0 %v487
        %779 = vmatpush1.msra.mxu0 %v486
        %780 = vmatprep.subr.mxu0 %v496
        %781 = vmatpush1.msra.mxu0 %v495
        %782 = vmatprep.subr.mxu0 %v505
        %783 = vmatpush1.msra.mxu0 %v504
        %784 = vmatprep.subr.mxu0 %v514
        %785 = vmatpush1.msra.mxu0 %v513
        %786 = vmatprep.subr.mxu0 %v523
        %787 = vmatpush1.msra.mxu0 %v522
        %788 = vmatprep.subr.mxu0 %v532
        %789 = vmatpush1.msra.mxu0 %v531
        %790 = vmatprep.subr.mxu0 %v541
        %791 = vmatpush1.msra.mxu0 %v540
        %792 = vmatprep.subr.mxu0 %v550
        %793 = vmatpush1.msra.mxu0 %v549
        %794 = vmatprep.subr.mxu0 %v559
        %795 = vmatpush1.msra.mxu0 %v558
        %796 = vmatprep.subr.mxu0 %v568
        %797 = vmatpush1.msra.mxu0 %v567
        %798 = vmatprep.subr.mxu0 %v577
        %799 = vmatpush1.msra.mxu0 %v576
        %800 = vmatprep.subr.mxu0 %v586
        %801 = vmatpush1.msra.mxu0 %v585
        %802 = vmatprep.mubr.f32.mxu0 %v259
        %803 = vmatmul.mubr.f32.gmra.mrb[0].mxu0 %v258
        %v804 = vpop.f32.mrb[0].mxu0
        %v805 = vadd.f32 0.0, %v804
        %v806 = vpop.f32.mrb[0].mxu0
        %v807 = vadd.f32 0.0, %v806
        %808 = vmatprep.mubr.f32.mxu0 %v262
        %809 = vmatmul.mubr.f32.gmra.mrb[0].mxu0 %v261
        %v810 = vpop.f32.mrb[0].mxu0
        %v811 = vadd.f32 0.0, %v810
        %v812 = vpop.f32.mrb[0].mxu0
        %v813 = vadd.f32 0.0, %v812
        %814 = vmatprep.mubr.f32.mxu0 %v265
        %815 = vmatmul.mubr.f32.gmra.mrb[0].mxu0 %v264
        %v816 = vpop.f32.mrb[0].mxu0
        %v817 = vadd.f32 0.0, %v816
        %v818 = vpop.f32.mrb[0].mxu0
        %v819 = vadd.f32 0.0, %v818
        %820 = vmatprep.mubr.f32.mxu0 %v268
        %821 = vmatmul.mubr.f32.gmra.mrb[0].mxu0 %v267
        %v822 = vpop.f32.mrb[0].mxu0
        %v823 = vadd.f32 0.0, %v822
        %v824 = vpop.f32.mrb[0].mxu0
        %v825 = vadd.f32 0.0, %v824
        %826 = vmatprep.mubr.f32.mxu0 %v271
        %827 = vmatmul.mubr.f32.gmra.mrb[0].mxu0 %v270
        %v828 = vpop.f32.mrb[0].mxu0
        %v829 = vadd.f32 0.0, %v828
        %v830 = vpop.f32.mrb[0].mxu0
        %v831 = vadd.f32 0.0, %v830
        %832 = vmatprep.mubr.f32.mxu0 %v274
        %833 = vmatmul.mubr.f32.gmra.mrb[0].mxu0 %v273
        %v834 = vpop.f32.mrb[0].mxu0
        %v835 = vadd.f32 0.0, %v834
        %v836 = vpop.f32.mrb[0].mxu0
        %v837 = vadd.f32 0.0, %v836
        %838 = vmatprep.mubr.f32.mxu0 %v277
        %839 = vmatmul.mubr.f32.gmra.mrb[0].mxu0 %v276
        %v840 = vpop.f32.mrb[0].mxu0
        %v841 = vadd.f32 0.0, %v840
        %v842 = vpop.f32.mrb[0].mxu0
        %v843 = vadd.f32 0.0, %v842
        %844 = vmatprep.mubr.f32.mxu0 %v280
        %845 = vmatmul.mubr.f32.gmra.mrb[0].mxu0 %v279
        %v846 = vpop.f32.mrb[0].mxu0
        %v847 = vadd.f32 0.0, %v846
        %v848 = vpop.f32.mrb[0].mxu0
        %v849 = vadd.f32 0.0, %v848
        %850 = vmatprep.mubr.f32.mxu0 %v283
        %851 = vmatmul.mubr.f32.gmra.mrb[0].mxu0 %v282
        %v852 = vpop.f32.mrb[0].mxu0
        %v853 = vadd.f32 0.0, %v852
        %v854 = vpop.f32.mrb[0].mxu0
        %v855 = vadd.f32 0.0, %v854
        %856 = vmatprep.mubr.f32.mxu0 %v286
        %857 = vmatmul.mubr.f32.gmra.mrb[0].mxu0 %v285
        %v858 = vpop.f32.mrb[0].mxu0
        %v859 = vadd.f32 0.0, %v858
        %v860 = vpop.f32.mrb[0].mxu0
        %v861 = vadd.f32 0.0, %v860
        %862 = vmatprep.mubr.f32.mxu0 %v289
        %863 = vmatmul.mubr.f32.gmra.mrb[0].mxu0 %v288
        %v864 = vpop.f32.mrb[0].mxu0
        %v865 = vadd.f32 0.0, %v864
        %v866 = vpop.f32.mrb[0].mxu0
        %v867 = vadd.f32 0.0, %v866
        %868 = vmatprep.mubr.f32.mxu0 %v292
        %869 = vmatmul.mubr.f32.gmra.mrb[0].mxu0 %v291
        %v870 = vpop.f32.mrb[0].mxu0
        %v871 = vadd.f32 0.0, %v870
        %v872 = vpop.f32.mrb[0].mxu0
        %v873 = vadd.f32 0.0, %v872
        %874 = vmatprep.mubr.f32.mxu0 %v295
        %875 = vmatmul.mubr.f32.gmra.mrb[0].mxu0 %v294
        %v876 = vpop.f32.mrb[0].mxu0
        %v877 = vadd.f32 0.0, %v876
        %v878 = vpop.f32.mrb[0].mxu0
        %v879 = vadd.f32 0.0, %v878
        %880 = vmatprep.mubr.f32.mxu0 %v298
        %881 = vmatmul.mubr.f32.gmra.mrb[0].mxu0 %v297
        %v882 = vpop.f32.mrb[0].mxu0
        %v883 = vadd.f32 0.0, %v882
        %v884 = vpop.f32.mrb[0].mxu0
        %v885 = vadd.f32 0.0, %v884
        %886 = vmatprep.mubr.f32.mxu0 %v301
        %887 = vmatmul.mubr.f32.gmra.mrb[0].mxu0 %v300
        %v888 = vpop.f32.mrb[0].mxu0
        %v889 = vadd.f32 0.0, %v888
        %v890 = vpop.f32.mrb[0].mxu0
        %v891 = vadd.f32 0.0, %v890
        %892 = vmatprep.mubr.f32.mxu0 %v304
        %893 = vmatmul.mubr.f32.gmra.mrb[0].mxu0 %v303
        %v894 = vpop.f32.mrb[0].mxu0
        %v895 = vadd.f32 0.0, %v894
        %v896 = vpop.f32.mrb[0].mxu0
        %v897 = vadd.f32 0.0, %v896
        %898 = vdwg.mxu0
        %899 = vmatprep.subr.mxu0 %v595
        %900 = vmatpush1.msra.mxu0 %v594
        %901 = vmatprep.subr.mxu0 %v604
        %902 = vmatpush1.msra.mxu0 %v603
        %903 = vmatprep.subr.mxu0 %v613
        %904 = vmatpush1.msra.mxu0 %v612
        %905 = vmatprep.subr.mxu0 %v622
        %906 = vmatpush1.msra.mxu0 %v621
        %907 = vmatprep.subr.mxu0 %v631
        %908 = vmatpush1.msra.mxu0 %v630
        %909 = vmatprep.subr.mxu0 %v640
        %910 = vmatpush1.msra.mxu0 %v639
        %911 = vmatprep.subr.mxu0 %v649
        %912 = vmatpush1.msra.mxu0 %v648
        %913 = vmatprep.subr.mxu0 %v658
        %914 = vmatpush1.msra.mxu0 %v657
        %915 = vmatprep.subr.mxu0 %v667
        %916 = vmatpush1.msra.mxu0 %v666
        %917 = vmatprep.subr.mxu0 %v676
        %918 = vmatpush1.msra.mxu0 %v675
        %919 = vmatprep.subr.mxu0 %v685
        %920 = vmatpush1.msra.mxu0 %v684
        %921 = vmatprep.subr.mxu0 %v694
        %922 = vmatpush1.msra.mxu0 %v693
        %923 = vmatprep.subr.mxu0 %v703
        %924 = vmatpush1.msra.mxu0 %v702
        %925 = vmatprep.subr.mxu0 %v712
        %926 = vmatpush1.msra.mxu0 %v711
        %927 = vmatprep.subr.mxu0 %v721
        %928 = vmatpush1.msra.mxu0 %v720
        %929 = vmatprep.subr.mxu0 %v730
        %930 = vmatpush1.msra.mxu0 %v729
        %931 = vmatprep.subr.mxu0 0.0
        %932 = vmatpush1.msra.mxu0 0.0
        %933 = vmatprep.subr.mxu0 0.0
        %934 = vmatpush1.msra.mxu0 0.0
        %935 = vmatprep.subr.mxu0 0.0
        %936 = vmatpush1.msra.mxu0 0.0
        %937 = vmatprep.subr.mxu0 0.0
        %938 = vmatpush1.msra.mxu0 0.0
        %939 = vmatprep.subr.mxu0 0.0
        %940 = vmatpush1.msra.mxu0 0.0
        %941 = vmatprep.subr.mxu0 0.0
        %942 = vmatpush1.msra.mxu0 0.0
        %943 = vmatprep.subr.mxu0 0.0
        %944 = vmatpush1.msra.mxu0 0.0
        %945 = vmatprep.subr.mxu0 0.0
        %946 = vmatpush1.msra.mxu0 0.0
        %947 = vmatprep.subr.mxu0 0.0
        %948 = vmatpush1.msra.mxu0 0.0
        %949 = vmatprep.subr.mxu0 0.0
        %950 = vmatpush1.msra.mxu0 0.0
        %951 = vmatprep.subr.mxu0 0.0
        %952 = vmatpush1.msra.mxu0 0.0
        %953 = vmatprep.subr.mxu0 0.0
        %954 = vmatpush1.msra.mxu0 0.0
        %955 = vmatprep.subr.mxu0 0.0
        %956 = vmatpush1.msra.mxu0 0.0
        %957 = vmatprep.subr.mxu0 0.0
        %958 = vmatpush1.msra.mxu0 0.0
        %959 = vmatprep.subr.mxu0 0.0
        %960 = vmatpush1.msra.mxu0 0.0
        %961 = vmatprep.subr.mxu0 0.0
        %962 = vmatpush1.msra.mxu0 0.0
        %963 = vmatprep.mubr.f32.mxu0 0.0
        %964 = vmatmul.mubr.f32.gmra.mrb[0].mxu0 %v260
        %v965 = vpop.f32.mrb[0].mxu0
        %v966 = vadd.f32 %v805, %v965
        %v967 = vpop.f32.mrb[0].mxu0
        %v968 = vadd.f32 %v807, %v967
        %969 = vmatprep.mubr.f32.mxu0 0.0
        %970 = vmatmul.mubr.f32.gmra.mrb[0].mxu0 %v263
        %v971 = vpop.f32.mrb[0].mxu0
        %v972 = vadd.f32 %v811, %v971
        %v973 = vpop.f32.mrb[0].mxu0
        %v974 = vadd.f32 %v813, %v973
        %975 = vmatprep.mubr.f32.mxu0 0.0
        %976 = vmatmul.mubr.f32.gmra.mrb[0].mxu0 %v266
        %v977 = vpop.f32.mrb[0].mxu0
        %v978 = vadd.f32 %v817, %v977
        %v979 = vpop.f32.mrb[0].mxu0
        %v980 = vadd.f32 %v819, %v979
        %981 = vmatprep.mubr.f32.mxu0 0.0
        %982 = vmatmul.mubr.f32.gmra.mrb[0].mxu0 %v269
        %v983 = vpop.f32.mrb[0].mxu0
        %v984 = vadd.f32 %v823, %v983
        %v985 = vpop.f32.mrb[0].mxu0
        %v986 = vadd.f32 %v825, %v985
        %987 = vmatprep.mubr.f32.mxu0 0.0
        %988 = vmatmul.mubr.f32.gmra.mrb[0].mxu0 %v272
        %v989 = vpop.f32.mrb[0].mxu0
        %v990 = vadd.f32 %v829, %v989
        %v991 = vpop.f32.mrb[0].mxu0
        %v992 = vadd.f32 %v831, %v991
        %993 = vmatprep.mubr.f32.mxu0 0.0
        %994 = vmatmul.mubr.f32.gmra.mrb[0].mxu0 %v275
        %v995 = vpop.f32.mrb[0].mxu0
        %v996 = vadd.f32 %v835, %v995
        %v997 = vpop.f32.mrb[0].mxu0
        %v998 = vadd.f32 %v837, %v997
        %999 = vmatprep.mubr.f32.mxu0 0.0
        %1000 = vmatmul.mubr.f32.gmra.mrb[0].mxu0 %v278
        %v1001 = vpop.f32.mrb[0].mxu0
        %v1002 = vadd.f32 %v841, %v1001
        %v1003 = vpop.f32.mrb[0].mxu0
        %v1004 = vadd.f32 %v843, %v1003
        %1005 = vmatprep.mubr.f32.mxu0 0.0
        %1006 = vmatmul.mubr.f32.gmra.mrb[0].mxu0 %v281
        %v1007 = vpop.f32.mrb[0].mxu0
        %v1008 = vadd.f32 %v847, %v1007
        %v1009 = vpop.f32.mrb[0].mxu0
        %v1010 = vadd.f32 %v849, %v1009
        %1011 = vmatprep.mubr.f32.mxu0 0.0
        %1012 = vmatmul.mubr.f32.gmra.mrb[0].mxu0 %v284
        %v1013 = vpop.f32.mrb[0].mxu0
        %v1014 = vadd.f32 %v853, %v1013
        %v1015 = vpop.f32.mrb[0].mxu0
        %v1016 = vadd.f32 %v855, %v1015
        %1017 = vmatprep.mubr.f32.mxu0 0.0
        %1018 = vmatmul.mubr.f32.gmra.mrb[0].mxu0 %v287
        %v1019 = vpop.f32.mrb[0].mxu0
        %v1020 = vadd.f32 %v859, %v1019
        %v1021 = vpop.f32.mrb[0].mxu0
        %v1022 = vadd.f32 %v861, %v1021
        %1023 = vmatprep.mubr.f32.mxu0 0.0
        %1024 = vmatmul.mubr.f32.gmra.mrb[0].mxu0 %v290
        %v1025 = vpop.f32.mrb[0].mxu0
        %v1026 = vadd.f32 %v865, %v1025
        %v1027 = vpop.f32.mrb[0].mxu0
        %v1028 = vadd.f32 %v867, %v1027
        %1029 = vmatprep.mubr.f32.mxu0 0.0
        %1030 = vmatmul.mubr.f32.gmra.mrb[0].mxu0 %v293
        %v1031 = vpop.f32.mrb[0].mxu0
        %v1032 = vadd.f32 %v871, %v1031
        %v1033 = vpop.f32.mrb[0].mxu0
        %v1034 = vadd.f32 %v873, %v1033
        %1035 = vmatprep.mubr.f32.mxu0 0.0
        %1036 = vmatmul.mubr.f32.gmra.mrb[0].mxu0 %v296
        %v1037 = vpop.f32.mrb[0].mxu0
        %v1038 = vadd.f32 %v877, %v1037
        %v1039 = vpop.f32.mrb[0].mxu0
        %v1040 = vadd.f32 %v879, %v1039
        %1041 = vmatprep.mubr.f32.mxu0 0.0
        %1042 = vmatmul.mubr.f32.gmra.mrb[0].mxu0 %v299
        %v1043 = vpop.f32.mrb[0].mxu0
        %v1044 = vadd.f32 %v883, %v1043
        %v1045 = vpop.f32.mrb[0].mxu0
        %v1046 = vadd.f32 %v885, %v1045
        %1047 = vmatprep.mubr.f32.mxu0 0.0
        %1048 = vmatmul.mubr.f32.gmra.mrb[0].mxu0 %v302
        %v1049 = vpop.f32.mrb[0].mxu0
        %v1050 = vadd.f32 %v889, %v1049
        %v1051 = vpop.f32.mrb[0].mxu0
        %v1052 = vadd.f32 %v891, %v1051
        %1053 = vmatprep.mubr.f32.mxu0 0.0
        %1054 = vmatmul.mubr.f32.gmra.mrb[0].mxu0 %v305
        %v1055 = vpop.f32.mrb[0].mxu0
        %v1056 = vadd.f32 %v895, %v1055
        %v1057 = vpop.f32.mrb[0].mxu0
        %v1058 = vadd.f32 %v897, %v1057
        %1059 = vdwg.mxu0
        %1060 = vmatprep.subr.mxu0 %v309
        %1061 = vmatpush1.msra.mxu0 %v308
        %1062 = vmatprep.subr.mxu0 %v318
        %1063 = vmatpush1.msra.mxu0 %v317
        %1064 = vmatprep.subr.mxu0 %v327
        %1065 = vmatpush1.msra.mxu0 %v326
        %1066 = vmatprep.subr.mxu0 %v336
        %1067 = vmatpush1.msra.mxu0 %v335
        %1068 = vmatprep.subr.mxu0 %v345
        %1069 = vmatpush1.msra.mxu0 %v344
        %1070 = vmatprep.subr.mxu0 %v354
        %1071 = vmatpush1.msra.mxu0 %v353
        %1072 = vmatprep.subr.mxu0 %v363
        %1073 = vmatpush1.msra.mxu0 %v362
        %1074 = vmatprep.subr.mxu0 %v372
        %1075 = vmatpush1.msra.mxu0 %v371
        %1076 = vmatprep.subr.mxu0 %v381
        %1077 = vmatpush1.msra.mxu0 %v380
        %1078 = vmatprep.subr.mxu0 %v390
        %1079 = vmatpush1.msra.mxu0 %v389
        %1080 = vmatprep.subr.mxu0 %v399
        %1081 = vmatpush1.msra.mxu0 %v398
        %1082 = vmatprep.subr.mxu0 %v408
        %1083 = vmatpush1.msra.mxu0 %v407
        %1084 = vmatprep.subr.mxu0 %v417
        %1085 = vmatpush1.msra.mxu0 %v416
        %1086 = vmatprep.subr.mxu0 %v426
        %1087 = vmatpush1.msra.mxu0 %v425
        %1088 = vmatprep.subr.mxu0 %v435
        %1089 = vmatpush1.msra.mxu0 %v434
        %1090 = vmatprep.subr.mxu0 %v444
        %1091 = vmatpush1.msra.mxu0 %v443
        %1092 = vmatprep.subr.mxu0 %v453
        %1093 = vmatpush1.msra.mxu0 %v452
        %1094 = vmatprep.subr.mxu0 %v462
        %1095 = vmatpush1.msra.mxu0 %v461
        %1096 = vmatprep.subr.mxu0 %v471
        %1097 = vmatpush1.msra.mxu0 %v470
        %1098 = vmatprep.subr.mxu0 %v480
        %1099 = vmatpush1.msra.mxu0 %v479
        %1100 = vmatprep.subr.mxu0 %v489
        %1101 = vmatpush1.msra.mxu0 %v488
        %1102 = vmatprep.subr.mxu0 %v498
        %1103 = vmatpush1.msra.mxu0 %v497
        %1104 = vmatprep.subr.mxu0 %v507
        %1105 = vmatpush1.msra.mxu0 %v506
        %1106 = vmatprep.subr.mxu0 %v516
        %1107 = vmatpush1.msra.mxu0 %v515
        %1108 = vmatprep.subr.mxu0 %v525
        %1109 = vmatpush1.msra.mxu0 %v524
        %1110 = vmatprep.subr.mxu0 %v534
        %1111 = vmatpush1.msra.mxu0 %v533
        %1112 = vmatprep.subr.mxu0 %v543
        %1113 = vmatpush1.msra.mxu0 %v542
        %1114 = vmatprep.subr.mxu0 %v552
        %1115 = vmatpush1.msra.mxu0 %v551
        %1116 = vmatprep.subr.mxu0 %v561
        %1117 = vmatpush1.msra.mxu0 %v560
        %1118 = vmatprep.subr.mxu0 %v570
        %1119 = vmatpush1.msra.mxu0 %v569
        %1120 = vmatprep.subr.mxu0 %v579
        %1121 = vmatpush1.msra.mxu0 %v578
        %1122 = vmatprep.subr.mxu0 %v588
        %1123 = vmatpush1.msra.mxu0 %v587
        %1124 = vmatprep.mubr.f32.mxu0 %v259
        %1125 = vmatmul.mubr.f32.gmra.mrb[0].mxu0 %v258
        %v1126 = vpop.f32.mrb[0].mxu0
        %v1127 = vadd.f32 0.0, %v1126
        %v1128 = vpop.f32.mrb[0].mxu0
        %v1129 = vadd.f32 0.0, %v1128
        %1130 = vmatprep.mubr.f32.mxu0 %v262
        %1131 = vmatmul.mubr.f32.gmra.mrb[0].mxu0 %v261
        %v1132 = vpop.f32.mrb[0].mxu0
        %v1133 = vadd.f32 0.0, %v1132
        %v1134 = vpop.f32.mrb[0].mxu0
        %v1135 = vadd.f32 0.0, %v1134
        %1136 = vmatprep.mubr.f32.mxu0 %v265
        %1137 = vmatmul.mubr.f32.gmra.mrb[0].mxu0 %v264
        %v1138 = vpop.f32.mrb[0].mxu0
        %v1139 = vadd.f32 0.0, %v1138
        %v1140 = vpop.f32.mrb[0].mxu0
        %v1141 = vadd.f32 0.0, %v1140
        %1142 = vmatprep.mubr.f32.mxu0 %v268
        %1143 = vmatmul.mubr.f32.gmra.mrb[0].mxu0 %v267
        %v1144 = vpop.f32.mrb[0].mxu0
        %v1145 = vadd.f32 0.0, %v1144
        %v1146 = vpop.f32.mrb[0].mxu0
        %v1147 = vadd.f32 0.0, %v1146
        %1148 = vmatprep.mubr.f32.mxu0 %v271
        %1149 = vmatmul.mubr.f32.gmra.mrb[0].mxu0 %v270
        %v1150 = vpop.f32.mrb[0].mxu0
        %v1151 = vadd.f32 0.0, %v1150
        %v1152 = vpop.f32.mrb[0].mxu0
        %v1153 = vadd.f32 0.0, %v1152
        %1154 = vmatprep.mubr.f32.mxu0 %v274
        %1155 = vmatmul.mubr.f32.gmra.mrb[0].mxu0 %v273
        %v1156 = vpop.f32.mrb[0].mxu0
        %v1157 = vadd.f32 0.0, %v1156
        %v1158 = vpop.f32.mrb[0].mxu0
        %v1159 = vadd.f32 0.0, %v1158
        %1160 = vmatprep.mubr.f32.mxu0 %v277
        %1161 = vmatmul.mubr.f32.gmra.mrb[0].mxu0 %v276
        %v1162 = vpop.f32.mrb[0].mxu0
        %v1163 = vadd.f32 0.0, %v1162
        %v1164 = vpop.f32.mrb[0].mxu0
        %v1165 = vadd.f32 0.0, %v1164
        %1166 = vmatprep.mubr.f32.mxu0 %v280
        %1167 = vmatmul.mubr.f32.gmra.mrb[0].mxu0 %v279
        %v1168 = vpop.f32.mrb[0].mxu0
        %v1169 = vadd.f32 0.0, %v1168
        %v1170 = vpop.f32.mrb[0].mxu0
        %v1171 = vadd.f32 0.0, %v1170
        %1172 = vmatprep.mubr.f32.mxu0 %v283
        %1173 = vmatmul.mubr.f32.gmra.mrb[0].mxu0 %v282
        %v1174 = vpop.f32.mrb[0].mxu0
        %v1175 = vadd.f32 0.0, %v1174
        %v1176 = vpop.f32.mrb[0].mxu0
        %v1177 = vadd.f32 0.0, %v1176
        %1178 = vmatprep.mubr.f32.mxu0 %v286
        %1179 = vmatmul.mubr.f32.gmra.mrb[0].mxu0 %v285
        %v1180 = vpop.f32.mrb[0].mxu0
        %v1181 = vadd.f32 0.0, %v1180
        %v1182 = vpop.f32.mrb[0].mxu0
        %v1183 = vadd.f32 0.0, %v1182
        %1184 = vmatprep.mubr.f32.mxu0 %v289
        %1185 = vmatmul.mubr.f32.gmra.mrb[0].mxu0 %v288
        %v1186 = vpop.f32.mrb[0].mxu0
        %v1187 = vadd.f32 0.0, %v1186
        %v1188 = vpop.f32.mrb[0].mxu0
        %v1189 = vadd.f32 0.0, %v1188
        %1190 = vmatprep.mubr.f32.mxu0 %v292
        %1191 = vmatmul.mubr.f32.gmra.mrb[0].mxu0 %v291
        %v1192 = vpop.f32.mrb[0].mxu0
        %v1193 = vadd.f32 0.0, %v1192
        %v1194 = vpop.f32.mrb[0].mxu0
        %v1195 = vadd.f32 0.0, %v1194
        %1196 = vmatprep.mubr.f32.mxu0 %v295
        %1197 = vmatmul.mubr.f32.gmra.mrb[0].mxu0 %v294
        %v1198 = vpop.f32.mrb[0].mxu0
        %v1199 = vadd.f32 0.0, %v1198
        %v1200 = vpop.f32.mrb[0].mxu0
        %v1201 = vadd.f32 0.0, %v1200
        %1202 = vmatprep.mubr.f32.mxu0 %v298
        %1203 = vmatmul.mubr.f32.gmra.mrb[0].mxu0 %v297
        %v1204 = vpop.f32.mrb[0].mxu0
        %v1205 = vadd.f32 0.0, %v1204
        %v1206 = vpop.f32.mrb[0].mxu0
        %v1207 = vadd.f32 0.0, %v1206
        %1208 = vmatprep.mubr.f32.mxu0 %v301
        %1209 = vmatmul.mubr.f32.gmra.mrb[0].mxu0 %v300
        %v1210 = vpop.f32.mrb[0].mxu0
        %v1211 = vadd.f32 0.0, %v1210
        %v1212 = vpop.f32.mrb[0].mxu0
        %v1213 = vadd.f32 0.0, %v1212
        %1214 = vmatprep.mubr.f32.mxu0 %v304
        %1215 = vmatmul.mubr.f32.gmra.mrb[0].mxu0 %v303
        %v1216 = vpop.f32.mrb[0].mxu0
        %v1217 = vadd.f32 0.0, %v1216
        %v1218 = vpop.f32.mrb[0].mxu0
        %v1219 = vadd.f32 0.0, %v1218
        %1220 = vdwg.mxu0
        %1221 = vmatprep.subr.mxu0 %v597
        %1222 = vmatpush1.msra.mxu0 %v596
        %1223 = vmatprep.subr.mxu0 %v606
        %1224 = vmatpush1.msra.mxu0 %v605
        %1225 = vmatprep.subr.mxu0 %v615
        %1226 = vmatpush1.msra.mxu0 %v614
        %1227 = vmatprep.subr.mxu0 %v624
        %1228 = vmatpush1.msra.mxu0 %v623
        %1229 = vmatprep.subr.mxu0 %v633
        %1230 = vmatpush1.msra.mxu0 %v632
        %1231 = vmatprep.subr.mxu0 %v642
        %1232 = vmatpush1.msra.mxu0 %v641
        %1233 = vmatprep.subr.mxu0 %v651
        %1234 = vmatpush1.msra.mxu0 %v650
        %1235 = vmatprep.subr.mxu0 %v660
        %1236 = vmatpush1.msra.mxu0 %v659
        %1237 = vmatprep.subr.mxu0 %v669
        %1238 = vmatpush1.msra.mxu0 %v668
        %1239 = vmatprep.subr.mxu0 %v678
        %1240 = vmatpush1.msra.mxu0 %v677
        %1241 = vmatprep.subr.mxu0 %v687
        %1242 = vmatpush1.msra.mxu0 %v686
        %1243 = vmatprep.subr.mxu0 %v696
        %1244 = vmatpush1.msra.mxu0 %v695
        %1245 = vmatprep.subr.mxu0 %v705
        %1246 = vmatpush1.msra.mxu0 %v704
        %1247 = vmatprep.subr.mxu0 %v714
        %1248 = vmatpush1.msra.mxu0 %v713
        %1249 = vmatprep.subr.mxu0 %v723
        %1250 = vmatpush1.msra.mxu0 %v722
        %1251 = vmatprep.subr.mxu0 %v732
        %1252 = vmatpush1.msra.mxu0 %v731
        %1253 = vmatprep.subr.mxu0 0.0
        %1254 = vmatpush1.msra.mxu0 0.0
        %1255 = vmatprep.subr.mxu0 0.0
        %1256 = vmatpush1.msra.mxu0 0.0
        %1257 = vmatprep.subr.mxu0 0.0
        %1258 = vmatpush1.msra.mxu0 0.0
        %1259 = vmatprep.subr.mxu0 0.0
        %1260 = vmatpush1.msra.mxu0 0.0
        %1261 = vmatprep.subr.mxu0 0.0
        %1262 = vmatpush1.msra.mxu0 0.0
        %1263 = vmatprep.subr.mxu0 0.0
        %1264 = vmatpush1.msra.mxu0 0.0
        %1265 = vmatprep.subr.mxu0 0.0
        %1266 = vmatpush1.msra.mxu0 0.0
        %1267 = vmatprep.subr.mxu0 0.0
        %1268 = vmatpush1.msra.mxu0 0.0
        %1269 = vmatprep.subr.mxu0 0.0
        %1270 = vmatpush1.msra.mxu0 0.0
        %1271 = vmatprep.subr.mxu0 0.0
        %1272 = vmatpush1.msra.mxu0 0.0
        %1273 = vmatprep.subr.mxu0 0.0
        %1274 = vmatpush1.msra.mxu0 0.0
        %1275 = vmatprep.subr.mxu0 0.0
        %1276 = vmatpush1.msra.mxu0 0.0
        %1277 = vmatprep.subr.mxu0 0.0
        %1278 = vmatpush1.msra.mxu0 0.0
        %1279 = vmatprep.subr.mxu0 0.0
        %1280 = vmatpush1.msra.mxu0 0.0
        %1281 = vmatprep.subr.mxu0 0.0
        %1282 = vmatpush1.msra.mxu0 0.0
        %1283 = vmatprep.subr.mxu0 0.0
        %1284 = vmatpush1.msra.mxu0 0.0
        %1285 = vmatprep.mubr.f32.mxu0 0.0
        %1286 = vmatmul.mubr.f32.gmra.mrb[0].mxu0 %v260
        %v1287 = vpop.f32.mrb[0].mxu0
        %v1288 = vadd.f32 %v1127, %v1287
        %v1289 = vpop.f32.mrb[0].mxu0
        %v1290 = vadd.f32 %v1129, %v1289
        %1291 = vmatprep.mubr.f32.mxu0 0.0
        %1292 = vmatmul.mubr.f32.gmra.mrb[0].mxu0 %v263
        %v1293 = vpop.f32.mrb[0].mxu0
        %v1294 = vadd.f32 %v1133, %v1293
        %v1295 = vpop.f32.mrb[0].mxu0
        %v1296 = vadd.f32 %v1135, %v1295
        %1297 = vmatprep.mubr.f32.mxu0 0.0
        %1298 = vmatmul.mubr.f32.gmra.mrb[0].mxu0 %v266
        %v1299 = vpop.f32.mrb[0].mxu0
        %v1300 = vadd.f32 %v1139, %v1299
        %v1301 = vpop.f32.mrb[0].mxu0
        %v1302 = vadd.f32 %v1141, %v1301
        %1303 = vmatprep.mubr.f32.mxu0 0.0
        %1304 = vmatmul.mubr.f32.gmra.mrb[0].mxu0 %v269
        %v1305 = vpop.f32.mrb[0].mxu0
        %v1306 = vadd.f32 %v1145, %v1305
        %v1307 = vpop.f32.mrb[0].mxu0
        %v1308 = vadd.f32 %v1147, %v1307
        %1309 = vmatprep.mubr.f32.mxu0 0.0
        %1310 = vmatmul.mubr.f32.gmra.mrb[0].mxu0 %v272
        %v1311 = vpop.f32.mrb[0].mxu0
        %v1312 = vadd.f32 %v1151, %v1311
        %v1313 = vpop.f32.mrb[0].mxu0
        %v1314 = vadd.f32 %v1153, %v1313
        %1315 = vmatprep.mubr.f32.mxu0 0.0
        %1316 = vmatmul.mubr.f32.gmra.mrb[0].mxu0 %v275
        %v1317 = vpop.f32.mrb[0].mxu0
        %v1318 = vadd.f32 %v1157, %v1317
        %v1319 = vpop.f32.mrb[0].mxu0
        %v1320 = vadd.f32 %v1159, %v1319
        %1321 = vmatprep.mubr.f32.mxu0 0.0
        %1322 = vmatmul.mubr.f32.gmra.mrb[0].mxu0 %v278
        %v1323 = vpop.f32.mrb[0].mxu0
        %v1324 = vadd.f32 %v1163, %v1323
        %v1325 = vpop.f32.mrb[0].mxu0
        %v1326 = vadd.f32 %v1165, %v1325
        %1327 = vmatprep.mubr.f32.mxu0 0.0
        %1328 = vmatmul.mubr.f32.gmra.mrb[0].mxu0 %v281
        %v1329 = vpop.f32.mrb[0].mxu0
        %v1330 = vadd.f32 %v1169, %v1329
        %v1331 = vpop.f32.mrb[0].mxu0
        %v1332 = vadd.f32 %v1171, %v1331
        %1333 = vmatprep.mubr.f32.mxu0 0.0
        %1334 = vmatmul.mubr.f32.gmra.mrb[0].mxu0 %v284
        %v1335 = vpop.f32.mrb[0].mxu0
        %v1336 = vadd.f32 %v1175, %v1335
        %v1337 = vpop.f32.mrb[0].mxu0
        %v1338 = vadd.f32 %v1177, %v1337
        %1339 = vmatprep.mubr.f32.mxu0 0.0
        %1340 = vmatmul.mubr.f32.gmra.mrb[0].mxu0 %v287
        %v1341 = vpop.f32.mrb[0].mxu0
        %v1342 = vadd.f32 %v1181, %v1341
        %v1343 = vpop.f32.mrb[0].mxu0
        %v1344 = vadd.f32 %v1183, %v1343
        %1345 = vmatprep.mubr.f32.mxu0 0.0
        %1346 = vmatmul.mubr.f32.gmra.mrb[0].mxu0 %v290
        %v1347 = vpop.f32.mrb[0].mxu0
        %v1348 = vadd.f32 %v1187, %v1347
        %v1349 = vpop.f32.mrb[0].mxu0
        %v1350 = vadd.f32 %v1189, %v1349
        %1351 = vmatprep.mubr.f32.mxu0 0.0
        %1352 = vmatmul.mubr.f32.gmra.mrb[0].mxu0 %v293
        %v1353 = vpop.f32.mrb[0].mxu0
        %v1354 = vadd.f32 %v1193, %v1353
        %v1355 = vpop.f32.mrb[0].mxu0
        %v1356 = vadd.f32 %v1195, %v1355
        %1357 = vmatprep.mubr.f32.mxu0 0.0
        %1358 = vmatmul.mubr.f32.gmra.mrb[0].mxu0 %v296
        %v1359 = vpop.f32.mrb[0].mxu0
        %v1360 = vadd.f32 %v1199, %v1359
        %v1361 = vpop.f32.mrb[0].mxu0
        %v1362 = vadd.f32 %v1201, %v1361
        %1363 = vmatprep.mubr.f32.mxu0 0.0
        %1364 = vmatmul.mubr.f32.gmra.mrb[0].mxu0 %v299
        %v1365 = vpop.f32.mrb[0].mxu0
        %v1366 = vadd.f32 %v1205, %v1365
        %v1367 = vpop.f32.mrb[0].mxu0
        %v1368 = vadd.f32 %v1207, %v1367
        %1369 = vmatprep.mubr.f32.mxu0 0.0
        %1370 = vmatmul.mubr.f32.gmra.mrb[0].mxu0 %v302
        %v1371 = vpop.f32.mrb[0].mxu0
        %v1372 = vadd.f32 %v1211, %v1371
        %v1373 = vpop.f32.mrb[0].mxu0
        %v1374 = vadd.f32 %v1213, %v1373
        %1375 = vmatprep.mubr.f32.mxu0 0.0
        %1376 = vmatmul.mubr.f32.gmra.mrb[0].mxu0 %v305
        %v1377 = vpop.f32.mrb[0].mxu0
        %v1378 = vadd.f32 %v1217, %v1377
        %v1379 = vpop.f32.mrb[0].mxu0
        %v1380 = vadd.f32 %v1219, %v1379
        %1381 = vdwg.mxu0
        %1382 = vmatprep.subr.mxu0 %v311
        %1383 = vmatpush1.msra.mxu0 %v310
        %1384 = vmatprep.subr.mxu0 %v320
        %1385 = vmatpush1.msra.mxu0 %v319
        %1386 = vmatprep.subr.mxu0 %v329
        %1387 = vmatpush1.msra.mxu0 %v328
        %1388 = vmatprep.subr.mxu0 %v338
        %1389 = vmatpush1.msra.mxu0 %v337
        %1390 = vmatprep.subr.mxu0 %v347
        %1391 = vmatpush1.msra.mxu0 %v346
        %1392 = vmatprep.subr.mxu0 %v356
        %1393 = vmatpush1.msra.mxu0 %v355
        %1394 = vmatprep.subr.mxu0 %v365
        %1395 = vmatpush1.msra.mxu0 %v364
        %1396 = vmatprep.subr.mxu0 %v374
        %1397 = vmatpush1.msra.mxu0 %v373
        %1398 = vmatprep.subr.mxu0 %v383
        %1399 = vmatpush1.msra.mxu0 %v382
        %1400 = vmatprep.subr.mxu0 %v392
        %1401 = vmatpush1.msra.mxu0 %v391
        %1402 = vmatprep.subr.mxu0 %v401
        %1403 = vmatpush1.msra.mxu0 %v400
        %1404 = vmatprep.subr.mxu0 %v410
        %1405 = vmatpush1.msra.mxu0 %v409
        %1406 = vmatprep.subr.mxu0 %v419
        %1407 = vmatpush1.msra.mxu0 %v418
        %1408 = vmatprep.subr.mxu0 %v428
        %1409 = vmatpush1.msra.mxu0 %v427
        %1410 = vmatprep.subr.mxu0 %v437
        %1411 = vmatpush1.msra.mxu0 %v436
        %1412 = vmatprep.subr.mxu0 %v446
        %1413 = vmatpush1.msra.mxu0 %v445
        %1414 = vmatprep.subr.mxu0 %v455
        %1415 = vmatpush1.msra.mxu0 %v454
        %1416 = vmatprep.subr.mxu0 %v464
        %1417 = vmatpush1.msra.mxu0 %v463
        %1418 = vmatprep.subr.mxu0 %v473
        %1419 = vmatpush1.msra.mxu0 %v472
        %1420 = vmatprep.subr.mxu0 %v482
        %1421 = vmatpush1.msra.mxu0 %v481
        %1422 = vmatprep.subr.mxu0 %v491
        %1423 = vmatpush1.msra.mxu0 %v490
        %1424 = vmatprep.subr.mxu0 %v500
        %1425 = vmatpush1.msra.mxu0 %v499
        %1426 = vmatprep.subr.mxu0 %v509
        %1427 = vmatpush1.msra.mxu0 %v508
        %1428 = vmatprep.subr.mxu0 %v518
        %1429 = vmatpush1.msra.mxu0 %v517
        %1430 = vmatprep.subr.mxu0 %v527
        %1431 = vmatpush1.msra.mxu0 %v526
        %1432 = vmatprep.subr.mxu0 %v536
        %1433 = vmatpush1.msra.mxu0 %v535
        %1434 = vmatprep.subr.mxu0 %v545
        %1435 = vmatpush1.msra.mxu0 %v544
        %1436 = vmatprep.subr.mxu0 %v554
        %1437 = vmatpush1.msra.mxu0 %v553
        %1438 = vmatprep.subr.mxu0 %v563
        %1439 = vmatpush1.msra.mxu0 %v562
        %1440 = vmatprep.subr.mxu0 %v572
        %1441 = vmatpush1.msra.mxu0 %v571
        %1442 = vmatprep.subr.mxu0 %v581
        %1443 = vmatpush1.msra.mxu0 %v580
        %1444 = vmatprep.subr.mxu0 %v590
        %1445 = vmatpush1.msra.mxu0 %v589
        %1446 = vmatprep.mubr.f32.mxu0 %v259
        %1447 = vmatmul.mubr.f32.gmra.mrb[0].mxu0 %v258
        %v1448 = vpop.f32.mrb[0].mxu0
        %v1449 = vadd.f32 0.0, %v1448
        %v1450 = vpop.f32.mrb[0].mxu0
        %v1451 = vadd.f32 0.0, %v1450
        %1452 = vmatprep.mubr.f32.mxu0 %v262
        %1453 = vmatmul.mubr.f32.gmra.mrb[0].mxu0 %v261
        %v1454 = vpop.f32.mrb[0].mxu0
        %v1455 = vadd.f32 0.0, %v1454
        %v1456 = vpop.f32.mrb[0].mxu0
        %v1457 = vadd.f32 0.0, %v1456
        %1458 = vmatprep.mubr.f32.mxu0 %v265
        %1459 = vmatmul.mubr.f32.gmra.mrb[0].mxu0 %v264
        %v1460 = vpop.f32.mrb[0].mxu0
        %v1461 = vadd.f32 0.0, %v1460
        %v1462 = vpop.f32.mrb[0].mxu0
        %v1463 = vadd.f32 0.0, %v1462
        %1464 = vmatprep.mubr.f32.mxu0 %v268
        %1465 = vmatmul.mubr.f32.gmra.mrb[0].mxu0 %v267
        %v1466 = vpop.f32.mrb[0].mxu0
        %v1467 = vadd.f32 0.0, %v1466
        %v1468 = vpop.f32.mrb[0].mxu0
        %v1469 = vadd.f32 0.0, %v1468
        %1470 = vmatprep.mubr.f32.mxu0 %v271
        %1471 = vmatmul.mubr.f32.gmra.mrb[0].mxu0 %v270
        %v1472 = vpop.f32.mrb[0].mxu0
        %v1473 = vadd.f32 0.0, %v1472
        %v1474 = vpop.f32.mrb[0].mxu0
        %v1475 = vadd.f32 0.0, %v1474
        %1476 = vmatprep.mubr.f32.mxu0 %v274
        %1477 = vmatmul.mubr.f32.gmra.mrb[0].mxu0 %v273
        %v1478 = vpop.f32.mrb[0].mxu0
        %v1479 = vadd.f32 0.0, %v1478
        %v1480 = vpop.f32.mrb[0].mxu0
        %v1481 = vadd.f32 0.0, %v1480
        %1482 = vmatprep.mubr.f32.mxu0 %v277
        %1483 = vmatmul.mubr.f32.gmra.mrb[0].mxu0 %v276
        %v1484 = vpop.f32.mrb[0].mxu0
        %v1485 = vadd.f32 0.0, %v1484
        %v1486 = vpop.f32.mrb[0].mxu0
        %v1487 = vadd.f32 0.0, %v1486
        %1488 = vmatprep.mubr.f32.mxu0 %v280
        %1489 = vmatmul.mubr.f32.gmra.mrb[0].mxu0 %v279
        %v1490 = vpop.f32.mrb[0].mxu0
        %v1491 = vadd.f32 0.0, %v1490
        %v1492 = vpop.f32.mrb[0].mxu0
        %v1493 = vadd.f32 0.0, %v1492
        %1494 = vmatprep.mubr.f32.mxu0 %v283
        %1495 = vmatmul.mubr.f32.gmra.mrb[0].mxu0 %v282
        %v1496 = vpop.f32.mrb[0].mxu0
        %v1497 = vadd.f32 0.0, %v1496
        %v1498 = vpop.f32.mrb[0].mxu0
        %v1499 = vadd.f32 0.0, %v1498
        %1500 = vmatprep.mubr.f32.mxu0 %v286
        %1501 = vmatmul.mubr.f32.gmra.mrb[0].mxu0 %v285
        %v1502 = vpop.f32.mrb[0].mxu0
        %v1503 = vadd.f32 0.0, %v1502
        %v1504 = vpop.f32.mrb[0].mxu0
        %v1505 = vadd.f32 0.0, %v1504
        %1506 = vmatprep.mubr.f32.mxu0 %v289
        %1507 = vmatmul.mubr.f32.gmra.mrb[0].mxu0 %v288
        %v1508 = vpop.f32.mrb[0].mxu0
        %v1509 = vadd.f32 0.0, %v1508
        %v1510 = vpop.f32.mrb[0].mxu0
        %v1511 = vadd.f32 0.0, %v1510
        %1512 = vmatprep.mubr.f32.mxu0 %v292
        %1513 = vmatmul.mubr.f32.gmra.mrb[0].mxu0 %v291
        %v1514 = vpop.f32.mrb[0].mxu0
        %v1515 = vadd.f32 0.0, %v1514
        %v1516 = vpop.f32.mrb[0].mxu0
        %v1517 = vadd.f32 0.0, %v1516
        %1518 = vmatprep.mubr.f32.mxu0 %v295
        %1519 = vmatmul.mubr.f32.gmra.mrb[0].mxu0 %v294
        %v1520 = vpop.f32.mrb[0].mxu0
        %v1521 = vadd.f32 0.0, %v1520
        %v1522 = vpop.f32.mrb[0].mxu0
        %v1523 = vadd.f32 0.0, %v1522
        %1524 = vmatprep.mubr.f32.mxu0 %v298
        %1525 = vmatmul.mubr.f32.gmra.mrb[0].mxu0 %v297
        %v1526 = vpop.f32.mrb[0].mxu0
        %v1527 = vadd.f32 0.0, %v1526
        %v1528 = vpop.f32.mrb[0].mxu0
        %v1529 = vadd.f32 0.0, %v1528
        %1530 = vmatprep.mubr.f32.mxu0 %v301
        %1531 = vmatmul.mubr.f32.gmra.mrb[0].mxu0 %v300
        %v1532 = vpop.f32.mrb[0].mxu0
        %v1533 = vadd.f32 0.0, %v1532
        %v1534 = vpop.f32.mrb[0].mxu0
        %v1535 = vadd.f32 0.0, %v1534
        %1536 = vmatprep.mubr.f32.mxu0 %v304
        %1537 = vmatmul.mubr.f32.gmra.mrb[0].mxu0 %v303
        %v1538 = vpop.f32.mrb[0].mxu0
        %v1539 = vadd.f32 0.0, %v1538
        %v1540 = vpop.f32.mrb[0].mxu0
        %v1541 = vadd.f32 0.0, %v1540
        %1542 = vdwg.mxu0
        %1543 = vmatprep.subr.mxu0 %v599
        %1544 = vmatpush1.msra.mxu0 %v598
        %1545 = vmatprep.subr.mxu0 %v608
        %1546 = vmatpush1.msra.mxu0 %v607
        %1547 = vmatprep.subr.mxu0 %v617
        %1548 = vmatpush1.msra.mxu0 %v616
        %1549 = vmatprep.subr.mxu0 %v626
        %1550 = vmatpush1.msra.mxu0 %v625
        %1551 = vmatprep.subr.mxu0 %v635
        %1552 = vmatpush1.msra.mxu0 %v634
        %1553 = vmatprep.subr.mxu0 %v644
        %1554 = vmatpush1.msra.mxu0 %v643
        %1555 = vmatprep.subr.mxu0 %v653
        %1556 = vmatpush1.msra.mxu0 %v652
        %1557 = vmatprep.subr.mxu0 %v662
        %1558 = vmatpush1.msra.mxu0 %v661
        %1559 = vmatprep.subr.mxu0 %v671
        %1560 = vmatpush1.msra.mxu0 %v670
        %1561 = vmatprep.subr.mxu0 %v680
        %1562 = vmatpush1.msra.mxu0 %v679
        %1563 = vmatprep.subr.mxu0 %v689
        %1564 = vmatpush1.msra.mxu0 %v688
        %1565 = vmatprep.subr.mxu0 %v698
        %1566 = vmatpush1.msra.mxu0 %v697
        %1567 = vmatprep.subr.mxu0 %v707
        %1568 = vmatpush1.msra.mxu0 %v706
        %1569 = vmatprep.subr.mxu0 %v716
        %1570 = vmatpush1.msra.mxu0 %v715
        %1571 = vmatprep.subr.mxu0 %v725
        %1572 = vmatpush1.msra.mxu0 %v724
        %1573 = vmatprep.subr.mxu0 %v734
        %1574 = vmatpush1.msra.mxu0 %v733
        %1575 = vmatprep.subr.mxu0 0.0
        %1576 = vmatpush1.msra.mxu0 0.0
        %1577 = vmatprep.subr.mxu0 0.0
        %1578 = vmatpush1.msra.mxu0 0.0
        %1579 = vmatprep.subr.mxu0 0.0
        %1580 = vmatpush1.msra.mxu0 0.0
        %1581 = vmatprep.subr.mxu0 0.0
        %1582 = vmatpush1.msra.mxu0 0.0
        %1583 = vmatprep.subr.mxu0 0.0
        %1584 = vmatpush1.msra.mxu0 0.0
        %1585 = vmatprep.subr.mxu0 0.0
        %1586 = vmatpush1.msra.mxu0 0.0
        %1587 = vmatprep.subr.mxu0 0.0
        %1588 = vmatpush1.msra.mxu0 0.0
        %1589 = vmatprep.subr.mxu0 0.0
        %1590 = vmatpush1.msra.mxu0 0.0
        %1591 = vmatprep.subr.mxu0 0.0
        %1592 = vmatpush1.msra.mxu0 0.0
        %1593 = vmatprep.subr.mxu0 0.0
        %1594 = vmatpush1.msra.mxu0 0.0
        %1595 = vmatprep.subr.mxu0 0.0
        %1596 = vmatpush1.msra.mxu0 0.0
        %1597 = vmatprep.subr.mxu0 0.0
        %1598 = vmatpush1.msra.mxu0 0.0
        %1599 = vmatprep.subr.mxu0 0.0
        %1600 = vmatpush1.msra.mxu0 0.0
        %1601 = vmatprep.subr.mxu0 0.0
        %1602 = vmatpush1.msra.mxu0 0.0
        %1603 = vmatprep.subr.mxu0 0.0
        %1604 = vmatpush1.msra.mxu0 0.0
        %1605 = vmatprep.subr.mxu0 0.0
        %1606 = vmatpush1.msra.mxu0 0.0
        %1607 = vmatprep.mubr.f32.mxu0 0.0
        %1608 = vmatmul.mubr.f32.gmra.mrb[0].mxu0 %v260
        %v1609 = vpop.f32.mrb[0].mxu0
        %v1610 = vadd.f32 %v1449, %v1609
        %v1611 = vpop.f32.mrb[0].mxu0
        %v1612 = vadd.f32 %v1451, %v1611
        %1613 = vmatprep.mubr.f32.mxu0 0.0
        %1614 = vmatmul.mubr.f32.gmra.mrb[0].mxu0 %v263
        %v1615 = vpop.f32.mrb[0].mxu0
        %v1616 = vadd.f32 %v1455, %v1615
        %v1617 = vpop.f32.mrb[0].mxu0
        %v1618 = vadd.f32 %v1457, %v1617
        %1619 = vmatprep.mubr.f32.mxu0 0.0
        %1620 = vmatmul.mubr.f32.gmra.mrb[0].mxu0 %v266
        %v1621 = vpop.f32.mrb[0].mxu0
        %v1622 = vadd.f32 %v1461, %v1621
        %v1623 = vpop.f32.mrb[0].mxu0
        %v1624 = vadd.f32 %v1463, %v1623
        %1625 = vmatprep.mubr.f32.mxu0 0.0
        %1626 = vmatmul.mubr.f32.gmra.mrb[0].mxu0 %v269
        %v1627 = vpop.f32.mrb[0].mxu0
        %v1628 = vadd.f32 %v1467, %v1627
        %v1629 = vpop.f32.mrb[0].mxu0
        %v1630 = vadd.f32 %v1469, %v1629
        %1631 = vmatprep.mubr.f32.mxu0 0.0
        %1632 = vmatmul.mubr.f32.gmra.mrb[0].mxu0 %v272
        %v1633 = vpop.f32.mrb[0].mxu0
        %v1634 = vadd.f32 %v1473, %v1633
        %v1635 = vpop.f32.mrb[0].mxu0
        %v1636 = vadd.f32 %v1475, %v1635
        %1637 = vmatprep.mubr.f32.mxu0 0.0
        %1638 = vmatmul.mubr.f32.gmra.mrb[0].mxu0 %v275
        %v1639 = vpop.f32.mrb[0].mxu0
        %v1640 = vadd.f32 %v1479, %v1639
        %v1641 = vpop.f32.mrb[0].mxu0
        %v1642 = vadd.f32 %v1481, %v1641
        %1643 = vmatprep.mubr.f32.mxu0 0.0
        %1644 = vmatmul.mubr.f32.gmra.mrb[0].mxu0 %v278
        %v1645 = vpop.f32.mrb[0].mxu0
        %v1646 = vadd.f32 %v1485, %v1645
        %v1647 = vpop.f32.mrb[0].mxu0
        %v1648 = vadd.f32 %v1487, %v1647
        %1649 = vmatprep.mubr.f32.mxu0 0.0
        %1650 = vmatmul.mubr.f32.gmra.mrb[0].mxu0 %v281
        %v1651 = vpop.f32.mrb[0].mxu0
        %v1652 = vadd.f32 %v1491, %v1651
        %v1653 = vpop.f32.mrb[0].mxu0
        %v1654 = vadd.f32 %v1493, %v1653
        %1655 = vmatprep.mubr.f32.mxu0 0.0
        %1656 = vmatmul.mubr.f32.gmra.mrb[0].mxu0 %v284
        %v1657 = vpop.f32.mrb[0].mxu0
        %v1658 = vadd.f32 %v1497, %v1657
        %v1659 = vpop.f32.mrb[0].mxu0
        %v1660 = vadd.f32 %v1499, %v1659
        %1661 = vmatprep.mubr.f32.mxu0 0.0
        %1662 = vmatmul.mubr.f32.gmra.mrb[0].mxu0 %v287
        %v1663 = vpop.f32.mrb[0].mxu0
        %v1664 = vadd.f32 %v1503, %v1663
        %v1665 = vpop.f32.mrb[0].mxu0
        %v1666 = vadd.f32 %v1505, %v1665
        %1667 = vmatprep.mubr.f32.mxu0 0.0
        %1668 = vmatmul.mubr.f32.gmra.mrb[0].mxu0 %v290
        %v1669 = vpop.f32.mrb[0].mxu0
        %v1670 = vadd.f32 %v1509, %v1669
        %v1671 = vpop.f32.mrb[0].mxu0
        %v1672 = vadd.f32 %v1511, %v1671
        %1673 = vmatprep.mubr.f32.mxu0 0.0
        %1674 = vmatmul.mubr.f32.gmra.mrb[0].mxu0 %v293
        %v1675 = vpop.f32.mrb[0].mxu0
        %v1676 = vadd.f32 %v1515, %v1675
        %v1677 = vpop.f32.mrb[0].mxu0
        %v1678 = vadd.f32 %v1517, %v1677
        %1679 = vmatprep.mubr.f32.mxu0 0.0
        %1680 = vmatmul.mubr.f32.gmra.mrb[0].mxu0 %v296
        %v1681 = vpop.f32.mrb[0].mxu0
        %v1682 = vadd.f32 %v1521, %v1681
        %v1683 = vpop.f32.mrb[0].mxu0
        %v1684 = vadd.f32 %v1523, %v1683
        %1685 = vmatprep.mubr.f32.mxu0 0.0
        %1686 = vmatmul.mubr.f32.gmra.mrb[0].mxu0 %v299
        %v1687 = vpop.f32.mrb[0].mxu0
        %v1688 = vadd.f32 %v1527, %v1687
        %v1689 = vpop.f32.mrb[0].mxu0
        %v1690 = vadd.f32 %v1529, %v1689
        %1691 = vmatprep.mubr.f32.mxu0 0.0
        %1692 = vmatmul.mubr.f32.gmra.mrb[0].mxu0 %v302
        %v1693 = vpop.f32.mrb[0].mxu0
        %v1694 = vadd.f32 %v1533, %v1693
        %v1695 = vpop.f32.mrb[0].mxu0
        %v1696 = vadd.f32 %v1535, %v1695
        %1697 = vmatprep.mubr.f32.mxu0 0.0
        %1698 = vmatmul.mubr.f32.gmra.mrb[0].mxu0 %v305
        %v1699 = vpop.f32.mrb[0].mxu0
        %v1700 = vadd.f32 %v1539, %v1699
        %v1701 = vpop.f32.mrb[0].mxu0
        %v1702 = vadd.f32 %v1541, %v1701
        %1703 = vdwg.mxu0
        %1704 = vmatprep.subr.mxu0 %v313
        %1705 = vmatpush1.msra.mxu0 %v312
        %1706 = vmatprep.subr.mxu0 %v322
        %1707 = vmatpush1.msra.mxu0 %v321
        %1708 = vmatprep.subr.mxu0 %v331
        %1709 = vmatpush1.msra.mxu0 %v330
        %1710 = vmatprep.subr.mxu0 %v340
        %1711 = vmatpush1.msra.mxu0 %v339
        %1712 = vmatprep.subr.mxu0 %v349
        %1713 = vmatpush1.msra.mxu0 %v348
        %1714 = vmatprep.subr.mxu0 %v358
        %1715 = vmatpush1.msra.mxu0 %v357
        %1716 = vmatprep.subr.mxu0 %v367
        %1717 = vmatpush1.msra.mxu0 %v366
        %1718 = vmatprep.subr.mxu0 %v376
        %1719 = vmatpush1.msra.mxu0 %v375
        %1720 = vmatprep.subr.mxu0 %v385
        %1721 = vmatpush1.msra.mxu0 %v384
        %1722 = vmatprep.subr.mxu0 %v394
        %1723 = vmatpush1.msra.mxu0 %v393
        %1724 = vmatprep.subr.mxu0 %v403
        %1725 = vmatpush1.msra.mxu0 %v402
        %1726 = vmatprep.subr.mxu0 %v412
        %1727 = vmatpush1.msra.mxu0 %v411
        %1728 = vmatprep.subr.mxu0 %v421
        %1729 = vmatpush1.msra.mxu0 %v420
        %1730 = vmatprep.subr.mxu0 %v430
        %1731 = vmatpush1.msra.mxu0 %v429
        %1732 = vmatprep.subr.mxu0 %v439
        %1733 = vmatpush1.msra.mxu0 %v438
        %1734 = vmatprep.subr.mxu0 %v448
        %1735 = vmatpush1.msra.mxu0 %v447
        %1736 = vmatprep.subr.mxu0 %v457
        %1737 = vmatpush1.msra.mxu0 %v456
        %1738 = vmatprep.subr.mxu0 %v466
        %1739 = vmatpush1.msra.mxu0 %v465
        %1740 = vmatprep.subr.mxu0 %v475
        %1741 = vmatpush1.msra.mxu0 %v474
        %1742 = vmatprep.subr.mxu0 %v484
        %1743 = vmatpush1.msra.mxu0 %v483
        %1744 = vmatprep.subr.mxu0 %v493
        %1745 = vmatpush1.msra.mxu0 %v492
        %1746 = vmatprep.subr.mxu0 %v502
        %1747 = vmatpush1.msra.mxu0 %v501
        %1748 = vmatprep.subr.mxu0 %v511
        %1749 = vmatpush1.msra.mxu0 %v510
        %1750 = vmatprep.subr.mxu0 %v520
        %1751 = vmatpush1.msra.mxu0 %v519
        %1752 = vmatprep.subr.mxu0 %v529
        %1753 = vmatpush1.msra.mxu0 %v528
        %1754 = vmatprep.subr.mxu0 %v538
        %1755 = vmatpush1.msra.mxu0 %v537
        %1756 = vmatprep.subr.mxu0 %v547
        %1757 = vmatpush1.msra.mxu0 %v546
        %1758 = vmatprep.subr.mxu0 %v556
        %1759 = vmatpush1.msra.mxu0 %v555
        %1760 = vmatprep.subr.mxu0 %v565
        %1761 = vmatpush1.msra.mxu0 %v564
        %1762 = vmatprep.subr.mxu0 %v574
        %1763 = vmatpush1.msra.mxu0 %v573
        %1764 = vmatprep.subr.mxu0 %v583
        %1765 = vmatpush1.msra.mxu0 %v582
        %1766 = vmatprep.subr.mxu0 %v592
        %1767 = vmatpush1.msra.mxu0 %v591
        %1768 = vmatprep.mubr.f32.mxu0 %v259
        %1769 = vmatmul.mubr.f32.gmra.mrb[0].mxu0 %v258
        %v1770 = vpop.f32.mrb[0].mxu0
        %v1771 = vadd.f32 0.0, %v1770
        %v1772 = vpop.f32.mrb[0].mxu0
        %v1773 = vadd.f32 0.0, %v1772
        %1774 = vmatprep.mubr.f32.mxu0 %v262
        %1775 = vmatmul.mubr.f32.gmra.mrb[0].mxu0 %v261
        %v1776 = vpop.f32.mrb[0].mxu0
        %v1777 = vadd.f32 0.0, %v1776
        %v1778 = vpop.f32.mrb[0].mxu0
        %v1779 = vadd.f32 0.0, %v1778
        %1780 = vmatprep.mubr.f32.mxu0 %v265
        %1781 = vmatmul.mubr.f32.gmra.mrb[0].mxu0 %v264
        %v1782 = vpop.f32.mrb[0].mxu0
        %v1783 = vadd.f32 0.0, %v1782
        %v1784 = vpop.f32.mrb[0].mxu0
        %v1785 = vadd.f32 0.0, %v1784
        %1786 = vmatprep.mubr.f32.mxu0 %v268
        %1787 = vmatmul.mubr.f32.gmra.mrb[0].mxu0 %v267
        %v1788 = vpop.f32.mrb[0].mxu0
        %v1789 = vadd.f32 0.0, %v1788
        %v1790 = vpop.f32.mrb[0].mxu0
        %v1791 = vadd.f32 0.0, %v1790
        %1792 = vmatprep.mubr.f32.mxu0 %v271
        %1793 = vmatmul.mubr.f32.gmra.mrb[0].mxu0 %v270
        %v1794 = vpop.f32.mrb[0].mxu0
        %v1795 = vadd.f32 0.0, %v1794
        %v1796 = vpop.f32.mrb[0].mxu0
        %v1797 = vadd.f32 0.0, %v1796
        %1798 = vmatprep.mubr.f32.mxu0 %v274
        %1799 = vmatmul.mubr.f32.gmra.mrb[0].mxu0 %v273
        %v1800 = vpop.f32.mrb[0].mxu0
        %v1801 = vadd.f32 0.0, %v1800
        %v1802 = vpop.f32.mrb[0].mxu0
        %v1803 = vadd.f32 0.0, %v1802
        %1804 = vmatprep.mubr.f32.mxu0 %v277
        %1805 = vmatmul.mubr.f32.gmra.mrb[0].mxu0 %v276
        %v1806 = vpop.f32.mrb[0].mxu0
        %v1807 = vadd.f32 0.0, %v1806
        %v1808 = vpop.f32.mrb[0].mxu0
        %v1809 = vadd.f32 0.0, %v1808
        %1810 = vmatprep.mubr.f32.mxu0 %v280
        %1811 = vmatmul.mubr.f32.gmra.mrb[0].mxu0 %v279
        %v1812 = vpop.f32.mrb[0].mxu0
        %v1813 = vadd.f32 0.0, %v1812
        %v1814 = vpop.f32.mrb[0].mxu0
        %v1815 = vadd.f32 0.0, %v1814
        %1816 = vmatprep.mubr.f32.mxu0 %v283
        %1817 = vmatmul.mubr.f32.gmra.mrb[0].mxu0 %v282
        %v1818 = vpop.f32.mrb[0].mxu0
        %v1819 = vadd.f32 0.0, %v1818
        %v1820 = vpop.f32.mrb[0].mxu0
        %v1821 = vadd.f32 0.0, %v1820
        %1822 = vmatprep.mubr.f32.mxu0 %v286
        %1823 = vmatmul.mubr.f32.gmra.mrb[0].mxu0 %v285
        %v1824 = vpop.f32.mrb[0].mxu0
        %v1825 = vadd.f32 0.0, %v1824
        %v1826 = vpop.f32.mrb[0].mxu0
        %v1827 = vadd.f32 0.0, %v1826
        %1828 = vmatprep.mubr.f32.mxu0 %v289
        %1829 = vmatmul.mubr.f32.gmra.mrb[0].mxu0 %v288
        %v1830 = vpop.f32.mrb[0].mxu0
        %v1831 = vadd.f32 0.0, %v1830
        %v1832 = vpop.f32.mrb[0].mxu0
        %v1833 = vadd.f32 0.0, %v1832
        %1834 = vmatprep.mubr.f32.mxu0 %v292
        %1835 = vmatmul.mubr.f32.gmra.mrb[0].mxu0 %v291
        %v1836 = vpop.f32.mrb[0].mxu0
        %v1837 = vadd.f32 0.0, %v1836
        %v1838 = vpop.f32.mrb[0].mxu0
        %v1839 = vadd.f32 0.0, %v1838
        %1840 = vmatprep.mubr.f32.mxu0 %v295
        %1841 = vmatmul.mubr.f32.gmra.mrb[0].mxu0 %v294
        %v1842 = vpop.f32.mrb[0].mxu0
        %v1843 = vadd.f32 0.0, %v1842
        %v1844 = vpop.f32.mrb[0].mxu0
        %v1845 = vadd.f32 0.0, %v1844
        %1846 = vmatprep.mubr.f32.mxu0 %v298
        %1847 = vmatmul.mubr.f32.gmra.mrb[0].mxu0 %v297
        %v1848 = vpop.f32.mrb[0].mxu0
        %v1849 = vadd.f32 0.0, %v1848
        %v1850 = vpop.f32.mrb[0].mxu0
        %v1851 = vadd.f32 0.0, %v1850
        %1852 = vmatprep.mubr.f32.mxu0 %v301
        %1853 = vmatmul.mubr.f32.gmra.mrb[0].mxu0 %v300
        %v1854 = vpop.f32.mrb[0].mxu0
        %v1855 = vadd.f32 0.0, %v1854
        %v1856 = vpop.f32.mrb[0].mxu0
        %v1857 = vadd.f32 0.0, %v1856
        %1858 = vmatprep.mubr.f32.mxu0 %v304
        %1859 = vmatmul.mubr.f32.gmra.mrb[0].mxu0 %v303
        %v1860 = vpop.f32.mrb[0].mxu0
        %v1861 = vadd.f32 0.0, %v1860
        %v1862 = vpop.f32.mrb[0].mxu0
        %v1863 = vadd.f32 0.0, %v1862
        %1864 = vdwg.mxu0
        %1865 = vmatprep.subr.mxu0 %v601
        %1866 = vmatpush1.msra.mxu0 %v600
        %1867 = vmatprep.subr.mxu0 %v610
        %1868 = vmatpush1.msra.mxu0 %v609
        %1869 = vmatprep.subr.mxu0 %v619
        %1870 = vmatpush1.msra.mxu0 %v618
        %1871 = vmatprep.subr.mxu0 %v628
        %1872 = vmatpush1.msra.mxu0 %v627
        %1873 = vmatprep.subr.mxu0 %v637
        %1874 = vmatpush1.msra.mxu0 %v636
        %1875 = vmatprep.subr.mxu0 %v646
        %1876 = vmatpush1.msra.mxu0 %v645
        %1877 = vmatprep.subr.mxu0 %v655
        %1878 = vmatpush1.msra.mxu0 %v654
        %1879 = vmatprep.subr.mxu0 %v664
        %1880 = vmatpush1.msra.mxu0 %v663
        %1881 = vmatprep.subr.mxu0 %v673
        %1882 = vmatpush1.msra.mxu0 %v672
        %1883 = vmatprep.subr.mxu0 %v682
        %1884 = vmatpush1.msra.mxu0 %v681
        %1885 = vmatprep.subr.mxu0 %v691
        %1886 = vmatpush1.msra.mxu0 %v690
        %1887 = vmatprep.subr.mxu0 %v700
        %1888 = vmatpush1.msra.mxu0 %v699
        %1889 = vmatprep.subr.mxu0 %v709
        %1890 = vmatpush1.msra.mxu0 %v708
        %1891 = vmatprep.subr.mxu0 %v718
        %1892 = vmatpush1.msra.mxu0 %v717
        %1893 = vmatprep.subr.mxu0 %v727
        %1894 = vmatpush1.msra.mxu0 %v726
        %1895 = vmatprep.subr.mxu0 %v736
        %1896 = vmatpush1.msra.mxu0 %v735
        %1897 = vmatprep.subr.mxu0 0.0
        %1898 = vmatpush1.msra.mxu0 0.0
        %1899 = vmatprep.subr.mxu0 0.0
        %1900 = vmatpush1.msra.mxu0 0.0
        %1901 = vmatprep.subr.mxu0 0.0
        %1902 = vmatpush1.msra.mxu0 0.0
        %1903 = vmatprep.subr.mxu0 0.0
        %1904 = vmatpush1.msra.mxu0 0.0
        %1905 = vmatprep.subr.mxu0 0.0
        %1906 = vmatpush1.msra.mxu0 0.0
        %1907 = vmatprep.subr.mxu0 0.0
        %1908 = vmatpush1.msra.mxu0 0.0
        %1909 = vmatprep.subr.mxu0 0.0
        %1910 = vmatpush1.msra.mxu0 0.0
        %1911 = vmatprep.subr.mxu0 0.0
        %1912 = vmatpush1.msra.mxu0 0.0
        %1913 = vmatprep.subr.mxu0 0.0
        %1914 = vmatpush1.msra.mxu0 0.0
        %1915 = vmatprep.subr.mxu0 0.0
        %1916 = vmatpush1.msra.mxu0 0.0
        %1917 = vmatprep.subr.mxu0 0.0
        %1918 = vmatpush1.msra.mxu0 0.0
        %1919 = vmatprep.subr.mxu0 0.0
        %1920 = vmatpush1.msra.mxu0 0.0
        %1921 = vmatprep.subr.mxu0 0.0
        %1922 = vmatpush1.msra.mxu0 0.0
        %1923 = vmatprep.subr.mxu0 0.0
        %1924 = vmatpush1.msra.mxu0 0.0
        %1925 = vmatprep.subr.mxu0 0.0
        %1926 = vmatpush1.msra.mxu0 0.0
        %1927 = vmatprep.subr.mxu0 0.0
        %1928 = vmatpush1.msra.mxu0 0.0
        %1929 = vmatprep.mubr.f32.mxu0 0.0
        %1930 = vmatmul.mubr.f32.gmra.mrb[0].mxu0 %v260
        %v1931 = vpop.f32.mrb[0].mxu0
        %v1932 = vadd.f32 %v1771, %v1931
        %v1933 = vpop.f32.mrb[0].mxu0
        %v1934 = vadd.f32 %v1773, %v1933
        %1935 = vmatprep.mubr.f32.mxu0 0.0
        %1936 = vmatmul.mubr.f32.gmra.mrb[0].mxu0 %v263
        %v1937 = vpop.f32.mrb[0].mxu0
        %v1938 = vadd.f32 %v1777, %v1937
        %v1939 = vpop.f32.mrb[0].mxu0
        %v1940 = vadd.f32 %v1779, %v1939
        %1941 = vmatprep.mubr.f32.mxu0 0.0
        %1942 = vmatmul.mubr.f32.gmra.mrb[0].mxu0 %v266
        %v1943 = vpop.f32.mrb[0].mxu0
        %v1944 = vadd.f32 %v1783, %v1943
        %v1945 = vpop.f32.mrb[0].mxu0
        %v1946 = vadd.f32 %v1785, %v1945
        %1947 = vmatprep.mubr.f32.mxu0 0.0
        %1948 = vmatmul.mubr.f32.gmra.mrb[0].mxu0 %v269
        %v1949 = vpop.f32.mrb[0].mxu0
        %v1950 = vadd.f32 %v1789, %v1949
        %v1951 = vpop.f32.mrb[0].mxu0
        %v1952 = vadd.f32 %v1791, %v1951
        %1953 = vmatprep.mubr.f32.mxu0 0.0
        %1954 = vmatmul.mubr.f32.gmra.mrb[0].mxu0 %v272
        %v1955 = vpop.f32.mrb[0].mxu0
        %v1956 = vadd.f32 %v1795, %v1955
        %v1957 = vpop.f32.mrb[0].mxu0
        %v1958 = vadd.f32 %v1797, %v1957
        %1959 = vmatprep.mubr.f32.mxu0 0.0
        %1960 = vmatmul.mubr.f32.gmra.mrb[0].mxu0 %v275
        %v1961 = vpop.f32.mrb[0].mxu0
        %v1962 = vadd.f32 %v1801, %v1961
        %v1963 = vpop.f32.mrb[0].mxu0
        %v1964 = vadd.f32 %v1803, %v1963
        %1965 = vmatprep.mubr.f32.mxu0 0.0
        %1966 = vmatmul.mubr.f32.gmra.mrb[0].mxu0 %v278
        %v1967 = vpop.f32.mrb[0].mxu0
        %v1968 = vadd.f32 %v1807, %v1967
        %v1969 = vpop.f32.mrb[0].mxu0
        %v1970 = vadd.f32 %v1809, %v1969
        %1971 = vmatprep.mubr.f32.mxu0 0.0
        %1972 = vmatmul.mubr.f32.gmra.mrb[0].mxu0 %v281
        %v1973 = vpop.f32.mrb[0].mxu0
        %v1974 = vadd.f32 %v1813, %v1973
        %v1975 = vpop.f32.mrb[0].mxu0
        %v1976 = vadd.f32 %v1815, %v1975
        %1977 = vmatprep.mubr.f32.mxu0 0.0
        %1978 = vmatmul.mubr.f32.gmra.mrb[0].mxu0 %v284
        %v1979 = vpop.f32.mrb[0].mxu0
        %v1980 = vadd.f32 %v1819, %v1979
        %v1981 = vpop.f32.mrb[0].mxu0
        %v1982 = vadd.f32 %v1821, %v1981
        %1983 = vmatprep.mubr.f32.mxu0 0.0
        %1984 = vmatmul.mubr.f32.gmra.mrb[0].mxu0 %v287
        %v1985 = vpop.f32.mrb[0].mxu0
        %v1986 = vadd.f32 %v1825, %v1985
        %v1987 = vpop.f32.mrb[0].mxu0
        %v1988 = vadd.f32 %v1827, %v1987
        %1989 = vmatprep.mubr.f32.mxu0 0.0
        %1990 = vmatmul.mubr.f32.gmra.mrb[0].mxu0 %v290
        %v1991 = vpop.f32.mrb[0].mxu0
        %v1992 = vadd.f32 %v1831, %v1991
        %v1993 = vpop.f32.mrb[0].mxu0
        %v1994 = vadd.f32 %v1833, %v1993
        %1995 = vmatprep.mubr.f32.mxu0 0.0
        %1996 = vmatmul.mubr.f32.gmra.mrb[0].mxu0 %v293
        %v1997 = vpop.f32.mrb[0].mxu0
        %v1998 = vadd.f32 %v1837, %v1997
        %v1999 = vpop.f32.mrb[0].mxu0
        %v2000 = vadd.f32 %v1839, %v1999
        %2001 = vmatprep.mubr.f32.mxu0 0.0
        %2002 = vmatmul.mubr.f32.gmra.mrb[0].mxu0 %v296
        %v2003 = vpop.f32.mrb[0].mxu0
        %v2004 = vadd.f32 %v1843, %v2003
        %v2005 = vpop.f32.mrb[0].mxu0
        %v2006 = vadd.f32 %v1845, %v2005
        %2007 = vmatprep.mubr.f32.mxu0 0.0
        %2008 = vmatmul.mubr.f32.gmra.mrb[0].mxu0 %v299
        %v2009 = vpop.f32.mrb[0].mxu0
        %v2010 = vadd.f32 %v1849, %v2009
        %v2011 = vpop.f32.mrb[0].mxu0
        %v2012 = vadd.f32 %v1851, %v2011
        %2013 = vmatprep.mubr.f32.mxu0 0.0
        %2014 = vmatmul.mubr.f32.gmra.mrb[0].mxu0 %v302
        %v2015 = vpop.f32.mrb[0].mxu0
        %v2016 = vadd.f32 %v1855, %v2015
        %v2017 = vpop.f32.mrb[0].mxu0
        %v2018 = vadd.f32 %v1857, %v2017
        %2019 = vmatprep.mubr.f32.mxu0 0.0
        %2020 = vmatmul.mubr.f32.gmra.mrb[0].mxu0 %v305
        %v2021 = vpop.f32.mrb[0].mxu0
        %v2022 = vadd.f32 %v1861, %v2021
        %v2023 = vpop.f32.mrb[0].mxu0
        %v2024 = vadd.f32 %v1863, %v2023
        %2025 = vdwg.mxu0
        %2026 = vmatprep.subr.mxu0 0.0
        %2027 = vmatpush1.msra.mxu0 %v314
        %2028 = vmatprep.subr.mxu0 0.0
        %2029 = vmatpush1.msra.mxu0 %v323
        %2030 = vmatprep.subr.mxu0 0.0
        %2031 = vmatpush1.msra.mxu0 %v332
        %2032 = vmatprep.subr.mxu0 0.0
        %2033 = vmatpush1.msra.mxu0 %v341
        %2034 = vmatprep.subr.mxu0 0.0
        %2035 = vmatpush1.msra.mxu0 %v350
        %2036 = vmatprep.subr.mxu0 0.0
        %2037 = vmatpush1.msra.mxu0 %v359
        %2038 = vmatprep.subr.mxu0 0.0
        %2039 = vmatpush1.msra.mxu0 %v368
        %2040 = vmatprep.subr.mxu0 0.0
        %2041 = vmatpush1.msra.mxu0 %v377
        %2042 = vmatprep.subr.mxu0 0.0
        %2043 = vmatpush1.msra.mxu0 %v386
        %2044 = vmatprep.subr.mxu0 0.0
        %2045 = vmatpush1.msra.mxu0 %v395
        %2046 = vmatprep.subr.mxu0 0.0
        %2047 = vmatpush1.msra.mxu0 %v404
        %2048 = vmatprep.subr.mxu0 0.0
        %2049 = vmatpush1.msra.mxu0 %v413
        %2050 = vmatprep.subr.mxu0 0.0
        %2051 = vmatpush1.msra.mxu0 %v422
        %2052 = vmatprep.subr.mxu0 0.0
        %2053 = vmatpush1.msra.mxu0 %v431
        %2054 = vmatprep.subr.mxu0 0.0
        %2055 = vmatpush1.msra.mxu0 %v440
        %2056 = vmatprep.subr.mxu0 0.0
        %2057 = vmatpush1.msra.mxu0 %v449
        %2058 = vmatprep.subr.mxu0 0.0
        %2059 = vmatpush1.msra.mxu0 %v458
        %2060 = vmatprep.subr.mxu0 0.0
        %2061 = vmatpush1.msra.mxu0 %v467
        %2062 = vmatprep.subr.mxu0 0.0
        %2063 = vmatpush1.msra.mxu0 %v476
        %2064 = vmatprep.subr.mxu0 0.0
        %2065 = vmatpush1.msra.mxu0 %v485
        %2066 = vmatprep.subr.mxu0 0.0
        %2067 = vmatpush1.msra.mxu0 %v494
        %2068 = vmatprep.subr.mxu0 0.0
        %2069 = vmatpush1.msra.mxu0 %v503
        %2070 = vmatprep.subr.mxu0 0.0
        %2071 = vmatpush1.msra.mxu0 %v512
        %2072 = vmatprep.subr.mxu0 0.0
        %2073 = vmatpush1.msra.mxu0 %v521
        %2074 = vmatprep.subr.mxu0 0.0
        %2075 = vmatpush1.msra.mxu0 %v530
        %2076 = vmatprep.subr.mxu0 0.0
        %2077 = vmatpush1.msra.mxu0 %v539
        %2078 = vmatprep.subr.mxu0 0.0
        %2079 = vmatpush1.msra.mxu0 %v548
        %2080 = vmatprep.subr.mxu0 0.0
        %2081 = vmatpush1.msra.mxu0 %v557
        %2082 = vmatprep.subr.mxu0 0.0
        %2083 = vmatpush1.msra.mxu0 %v566
        %2084 = vmatprep.subr.mxu0 0.0
        %2085 = vmatpush1.msra.mxu0 %v575
        %2086 = vmatprep.subr.mxu0 0.0
        %2087 = vmatpush1.msra.mxu0 %v584
        %2088 = vmatprep.subr.mxu0 0.0
        %2089 = vmatpush1.msra.mxu0 %v593
        %2090 = vmatprep.mubr.f32.mxu0 %v259
        %2091 = vmatmul.mubr.f32.gmra.mrb[0].mxu0 %v258
        %v2092 = vpop.f32.mrb[0].mxu0
        %v2093 = vadd.f32 0.0, %v2092
        %v2094 = vpop.f32.mrb[0].mxu0
        %2095 = vmatprep.mubr.f32.mxu0 %v262
        %2096 = vmatmul.mubr.f32.gmra.mrb[0].mxu0 %v261
        %v2097 = vpop.f32.mrb[0].mxu0
        %v2098 = vadd.f32 0.0, %v2097
        %v2099 = vpop.f32.mrb[0].mxu0
        %2100 = vmatprep.mubr.f32.mxu0 %v265
        %2101 = vmatmul.mubr.f32.gmra.mrb[0].mxu0 %v264
        %v2102 = vpop.f32.mrb[0].mxu0
        %v2103 = vadd.f32 0.0, %v2102
        %v2104 = vpop.f32.mrb[0].mxu0
        %2105 = vmatprep.mubr.f32.mxu0 %v268
        %2106 = vmatmul.mubr.f32.gmra.mrb[0].mxu0 %v267
        %v2107 = vpop.f32.mrb[0].mxu0
        %v2108 = vadd.f32 0.0, %v2107
        %v2109 = vpop.f32.mrb[0].mxu0
        %2110 = vmatprep.mubr.f32.mxu0 %v271
        %2111 = vmatmul.mubr.f32.gmra.mrb[0].mxu0 %v270
        %v2112 = vpop.f32.mrb[0].mxu0
        %v2113 = vadd.f32 0.0, %v2112
        %v2114 = vpop.f32.mrb[0].mxu0
        %2115 = vmatprep.mubr.f32.mxu0 %v274
        %2116 = vmatmul.mubr.f32.gmra.mrb[0].mxu0 %v273
        %v2117 = vpop.f32.mrb[0].mxu0
        %v2118 = vadd.f32 0.0, %v2117
        %v2119 = vpop.f32.mrb[0].mxu0
        %2120 = vmatprep.mubr.f32.mxu0 %v277
        %2121 = vmatmul.mubr.f32.gmra.mrb[0].mxu0 %v276
        %v2122 = vpop.f32.mrb[0].mxu0
        %v2123 = vadd.f32 0.0, %v2122
        %v2124 = vpop.f32.mrb[0].mxu0
        %2125 = vmatprep.mubr.f32.mxu0 %v280
        %2126 = vmatmul.mubr.f32.gmra.mrb[0].mxu0 %v279
        %v2127 = vpop.f32.mrb[0].mxu0
        %v2128 = vadd.f32 0.0, %v2127
        %v2129 = vpop.f32.mrb[0].mxu0
        %2130 = vmatprep.mubr.f32.mxu0 %v283
        %2131 = vmatmul.mubr.f32.gmra.mrb[0].mxu0 %v282
        %v2132 = vpop.f32.mrb[0].mxu0
        %v2133 = vadd.f32 0.0, %v2132
        %v2134 = vpop.f32.mrb[0].mxu0
        %2135 = vmatprep.mubr.f32.mxu0 %v286
        %2136 = vmatmul.mubr.f32.gmra.mrb[0].mxu0 %v285
        %v2137 = vpop.f32.mrb[0].mxu0
        %v2138 = vadd.f32 0.0, %v2137
        %v2139 = vpop.f32.mrb[0].mxu0
        %2140 = vmatprep.mubr.f32.mxu0 %v289
        %2141 = vmatmul.mubr.f32.gmra.mrb[0].mxu0 %v288
        %v2142 = vpop.f32.mrb[0].mxu0
        %v2143 = vadd.f32 0.0, %v2142
        %v2144 = vpop.f32.mrb[0].mxu0
        %2145 = vmatprep.mubr.f32.mxu0 %v292
        %2146 = vmatmul.mubr.f32.gmra.mrb[0].mxu0 %v291
        %v2147 = vpop.f32.mrb[0].mxu0
        %v2148 = vadd.f32 0.0, %v2147
        %v2149 = vpop.f32.mrb[0].mxu0
        %2150 = vmatprep.mubr.f32.mxu0 %v295
        %2151 = vmatmul.mubr.f32.gmra.mrb[0].mxu0 %v294
        %v2152 = vpop.f32.mrb[0].mxu0
        %v2153 = vadd.f32 0.0, %v2152
        %v2154 = vpop.f32.mrb[0].mxu0
        %2155 = vmatprep.mubr.f32.mxu0 %v298
        %2156 = vmatmul.mubr.f32.gmra.mrb[0].mxu0 %v297
        %v2157 = vpop.f32.mrb[0].mxu0
        %v2158 = vadd.f32 0.0, %v2157
        %v2159 = vpop.f32.mrb[0].mxu0
        %2160 = vmatprep.mubr.f32.mxu0 %v301
        %2161 = vmatmul.mubr.f32.gmra.mrb[0].mxu0 %v300
        %v2162 = vpop.f32.mrb[0].mxu0
        %v2163 = vadd.f32 0.0, %v2162
        %v2164 = vpop.f32.mrb[0].mxu0
        %2165 = vmatprep.mubr.f32.mxu0 %v304
        %2166 = vmatmul.mubr.f32.gmra.mrb[0].mxu0 %v303
        %v2167 = vpop.f32.mrb[0].mxu0
        %v2168 = vadd.f32 0.0, %v2167
        %v2169 = vpop.f32.mrb[0].mxu0
        %2170 = vdwg.mxu0
        %2171 = vmatprep.subr.mxu0 0.0
        %2172 = vmatpush1.msra.mxu0 %v602
        %2173 = vmatprep.subr.mxu0 0.0
        %2174 = vmatpush1.msra.mxu0 %v611
        %2175 = vmatprep.subr.mxu0 0.0
        %2176 = vmatpush1.msra.mxu0 %v620
        %2177 = vmatprep.subr.mxu0 0.0
        %2178 = vmatpush1.msra.mxu0 %v629
        %2179 = vmatprep.subr.mxu0 0.0
        %2180 = vmatpush1.msra.mxu0 %v638
        %2181 = vmatprep.subr.mxu0 0.0
        %2182 = vmatpush1.msra.mxu0 %v647
        %2183 = vmatprep.subr.mxu0 0.0
        %2184 = vmatpush1.msra.mxu0 %v656
        %2185 = vmatprep.subr.mxu0 0.0
        %2186 = vmatpush1.msra.mxu0 %v665
        %2187 = vmatprep.subr.mxu0 0.0
        %2188 = vmatpush1.msra.mxu0 %v674
        %2189 = vmatprep.subr.mxu0 0.0
        %2190 = vmatpush1.msra.mxu0 %v683
        %2191 = vmatprep.subr.mxu0 0.0
        %2192 = vmatpush1.msra.mxu0 %v692
        %2193 = vmatprep.subr.mxu0 0.0
        %2194 = vmatpush1.msra.mxu0 %v701
        %2195 = vmatprep.subr.mxu0 0.0
        %2196 = vmatpush1.msra.mxu0 %v710
        %2197 = vmatprep.subr.mxu0 0.0
        %2198 = vmatpush1.msra.mxu0 %v719
        %2199 = vmatprep.subr.mxu0 0.0
        %2200 = vmatpush1.msra.mxu0 %v728
        %2201 = vmatprep.subr.mxu0 0.0
        %2202 = vmatpush1.msra.mxu0 %v737
        %2203 = vmatprep.subr.mxu0 0.0
        %2204 = vmatpush1.msra.mxu0 0.0
        %2205 = vmatprep.subr.mxu0 0.0
        %2206 = vmatpush1.msra.mxu0 0.0
        %2207 = vmatprep.subr.mxu0 0.0
        %2208 = vmatpush1.msra.mxu0 0.0
        %2209 = vmatprep.subr.mxu0 0.0
        %2210 = vmatpush1.msra.mxu0 0.0
        %2211 = vmatprep.subr.mxu0 0.0
        %2212 = vmatpush1.msra.mxu0 0.0
        %2213 = vmatprep.subr.mxu0 0.0
        %2214 = vmatpush1.msra.mxu0 0.0
        %2215 = vmatprep.subr.mxu0 0.0
        %2216 = vmatpush1.msra.mxu0 0.0
        %2217 = vmatprep.subr.mxu0 0.0
        %2218 = vmatpush1.msra.mxu0 0.0
        %2219 = vmatprep.subr.mxu0 0.0
        %2220 = vmatpush1.msra.mxu0 0.0
        %2221 = vmatprep.subr.mxu0 0.0
        %2222 = vmatpush1.msra.mxu0 0.0
        %2223 = vmatprep.subr.mxu0 0.0
        %2224 = vmatpush1.msra.mxu0 0.0
        %2225 = vmatprep.subr.mxu0 0.0
        %2226 = vmatpush1.msra.mxu0 0.0
        %2227 = vmatprep.subr.mxu0 0.0
        %2228 = vmatpush1.msra.mxu0 0.0
        %2229 = vmatprep.subr.mxu0 0.0
        %2230 = vmatpush1.msra.mxu0 0.0
        %2231 = vmatprep.subr.mxu0 0.0
        %2232 = vmatpush1.msra.mxu0 0.0
        %2233 = vmatprep.subr.mxu0 0.0
        %2234 = vmatpush1.msra.mxu0 0.0
        %2235 = vmatprep.mubr.f32.mxu0 0.0
        %2236 = vmatmul.mubr.f32.gmra.mrb[0].mxu0 %v260
        %v2237 = vpop.f32.mrb[0].mxu0
        %v2238 = vadd.f32 %v2093, %v2237
        %v2239 = vpop.f32.mrb[0].mxu0
        %2240 = vmatprep.mubr.f32.mxu0 0.0
        %2241 = vmatmul.mubr.f32.gmra.mrb[0].mxu0 %v263
        %v2242 = vpop.f32.mrb[0].mxu0
        %v2243 = vadd.f32 %v2098, %v2242
        %v2244 = vpop.f32.mrb[0].mxu0
        %2245 = vmatprep.mubr.f32.mxu0 0.0
        %2246 = vmatmul.mubr.f32.gmra.mrb[0].mxu0 %v266
        %v2247 = vpop.f32.mrb[0].mxu0
        %v2248 = vadd.f32 %v2103, %v2247
        %v2249 = vpop.f32.mrb[0].mxu0
        %2250 = vmatprep.mubr.f32.mxu0 0.0
        %2251 = vmatmul.mubr.f32.gmra.mrb[0].mxu0 %v269
        %v2252 = vpop.f32.mrb[0].mxu0
        %v2253 = vadd.f32 %v2108, %v2252
        %v2254 = vpop.f32.mrb[0].mxu0
        %2255 = vmatprep.mubr.f32.mxu0 0.0
        %2256 = vmatmul.mubr.f32.gmra.mrb[0].mxu0 %v272
        %v2257 = vpop.f32.mrb[0].mxu0
        %v2258 = vadd.f32 %v2113, %v2257
        %v2259 = vpop.f32.mrb[0].mxu0
        %2260 = vmatprep.mubr.f32.mxu0 0.0
        %2261 = vmatmul.mubr.f32.gmra.mrb[0].mxu0 %v275
        %v2262 = vpop.f32.mrb[0].mxu0
        %v2263 = vadd.f32 %v2118, %v2262
        %v2264 = vpop.f32.mrb[0].mxu0
        %2265 = vmatprep.mubr.f32.mxu0 0.0
        %2266 = vmatmul.mubr.f32.gmra.mrb[0].mxu0 %v278
        %v2267 = vpop.f32.mrb[0].mxu0
        %v2268 = vadd.f32 %v2123, %v2267
        %v2269 = vpop.f32.mrb[0].mxu0
        %2270 = vmatprep.mubr.f32.mxu0 0.0
        %2271 = vmatmul.mubr.f32.gmra.mrb[0].mxu0 %v281
        %v2272 = vpop.f32.mrb[0].mxu0
        %v2273 = vadd.f32 %v2128, %v2272
        %v2274 = vpop.f32.mrb[0].mxu0
        %2275 = vmatprep.mubr.f32.mxu0 0.0
        %2276 = vmatmul.mubr.f32.gmra.mrb[0].mxu0 %v284
        %v2277 = vpop.f32.mrb[0].mxu0
        %v2278 = vadd.f32 %v2133, %v2277
        %v2279 = vpop.f32.mrb[0].mxu0
        %2280 = vmatprep.mubr.f32.mxu0 0.0
        %2281 = vmatmul.mubr.f32.gmra.mrb[0].mxu0 %v287
        %v2282 = vpop.f32.mrb[0].mxu0
        %v2283 = vadd.f32 %v2138, %v2282
        %v2284 = vpop.f32.mrb[0].mxu0
        %2285 = vmatprep.mubr.f32.mxu0 0.0
        %2286 = vmatmul.mubr.f32.gmra.mrb[0].mxu0 %v290
        %v2287 = vpop.f32.mrb[0].mxu0
        %v2288 = vadd.f32 %v2143, %v2287
        %v2289 = vpop.f32.mrb[0].mxu0
        %2290 = vmatprep.mubr.f32.mxu0 0.0
        %2291 = vmatmul.mubr.f32.gmra.mrb[0].mxu0 %v293
        %v2292 = vpop.f32.mrb[0].mxu0
        %v2293 = vadd.f32 %v2148, %v2292
        %v2294 = vpop.f32.mrb[0].mxu0
        %2295 = vmatprep.mubr.f32.mxu0 0.0
        %2296 = vmatmul.mubr.f32.gmra.mrb[0].mxu0 %v296
        %v2297 = vpop.f32.mrb[0].mxu0
        %v2298 = vadd.f32 %v2153, %v2297
        %v2299 = vpop.f32.mrb[0].mxu0
        %2300 = vmatprep.mubr.f32.mxu0 0.0
        %2301 = vmatmul.mubr.f32.gmra.mrb[0].mxu0 %v299
        %v2302 = vpop.f32.mrb[0].mxu0
        %v2303 = vadd.f32 %v2158, %v2302
        %v2304 = vpop.f32.mrb[0].mxu0
        %2305 = vmatprep.mubr.f32.mxu0 0.0
        %2306 = vmatmul.mubr.f32.gmra.mrb[0].mxu0 %v302
        %v2307 = vpop.f32.mrb[0].mxu0
        %v2308 = vadd.f32 %v2163, %v2307
        %v2309 = vpop.f32.mrb[0].mxu0
        %2310 = vmatprep.mubr.f32.mxu0 0.0
        %2311 = vmatmul.mubr.f32.gmra.mrb[0].mxu0 %v305
        %v2312 = vpop.f32.mrb[0].mxu0
        %v2313 = vadd.f32 %v2168, %v2312
        %v2314 = vpop.f32.mrb[0].mxu0
        %2315 = vdwg.mxu0
        %v2316 = vlaneseq
        %v2317 = vshrl.u32 %v2316, 7
        %v2318 = vadd.s32 %v2317, 8
        %v2319 = vadd.s32 %v2317, 16
        %v2320 = vadd.s32 %v2317, 24
        %v2321 = vadd.s32 %v2317, 32
        %v2322 = vadd.s32 %v2317, 40
        %v2323 = vadd.s32 %v2317, 48
        %v2324 = vadd.s32 %v2317, 56
        %v2325 = vadd.s32 %v2317, 64
        %v2326 = vadd.s32 %v2317, 72
        %v2327 = vadd.s32 %v2317, 80
        %v2328 = vadd.s32 %v2317, 88
        %v2329 = vadd.s32 %v2317, 96
        %v2330 = vadd.s32 %v2317, 104
        %v2331 = vadd.s32 %v2317, 112
        %v2332 = vadd.s32 %v2317, 120
        %v2333 = vlaneseq
        %v2334 = vand.u32 %v2333, 127
        %vm2335 = vcmp.le.s32.totalorder %v2334, %v2317
        %vm2336 = vcmp.le.s32.totalorder %v2334, %v2318
        %vm2337 = vcmp.le.s32.totalorder %v2334, %v2319
        %vm2338 = vcmp.le.s32.totalorder %v2334, %v2320
        %vm2339 = vcmp.le.s32.totalorder %v2334, %v2321
        %vm2340 = vcmp.le.s32.totalorder %v2334, %v2322
        %vm2341 = vcmp.le.s32.totalorder %v2334, %v2323
        %vm2342 = vcmp.le.s32.totalorder %v2334, %v2324
        %vm2343 = vcmp.le.s32.totalorder %v2334, %v2325
        %vm2344 = vcmp.le.s32.totalorder %v2334, %v2326
        %vm2345 = vcmp.le.s32.totalorder %v2334, %v2327
        %vm2346 = vcmp.le.s32.totalorder %v2334, %v2328
        %vm2347 = vcmp.le.s32.totalorder %v2334, %v2329
        %vm2348 = vcmp.le.s32.totalorder %v2334, %v2330
        %vm2349 = vcmp.le.s32.totalorder %v2334, %v2331
        %vm2350 = vcmp.le.s32.totalorder %v2334, %v2332
        %v2351 = vsel %vm2335, 0.0, -1e+30
        %v2352 = vsel %vm2336, 0.0, -1e+30
        %v2353 = vsel %vm2337, 0.0, -1e+30
        %v2354 = vsel %vm2338, 0.0, -1e+30
        %v2355 = vsel %vm2339, 0.0, -1e+30
        %v2356 = vsel %vm2340, 0.0, -1e+30
        %v2357 = vsel %vm2341, 0.0, -1e+30
        %v2358 = vsel %vm2342, 0.0, -1e+30
        %v2359 = vsel %vm2343, 0.0, -1e+30
        %v2360 = vsel %vm2344, 0.0, -1e+30
        %v2361 = vsel %vm2345, 0.0, -1e+30
        %v2362 = vsel %vm2346, 0.0, -1e+30
        %v2363 = vsel %vm2347, 0.0, -1e+30
        %v2364 = vsel %vm2348, 0.0, -1e+30
        %v2365 = vsel %vm2349, 0.0, -1e+30
        %v2366 = vsel %vm2350, 0.0, -1e+30
        %vm2367 = vcmask 523264
        %v2369 = vsel %vm2367, %v966, 0
        %v2372 = vsel %vm2367, %v972, 0
        %v2375 = vsel %vm2367, %v978, 0
        %v2378 = vsel %vm2367, %v984, 0
        %v2381 = vsel %vm2367, %v990, 0
        %v2384 = vsel %vm2367, %v996, 0
        %v2387 = vsel %vm2367, %v1002, 0
        %v2390 = vsel %vm2367, %v1008, 0
        %v2393 = vsel %vm2367, %v1014, 0
        %v2396 = vsel %vm2367, %v1020, 0
        %v2399 = vsel %vm2367, %v1026, 0
        %v2402 = vsel %vm2367, %v1032, 0
        %v2405 = vsel %vm2367, %v1038, 0
        %v2408 = vsel %vm2367, %v1044, 0
        %v2411 = vsel %vm2367, %v1050, 0
        %v2414 = vsel %vm2367, %v1056, 0
        %v2417 = vsel %vm2367, %v1290, 0
        %v2420 = vsel %vm2367, %v1296, 0
        %v2423 = vsel %vm2367, %v1302, 0
        %v2426 = vsel %vm2367, %v1308, 0
        %v2429 = vsel %vm2367, %v1314, 0
        %v2432 = vsel %vm2367, %v1320, 0
        %v2435 = vsel %vm2367, %v1326, 0
        %v2438 = vsel %vm2367, %v1332, 0
        %v2441 = vsel %vm2367, %v1338, 0
        %v2444 = vsel %vm2367, %v1344, 0
        %v2447 = vsel %vm2367, %v1350, 0
        %v2450 = vsel %vm2367, %v1356, 0
        %v2453 = vsel %vm2367, %v1362, 0
        %v2456 = vsel %vm2367, %v1368, 0
        %v2459 = vsel %vm2367, %v1374, 0
        %v2462 = vsel %vm2367, %v1380, 0
        %2464 = vmatprep.subr.mxu0 0.0
        %2465 = vmatpush1.xpose.msra.mxu0 %v2417
        %2466 = vmatprep.subr.mxu0 0.0
        %2467 = vmatpush1.xpose.msra.mxu0 %v2420
        %2468 = vmatprep.subr.mxu0 0.0
        %2469 = vmatpush1.xpose.msra.mxu0 %v2423
        %2470 = vmatprep.subr.mxu0 0.0
        %2471 = vmatpush1.xpose.msra.mxu0 %v2426
        %2472 = vmatprep.subr.mxu0 0.0
        %2473 = vmatpush1.xpose.msra.mxu0 %v2429
        %2474 = vmatprep.subr.mxu0 0.0
        %2475 = vmatpush1.xpose.msra.mxu0 %v2432
        %2476 = vmatprep.subr.mxu0 0.0
        %2477 = vmatpush1.xpose.msra.mxu0 %v2435
        %2478 = vmatprep.subr.mxu0 0.0
        %2479 = vmatpush1.xpose.msra.mxu0 %v2438
        %2480 = vmatprep.subr.mxu0 0.0
        %2481 = vmatpush1.xpose.msra.mxu0 %v2441
        %2482 = vmatprep.subr.mxu0 0.0
        %2483 = vmatpush1.xpose.msra.mxu0 %v2444
        %2484 = vmatprep.subr.mxu0 0.0
        %2485 = vmatpush1.xpose.msra.mxu0 %v2447
        %2486 = vmatprep.subr.mxu0 0.0
        %2487 = vmatpush1.xpose.msra.mxu0 %v2450
        %2488 = vmatprep.subr.mxu0 0.0
        %2489 = vmatpush1.xpose.msra.mxu0 %v2453
        %2490 = vmatprep.subr.mxu0 0.0
        %2491 = vmatpush1.xpose.msra.mxu0 %v2456
        %2492 = vmatprep.subr.mxu0 0.0
        %2493 = vmatpush1.xpose.msra.mxu0 %v2459
        %2494 = vmatprep.subr.mxu0 0.0
        %2495 = vmatpush1.xpose.msra.mxu0 %v2462
        %2496 = vmatprep.subr.mxu0 0.0
        %2497 = vmatpush1.xpose.msra.mxu0 0.0
        %2498 = vmatprep.subr.mxu0 0.0
        %2499 = vmatpush1.xpose.msra.mxu0 0.0
        %2500 = vmatprep.subr.mxu0 0.0
        %2501 = vmatpush1.xpose.msra.mxu0 0.0
        %2502 = vmatprep.subr.mxu0 0.0
        %2503 = vmatpush1.xpose.msra.mxu0 0.0
        %2504 = vmatprep.subr.mxu0 0.0
        %2505 = vmatpush1.xpose.msra.mxu0 0.0
        %2506 = vmatprep.subr.mxu0 0.0
        %2507 = vmatpush1.xpose.msra.mxu0 0.0
        %2508 = vmatprep.subr.mxu0 0.0
        %2509 = vmatpush1.xpose.msra.mxu0 0.0
        %2510 = vmatprep.subr.mxu0 0.0
        %2511 = vmatpush1.xpose.msra.mxu0 0.0
        %2512 = vmatprep.subr.mxu0 0.0
        %2513 = vmatpush1.xpose.msra.mxu0 0.0
        %2514 = vmatprep.subr.mxu0 0.0
        %2515 = vmatpush1.xpose.msra.mxu0 0.0
        %2516 = vmatprep.subr.mxu0 0.0
        %2517 = vmatpush1.xpose.msra.mxu0 0.0
        %2518 = vmatprep.subr.mxu0 0.0
        %2519 = vmatpush1.xpose.msra.mxu0 0.0
        %2520 = vmatprep.subr.mxu0 0.0
        %2521 = vmatpush1.xpose.msra.mxu0 0.0
        %2522 = vmatprep.subr.mxu0 0.0
        %2523 = vmatpush1.xpose.msra.mxu0 0.0
        %2524 = vmatprep.subr.mxu0 0.0
        %2525 = vmatpush1.xpose.msra.mxu0 0.0
        %2526 = vmatprep.subr.mxu0 0.0
        %2527 = vmatpush1.xpose.msra.mxu0 0.0
        %2528 = vmatprep.mubr.f32.mxu0 0.0
        %2529 = vmatmul.mubr.f32.gmra.mrb[0].mxu0 %v2369
        %v2530 = vpop.f32.mrb[0].mxu0
        %v2531 = vadd.f32 %v2351, %v2530
        %v2532 = vpop.f32.mrb[0].mxu0
        %2533 = vmatprep.mubr.f32.mxu0 0.0
        %2534 = vmatmul.mubr.f32.gmra.mrb[0].mxu0 %v2372
        %v2535 = vpop.f32.mrb[0].mxu0
        %v2536 = vadd.f32 %v2352, %v2535
        %v2537 = vpop.f32.mrb[0].mxu0
        %2538 = vmatprep.mubr.f32.mxu0 0.0
        %2539 = vmatmul.mubr.f32.gmra.mrb[0].mxu0 %v2375
        %v2540 = vpop.f32.mrb[0].mxu0
        %v2541 = vadd.f32 %v2353, %v2540
        %v2542 = vpop.f32.mrb[0].mxu0
        %2543 = vmatprep.mubr.f32.mxu0 0.0
        %2544 = vmatmul.mubr.f32.gmra.mrb[0].mxu0 %v2378
        %v2545 = vpop.f32.mrb[0].mxu0
        %v2546 = vadd.f32 %v2354, %v2545
        %v2547 = vpop.f32.mrb[0].mxu0
        %2548 = vmatprep.mubr.f32.mxu0 0.0
        %2549 = vmatmul.mubr.f32.gmra.mrb[0].mxu0 %v2381
        %v2550 = vpop.f32.mrb[0].mxu0
        %v2551 = vadd.f32 %v2355, %v2550
        %v2552 = vpop.f32.mrb[0].mxu0
        %2553 = vmatprep.mubr.f32.mxu0 0.0
        %2554 = vmatmul.mubr.f32.gmra.mrb[0].mxu0 %v2384
        %v2555 = vpop.f32.mrb[0].mxu0
        %v2556 = vadd.f32 %v2356, %v2555
        %v2557 = vpop.f32.mrb[0].mxu0
        %2558 = vmatprep.mubr.f32.mxu0 0.0
        %2559 = vmatmul.mubr.f32.gmra.mrb[0].mxu0 %v2387
        %v2560 = vpop.f32.mrb[0].mxu0
        %v2561 = vadd.f32 %v2357, %v2560
        %v2562 = vpop.f32.mrb[0].mxu0
        %2563 = vmatprep.mubr.f32.mxu0 0.0
        %2564 = vmatmul.mubr.f32.gmra.mrb[0].mxu0 %v2390
        %v2565 = vpop.f32.mrb[0].mxu0
        %v2566 = vadd.f32 %v2358, %v2565
        %v2567 = vpop.f32.mrb[0].mxu0
        %2568 = vmatprep.mubr.f32.mxu0 0.0
        %2569 = vmatmul.mubr.f32.gmra.mrb[0].mxu0 %v2393
        %v2570 = vpop.f32.mrb[0].mxu0
        %v2571 = vadd.f32 %v2359, %v2570
        %v2572 = vpop.f32.mrb[0].mxu0
        %2573 = vmatprep.mubr.f32.mxu0 0.0
        %2574 = vmatmul.mubr.f32.gmra.mrb[0].mxu0 %v2396
        %v2575 = vpop.f32.mrb[0].mxu0
        %v2576 = vadd.f32 %v2360, %v2575
        %v2577 = vpop.f32.mrb[0].mxu0
        %2578 = vmatprep.mubr.f32.mxu0 0.0
        %2579 = vmatmul.mubr.f32.gmra.mrb[0].mxu0 %v2399
        %v2580 = vpop.f32.mrb[0].mxu0
        %v2581 = vadd.f32 %v2361, %v2580
        %v2582 = vpop.f32.mrb[0].mxu0
        %2583 = vmatprep.mubr.f32.mxu0 0.0
        %2584 = vmatmul.mubr.f32.gmra.mrb[0].mxu0 %v2402
        %v2585 = vpop.f32.mrb[0].mxu0
        %v2586 = vadd.f32 %v2362, %v2585
        %v2587 = vpop.f32.mrb[0].mxu0
        %2588 = vmatprep.mubr.f32.mxu0 0.0
        %2589 = vmatmul.mubr.f32.gmra.mrb[0].mxu0 %v2405
        %v2590 = vpop.f32.mrb[0].mxu0
        %v2591 = vadd.f32 %v2363, %v2590
        %v2592 = vpop.f32.mrb[0].mxu0
        %2593 = vmatprep.mubr.f32.mxu0 0.0
        %2594 = vmatmul.mubr.f32.gmra.mrb[0].mxu0 %v2408
        %v2595 = vpop.f32.mrb[0].mxu0
        %v2596 = vadd.f32 %v2364, %v2595
        %v2597 = vpop.f32.mrb[0].mxu0
        %2598 = vmatprep.mubr.f32.mxu0 0.0
        %2599 = vmatmul.mubr.f32.gmra.mrb[0].mxu0 %v2411
        %v2600 = vpop.f32.mrb[0].mxu0
        %v2601 = vadd.f32 %v2365, %v2600
        %v2602 = vpop.f32.mrb[0].mxu0
        %2603 = vmatprep.mubr.f32.mxu0 0.0
        %2604 = vmatmul.mubr.f32.gmra.mrb[0].mxu0 %v2414
        %v2605 = vpop.f32.mrb[0].mxu0
        %v2606 = vadd.f32 %v2366, %v2605
        %v2607 = vpop.f32.mrb[0].mxu0
        %2608 = vdwg.mxu0
        %2609 = vmax.xlane.f32.xlu0 %v2531
        %v2610 = vpop.xlane.xlu0 %2609
        %2611 = vmax.xlane.f32.xlu0 %v2536
        %v2612 = vpop.xlane.xlu0 %2611
        %2613 = vmax.xlane.f32.xlu0 %v2541
        %v2614 = vpop.xlane.xlu0 %2613
        %2615 = vmax.xlane.f32.xlu0 %v2546
        %v2616 = vpop.xlane.xlu0 %2615
        %2617 = vmax.xlane.f32.xlu0 %v2551
        %v2618 = vpop.xlane.xlu0 %2617
        %2619 = vmax.xlane.f32.xlu0 %v2556
        %v2620 = vpop.xlane.xlu0 %2619
        %2621 = vmax.xlane.f32.xlu0 %v2561
        %v2622 = vpop.xlane.xlu0 %2621
        %2623 = vmax.xlane.f32.xlu0 %v2566
        %v2624 = vpop.xlane.xlu0 %2623
        %2625 = vmax.xlane.f32.xlu0 %v2571
        %v2626 = vpop.xlane.xlu0 %2625
        %2627 = vmax.xlane.f32.xlu0 %v2576
        %v2628 = vpop.xlane.xlu0 %2627
        %2629 = vmax.xlane.f32.xlu0 %v2581
        %v2630 = vpop.xlane.xlu0 %2629
        %2631 = vmax.xlane.f32.xlu0 %v2586
        %v2632 = vpop.xlane.xlu0 %2631
        %2633 = vmax.xlane.f32.xlu0 %v2591
        %v2634 = vpop.xlane.xlu0 %2633
        %2635 = vmax.xlane.f32.xlu0 %v2596
        %v2636 = vpop.xlane.xlu0 %2635
        %2637 = vmax.xlane.f32.xlu0 %v2601
        %v2638 = vpop.xlane.xlu0 %2637
        %2639 = vmax.xlane.f32.xlu0 %v2606
        %v2640 = vpop.xlane.xlu0 %2639
        %v2641 = vsub.f32 %v2531, %v2610
        %v2642 = vsub.f32 %v2536, %v2612
        %v2643 = vsub.f32 %v2541, %v2614
        %v2644 = vsub.f32 %v2546, %v2616
        %v2645 = vsub.f32 %v2551, %v2618
        %v2646 = vsub.f32 %v2556, %v2620
        %v2647 = vsub.f32 %v2561, %v2622
        %v2648 = vsub.f32 %v2566, %v2624
        %v2649 = vsub.f32 %v2571, %v2626
        %v2650 = vsub.f32 %v2576, %v2628
        %v2651 = vsub.f32 %v2581, %v2630
        %v2652 = vsub.f32 %v2586, %v2632
        %v2653 = vsub.f32 %v2591, %v2634
        %v2654 = vsub.f32 %v2596, %v2636
        %v2655 = vsub.f32 %v2601, %v2638
        %v2656 = vsub.f32 %v2606, %v2640
        %v2657 = vmul.f32 %v2641, 1.442695
        %v2658 = vpow.pop %v2657
        %v2659 = vmul.f32 %v2642, 1.442695
        %v2660 = vpow.pop %v2659
        %v2661 = vmul.f32 %v2643, 1.442695
        %v2662 = vpow.pop %v2661
        %v2663 = vmul.f32 %v2644, 1.442695
        %v2664 = vpow.pop %v2663
        %v2665 = vmul.f32 %v2645, 1.442695
        %v2666 = vpow.pop %v2665
        %v2667 = vmul.f32 %v2646, 1.442695
        %v2668 = vpow.pop %v2667
        %v2669 = vmul.f32 %v2647, 1.442695
        %v2670 = vpow.pop %v2669
        %v2671 = vmul.f32 %v2648, 1.442695
        %v2672 = vpow.pop %v2671
        %v2673 = vmul.f32 %v2649, 1.442695
        %v2674 = vpow.pop %v2673
        %v2675 = vmul.f32 %v2650, 1.442695
        %v2676 = vpow.pop %v2675
        %v2677 = vmul.f32 %v2651, 1.442695
        %v2678 = vpow.pop %v2677
        %v2679 = vmul.f32 %v2652, 1.442695
        %v2680 = vpow.pop %v2679
        %v2681 = vmul.f32 %v2653, 1.442695
        %v2682 = vpow.pop %v2681
        %v2683 = vmul.f32 %v2654, 1.442695
        %v2684 = vpow.pop %v2683
        %v2685 = vmul.f32 %v2655, 1.442695
        %v2686 = vpow.pop %v2685
        %v2687 = vmul.f32 %v2656, 1.442695
        %v2688 = vpow.pop %v2687
        %2689 = vadd.xlane.f32.xlu0 %v2658
        %v2690 = vpop.xlane.xlu0 %2689
        %2691 = vadd.xlane.f32.xlu0 %v2660
        %v2692 = vpop.xlane.xlu0 %2691
        %2693 = vadd.xlane.f32.xlu0 %v2662
        %v2694 = vpop.xlane.xlu0 %2693
        %2695 = vadd.xlane.f32.xlu0 %v2664
        %v2696 = vpop.xlane.xlu0 %2695
        %2697 = vadd.xlane.f32.xlu0 %v2666
        %v2698 = vpop.xlane.xlu0 %2697
        %2699 = vadd.xlane.f32.xlu0 %v2668
        %v2700 = vpop.xlane.xlu0 %2699
        %2701 = vadd.xlane.f32.xlu0 %v2670
        %v2702 = vpop.xlane.xlu0 %2701
        %2703 = vadd.xlane.f32.xlu0 %v2672
        %v2704 = vpop.xlane.xlu0 %2703
        %2705 = vadd.xlane.f32.xlu0 %v2674
        %v2706 = vpop.xlane.xlu0 %2705
        %2707 = vadd.xlane.f32.xlu0 %v2676
        %v2708 = vpop.xlane.xlu0 %2707
        %2709 = vadd.xlane.f32.xlu0 %v2678
        %v2710 = vpop.xlane.xlu0 %2709
        %2711 = vadd.xlane.f32.xlu0 %v2680
        %v2712 = vpop.xlane.xlu0 %2711
        %2713 = vadd.xlane.f32.xlu0 %v2682
        %v2714 = vpop.xlane.xlu0 %2713
        %2715 = vadd.xlane.f32.xlu0 %v2684
        %v2716 = vpop.xlane.xlu0 %2715
        %2717 = vadd.xlane.f32.xlu0 %v2686
        %v2718 = vpop.xlane.xlu0 %2717
        %2719 = vadd.xlane.f32.xlu0 %v2688
        %v2720 = vpop.xlane.xlu0 %2719
        %v2721 = vrcp.pop %v2690
        %v2722 = vrcp.pop %v2692
        %v2723 = vrcp.pop %v2694
        %v2724 = vrcp.pop %v2696
        %v2725 = vrcp.pop %v2698
        %v2726 = vrcp.pop %v2700
        %v2727 = vrcp.pop %v2702
        %v2728 = vrcp.pop %v2704
        %v2729 = vrcp.pop %v2706
        %v2730 = vrcp.pop %v2708
        %v2731 = vrcp.pop %v2710
        %v2732 = vrcp.pop %v2712
        %v2733 = vrcp.pop %v2714
        %v2734 = vrcp.pop %v2716
        %v2735 = vrcp.pop %v2718
        %v2736 = vrcp.pop %v2720
        %v2737 = vmul.f32 %v2690, %v2721
        %v2738 = vmul.f32 %v2692, %v2722
        %v2739 = vmul.f32 %v2694, %v2723
        %v2740 = vmul.f32 %v2696, %v2724
        %v2741 = vmul.f32 %v2698, %v2725
        %v2742 = vmul.f32 %v2700, %v2726
        %v2743 = vmul.f32 %v2702, %v2727
        %v2744 = vmul.f32 %v2704, %v2728
        %v2745 = vmul.f32 %v2706, %v2729
        %v2746 = vmul.f32 %v2708, %v2730
        %v2747 = vmul.f32 %v2710, %v2731
        %v2748 = vmul.f32 %v2712, %v2732
        %v2749 = vmul.f32 %v2714, %v2733
        %v2750 = vmul.f32 %v2716, %v2734
        %v2751 = vmul.f32 %v2718, %v2735
        %v2752 = vmul.f32 %v2720, %v2736
        %v2753 = vsub.f32 2.0, %v2737
        %v2754 = vsub.f32 2.0, %v2738
        %v2755 = vsub.f32 2.0, %v2739
        %v2756 = vsub.f32 2.0, %v2740
        %v2757 = vsub.f32 2.0, %v2741
        %v2758 = vsub.f32 2.0, %v2742
        %v2759 = vsub.f32 2.0, %v2743
        %v2760 = vsub.f32 2.0, %v2744
        %v2761 = vsub.f32 2.0, %v2745
        %v2762 = vsub.f32 2.0, %v2746
        %v2763 = vsub.f32 2.0, %v2747
        %v2764 = vsub.f32 2.0, %v2748
        %v2765 = vsub.f32 2.0, %v2749
        %v2766 = vsub.f32 2.0, %v2750
        %v2767 = vsub.f32 2.0, %v2751
        %v2768 = vsub.f32 2.0, %v2752
        %v2769 = vmul.f32 %v2721, %v2753
        %v2770 = vmul.f32 %v2722, %v2754
        %v2771 = vmul.f32 %v2723, %v2755
        %v2772 = vmul.f32 %v2724, %v2756
        %v2773 = vmul.f32 %v2725, %v2757
        %v2774 = vmul.f32 %v2726, %v2758
        %v2775 = vmul.f32 %v2727, %v2759
        %v2776 = vmul.f32 %v2728, %v2760
        %v2777 = vmul.f32 %v2729, %v2761
        %v2778 = vmul.f32 %v2730, %v2762
        %v2779 = vmul.f32 %v2731, %v2763
        %v2780 = vmul.f32 %v2732, %v2764
        %v2781 = vmul.f32 %v2733, %v2765
        %v2782 = vmul.f32 %v2734, %v2766
        %v2783 = vmul.f32 %v2735, %v2767
        %v2784 = vmul.f32 %v2736, %v2768
        %v2785 = vmul.f32 %v2658, %v2769
        %v2786 = vmul.f32 %v2660, %v2770
        %v2787 = vmul.f32 %v2662, %v2771
        %v2788 = vmul.f32 %v2664, %v2772
        %v2789 = vmul.f32 %v2666, %v2773
        %v2790 = vmul.f32 %v2668, %v2774
        %v2791 = vmul.f32 %v2670, %v2775
        %v2792 = vmul.f32 %v2672, %v2776
        %v2793 = vmul.f32 %v2674, %v2777
        %v2794 = vmul.f32 %v2676, %v2778
        %v2795 = vmul.f32 %v2678, %v2779
        %v2796 = vmul.f32 %v2680, %v2780
        %v2797 = vmul.f32 %v2682, %v2781
        %v2798 = vmul.f32 %v2684, %v2782
        %v2799 = vmul.f32 %v2686, %v2783
        %v2800 = vmul.f32 %v2688, %v2784
        %2801 = vmatprep.subr.mxu0 0.0
        %2802 = vmatpush1.msra.mxu0 %v1932
        %2803 = vmatprep.subr.mxu0 0.0
        %2804 = vmatpush1.msra.mxu0 %v1938
        %2805 = vmatprep.subr.mxu0 0.0
        %2806 = vmatpush1.msra.mxu0 %v1944
        %2807 = vmatprep.subr.mxu0 0.0
        %2808 = vmatpush1.msra.mxu0 %v1950
        %2809 = vmatprep.subr.mxu0 0.0
        %2810 = vmatpush1.msra.mxu0 %v1956
        %2811 = vmatprep.subr.mxu0 0.0
        %2812 = vmatpush1.msra.mxu0 %v1962
        %2813 = vmatprep.subr.mxu0 0.0
        %2814 = vmatpush1.msra.mxu0 %v1968
        %2815 = vmatprep.subr.mxu0 0.0
        %2816 = vmatpush1.msra.mxu0 %v1974
        %2817 = vmatprep.subr.mxu0 0.0
        %2818 = vmatpush1.msra.mxu0 %v1980
        %2819 = vmatprep.subr.mxu0 0.0
        %2820 = vmatpush1.msra.mxu0 %v1986
        %2821 = vmatprep.subr.mxu0 0.0
        %2822 = vmatpush1.msra.mxu0 %v1992
        %2823 = vmatprep.subr.mxu0 0.0
        %2824 = vmatpush1.msra.mxu0 %v1998
        %2825 = vmatprep.subr.mxu0 0.0
        %2826 = vmatpush1.msra.mxu0 %v2004
        %2827 = vmatprep.subr.mxu0 0.0
        %2828 = vmatpush1.msra.mxu0 %v2010
        %2829 = vmatprep.subr.mxu0 0.0
        %2830 = vmatpush1.msra.mxu0 %v2016
        %2831 = vmatprep.subr.mxu0 0.0
        %2832 = vmatpush1.msra.mxu0 %v2022
        %2833 = vmatprep.subr.mxu0 0.0
        %2834 = vmatpush1.msra.mxu0 0.0
        %2835 = vmatprep.subr.mxu0 0.0
        %2836 = vmatpush1.msra.mxu0 0.0
        %2837 = vmatprep.subr.mxu0 0.0
        %2838 = vmatpush1.msra.mxu0 0.0
        %2839 = vmatprep.subr.mxu0 0.0
        %2840 = vmatpush1.msra.mxu0 0.0
        %2841 = vmatprep.subr.mxu0 0.0
        %2842 = vmatpush1.msra.mxu0 0.0
        %2843 = vmatprep.subr.mxu0 0.0
        %2844 = vmatpush1.msra.mxu0 0.0
        %2845 = vmatprep.subr.mxu0 0.0
        %2846 = vmatpush1.msra.mxu0 0.0
        %2847 = vmatprep.subr.mxu0 0.0
        %2848 = vmatpush1.msra.mxu0 0.0
        %2849 = vmatprep.subr.mxu0 0.0
        %2850 = vmatpush1.msra.mxu0 0.0
        %2851 = vmatprep.subr.mxu0 0.0
        %2852 = vmatpush1.msra.mxu0 0.0
        %2853 = vmatprep.subr.mxu0 0.0
        %2854 = vmatpush1.msra.mxu0 0.0
        %2855 = vmatprep.subr.mxu0 0.0
        %2856 = vmatpush1.msra.mxu0 0.0
        %2857 = vmatprep.subr.mxu0 0.0
        %2858 = vmatpush1.msra.mxu0 0.0
        %2859 = vmatprep.subr.mxu0 0.0
        %2860 = vmatpush1.msra.mxu0 0.0
        %2861 = vmatprep.subr.mxu0 0.0
        %2862 = vmatpush1.msra.mxu0 0.0
        %2863 = vmatprep.subr.mxu0 0.0
        %2864 = vmatpush1.msra.mxu0 0.0
        %2865 = vmatprep.mubr.f32.mxu0 0.0
        %2866 = vmatmul.mubr.f32.gmra.mrb[0].mxu0 %v2785
        %v2867 = vpop.f32.mrb[0].mxu0
        %v2868 = vadd.f32 0.0, %v2867
        %v2869 = vpop.f32.mrb[0].mxu0
        %2870 = vmatprep.mubr.f32.mxu0 0.0
        %2871 = vmatmul.mubr.f32.gmra.mrb[0].mxu0 %v2786
        %v2872 = vpop.f32.mrb[0].mxu0
        %v2873 = vadd.f32 0.0, %v2872
        %v2874 = vpop.f32.mrb[0].mxu0
        %2875 = vmatprep.mubr.f32.mxu0 0.0
        %2876 = vmatmul.mubr.f32.gmra.mrb[0].mxu0 %v2787
        %v2877 = vpop.f32.mrb[0].mxu0
        %v2878 = vadd.f32 0.0, %v2877
        %v2879 = vpop.f32.mrb[0].mxu0
        %2880 = vmatprep.mubr.f32.mxu0 0.0
        %2881 = vmatmul.mubr.f32.gmra.mrb[0].mxu0 %v2788
        %v2882 = vpop.f32.mrb[0].mxu0
        %v2883 = vadd.f32 0.0, %v2882
        %v2884 = vpop.f32.mrb[0].mxu0
        %2885 = vmatprep.mubr.f32.mxu0 0.0
        %2886 = vmatmul.mubr.f32.gmra.mrb[0].mxu0 %v2789
        %v2887 = vpop.f32.mrb[0].mxu0
        %v2888 = vadd.f32 0.0, %v2887
        %v2889 = vpop.f32.mrb[0].mxu0
        %2890 = vmatprep.mubr.f32.mxu0 0.0
        %2891 = vmatmul.mubr.f32.gmra.mrb[0].mxu0 %v2790
        %v2892 = vpop.f32.mrb[0].mxu0
        %v2893 = vadd.f32 0.0, %v2892
        %v2894 = vpop.f32.mrb[0].mxu0
        %2895 = vmatprep.mubr.f32.mxu0 0.0
        %2896 = vmatmul.mubr.f32.gmra.mrb[0].mxu0 %v2791
        %v2897 = vpop.f32.mrb[0].mxu0
        %v2898 = vadd.f32 0.0, %v2897
        %v2899 = vpop.f32.mrb[0].mxu0
        %2900 = vmatprep.mubr.f32.mxu0 0.0
        %2901 = vmatmul.mubr.f32.gmra.mrb[0].mxu0 %v2792
        %v2902 = vpop.f32.mrb[0].mxu0
        %v2903 = vadd.f32 0.0, %v2902
        %v2904 = vpop.f32.mrb[0].mxu0
        %2905 = vmatprep.mubr.f32.mxu0 0.0
        %2906 = vmatmul.mubr.f32.gmra.mrb[0].mxu0 %v2793
        %v2907 = vpop.f32.mrb[0].mxu0
        %v2908 = vadd.f32 0.0, %v2907
        %v2909 = vpop.f32.mrb[0].mxu0
        %2910 = vmatprep.mubr.f32.mxu0 0.0
        %2911 = vmatmul.mubr.f32.gmra.mrb[0].mxu0 %v2794
        %v2912 = vpop.f32.mrb[0].mxu0
        %v2913 = vadd.f32 0.0, %v2912
        %v2914 = vpop.f32.mrb[0].mxu0
        %2915 = vmatprep.mubr.f32.mxu0 0.0
        %2916 = vmatmul.mubr.f32.gmra.mrb[0].mxu0 %v2795
        %v2917 = vpop.f32.mrb[0].mxu0
        %v2918 = vadd.f32 0.0, %v2917
        %v2919 = vpop.f32.mrb[0].mxu0
        %2920 = vmatprep.mubr.f32.mxu0 0.0
        %2921 = vmatmul.mubr.f32.gmra.mrb[0].mxu0 %v2796
        %v2922 = vpop.f32.mrb[0].mxu0
        %v2923 = vadd.f32 0.0, %v2922
        %v2924 = vpop.f32.mrb[0].mxu0
        %2925 = vmatprep.mubr.f32.mxu0 0.0
        %2926 = vmatmul.mubr.f32.gmra.mrb[0].mxu0 %v2797
        %v2927 = vpop.f32.mrb[0].mxu0
        %v2928 = vadd.f32 0.0, %v2927
        %v2929 = vpop.f32.mrb[0].mxu0
        %2930 = vmatprep.mubr.f32.mxu0 0.0
        %2931 = vmatmul.mubr.f32.gmra.mrb[0].mxu0 %v2798
        %v2932 = vpop.f32.mrb[0].mxu0
        %v2933 = vadd.f32 0.0, %v2932
        %v2934 = vpop.f32.mrb[0].mxu0
        %2935 = vmatprep.mubr.f32.mxu0 0.0
        %2936 = vmatmul.mubr.f32.gmra.mrb[0].mxu0 %v2799
        %v2937 = vpop.f32.mrb[0].mxu0
        %v2938 = vadd.f32 0.0, %v2937
        %v2939 = vpop.f32.mrb[0].mxu0
        %2940 = vmatprep.mubr.f32.mxu0 0.0
        %2941 = vmatmul.mubr.f32.gmra.mrb[0].mxu0 %v2800
        %v2942 = vpop.f32.mrb[0].mxu0
        %v2943 = vadd.f32 0.0, %v2942
        %v2944 = vpop.f32.mrb[0].mxu0
        %2945 = vdwg.mxu0
        %2946 = vrot.lane.b32.xlu0 %v966, 64
        %v2947 = vpop.permute.xlu0 %2946
        %2948 = vrot.lane.b32.xlu0 %v972, 64
        %v2949 = vpop.permute.xlu0 %2948
        %2950 = vrot.lane.b32.xlu0 %v978, 64
        %v2951 = vpop.permute.xlu0 %2950
        %2952 = vrot.lane.b32.xlu0 %v984, 64
        %v2953 = vpop.permute.xlu0 %2952
        %2954 = vrot.lane.b32.xlu0 %v990, 64
        %v2955 = vpop.permute.xlu0 %2954
        %2956 = vrot.lane.b32.xlu0 %v996, 64
        %v2957 = vpop.permute.xlu0 %2956
        %2958 = vrot.lane.b32.xlu0 %v1002, 64
        %v2959 = vpop.permute.xlu0 %2958
        %2960 = vrot.lane.b32.xlu0 %v1008, 64
        %v2961 = vpop.permute.xlu0 %2960
        %2962 = vrot.lane.b32.xlu0 %v1014, 64
        %v2963 = vpop.permute.xlu0 %2962
        %2964 = vrot.lane.b32.xlu0 %v1020, 64
        %v2965 = vpop.permute.xlu0 %2964
        %2966 = vrot.lane.b32.xlu0 %v1026, 64
        %v2967 = vpop.permute.xlu0 %2966
        %2968 = vrot.lane.b32.xlu0 %v1032, 64
        %v2969 = vpop.permute.xlu0 %2968
        %2970 = vrot.lane.b32.xlu0 %v1038, 64
        %v2971 = vpop.permute.xlu0 %2970
        %2972 = vrot.lane.b32.xlu0 %v1044, 64
        %v2973 = vpop.permute.xlu0 %2972
        %2974 = vrot.lane.b32.xlu0 %v1050, 64
        %v2975 = vpop.permute.xlu0 %2974
        %2976 = vrot.lane.b32.xlu0 %v1056, 64
        %v2977 = vpop.permute.xlu0 %2976
        %2978 = vrot.lane.b32.xlu0 %v1290, 64
        %v2979 = vpop.permute.xlu0 %2978
        %2980 = vrot.lane.b32.xlu0 %v1296, 64
        %v2981 = vpop.permute.xlu0 %2980
        %2982 = vrot.lane.b32.xlu0 %v1302, 64
        %v2983 = vpop.permute.xlu0 %2982
        %2984 = vrot.lane.b32.xlu0 %v1308, 64
        %v2985 = vpop.permute.xlu0 %2984
        %2986 = vrot.lane.b32.xlu0 %v1314, 64
        %v2987 = vpop.permute.xlu0 %2986
        %2988 = vrot.lane.b32.xlu0 %v1320, 64
        %v2989 = vpop.permute.xlu0 %2988
        %2990 = vrot.lane.b32.xlu0 %v1326, 64
        %v2991 = vpop.permute.xlu0 %2990
        %2992 = vrot.lane.b32.xlu0 %v1332, 64
        %v2993 = vpop.permute.xlu0 %2992
        %2994 = vrot.lane.b32.xlu0 %v1338, 64
        %v2995 = vpop.permute.xlu0 %2994
        %2996 = vrot.lane.b32.xlu0 %v1344, 64
        %v2997 = vpop.permute.xlu0 %2996
        %2998 = vrot.lane.b32.xlu0 %v1350, 64
        %v2999 = vpop.permute.xlu0 %2998
        %3000 = vrot.lane.b32.xlu0 %v1356, 64
        %v3001 = vpop.permute.xlu0 %3000
        %3002 = vrot.lane.b32.xlu0 %v1362, 64
        %v3003 = vpop.permute.xlu0 %3002
        %3004 = vrot.lane.b32.xlu0 %v1368, 64
        %v3005 = vpop.permute.xlu0 %3004
        %3006 = vrot.lane.b32.xlu0 %v1374, 64
        %v3007 = vpop.permute.xlu0 %3006
        %3008 = vrot.lane.b32.xlu0 %v1380, 64
        %v3009 = vpop.permute.xlu0 %3008
        %v3010 = vsel %vm2367, %v2947, 0
        %v3012 = vsel %vm2367, %v2949, 0
        %v3014 = vsel %vm2367, %v2951, 0
        %v3016 = vsel %vm2367, %v2953, 0
        %v3018 = vsel %vm2367, %v2955, 0
        %v3020 = vsel %vm2367, %v2957, 0
        %v3022 = vsel %vm2367, %v2959, 0
        %v3024 = vsel %vm2367, %v2961, 0
        %v3026 = vsel %vm2367, %v2963, 0
        %v3028 = vsel %vm2367, %v2965, 0
        %v3030 = vsel %vm2367, %v2967, 0
        %v3032 = vsel %vm2367, %v2969, 0
        %v3034 = vsel %vm2367, %v2971, 0
        %v3036 = vsel %vm2367, %v2973, 0
        %v3038 = vsel %vm2367, %v2975, 0
        %v3040 = vsel %vm2367, %v2977, 0
        %v3042 = vsel %vm2367, %v2979, 0
        %v3044 = vsel %vm2367, %v2981, 0
        %v3046 = vsel %vm2367, %v2983, 0
        %v3048 = vsel %vm2367, %v2985, 0
        %v3050 = vsel %vm2367, %v2987, 0
        %v3052 = vsel %vm2367, %v2989, 0
        %v3054 = vsel %vm2367, %v2991, 0
        %v3056 = vsel %vm2367, %v2993, 0
        %v3058 = vsel %vm2367, %v2995, 0
        %v3060 = vsel %vm2367, %v2997, 0
        %v3062 = vsel %vm2367, %v2999, 0
        %v3064 = vsel %vm2367, %v3001, 0
        %v3066 = vsel %vm2367, %v3003, 0
        %v3068 = vsel %vm2367, %v3005, 0
        %v3070 = vsel %vm2367, %v3007, 0
        %v3072 = vsel %vm2367, %v3009, 0
        %3074 = vmatprep.subr.mxu0 0.0
        %3075 = vmatpush1.xpose.msra.mxu0 %v3042
        %3076 = vmatprep.subr.mxu0 0.0
        %3077 = vmatpush1.xpose.msra.mxu0 %v3044
        %3078 = vmatprep.subr.mxu0 0.0
        %3079 = vmatpush1.xpose.msra.mxu0 %v3046
        %3080 = vmatprep.subr.mxu0 0.0
        %3081 = vmatpush1.xpose.msra.mxu0 %v3048
        %3082 = vmatprep.subr.mxu0 0.0
        %3083 = vmatpush1.xpose.msra.mxu0 %v3050
        %3084 = vmatprep.subr.mxu0 0.0
        %3085 = vmatpush1.xpose.msra.mxu0 %v3052
        %3086 = vmatprep.subr.mxu0 0.0
        %3087 = vmatpush1.xpose.msra.mxu0 %v3054
        %3088 = vmatprep.subr.mxu0 0.0
        %3089 = vmatpush1.xpose.msra.mxu0 %v3056
        %3090 = vmatprep.subr.mxu0 0.0
        %3091 = vmatpush1.xpose.msra.mxu0 %v3058
        %3092 = vmatprep.subr.mxu0 0.0
        %3093 = vmatpush1.xpose.msra.mxu0 %v3060
        %3094 = vmatprep.subr.mxu0 0.0
        %3095 = vmatpush1.xpose.msra.mxu0 %v3062
        %3096 = vmatprep.subr.mxu0 0.0
        %3097 = vmatpush1.xpose.msra.mxu0 %v3064
        %3098 = vmatprep.subr.mxu0 0.0
        %3099 = vmatpush1.xpose.msra.mxu0 %v3066
        %3100 = vmatprep.subr.mxu0 0.0
        %3101 = vmatpush1.xpose.msra.mxu0 %v3068
        %3102 = vmatprep.subr.mxu0 0.0
        %3103 = vmatpush1.xpose.msra.mxu0 %v3070
        %3104 = vmatprep.subr.mxu0 0.0
        %3105 = vmatpush1.xpose.msra.mxu0 %v3072
        %3106 = vmatprep.subr.mxu0 0.0
        %3107 = vmatpush1.xpose.msra.mxu0 0.0
        %3108 = vmatprep.subr.mxu0 0.0
        %3109 = vmatpush1.xpose.msra.mxu0 0.0
        %3110 = vmatprep.subr.mxu0 0.0
        %3111 = vmatpush1.xpose.msra.mxu0 0.0
        %3112 = vmatprep.subr.mxu0 0.0
        %3113 = vmatpush1.xpose.msra.mxu0 0.0
        %3114 = vmatprep.subr.mxu0 0.0
        %3115 = vmatpush1.xpose.msra.mxu0 0.0
        %3116 = vmatprep.subr.mxu0 0.0
        %3117 = vmatpush1.xpose.msra.mxu0 0.0
        %3118 = vmatprep.subr.mxu0 0.0
        %3119 = vmatpush1.xpose.msra.mxu0 0.0
        %3120 = vmatprep.subr.mxu0 0.0
        %3121 = vmatpush1.xpose.msra.mxu0 0.0
        %3122 = vmatprep.subr.mxu0 0.0
        %3123 = vmatpush1.xpose.msra.mxu0 0.0
        %3124 = vmatprep.subr.mxu0 0.0
        %3125 = vmatpush1.xpose.msra.mxu0 0.0
        %3126 = vmatprep.subr.mxu0 0.0
        %3127 = vmatpush1.xpose.msra.mxu0 0.0
        %3128 = vmatprep.subr.mxu0 0.0
        %3129 = vmatpush1.xpose.msra.mxu0 0.0
        %3130 = vmatprep.subr.mxu0 0.0
        %3131 = vmatpush1.xpose.msra.mxu0 0.0
        %3132 = vmatprep.subr.mxu0 0.0
        %3133 = vmatpush1.xpose.msra.mxu0 0.0
        %3134 = vmatprep.subr.mxu0 0.0
        %3135 = vmatpush1.xpose.msra.mxu0 0.0
        %3136 = vmatprep.subr.mxu0 0.0
        %3137 = vmatpush1.xpose.msra.mxu0 0.0
        %3138 = vmatprep.mubr.f32.mxu0 0.0
        %3139 = vmatmul.mubr.f32.gmra.mrb[0].mxu0 %v3010
        %v3140 = vpop.f32.mrb[0].mxu0
        %v3141 = vadd.f32 %v2351, %v3140
        %v3142 = vpop.f32.mrb[0].mxu0
        %3143 = vmatprep.mubr.f32.mxu0 0.0
        %3144 = vmatmul.mubr.f32.gmra.mrb[0].mxu0 %v3012
        %v3145 = vpop.f32.mrb[0].mxu0
        %v3146 = vadd.f32 %v2352, %v3145
        %v3147 = vpop.f32.mrb[0].mxu0
        %3148 = vmatprep.mubr.f32.mxu0 0.0
        %3149 = vmatmul.mubr.f32.gmra.mrb[0].mxu0 %v3014
        %v3150 = vpop.f32.mrb[0].mxu0
        %v3151 = vadd.f32 %v2353, %v3150
        %v3152 = vpop.f32.mrb[0].mxu0
        %3153 = vmatprep.mubr.f32.mxu0 0.0
        %3154 = vmatmul.mubr.f32.gmra.mrb[0].mxu0 %v3016
        %v3155 = vpop.f32.mrb[0].mxu0
        %v3156 = vadd.f32 %v2354, %v3155
        %v3157 = vpop.f32.mrb[0].mxu0
        %3158 = vmatprep.mubr.f32.mxu0 0.0
        %3159 = vmatmul.mubr.f32.gmra.mrb[0].mxu0 %v3018
        %v3160 = vpop.f32.mrb[0].mxu0
        %v3161 = vadd.f32 %v2355, %v3160
        %v3162 = vpop.f32.mrb[0].mxu0
        %3163 = vmatprep.mubr.f32.mxu0 0.0
        %3164 = vmatmul.mubr.f32.gmra.mrb[0].mxu0 %v3020
        %v3165 = vpop.f32.mrb[0].mxu0
        %v3166 = vadd.f32 %v2356, %v3165
        %v3167 = vpop.f32.mrb[0].mxu0
        %3168 = vmatprep.mubr.f32.mxu0 0.0
        %3169 = vmatmul.mubr.f32.gmra.mrb[0].mxu0 %v3022
        %v3170 = vpop.f32.mrb[0].mxu0
        %v3171 = vadd.f32 %v2357, %v3170
        %v3172 = vpop.f32.mrb[0].mxu0
        %3173 = vmatprep.mubr.f32.mxu0 0.0
        %3174 = vmatmul.mubr.f32.gmra.mrb[0].mxu0 %v3024
        %v3175 = vpop.f32.mrb[0].mxu0
        %v3176 = vadd.f32 %v2358, %v3175
        %v3177 = vpop.f32.mrb[0].mxu0
        %3178 = vmatprep.mubr.f32.mxu0 0.0
        %3179 = vmatmul.mubr.f32.gmra.mrb[0].mxu0 %v3026
        %v3180 = vpop.f32.mrb[0].mxu0
        %v3181 = vadd.f32 %v2359, %v3180
        %v3182 = vpop.f32.mrb[0].mxu0
        %3183 = vmatprep.mubr.f32.mxu0 0.0
        %3184 = vmatmul.mubr.f32.gmra.mrb[0].mxu0 %v3028
        %v3185 = vpop.f32.mrb[0].mxu0
        %v3186 = vadd.f32 %v2360, %v3185
        %v3187 = vpop.f32.mrb[0].mxu0
        %3188 = vmatprep.mubr.f32.mxu0 0.0
        %3189 = vmatmul.mubr.f32.gmra.mrb[0].mxu0 %v3030
        %v3190 = vpop.f32.mrb[0].mxu0
        %v3191 = vadd.f32 %v2361, %v3190
        %v3192 = vpop.f32.mrb[0].mxu0
        %3193 = vmatprep.mubr.f32.mxu0 0.0
        %3194 = vmatmul.mubr.f32.gmra.mrb[0].mxu0 %v3032
        %v3195 = vpop.f32.mrb[0].mxu0
        %v3196 = vadd.f32 %v2362, %v3195
        %v3197 = vpop.f32.mrb[0].mxu0
        %3198 = vmatprep.mubr.f32.mxu0 0.0
        %3199 = vmatmul.mubr.f32.gmra.mrb[0].mxu0 %v3034
        %v3200 = vpop.f32.mrb[0].mxu0
        %v3201 = vadd.f32 %v2363, %v3200
        %v3202 = vpop.f32.mrb[0].mxu0
        %3203 = vmatprep.mubr.f32.mxu0 0.0
        %3204 = vmatmul.mubr.f32.gmra.mrb[0].mxu0 %v3036
        %v3205 = vpop.f32.mrb[0].mxu0
        %v3206 = vadd.f32 %v2364, %v3205
        %v3207 = vpop.f32.mrb[0].mxu0
        %3208 = vmatprep.mubr.f32.mxu0 0.0
        %3209 = vmatmul.mubr.f32.gmra.mrb[0].mxu0 %v3038
        %v3210 = vpop.f32.mrb[0].mxu0
        %v3211 = vadd.f32 %v2365, %v3210
        %v3212 = vpop.f32.mrb[0].mxu0
        %3213 = vmatprep.mubr.f32.mxu0 0.0
        %3214 = vmatmul.mubr.f32.gmra.mrb[0].mxu0 %v3040
        %v3215 = vpop.f32.mrb[0].mxu0
        %v3216 = vadd.f32 %v2366, %v3215
        %v3217 = vpop.f32.mrb[0].mxu0
        %3218 = vdwg.mxu0
        %3219 = vmax.xlane.f32.xlu0 %v3141
        %v3220 = vpop.xlane.xlu0 %3219
        %3221 = vmax.xlane.f32.xlu0 %v3146
        %v3222 = vpop.xlane.xlu0 %3221
        %3223 = vmax.xlane.f32.xlu0 %v3151
        %v3224 = vpop.xlane.xlu0 %3223
        %3225 = vmax.xlane.f32.xlu0 %v3156
        %v3226 = vpop.xlane.xlu0 %3225
        %3227 = vmax.xlane.f32.xlu0 %v3161
        %v3228 = vpop.xlane.xlu0 %3227
        %3229 = vmax.xlane.f32.xlu0 %v3166
        %v3230 = vpop.xlane.xlu0 %3229
        %3231 = vmax.xlane.f32.xlu0 %v3171
        %v3232 = vpop.xlane.xlu0 %3231
        %3233 = vmax.xlane.f32.xlu0 %v3176
        %v3234 = vpop.xlane.xlu0 %3233
        %3235 = vmax.xlane.f32.xlu0 %v3181
        %v3236 = vpop.xlane.xlu0 %3235
        %3237 = vmax.xlane.f32.xlu0 %v3186
        %v3238 = vpop.xlane.xlu0 %3237
        %3239 = vmax.xlane.f32.xlu0 %v3191
        %v3240 = vpop.xlane.xlu0 %3239
        %3241 = vmax.xlane.f32.xlu0 %v3196
        %v3242 = vpop.xlane.xlu0 %3241
        %3243 = vmax.xlane.f32.xlu0 %v3201
        %v3244 = vpop.xlane.xlu0 %3243
        %3245 = vmax.xlane.f32.xlu0 %v3206
        %v3246 = vpop.xlane.xlu0 %3245
        %3247 = vmax.xlane.f32.xlu0 %v3211
        %v3248 = vpop.xlane.xlu0 %3247
        %3249 = vmax.xlane.f32.xlu0 %v3216
        %v3250 = vpop.xlane.xlu0 %3249
        %v3251 = vsub.f32 %v3141, %v3220
        %v3252 = vsub.f32 %v3146, %v3222
        %v3253 = vsub.f32 %v3151, %v3224
        %v3254 = vsub.f32 %v3156, %v3226
        %v3255 = vsub.f32 %v3161, %v3228
        %v3256 = vsub.f32 %v3166, %v3230
        %v3257 = vsub.f32 %v3171, %v3232
        %v3258 = vsub.f32 %v3176, %v3234
        %v3259 = vsub.f32 %v3181, %v3236
        %v3260 = vsub.f32 %v3186, %v3238
        %v3261 = vsub.f32 %v3191, %v3240
        %v3262 = vsub.f32 %v3196, %v3242
        %v3263 = vsub.f32 %v3201, %v3244
        %v3264 = vsub.f32 %v3206, %v3246
        %v3265 = vsub.f32 %v3211, %v3248
        %v3266 = vsub.f32 %v3216, %v3250
        %v3267 = vmul.f32 %v3251, 1.442695
        %v3268 = vpow.pop %v3267
        %v3269 = vmul.f32 %v3252, 1.442695
        %v3270 = vpow.pop %v3269
        %v3271 = vmul.f32 %v3253, 1.442695
        %v3272 = vpow.pop %v3271
        %v3273 = vmul.f32 %v3254, 1.442695
        %v3274 = vpow.pop %v3273
        %v3275 = vmul.f32 %v3255, 1.442695
        %v3276 = vpow.pop %v3275
        %v3277 = vmul.f32 %v3256, 1.442695
        %v3278 = vpow.pop %v3277
        %v3279 = vmul.f32 %v3257, 1.442695
        %v3280 = vpow.pop %v3279
        %v3281 = vmul.f32 %v3258, 1.442695
        %v3282 = vpow.pop %v3281
        %v3283 = vmul.f32 %v3259, 1.442695
        %v3284 = vpow.pop %v3283
        %v3285 = vmul.f32 %v3260, 1.442695
        %v3286 = vpow.pop %v3285
        %v3287 = vmul.f32 %v3261, 1.442695
        %v3288 = vpow.pop %v3287
        %v3289 = vmul.f32 %v3262, 1.442695
        %v3290 = vpow.pop %v3289
        %v3291 = vmul.f32 %v3263, 1.442695
        %v3292 = vpow.pop %v3291
        %v3293 = vmul.f32 %v3264, 1.442695
        %v3294 = vpow.pop %v3293
        %v3295 = vmul.f32 %v3265, 1.442695
        %v3296 = vpow.pop %v3295
        %v3297 = vmul.f32 %v3266, 1.442695
        %v3298 = vpow.pop %v3297
        %3299 = vadd.xlane.f32.xlu0 %v3268
        %v3300 = vpop.xlane.xlu0 %3299
        %3301 = vadd.xlane.f32.xlu0 %v3270
        %v3302 = vpop.xlane.xlu0 %3301
        %3303 = vadd.xlane.f32.xlu0 %v3272
        %v3304 = vpop.xlane.xlu0 %3303
        %3305 = vadd.xlane.f32.xlu0 %v3274
        %v3306 = vpop.xlane.xlu0 %3305
        %3307 = vadd.xlane.f32.xlu0 %v3276
        %v3308 = vpop.xlane.xlu0 %3307
        %3309 = vadd.xlane.f32.xlu0 %v3278
        %v3310 = vpop.xlane.xlu0 %3309
        %3311 = vadd.xlane.f32.xlu0 %v3280
        %v3312 = vpop.xlane.xlu0 %3311
        %3313 = vadd.xlane.f32.xlu0 %v3282
        %v3314 = vpop.xlane.xlu0 %3313
        %3315 = vadd.xlane.f32.xlu0 %v3284
        %v3316 = vpop.xlane.xlu0 %3315
        %3317 = vadd.xlane.f32.xlu0 %v3286
        %v3318 = vpop.xlane.xlu0 %3317
        %3319 = vadd.xlane.f32.xlu0 %v3288
        %v3320 = vpop.xlane.xlu0 %3319
        %3321 = vadd.xlane.f32.xlu0 %v3290
        %v3322 = vpop.xlane.xlu0 %3321
        %3323 = vadd.xlane.f32.xlu0 %v3292
        %v3324 = vpop.xlane.xlu0 %3323
        %3325 = vadd.xlane.f32.xlu0 %v3294
        %v3326 = vpop.xlane.xlu0 %3325
        %3327 = vadd.xlane.f32.xlu0 %v3296
        %v3328 = vpop.xlane.xlu0 %3327
        %3329 = vadd.xlane.f32.xlu0 %v3298
        %v3330 = vpop.xlane.xlu0 %3329
        %v3331 = vrcp.pop %v3300
        %v3332 = vrcp.pop %v3302
        %v3333 = vrcp.pop %v3304
        %v3334 = vrcp.pop %v3306
        %v3335 = vrcp.pop %v3308
        %v3336 = vrcp.pop %v3310
        %v3337 = vrcp.pop %v3312
        %v3338 = vrcp.pop %v3314
        %v3339 = vrcp.pop %v3316
        %v3340 = vrcp.pop %v3318
        %v3341 = vrcp.pop %v3320
        %v3342 = vrcp.pop %v3322
        %v3343 = vrcp.pop %v3324
        %v3344 = vrcp.pop %v3326
        %v3345 = vrcp.pop %v3328
        %v3346 = vrcp.pop %v3330
        %v3347 = vmul.f32 %v3300, %v3331
        %v3348 = vmul.f32 %v3302, %v3332
        %v3349 = vmul.f32 %v3304, %v3333
        %v3350 = vmul.f32 %v3306, %v3334
        %v3351 = vmul.f32 %v3308, %v3335
        %v3352 = vmul.f32 %v3310, %v3336
        %v3353 = vmul.f32 %v3312, %v3337
        %v3354 = vmul.f32 %v3314, %v3338
        %v3355 = vmul.f32 %v3316, %v3339
        %v3356 = vmul.f32 %v3318, %v3340
        %v3357 = vmul.f32 %v3320, %v3341
        %v3358 = vmul.f32 %v3322, %v3342
        %v3359 = vmul.f32 %v3324, %v3343
        %v3360 = vmul.f32 %v3326, %v3344
        %v3361 = vmul.f32 %v3328, %v3345
        %v3362 = vmul.f32 %v3330, %v3346
        %v3363 = vsub.f32 2.0, %v3347
        %v3364 = vsub.f32 2.0, %v3348
        %v3365 = vsub.f32 2.0, %v3349
        %v3366 = vsub.f32 2.0, %v3350
        %v3367 = vsub.f32 2.0, %v3351
        %v3368 = vsub.f32 2.0, %v3352
        %v3369 = vsub.f32 2.0, %v3353
        %v3370 = vsub.f32 2.0, %v3354
        %v3371 = vsub.f32 2.0, %v3355
        %v3372 = vsub.f32 2.0, %v3356
        %v3373 = vsub.f32 2.0, %v3357
        %v3374 = vsub.f32 2.0, %v3358
        %v3375 = vsub.f32 2.0, %v3359
        %v3376 = vsub.f32 2.0, %v3360
        %v3377 = vsub.f32 2.0, %v3361
        %v3378 = vsub.f32 2.0, %v3362
        %v3379 = vmul.f32 %v3331, %v3363
        %v3380 = vmul.f32 %v3332, %v3364
        %v3381 = vmul.f32 %v3333, %v3365
        %v3382 = vmul.f32 %v3334, %v3366
        %v3383 = vmul.f32 %v3335, %v3367
        %v3384 = vmul.f32 %v3336, %v3368
        %v3385 = vmul.f32 %v3337, %v3369
        %v3386 = vmul.f32 %v3338, %v3370
        %v3387 = vmul.f32 %v3339, %v3371
        %v3388 = vmul.f32 %v3340, %v3372
        %v3389 = vmul.f32 %v3341, %v3373
        %v3390 = vmul.f32 %v3342, %v3374
        %v3391 = vmul.f32 %v3343, %v3375
        %v3392 = vmul.f32 %v3344, %v3376
        %v3393 = vmul.f32 %v3345, %v3377
        %v3394 = vmul.f32 %v3346, %v3378
        %v3395 = vmul.f32 %v3268, %v3379
        %v3396 = vmul.f32 %v3270, %v3380
        %v3397 = vmul.f32 %v3272, %v3381
        %v3398 = vmul.f32 %v3274, %v3382
        %v3399 = vmul.f32 %v3276, %v3383
        %v3400 = vmul.f32 %v3278, %v3384
        %v3401 = vmul.f32 %v3280, %v3385
        %v3402 = vmul.f32 %v3282, %v3386
        %v3403 = vmul.f32 %v3284, %v3387
        %v3404 = vmul.f32 %v3286, %v3388
        %v3405 = vmul.f32 %v3288, %v3389
        %v3406 = vmul.f32 %v3290, %v3390
        %v3407 = vmul.f32 %v3292, %v3391
        %v3408 = vmul.f32 %v3294, %v3392
        %v3409 = vmul.f32 %v3296, %v3393
        %v3410 = vmul.f32 %v3298, %v3394
        %3427 = vrot.lane.b32.xlu0 %v1932, 64
        %v3428 = vpop.permute.xlu0 %3427
        %3429 = vrot.lane.b32.xlu0 %v1938, 64
        %v3430 = vpop.permute.xlu0 %3429
        %3431 = vrot.lane.b32.xlu0 %v1944, 64
        %v3432 = vpop.permute.xlu0 %3431
        %3433 = vrot.lane.b32.xlu0 %v1950, 64
        %v3434 = vpop.permute.xlu0 %3433
        %3435 = vrot.lane.b32.xlu0 %v1956, 64
        %v3436 = vpop.permute.xlu0 %3435
        %3437 = vrot.lane.b32.xlu0 %v1962, 64
        %v3438 = vpop.permute.xlu0 %3437
        %3439 = vrot.lane.b32.xlu0 %v1968, 64
        %v3440 = vpop.permute.xlu0 %3439
        %3441 = vrot.lane.b32.xlu0 %v1974, 64
        %v3442 = vpop.permute.xlu0 %3441
        %3443 = vrot.lane.b32.xlu0 %v1980, 64
        %v3444 = vpop.permute.xlu0 %3443
        %3445 = vrot.lane.b32.xlu0 %v1986, 64
        %v3446 = vpop.permute.xlu0 %3445
        %3447 = vrot.lane.b32.xlu0 %v1992, 64
        %v3448 = vpop.permute.xlu0 %3447
        %3449 = vrot.lane.b32.xlu0 %v1998, 64
        %v3450 = vpop.permute.xlu0 %3449
        %3451 = vrot.lane.b32.xlu0 %v2004, 64
        %v3452 = vpop.permute.xlu0 %3451
        %3453 = vrot.lane.b32.xlu0 %v2010, 64
        %v3454 = vpop.permute.xlu0 %3453
        %3455 = vrot.lane.b32.xlu0 %v2016, 64
        %v3456 = vpop.permute.xlu0 %3455
        %3457 = vrot.lane.b32.xlu0 %v2022, 64
        %v3458 = vpop.permute.xlu0 %3457
        %3475 = vmatprep.subr.mxu0 0.0
        %3476 = vmatpush1.msra.mxu0 %v3428
        %3477 = vmatprep.subr.mxu0 0.0
        %3478 = vmatpush1.msra.mxu0 %v3430
        %3479 = vmatprep.subr.mxu0 0.0
        %3480 = vmatpush1.msra.mxu0 %v3432
        %3481 = vmatprep.subr.mxu0 0.0
        %3482 = vmatpush1.msra.mxu0 %v3434
        %3483 = vmatprep.subr.mxu0 0.0
        %3484 = vmatpush1.msra.mxu0 %v3436
        %3485 = vmatprep.subr.mxu0 0.0
        %3486 = vmatpush1.msra.mxu0 %v3438
        %3487 = vmatprep.subr.mxu0 0.0
        %3488 = vmatpush1.msra.mxu0 %v3440
        %3489 = vmatprep.subr.mxu0 0.0
        %3490 = vmatpush1.msra.mxu0 %v3442
        %3491 = vmatprep.subr.mxu0 0.0
        %3492 = vmatpush1.msra.mxu0 %v3444
        %3493 = vmatprep.subr.mxu0 0.0
        %3494 = vmatpush1.msra.mxu0 %v3446
        %3495 = vmatprep.subr.mxu0 0.0
        %3496 = vmatpush1.msra.mxu0 %v3448
        %3497 = vmatprep.subr.mxu0 0.0
        %3498 = vmatpush1.msra.mxu0 %v3450
        %3499 = vmatprep.subr.mxu0 0.0
        %3500 = vmatpush1.msra.mxu0 %v3452
        %3501 = vmatprep.subr.mxu0 0.0
        %3502 = vmatpush1.msra.mxu0 %v3454
        %3503 = vmatprep.subr.mxu0 0.0
        %3504 = vmatpush1.msra.mxu0 %v3456
        %3505 = vmatprep.subr.mxu0 0.0
        %3506 = vmatpush1.msra.mxu0 %v3458
        %3507 = vmatprep.subr.mxu0 0.0
        %3508 = vmatpush1.msra.mxu0 0.0
        %3509 = vmatprep.subr.mxu0 0.0
        %3510 = vmatpush1.msra.mxu0 0.0
        %3511 = vmatprep.subr.mxu0 0.0
        %3512 = vmatpush1.msra.mxu0 0.0
        %3513 = vmatprep.subr.mxu0 0.0
        %3514 = vmatpush1.msra.mxu0 0.0
        %3515 = vmatprep.subr.mxu0 0.0
        %3516 = vmatpush1.msra.mxu0 0.0
        %3517 = vmatprep.subr.mxu0 0.0
        %3518 = vmatpush1.msra.mxu0 0.0
        %3519 = vmatprep.subr.mxu0 0.0
        %3520 = vmatpush1.msra.mxu0 0.0
        %3521 = vmatprep.subr.mxu0 0.0
        %3522 = vmatpush1.msra.mxu0 0.0
        %3523 = vmatprep.subr.mxu0 0.0
        %3524 = vmatpush1.msra.mxu0 0.0
        %3525 = vmatprep.subr.mxu0 0.0
        %3526 = vmatpush1.msra.mxu0 0.0
        %3527 = vmatprep.subr.mxu0 0.0
        %3528 = vmatpush1.msra.mxu0 0.0
        %3529 = vmatprep.subr.mxu0 0.0
        %3530 = vmatpush1.msra.mxu0 0.0
        %3531 = vmatprep.subr.mxu0 0.0
        %3532 = vmatpush1.msra.mxu0 0.0
        %3533 = vmatprep.subr.mxu0 0.0
        %3534 = vmatpush1.msra.mxu0 0.0
        %3535 = vmatprep.subr.mxu0 0.0
        %3536 = vmatpush1.msra.mxu0 0.0
        %3537 = vmatprep.subr.mxu0 0.0
        %3538 = vmatpush1.msra.mxu0 0.0
        %3539 = vmatprep.mubr.f32.mxu0 0.0
        %3540 = vmatmul.mubr.f32.gmra.mrb[0].mxu0 %v3395
        %v3541 = vpop.f32.mrb[0].mxu0
        %v3542 = vadd.f32 0.0, %v3541
        %v3543 = vpop.f32.mrb[0].mxu0
        %3544 = vmatprep.mubr.f32.mxu0 0.0
        %3545 = vmatmul.mubr.f32.gmra.mrb[0].mxu0 %v3396
        %v3546 = vpop.f32.mrb[0].mxu0
        %v3547 = vadd.f32 0.0, %v3546
        %v3548 = vpop.f32.mrb[0].mxu0
        %3549 = vmatprep.mubr.f32.mxu0 0.0
        %3550 = vmatmul.mubr.f32.gmra.mrb[0].mxu0 %v3397
        %v3551 = vpop.f32.mrb[0].mxu0
        %v3552 = vadd.f32 0.0, %v3551
        %v3553 = vpop.f32.mrb[0].mxu0
        %3554 = vmatprep.mubr.f32.mxu0 0.0
        %3555 = vmatmul.mubr.f32.gmra.mrb[0].mxu0 %v3398
        %v3556 = vpop.f32.mrb[0].mxu0
        %v3557 = vadd.f32 0.0, %v3556
        %v3558 = vpop.f32.mrb[0].mxu0
        %3559 = vmatprep.mubr.f32.mxu0 0.0
        %3560 = vmatmul.mubr.f32.gmra.mrb[0].mxu0 %v3399
        %v3561 = vpop.f32.mrb[0].mxu0
        %v3562 = vadd.f32 0.0, %v3561
        %v3563 = vpop.f32.mrb[0].mxu0
        %3564 = vmatprep.mubr.f32.mxu0 0.0
        %3565 = vmatmul.mubr.f32.gmra.mrb[0].mxu0 %v3400
        %v3566 = vpop.f32.mrb[0].mxu0
        %v3567 = vadd.f32 0.0, %v3566
        %v3568 = vpop.f32.mrb[0].mxu0
        %3569 = vmatprep.mubr.f32.mxu0 0.0
        %3570 = vmatmul.mubr.f32.gmra.mrb[0].mxu0 %v3401
        %v3571 = vpop.f32.mrb[0].mxu0
        %v3572 = vadd.f32 0.0, %v3571
        %v3573 = vpop.f32.mrb[0].mxu0
        %3574 = vmatprep.mubr.f32.mxu0 0.0
        %3575 = vmatmul.mubr.f32.gmra.mrb[0].mxu0 %v3402
        %v3576 = vpop.f32.mrb[0].mxu0
        %v3577 = vadd.f32 0.0, %v3576
        %v3578 = vpop.f32.mrb[0].mxu0
        %3579 = vmatprep.mubr.f32.mxu0 0.0
        %3580 = vmatmul.mubr.f32.gmra.mrb[0].mxu0 %v3403
        %v3581 = vpop.f32.mrb[0].mxu0
        %v3582 = vadd.f32 0.0, %v3581
        %v3583 = vpop.f32.mrb[0].mxu0
        %3584 = vmatprep.mubr.f32.mxu0 0.0
        %3585 = vmatmul.mubr.f32.gmra.mrb[0].mxu0 %v3404
        %v3586 = vpop.f32.mrb[0].mxu0
        %v3587 = vadd.f32 0.0, %v3586
        %v3588 = vpop.f32.mrb[0].mxu0
        %3589 = vmatprep.mubr.f32.mxu0 0.0
        %3590 = vmatmul.mubr.f32.gmra.mrb[0].mxu0 %v3405
        %v3591 = vpop.f32.mrb[0].mxu0
        %v3592 = vadd.f32 0.0, %v3591
        %v3593 = vpop.f32.mrb[0].mxu0
        %3594 = vmatprep.mubr.f32.mxu0 0.0
        %3595 = vmatmul.mubr.f32.gmra.mrb[0].mxu0 %v3406
        %v3596 = vpop.f32.mrb[0].mxu0
        %v3597 = vadd.f32 0.0, %v3596
        %v3598 = vpop.f32.mrb[0].mxu0
        %3599 = vmatprep.mubr.f32.mxu0 0.0
        %3600 = vmatmul.mubr.f32.gmra.mrb[0].mxu0 %v3407
        %v3601 = vpop.f32.mrb[0].mxu0
        %v3602 = vadd.f32 0.0, %v3601
        %v3603 = vpop.f32.mrb[0].mxu0
        %3604 = vmatprep.mubr.f32.mxu0 0.0
        %3605 = vmatmul.mubr.f32.gmra.mrb[0].mxu0 %v3408
        %v3606 = vpop.f32.mrb[0].mxu0
        %v3607 = vadd.f32 0.0, %v3606
        %v3608 = vpop.f32.mrb[0].mxu0
        %3609 = vmatprep.mubr.f32.mxu0 0.0
        %3610 = vmatmul.mubr.f32.gmra.mrb[0].mxu0 %v3409
        %v3611 = vpop.f32.mrb[0].mxu0
        %v3612 = vadd.f32 0.0, %v3611
        %v3613 = vpop.f32.mrb[0].mxu0
        %3614 = vmatprep.mubr.f32.mxu0 0.0
        %3615 = vmatmul.mubr.f32.gmra.mrb[0].mxu0 %v3410
        %v3616 = vpop.f32.mrb[0].mxu0
        %v3617 = vadd.f32 0.0, %v3616
        %v3618 = vpop.f32.mrb[0].mxu0
        %3619 = vdwg.mxu0
        %3636 = vrot.lane.b32.xlu0 %v3542, 64
        %v3637 = vpop.permute.xlu0 %3636
        %3638 = vrot.lane.b32.xlu0 %v3547, 64
        %v3639 = vpop.permute.xlu0 %3638
        %3640 = vrot.lane.b32.xlu0 %v3552, 64
        %v3641 = vpop.permute.xlu0 %3640
        %3642 = vrot.lane.b32.xlu0 %v3557, 64
        %v3643 = vpop.permute.xlu0 %3642
        %3644 = vrot.lane.b32.xlu0 %v3562, 64
        %v3645 = vpop.permute.xlu0 %3644
        %3646 = vrot.lane.b32.xlu0 %v3567, 64
        %v3647 = vpop.permute.xlu0 %3646
        %3648 = vrot.lane.b32.xlu0 %v3572, 64
        %v3649 = vpop.permute.xlu0 %3648
        %3650 = vrot.lane.b32.xlu0 %v3577, 64
        %v3651 = vpop.permute.xlu0 %3650
        %3652 = vrot.lane.b32.xlu0 %v3582, 64
        %v3653 = vpop.permute.xlu0 %3652
        %3654 = vrot.lane.b32.xlu0 %v3587, 64
        %v3655 = vpop.permute.xlu0 %3654
        %3656 = vrot.lane.b32.xlu0 %v3592, 64
        %v3657 = vpop.permute.xlu0 %3656
        %3658 = vrot.lane.b32.xlu0 %v3597, 64
        %v3659 = vpop.permute.xlu0 %3658
        %3660 = vrot.lane.b32.xlu0 %v3602, 64
        %v3661 = vpop.permute.xlu0 %3660
        %3662 = vrot.lane.b32.xlu0 %v3607, 64
        %v3663 = vpop.permute.xlu0 %3662
        %3664 = vrot.lane.b32.xlu0 %v3612, 64
        %v3665 = vpop.permute.xlu0 %3664
        %3666 = vrot.lane.b32.xlu0 %v3617, 64
        %v3667 = vpop.permute.xlu0 %3666
        %v3684 = vsel %vm2367, %v2868, %v3637
        %v3685 = vsel %vm2367, %v2873, %v3639
        %v3686 = vsel %vm2367, %v2878, %v3641
        %v3687 = vsel %vm2367, %v2883, %v3643
        %v3688 = vsel %vm2367, %v2888, %v3645
        %v3689 = vsel %vm2367, %v2893, %v3647
        %v3690 = vsel %vm2367, %v2898, %v3649
        %v3691 = vsel %vm2367, %v2903, %v3651
        %v3692 = vsel %vm2367, %v2908, %v3653
        %v3693 = vsel %vm2367, %v2913, %v3655
        %v3694 = vsel %vm2367, %v2918, %v3657
        %v3695 = vsel %vm2367, %v2923, %v3659
        %v3696 = vsel %vm2367, %v2928, %v3661
        %v3697 = vsel %vm2367, %v2933, %v3663
        %v3698 = vsel %vm2367, %v2938, %v3665
        %v3699 = vsel %vm2367, %v2943, %v3667
        %3700 = vst [vmem:[#allocation2] sm:$0xff] %v3684
        %3701 = vst [vmem:[#allocation2 + $0x18] sm:$0xff] %v3685
        %3702 = vst [vmem:[#allocation2 + $0x30] sm:$0xff] %v3686
        %3703 = vst [vmem:[#allocation2 + $0x48] sm:$0xff] %v3687
        %3704 = vst [vmem:[#allocation2 + $0x60] sm:$0xff] %v3688
        %3705 = vst [vmem:[#allocation2 + $0x78] sm:$0xff] %v3689
        %3706 = vst [vmem:[#allocation2 + $0x90] sm:$0xff] %v3690
        %3707 = vst [vmem:[#allocation2 + $0xa8] sm:$0xff] %v3691
        %3708 = vst [vmem:[#allocation2 + $0xc0] sm:$0xff] %v3692
        %3709 = vst [vmem:[#allocation2 + $0xd8] sm:$0xff] %v3693
        %3710 = vst [vmem:[#allocation2 + $0xf0] sm:$0xff] %v3694
        %3711 = vst [vmem:[#allocation2 + $0x108] sm:$0xff] %v3695
        %3712 = vst [vmem:[#allocation2 + $0x120] sm:$0xff] %v3696
        %3713 = vst [vmem:[#allocation2 + $0x138] sm:$0xff] %v3697
        %3714 = vst [vmem:[#allocation2 + $0x150] sm:$0xff] %v3698
        %3715 = vst [vmem:[#allocation2 + $0x168] sm:$0xff] %v3699
        %v3717 = vsel %vm2367, %v968, 0
        %v3720 = vsel %vm2367, %v974, 0
        %v3723 = vsel %vm2367, %v980, 0
        %v3726 = vsel %vm2367, %v986, 0
        %v3729 = vsel %vm2367, %v992, 0
        %v3732 = vsel %vm2367, %v998, 0
        %v3735 = vsel %vm2367, %v1004, 0
        %v3738 = vsel %vm2367, %v1010, 0
        %v3741 = vsel %vm2367, %v1016, 0
        %v3744 = vsel %vm2367, %v1022, 0
        %v3747 = vsel %vm2367, %v1028, 0
        %v3750 = vsel %vm2367, %v1034, 0
        %v3753 = vsel %vm2367, %v1040, 0
        %v3756 = vsel %vm2367, %v1046, 0
        %v3759 = vsel %vm2367, %v1052, 0
        %v3762 = vsel %vm2367, %v1058, 0
        %v3765 = vsel %vm2367, %v1610, 0
        %v3768 = vsel %vm2367, %v1616, 0
        %v3771 = vsel %vm2367, %v1622, 0
        %v3774 = vsel %vm2367, %v1628, 0
        %v3777 = vsel %vm2367, %v1634, 0
        %v3780 = vsel %vm2367, %v1640, 0
        %v3783 = vsel %vm2367, %v1646, 0
        %v3786 = vsel %vm2367, %v1652, 0
        %v3789 = vsel %vm2367, %v1658, 0
        %v3792 = vsel %vm2367, %v1664, 0
        %v3795 = vsel %vm2367, %v1670, 0
        %v3798 = vsel %vm2367, %v1676, 0
        %v3801 = vsel %vm2367, %v1682, 0
        %v3804 = vsel %vm2367, %v1688, 0
        %v3807 = vsel %vm2367, %v1694, 0
        %v3810 = vsel %vm2367, %v1700, 0
        %3812 = vmatprep.subr.mxu0 0.0
        %3813 = vmatpush1.xpose.msra.mxu0 %v3765
        %3814 = vmatprep.subr.mxu0 0.0
        %3815 = vmatpush1.xpose.msra.mxu0 %v3768
        %3816 = vmatprep.subr.mxu0 0.0
        %3817 = vmatpush1.xpose.msra.mxu0 %v3771
        %3818 = vmatprep.subr.mxu0 0.0
        %3819 = vmatpush1.xpose.msra.mxu0 %v3774
        %3820 = vmatprep.subr.mxu0 0.0
        %3821 = vmatpush1.xpose.msra.mxu0 %v3777
        %3822 = vmatprep.subr.mxu0 0.0
        %3823 = vmatpush1.xpose.msra.mxu0 %v3780
        %3824 = vmatprep.subr.mxu0 0.0
        %3825 = vmatpush1.xpose.msra.mxu0 %v3783
        %3826 = vmatprep.subr.mxu0 0.0
        %3827 = vmatpush1.xpose.msra.mxu0 %v3786
        %3828 = vmatprep.subr.mxu0 0.0
        %3829 = vmatpush1.xpose.msra.mxu0 %v3789
        %3830 = vmatprep.subr.mxu0 0.0
        %3831 = vmatpush1.xpose.msra.mxu0 %v3792
        %3832 = vmatprep.subr.mxu0 0.0
        %3833 = vmatpush1.xpose.msra.mxu0 %v3795
        %3834 = vmatprep.subr.mxu0 0.0
        %3835 = vmatpush1.xpose.msra.mxu0 %v3798
        %3836 = vmatprep.subr.mxu0 0.0
        %3837 = vmatpush1.xpose.msra.mxu0 %v3801
        %3838 = vmatprep.subr.mxu0 0.0
        %3839 = vmatpush1.xpose.msra.mxu0 %v3804
        %3840 = vmatprep.subr.mxu0 0.0
        %3841 = vmatpush1.xpose.msra.mxu0 %v3807
        %3842 = vmatprep.subr.mxu0 0.0
        %3843 = vmatpush1.xpose.msra.mxu0 %v3810
        %3844 = vmatprep.subr.mxu0 0.0
        %3845 = vmatpush1.xpose.msra.mxu0 0.0
        %3846 = vmatprep.subr.mxu0 0.0
        %3847 = vmatpush1.xpose.msra.mxu0 0.0
        %3848 = vmatprep.subr.mxu0 0.0
        %3849 = vmatpush1.xpose.msra.mxu0 0.0
        %3850 = vmatprep.subr.mxu0 0.0
        %3851 = vmatpush1.xpose.msra.mxu0 0.0
        %3852 = vmatprep.subr.mxu0 0.0
        %3853 = vmatpush1.xpose.msra.mxu0 0.0
        %3854 = vmatprep.subr.mxu0 0.0
        %3855 = vmatpush1.xpose.msra.mxu0 0.0
        %3856 = vmatprep.subr.mxu0 0.0
        %3857 = vmatpush1.xpose.msra.mxu0 0.0
        %3858 = vmatprep.subr.mxu0 0.0
        %3859 = vmatpush1.xpose.msra.mxu0 0.0
        %3860 = vmatprep.subr.mxu0 0.0
        %3861 = vmatpush1.xpose.msra.mxu0 0.0
        %3862 = vmatprep.subr.mxu0 0.0
        %3863 = vmatpush1.xpose.msra.mxu0 0.0
        %3864 = vmatprep.subr.mxu0 0.0
        %3865 = vmatpush1.xpose.msra.mxu0 0.0
        %3866 = vmatprep.subr.mxu0 0.0
        %3867 = vmatpush1.xpose.msra.mxu0 0.0
        %3868 = vmatprep.subr.mxu0 0.0
        %3869 = vmatpush1.xpose.msra.mxu0 0.0
        %3870 = vmatprep.subr.mxu0 0.0
        %3871 = vmatpush1.xpose.msra.mxu0 0.0
        %3872 = vmatprep.subr.mxu0 0.0
        %3873 = vmatpush1.xpose.msra.mxu0 0.0
        %3874 = vmatprep.subr.mxu0 0.0
        %3875 = vmatpush1.xpose.msra.mxu0 0.0
        %3876 = vmatprep.mubr.f32.mxu0 0.0
        %3877 = vmatmul.mubr.f32.gmra.mrb[0].mxu0 %v3717
        %v3878 = vpop.f32.mrb[0].mxu0
        %v3879 = vadd.f32 %v2351, %v3878
        %v3880 = vpop.f32.mrb[0].mxu0
        %3881 = vmatprep.mubr.f32.mxu0 0.0
        %3882 = vmatmul.mubr.f32.gmra.mrb[0].mxu0 %v3720
        %v3883 = vpop.f32.mrb[0].mxu0
        %v3884 = vadd.f32 %v2352, %v3883
        %v3885 = vpop.f32.mrb[0].mxu0
        %3886 = vmatprep.mubr.f32.mxu0 0.0
        %3887 = vmatmul.mubr.f32.gmra.mrb[0].mxu0 %v3723
        %v3888 = vpop.f32.mrb[0].mxu0
        %v3889 = vadd.f32 %v2353, %v3888
        %v3890 = vpop.f32.mrb[0].mxu0
        %3891 = vmatprep.mubr.f32.mxu0 0.0
        %3892 = vmatmul.mubr.f32.gmra.mrb[0].mxu0 %v3726
        %v3893 = vpop.f32.mrb[0].mxu0
        %v3894 = vadd.f32 %v2354, %v3893
        %v3895 = vpop.f32.mrb[0].mxu0
        %3896 = vmatprep.mubr.f32.mxu0 0.0
        %3897 = vmatmul.mubr.f32.gmra.mrb[0].mxu0 %v3729
        %v3898 = vpop.f32.mrb[0].mxu0
        %v3899 = vadd.f32 %v2355, %v3898
        %v3900 = vpop.f32.mrb[0].mxu0
        %3901 = vmatprep.mubr.f32.mxu0 0.0
        %3902 = vmatmul.mubr.f32.gmra.mrb[0].mxu0 %v3732
        %v3903 = vpop.f32.mrb[0].mxu0
        %v3904 = vadd.f32 %v2356, %v3903
        %v3905 = vpop.f32.mrb[0].mxu0
        %3906 = vmatprep.mubr.f32.mxu0 0.0
        %3907 = vmatmul.mubr.f32.gmra.mrb[0].mxu0 %v3735
        %v3908 = vpop.f32.mrb[0].mxu0
        %v3909 = vadd.f32 %v2357, %v3908
        %v3910 = vpop.f32.mrb[0].mxu0
        %3911 = vmatprep.mubr.f32.mxu0 0.0
        %3912 = vmatmul.mubr.f32.gmra.mrb[0].mxu0 %v3738
        %v3913 = vpop.f32.mrb[0].mxu0
        %v3914 = vadd.f32 %v2358, %v3913
        %v3915 = vpop.f32.mrb[0].mxu0
        %3916 = vmatprep.mubr.f32.mxu0 0.0
        %3917 = vmatmul.mubr.f32.gmra.mrb[0].mxu0 %v3741
        %v3918 = vpop.f32.mrb[0].mxu0
        %v3919 = vadd.f32 %v2359, %v3918
        %v3920 = vpop.f32.mrb[0].mxu0
        %3921 = vmatprep.mubr.f32.mxu0 0.0
        %3922 = vmatmul.mubr.f32.gmra.mrb[0].mxu0 %v3744
        %v3923 = vpop.f32.mrb[0].mxu0
        %v3924 = vadd.f32 %v2360, %v3923
        %v3925 = vpop.f32.mrb[0].mxu0
        %3926 = vmatprep.mubr.f32.mxu0 0.0
        %3927 = vmatmul.mubr.f32.gmra.mrb[0].mxu0 %v3747
        %v3928 = vpop.f32.mrb[0].mxu0
        %v3929 = vadd.f32 %v2361, %v3928
        %v3930 = vpop.f32.mrb[0].mxu0
        %3931 = vmatprep.mubr.f32.mxu0 0.0
        %3932 = vmatmul.mubr.f32.gmra.mrb[0].mxu0 %v3750
        %v3933 = vpop.f32.mrb[0].mxu0
        %v3934 = vadd.f32 %v2362, %v3933
        %v3935 = vpop.f32.mrb[0].mxu0
        %3936 = vmatprep.mubr.f32.mxu0 0.0
        %3937 = vmatmul.mubr.f32.gmra.mrb[0].mxu0 %v3753
        %v3938 = vpop.f32.mrb[0].mxu0
        %v3939 = vadd.f32 %v2363, %v3938
        %v3940 = vpop.f32.mrb[0].mxu0
        %3941 = vmatprep.mubr.f32.mxu0 0.0
        %3942 = vmatmul.mubr.f32.gmra.mrb[0].mxu0 %v3756
        %v3943 = vpop.f32.mrb[0].mxu0
        %v3944 = vadd.f32 %v2364, %v3943
        %v3945 = vpop.f32.mrb[0].mxu0
        %3946 = vmatprep.mubr.f32.mxu0 0.0
        %3947 = vmatmul.mubr.f32.gmra.mrb[0].mxu0 %v3759
        %v3948 = vpop.f32.mrb[0].mxu0
        %v3949 = vadd.f32 %v2365, %v3948
        %v3950 = vpop.f32.mrb[0].mxu0
        %3951 = vmatprep.mubr.f32.mxu0 0.0
        %3952 = vmatmul.mubr.f32.gmra.mrb[0].mxu0 %v3762
        %v3953 = vpop.f32.mrb[0].mxu0
        %v3954 = vadd.f32 %v2366, %v3953
        %v3955 = vpop.f32.mrb[0].mxu0
        %3956 = vdwg.mxu0
        %3957 = vmax.xlane.f32.xlu0 %v3879
        %v3958 = vpop.xlane.xlu0 %3957
        %3959 = vmax.xlane.f32.xlu0 %v3884
        %v3960 = vpop.xlane.xlu0 %3959
        %3961 = vmax.xlane.f32.xlu0 %v3889
        %v3962 = vpop.xlane.xlu0 %3961
        %3963 = vmax.xlane.f32.xlu0 %v3894
        %v3964 = vpop.xlane.xlu0 %3963
        %3965 = vmax.xlane.f32.xlu0 %v3899
        %v3966 = vpop.xlane.xlu0 %3965
        %3967 = vmax.xlane.f32.xlu0 %v3904
        %v3968 = vpop.xlane.xlu0 %3967
        %3969 = vmax.xlane.f32.xlu0 %v3909
        %v3970 = vpop.xlane.xlu0 %3969
        %3971 = vmax.xlane.f32.xlu0 %v3914
        %v3972 = vpop.xlane.xlu0 %3971
        %3973 = vmax.xlane.f32.xlu0 %v3919
        %v3974 = vpop.xlane.xlu0 %3973
        %3975 = vmax.xlane.f32.xlu0 %v3924
        %v3976 = vpop.xlane.xlu0 %3975
        %3977 = vmax.xlane.f32.xlu0 %v3929
        %v3978 = vpop.xlane.xlu0 %3977
        %3979 = vmax.xlane.f32.xlu0 %v3934
        %v3980 = vpop.xlane.xlu0 %3979
        %3981 = vmax.xlane.f32.xlu0 %v3939
        %v3982 = vpop.xlane.xlu0 %3981
        %3983 = vmax.xlane.f32.xlu0 %v3944
        %v3984 = vpop.xlane.xlu0 %3983
        %3985 = vmax.xlane.f32.xlu0 %v3949
        %v3986 = vpop.xlane.xlu0 %3985
        %3987 = vmax.xlane.f32.xlu0 %v3954
        %v3988 = vpop.xlane.xlu0 %3987
        %v3989 = vsub.f32 %v3879, %v3958
        %v3990 = vsub.f32 %v3884, %v3960
        %v3991 = vsub.f32 %v3889, %v3962
        %v3992 = vsub.f32 %v3894, %v3964
        %v3993 = vsub.f32 %v3899, %v3966
        %v3994 = vsub.f32 %v3904, %v3968
        %v3995 = vsub.f32 %v3909, %v3970
        %v3996 = vsub.f32 %v3914, %v3972
        %v3997 = vsub.f32 %v3919, %v3974
        %v3998 = vsub.f32 %v3924, %v3976
        %v3999 = vsub.f32 %v3929, %v3978
        %v4000 = vsub.f32 %v3934, %v3980
        %v4001 = vsub.f32 %v3939, %v3982
        %v4002 = vsub.f32 %v3944, %v3984
        %v4003 = vsub.f32 %v3949, %v3986
        %v4004 = vsub.f32 %v3954, %v3988
        %v4005 = vmul.f32 %v3989, 1.442695
        %v4006 = vpow.pop %v4005
        %v4007 = vmul.f32 %v3990, 1.442695
        %v4008 = vpow.pop %v4007
        %v4009 = vmul.f32 %v3991, 1.442695
        %v4010 = vpow.pop %v4009
        %v4011 = vmul.f32 %v3992, 1.442695
        %v4012 = vpow.pop %v4011
        %v4013 = vmul.f32 %v3993, 1.442695
        %v4014 = vpow.pop %v4013
        %v4015 = vmul.f32 %v3994, 1.442695
        %v4016 = vpow.pop %v4015
        %v4017 = vmul.f32 %v3995, 1.442695
        %v4018 = vpow.pop %v4017
        %v4019 = vmul.f32 %v3996, 1.442695
        %v4020 = vpow.pop %v4019
        %v4021 = vmul.f32 %v3997, 1.442695
        %v4022 = vpow.pop %v4021
        %v4023 = vmul.f32 %v3998, 1.442695
        %v4024 = vpow.pop %v4023
        %v4025 = vmul.f32 %v3999, 1.442695
        %v4026 = vpow.pop %v4025
        %v4027 = vmul.f32 %v4000, 1.442695
        %v4028 = vpow.pop %v4027
        %v4029 = vmul.f32 %v4001, 1.442695
        %v4030 = vpow.pop %v4029
        %v4031 = vmul.f32 %v4002, 1.442695
        %v4032 = vpow.pop %v4031
        %v4033 = vmul.f32 %v4003, 1.442695
        %v4034 = vpow.pop %v4033
        %v4035 = vmul.f32 %v4004, 1.442695
        %v4036 = vpow.pop %v4035
        %4037 = vadd.xlane.f32.xlu0 %v4006
        %v4038 = vpop.xlane.xlu0 %4037
        %4039 = vadd.xlane.f32.xlu0 %v4008
        %v4040 = vpop.xlane.xlu0 %4039
        %4041 = vadd.xlane.f32.xlu0 %v4010
        %v4042 = vpop.xlane.xlu0 %4041
        %4043 = vadd.xlane.f32.xlu0 %v4012
        %v4044 = vpop.xlane.xlu0 %4043
        %4045 = vadd.xlane.f32.xlu0 %v4014
        %v4046 = vpop.xlane.xlu0 %4045
        %4047 = vadd.xlane.f32.xlu0 %v4016
        %v4048 = vpop.xlane.xlu0 %4047
        %4049 = vadd.xlane.f32.xlu0 %v4018
        %v4050 = vpop.xlane.xlu0 %4049
        %4051 = vadd.xlane.f32.xlu0 %v4020
        %v4052 = vpop.xlane.xlu0 %4051
        %4053 = vadd.xlane.f32.xlu0 %v4022
        %v4054 = vpop.xlane.xlu0 %4053
        %4055 = vadd.xlane.f32.xlu0 %v4024
        %v4056 = vpop.xlane.xlu0 %4055
        %4057 = vadd.xlane.f32.xlu0 %v4026
        %v4058 = vpop.xlane.xlu0 %4057
        %4059 = vadd.xlane.f32.xlu0 %v4028
        %v4060 = vpop.xlane.xlu0 %4059
        %4061 = vadd.xlane.f32.xlu0 %v4030
        %v4062 = vpop.xlane.xlu0 %4061
        %4063 = vadd.xlane.f32.xlu0 %v4032
        %v4064 = vpop.xlane.xlu0 %4063
        %4065 = vadd.xlane.f32.xlu0 %v4034
        %v4066 = vpop.xlane.xlu0 %4065
        %4067 = vadd.xlane.f32.xlu0 %v4036
        %v4068 = vpop.xlane.xlu0 %4067
        %v4069 = vrcp.pop %v4038
        %v4070 = vrcp.pop %v4040
        %v4071 = vrcp.pop %v4042
        %v4072 = vrcp.pop %v4044
        %v4073 = vrcp.pop %v4046
        %v4074 = vrcp.pop %v4048
        %v4075 = vrcp.pop %v4050
        %v4076 = vrcp.pop %v4052
        %v4077 = vrcp.pop %v4054
        %v4078 = vrcp.pop %v4056
        %v4079 = vrcp.pop %v4058
        %v4080 = vrcp.pop %v4060
        %v4081 = vrcp.pop %v4062
        %v4082 = vrcp.pop %v4064
        %v4083 = vrcp.pop %v4066
        %v4084 = vrcp.pop %v4068
        %v4085 = vmul.f32 %v4038, %v4069
        %v4086 = vmul.f32 %v4040, %v4070
        %v4087 = vmul.f32 %v4042, %v4071
        %v4088 = vmul.f32 %v4044, %v4072
        %v4089 = vmul.f32 %v4046, %v4073
        %v4090 = vmul.f32 %v4048, %v4074
        %v4091 = vmul.f32 %v4050, %v4075
        %v4092 = vmul.f32 %v4052, %v4076
        %v4093 = vmul.f32 %v4054, %v4077
        %v4094 = vmul.f32 %v4056, %v4078
        %v4095 = vmul.f32 %v4058, %v4079
        %v4096 = vmul.f32 %v4060, %v4080
        %v4097 = vmul.f32 %v4062, %v4081
        %v4098 = vmul.f32 %v4064, %v4082
        %v4099 = vmul.f32 %v4066, %v4083
        %v4100 = vmul.f32 %v4068, %v4084
        %v4101 = vsub.f32 2.0, %v4085
        %v4102 = vsub.f32 2.0, %v4086
        %v4103 = vsub.f32 2.0, %v4087
        %v4104 = vsub.f32 2.0, %v4088
        %v4105 = vsub.f32 2.0, %v4089
        %v4106 = vsub.f32 2.0, %v4090
        %v4107 = vsub.f32 2.0, %v4091
        %v4108 = vsub.f32 2.0, %v4092
        %v4109 = vsub.f32 2.0, %v4093
        %v4110 = vsub.f32 2.0, %v4094
        %v4111 = vsub.f32 2.0, %v4095
        %v4112 = vsub.f32 2.0, %v4096
        %v4113 = vsub.f32 2.0, %v4097
        %v4114 = vsub.f32 2.0, %v4098
        %v4115 = vsub.f32 2.0, %v4099
        %v4116 = vsub.f32 2.0, %v4100
        %v4117 = vmul.f32 %v4069, %v4101
        %v4118 = vmul.f32 %v4070, %v4102
        %v4119 = vmul.f32 %v4071, %v4103
        %v4120 = vmul.f32 %v4072, %v4104
        %v4121 = vmul.f32 %v4073, %v4105
        %v4122 = vmul.f32 %v4074, %v4106
        %v4123 = vmul.f32 %v4075, %v4107
        %v4124 = vmul.f32 %v4076, %v4108
        %v4125 = vmul.f32 %v4077, %v4109
        %v4126 = vmul.f32 %v4078, %v4110
        %v4127 = vmul.f32 %v4079, %v4111
        %v4128 = vmul.f32 %v4080, %v4112
        %v4129 = vmul.f32 %v4081, %v4113
        %v4130 = vmul.f32 %v4082, %v4114
        %v4131 = vmul.f32 %v4083, %v4115
        %v4132 = vmul.f32 %v4084, %v4116
        %v4133 = vmul.f32 %v4006, %v4117
        %v4134 = vmul.f32 %v4008, %v4118
        %v4135 = vmul.f32 %v4010, %v4119
        %v4136 = vmul.f32 %v4012, %v4120
        %v4137 = vmul.f32 %v4014, %v4121
        %v4138 = vmul.f32 %v4016, %v4122
        %v4139 = vmul.f32 %v4018, %v4123
        %v4140 = vmul.f32 %v4020, %v4124
        %v4141 = vmul.f32 %v4022, %v4125
        %v4142 = vmul.f32 %v4024, %v4126
        %v4143 = vmul.f32 %v4026, %v4127
        %v4144 = vmul.f32 %v4028, %v4128
        %v4145 = vmul.f32 %v4030, %v4129
        %v4146 = vmul.f32 %v4032, %v4130
        %v4147 = vmul.f32 %v4034, %v4131
        %v4148 = vmul.f32 %v4036, %v4132
        %4149 = vmatprep.subr.mxu0 0.0
        %4150 = vmatpush1.msra.mxu0 %v1934
        %4151 = vmatprep.subr.mxu0 0.0
        %4152 = vmatpush1.msra.mxu0 %v1940
        %4153 = vmatprep.subr.mxu0 0.0
        %4154 = vmatpush1.msra.mxu0 %v1946
        %4155 = vmatprep.subr.mxu0 0.0
        %4156 = vmatpush1.msra.mxu0 %v1952
        %4157 = vmatprep.subr.mxu0 0.0
        %4158 = vmatpush1.msra.mxu0 %v1958
        %4159 = vmatprep.subr.mxu0 0.0
        %4160 = vmatpush1.msra.mxu0 %v1964
        %4161 = vmatprep.subr.mxu0 0.0
        %4162 = vmatpush1.msra.mxu0 %v1970
        %4163 = vmatprep.subr.mxu0 0.0
        %4164 = vmatpush1.msra.mxu0 %v1976
        %4165 = vmatprep.subr.mxu0 0.0
        %4166 = vmatpush1.msra.mxu0 %v1982
        %4167 = vmatprep.subr.mxu0 0.0
        %4168 = vmatpush1.msra.mxu0 %v1988
        %4169 = vmatprep.subr.mxu0 0.0
        %4170 = vmatpush1.msra.mxu0 %v1994
        %4171 = vmatprep.subr.mxu0 0.0
        %4172 = vmatpush1.msra.mxu0 %v2000
        %4173 = vmatprep.subr.mxu0 0.0
        %4174 = vmatpush1.msra.mxu0 %v2006
        %4175 = vmatprep.subr.mxu0 0.0
        %4176 = vmatpush1.msra.mxu0 %v2012
        %4177 = vmatprep.subr.mxu0 0.0
        %4178 = vmatpush1.msra.mxu0 %v2018
        %4179 = vmatprep.subr.mxu0 0.0
        %4180 = vmatpush1.msra.mxu0 %v2024
        %4181 = vmatprep.subr.mxu0 0.0
        %4182 = vmatpush1.msra.mxu0 0.0
        %4183 = vmatprep.subr.mxu0 0.0
        %4184 = vmatpush1.msra.mxu0 0.0
        %4185 = vmatprep.subr.mxu0 0.0
        %4186 = vmatpush1.msra.mxu0 0.0
        %4187 = vmatprep.subr.mxu0 0.0
        %4188 = vmatpush1.msra.mxu0 0.0
        %4189 = vmatprep.subr.mxu0 0.0
        %4190 = vmatpush1.msra.mxu0 0.0
        %4191 = vmatprep.subr.mxu0 0.0
        %4192 = vmatpush1.msra.mxu0 0.0
        %4193 = vmatprep.subr.mxu0 0.0
        %4194 = vmatpush1.msra.mxu0 0.0
        %4195 = vmatprep.subr.mxu0 0.0
        %4196 = vmatpush1.msra.mxu0 0.0
        %4197 = vmatprep.subr.mxu0 0.0
        %4198 = vmatpush1.msra.mxu0 0.0
        %4199 = vmatprep.subr.mxu0 0.0
        %4200 = vmatpush1.msra.mxu0 0.0
        %4201 = vmatprep.subr.mxu0 0.0
        %4202 = vmatpush1.msra.mxu0 0.0
        %4203 = vmatprep.subr.mxu0 0.0
        %4204 = vmatpush1.msra.mxu0 0.0
        %4205 = vmatprep.subr.mxu0 0.0
        %4206 = vmatpush1.msra.mxu0 0.0
        %4207 = vmatprep.subr.mxu0 0.0
        %4208 = vmatpush1.msra.mxu0 0.0
        %4209 = vmatprep.subr.mxu0 0.0
        %4210 = vmatpush1.msra.mxu0 0.0
        %4211 = vmatprep.subr.mxu0 0.0
        %4212 = vmatpush1.msra.mxu0 0.0
        %4213 = vmatprep.mubr.f32.mxu0 0.0
        %4214 = vmatmul.mubr.f32.gmra.mrb[0].mxu0 %v4133
        %v4215 = vpop.f32.mrb[0].mxu0
        %v4216 = vadd.f32 0.0, %v4215
        %v4217 = vpop.f32.mrb[0].mxu0
        %4218 = vmatprep.mubr.f32.mxu0 0.0
        %4219 = vmatmul.mubr.f32.gmra.mrb[0].mxu0 %v4134
        %v4220 = vpop.f32.mrb[0].mxu0
        %v4221 = vadd.f32 0.0, %v4220
        %v4222 = vpop.f32.mrb[0].mxu0
        %4223 = vmatprep.mubr.f32.mxu0 0.0
        %4224 = vmatmul.mubr.f32.gmra.mrb[0].mxu0 %v4135
        %v4225 = vpop.f32.mrb[0].mxu0
        %v4226 = vadd.f32 0.0, %v4225
        %v4227 = vpop.f32.mrb[0].mxu0
        %4228 = vmatprep.mubr.f32.mxu0 0.0
        %4229 = vmatmul.mubr.f32.gmra.mrb[0].mxu0 %v4136
        %v4230 = vpop.f32.mrb[0].mxu0
        %v4231 = vadd.f32 0.0, %v4230
        %v4232 = vpop.f32.mrb[0].mxu0
        %4233 = vmatprep.mubr.f32.mxu0 0.0
        %4234 = vmatmul.mubr.f32.gmra.mrb[0].mxu0 %v4137
        %v4235 = vpop.f32.mrb[0].mxu0
        %v4236 = vadd.f32 0.0, %v4235
        %v4237 = vpop.f32.mrb[0].mxu0
        %4238 = vmatprep.mubr.f32.mxu0 0.0
        %4239 = vmatmul.mubr.f32.gmra.mrb[0].mxu0 %v4138
        %v4240 = vpop.f32.mrb[0].mxu0
        %v4241 = vadd.f32 0.0, %v4240
        %v4242 = vpop.f32.mrb[0].mxu0
        %4243 = vmatprep.mubr.f32.mxu0 0.0
        %4244 = vmatmul.mubr.f32.gmra.mrb[0].mxu0 %v4139
        %v4245 = vpop.f32.mrb[0].mxu0
        %v4246 = vadd.f32 0.0, %v4245
        %v4247 = vpop.f32.mrb[0].mxu0
        %4248 = vmatprep.mubr.f32.mxu0 0.0
        %4249 = vmatmul.mubr.f32.gmra.mrb[0].mxu0 %v4140
        %v4250 = vpop.f32.mrb[0].mxu0
        %v4251 = vadd.f32 0.0, %v4250
        %v4252 = vpop.f32.mrb[0].mxu0
        %4253 = vmatprep.mubr.f32.mxu0 0.0
        %4254 = vmatmul.mubr.f32.gmra.mrb[0].mxu0 %v4141
        %v4255 = vpop.f32.mrb[0].mxu0
        %v4256 = vadd.f32 0.0, %v4255
        %v4257 = vpop.f32.mrb[0].mxu0
        %4258 = vmatprep.mubr.f32.mxu0 0.0
        %4259 = vmatmul.mubr.f32.gmra.mrb[0].mxu0 %v4142
        %v4260 = vpop.f32.mrb[0].mxu0
        %v4261 = vadd.f32 0.0, %v4260
        %v4262 = vpop.f32.mrb[0].mxu0
        %4263 = vmatprep.mubr.f32.mxu0 0.0
        %4264 = vmatmul.mubr.f32.gmra.mrb[0].mxu0 %v4143
        %v4265 = vpop.f32.mrb[0].mxu0
        %v4266 = vadd.f32 0.0, %v4265
        %v4267 = vpop.f32.mrb[0].mxu0
        %4268 = vmatprep.mubr.f32.mxu0 0.0
        %4269 = vmatmul.mubr.f32.gmra.mrb[0].mxu0 %v4144
        %v4270 = vpop.f32.mrb[0].mxu0
        %v4271 = vadd.f32 0.0, %v4270
        %v4272 = vpop.f32.mrb[0].mxu0
        %4273 = vmatprep.mubr.f32.mxu0 0.0
        %4274 = vmatmul.mubr.f32.gmra.mrb[0].mxu0 %v4145
        %v4275 = vpop.f32.mrb[0].mxu0
        %v4276 = vadd.f32 0.0, %v4275
        %v4277 = vpop.f32.mrb[0].mxu0
        %4278 = vmatprep.mubr.f32.mxu0 0.0
        %4279 = vmatmul.mubr.f32.gmra.mrb[0].mxu0 %v4146
        %v4280 = vpop.f32.mrb[0].mxu0
        %v4281 = vadd.f32 0.0, %v4280
        %v4282 = vpop.f32.mrb[0].mxu0
        %4283 = vmatprep.mubr.f32.mxu0 0.0
        %4284 = vmatmul.mubr.f32.gmra.mrb[0].mxu0 %v4147
        %v4285 = vpop.f32.mrb[0].mxu0
        %v4286 = vadd.f32 0.0, %v4285
        %v4287 = vpop.f32.mrb[0].mxu0
        %4288 = vmatprep.mubr.f32.mxu0 0.0
        %4289 = vmatmul.mubr.f32.gmra.mrb[0].mxu0 %v4148
        %v4290 = vpop.f32.mrb[0].mxu0
        %v4291 = vadd.f32 0.0, %v4290
        %v4292 = vpop.f32.mrb[0].mxu0
        %4293 = vdwg.mxu0
        %4294 = vrot.lane.b32.xlu0 %v968, 64
        %v4295 = vpop.permute.xlu0 %4294
        %4296 = vrot.lane.b32.xlu0 %v974, 64
        %v4297 = vpop.permute.xlu0 %4296
        %4298 = vrot.lane.b32.xlu0 %v980, 64
        %v4299 = vpop.permute.xlu0 %4298
        %4300 = vrot.lane.b32.xlu0 %v986, 64
        %v4301 = vpop.permute.xlu0 %4300
        %4302 = vrot.lane.b32.xlu0 %v992, 64
        %v4303 = vpop.permute.xlu0 %4302
        %4304 = vrot.lane.b32.xlu0 %v998, 64
        %v4305 = vpop.permute.xlu0 %4304
        %4306 = vrot.lane.b32.xlu0 %v1004, 64
        %v4307 = vpop.permute.xlu0 %4306
        %4308 = vrot.lane.b32.xlu0 %v1010, 64
        %v4309 = vpop.permute.xlu0 %4308
        %4310 = vrot.lane.b32.xlu0 %v1016, 64
        %v4311 = vpop.permute.xlu0 %4310
        %4312 = vrot.lane.b32.xlu0 %v1022, 64
        %v4313 = vpop.permute.xlu0 %4312
        %4314 = vrot.lane.b32.xlu0 %v1028, 64
        %v4315 = vpop.permute.xlu0 %4314
        %4316 = vrot.lane.b32.xlu0 %v1034, 64
        %v4317 = vpop.permute.xlu0 %4316
        %4318 = vrot.lane.b32.xlu0 %v1040, 64
        %v4319 = vpop.permute.xlu0 %4318
        %4320 = vrot.lane.b32.xlu0 %v1046, 64
        %v4321 = vpop.permute.xlu0 %4320
        %4322 = vrot.lane.b32.xlu0 %v1052, 64
        %v4323 = vpop.permute.xlu0 %4322
        %4324 = vrot.lane.b32.xlu0 %v1058, 64
        %v4325 = vpop.permute.xlu0 %4324
        %4326 = vrot.lane.b32.xlu0 %v1610, 64
        %v4327 = vpop.permute.xlu0 %4326
        %4328 = vrot.lane.b32.xlu0 %v1616, 64
        %v4329 = vpop.permute.xlu0 %4328
        %4330 = vrot.lane.b32.xlu0 %v1622, 64
        %v4331 = vpop.permute.xlu0 %4330
        %4332 = vrot.lane.b32.xlu0 %v1628, 64
        %v4333 = vpop.permute.xlu0 %4332
        %4334 = vrot.lane.b32.xlu0 %v1634, 64
        %v4335 = vpop.permute.xlu0 %4334
        %4336 = vrot.lane.b32.xlu0 %v1640, 64
        %v4337 = vpop.permute.xlu0 %4336
        %4338 = vrot.lane.b32.xlu0 %v1646, 64
        %v4339 = vpop.permute.xlu0 %4338
        %4340 = vrot.lane.b32.xlu0 %v1652, 64
        %v4341 = vpop.permute.xlu0 %4340
        %4342 = vrot.lane.b32.xlu0 %v1658, 64
        %v4343 = vpop.permute.xlu0 %4342
        %4344 = vrot.lane.b32.xlu0 %v1664, 64
        %v4345 = vpop.permute.xlu0 %4344
        %4346 = vrot.lane.b32.xlu0 %v1670, 64
        %v4347 = vpop.permute.xlu0 %4346
        %4348 = vrot.lane.b32.xlu0 %v1676, 64
        %v4349 = vpop.permute.xlu0 %4348
        %4350 = vrot.lane.b32.xlu0 %v1682, 64
        %v4351 = vpop.permute.xlu0 %4350
        %4352 = vrot.lane.b32.xlu0 %v1688, 64
        %v4353 = vpop.permute.xlu0 %4352
        %4354 = vrot.lane.b32.xlu0 %v1694, 64
        %v4355 = vpop.permute.xlu0 %4354
        %4356 = vrot.lane.b32.xlu0 %v1700, 64
        %v4357 = vpop.permute.xlu0 %4356
        %v4358 = vsel %vm2367, %v4295, 0
        %v4360 = vsel %vm2367, %v4297, 0
        %v4362 = vsel %vm2367, %v4299, 0
        %v4364 = vsel %vm2367, %v4301, 0
        %v4366 = vsel %vm2367, %v4303, 0
        %v4368 = vsel %vm2367, %v4305, 0
        %v4370 = vsel %vm2367, %v4307, 0
        %v4372 = vsel %vm2367, %v4309, 0
        %v4374 = vsel %vm2367, %v4311, 0
        %v4376 = vsel %vm2367, %v4313, 0
        %v4378 = vsel %vm2367, %v4315, 0
        %v4380 = vsel %vm2367, %v4317, 0
        %v4382 = vsel %vm2367, %v4319, 0
        %v4384 = vsel %vm2367, %v4321, 0
        %v4386 = vsel %vm2367, %v4323, 0
        %v4388 = vsel %vm2367, %v4325, 0
        %v4390 = vsel %vm2367, %v4327, 0
        %v4392 = vsel %vm2367, %v4329, 0
        %v4394 = vsel %vm2367, %v4331, 0
        %v4396 = vsel %vm2367, %v4333, 0
        %v4398 = vsel %vm2367, %v4335, 0
        %v4400 = vsel %vm2367, %v4337, 0
        %v4402 = vsel %vm2367, %v4339, 0
        %v4404 = vsel %vm2367, %v4341, 0
        %v4406 = vsel %vm2367, %v4343, 0
        %v4408 = vsel %vm2367, %v4345, 0
        %v4410 = vsel %vm2367, %v4347, 0
        %v4412 = vsel %vm2367, %v4349, 0
        %v4414 = vsel %vm2367, %v4351, 0
        %v4416 = vsel %vm2367, %v4353, 0
        %v4418 = vsel %vm2367, %v4355, 0
        %v4420 = vsel %vm2367, %v4357, 0
        %4422 = vmatprep.subr.mxu0 0.0
        %4423 = vmatpush1.xpose.msra.mxu0 %v4390
        %4424 = vmatprep.subr.mxu0 0.0
        %4425 = vmatpush1.xpose.msra.mxu0 %v4392
        %4426 = vmatprep.subr.mxu0 0.0
        %4427 = vmatpush1.xpose.msra.mxu0 %v4394
        %4428 = vmatprep.subr.mxu0 0.0
        %4429 = vmatpush1.xpose.msra.mxu0 %v4396
        %4430 = vmatprep.subr.mxu0 0.0
        %4431 = vmatpush1.xpose.msra.mxu0 %v4398
        %4432 = vmatprep.subr.mxu0 0.0
        %4433 = vmatpush1.xpose.msra.mxu0 %v4400
        %4434 = vmatprep.subr.mxu0 0.0
        %4435 = vmatpush1.xpose.msra.mxu0 %v4402
        %4436 = vmatprep.subr.mxu0 0.0
        %4437 = vmatpush1.xpose.msra.mxu0 %v4404
        %4438 = vmatprep.subr.mxu0 0.0
        %4439 = vmatpush1.xpose.msra.mxu0 %v4406
        %4440 = vmatprep.subr.mxu0 0.0
        %4441 = vmatpush1.xpose.msra.mxu0 %v4408
        %4442 = vmatprep.subr.mxu0 0.0
        %4443 = vmatpush1.xpose.msra.mxu0 %v4410
        %4444 = vmatprep.subr.mxu0 0.0
        %4445 = vmatpush1.xpose.msra.mxu0 %v4412
        %4446 = vmatprep.subr.mxu0 0.0
        %4447 = vmatpush1.xpose.msra.mxu0 %v4414
        %4448 = vmatprep.subr.mxu0 0.0
        %4449 = vmatpush1.xpose.msra.mxu0 %v4416
        %4450 = vmatprep.subr.mxu0 0.0
        %4451 = vmatpush1.xpose.msra.mxu0 %v4418
        %4452 = vmatprep.subr.mxu0 0.0
        %4453 = vmatpush1.xpose.msra.mxu0 %v4420
        %4454 = vmatprep.subr.mxu0 0.0
        %4455 = vmatpush1.xpose.msra.mxu0 0.0
        %4456 = vmatprep.subr.mxu0 0.0
        %4457 = vmatpush1.xpose.msra.mxu0 0.0
        %4458 = vmatprep.subr.mxu0 0.0
        %4459 = vmatpush1.xpose.msra.mxu0 0.0
        %4460 = vmatprep.subr.mxu0 0.0
        %4461 = vmatpush1.xpose.msra.mxu0 0.0
        %4462 = vmatprep.subr.mxu0 0.0
        %4463 = vmatpush1.xpose.msra.mxu0 0.0
        %4464 = vmatprep.subr.mxu0 0.0
        %4465 = vmatpush1.xpose.msra.mxu0 0.0
        %4466 = vmatprep.subr.mxu0 0.0
        %4467 = vmatpush1.xpose.msra.mxu0 0.0
        %4468 = vmatprep.subr.mxu0 0.0
        %4469 = vmatpush1.xpose.msra.mxu0 0.0
        %4470 = vmatprep.subr.mxu0 0.0
        %4471 = vmatpush1.xpose.msra.mxu0 0.0
        %4472 = vmatprep.subr.mxu0 0.0
        %4473 = vmatpush1.xpose.msra.mxu0 0.0
        %4474 = vmatprep.subr.mxu0 0.0
        %4475 = vmatpush1.xpose.msra.mxu0 0.0
        %4476 = vmatprep.subr.mxu0 0.0
        %4477 = vmatpush1.xpose.msra.mxu0 0.0
        %4478 = vmatprep.subr.mxu0 0.0
        %4479 = vmatpush1.xpose.msra.mxu0 0.0
        %4480 = vmatprep.subr.mxu0 0.0
        %4481 = vmatpush1.xpose.msra.mxu0 0.0
        %4482 = vmatprep.subr.mxu0 0.0
        %4483 = vmatpush1.xpose.msra.mxu0 0.0
        %4484 = vmatprep.subr.mxu0 0.0
        %4485 = vmatpush1.xpose.msra.mxu0 0.0
        %4486 = vmatprep.mubr.f32.mxu0 0.0
        %4487 = vmatmul.mubr.f32.gmra.mrb[0].mxu0 %v4358
        %v4488 = vpop.f32.mrb[0].mxu0
        %v4489 = vadd.f32 %v2351, %v4488
        %v4490 = vpop.f32.mrb[0].mxu0
        %4491 = vmatprep.mubr.f32.mxu0 0.0
        %4492 = vmatmul.mubr.f32.gmra.mrb[0].mxu0 %v4360
        %v4493 = vpop.f32.mrb[0].mxu0
        %v4494 = vadd.f32 %v2352, %v4493
        %v4495 = vpop.f32.mrb[0].mxu0
        %4496 = vmatprep.mubr.f32.mxu0 0.0
        %4497 = vmatmul.mubr.f32.gmra.mrb[0].mxu0 %v4362
        %v4498 = vpop.f32.mrb[0].mxu0
        %v4499 = vadd.f32 %v2353, %v4498
        %v4500 = vpop.f32.mrb[0].mxu0
        %4501 = vmatprep.mubr.f32.mxu0 0.0
        %4502 = vmatmul.mubr.f32.gmra.mrb[0].mxu0 %v4364
        %v4503 = vpop.f32.mrb[0].mxu0
        %v4504 = vadd.f32 %v2354, %v4503
        %v4505 = vpop.f32.mrb[0].mxu0
        %4506 = vmatprep.mubr.f32.mxu0 0.0
        %4507 = vmatmul.mubr.f32.gmra.mrb[0].mxu0 %v4366
        %v4508 = vpop.f32.mrb[0].mxu0
        %v4509 = vadd.f32 %v2355, %v4508
        %v4510 = vpop.f32.mrb[0].mxu0
        %4511 = vmatprep.mubr.f32.mxu0 0.0
        %4512 = vmatmul.mubr.f32.gmra.mrb[0].mxu0 %v4368
        %v4513 = vpop.f32.mrb[0].mxu0
        %v4514 = vadd.f32 %v2356, %v4513
        %v4515 = vpop.f32.mrb[0].mxu0
        %4516 = vmatprep.mubr.f32.mxu0 0.0
        %4517 = vmatmul.mubr.f32.gmra.mrb[0].mxu0 %v4370
        %v4518 = vpop.f32.mrb[0].mxu0
        %v4519 = vadd.f32 %v2357, %v4518
        %v4520 = vpop.f32.mrb[0].mxu0
        %4521 = vmatprep.mubr.f32.mxu0 0.0
        %4522 = vmatmul.mubr.f32.gmra.mrb[0].mxu0 %v4372
        %v4523 = vpop.f32.mrb[0].mxu0
        %v4524 = vadd.f32 %v2358, %v4523
        %v4525 = vpop.f32.mrb[0].mxu0
        %4526 = vmatprep.mubr.f32.mxu0 0.0
        %4527 = vmatmul.mubr.f32.gmra.mrb[0].mxu0 %v4374
        %v4528 = vpop.f32.mrb[0].mxu0
        %v4529 = vadd.f32 %v2359, %v4528
        %v4530 = vpop.f32.mrb[0].mxu0
        %4531 = vmatprep.mubr.f32.mxu0 0.0
        %4532 = vmatmul.mubr.f32.gmra.mrb[0].mxu0 %v4376
        %v4533 = vpop.f32.mrb[0].mxu0
        %v4534 = vadd.f32 %v2360, %v4533
        %v4535 = vpop.f32.mrb[0].mxu0
        %4536 = vmatprep.mubr.f32.mxu0 0.0
        %4537 = vmatmul.mubr.f32.gmra.mrb[0].mxu0 %v4378
        %v4538 = vpop.f32.mrb[0].mxu0
        %v4539 = vadd.f32 %v2361, %v4538
        %v4540 = vpop.f32.mrb[0].mxu0
        %4541 = vmatprep.mubr.f32.mxu0 0.0
        %4542 = vmatmul.mubr.f32.gmra.mrb[0].mxu0 %v4380
        %v4543 = vpop.f32.mrb[0].mxu0
        %v4544 = vadd.f32 %v2362, %v4543
        %v4545 = vpop.f32.mrb[0].mxu0
        %4546 = vmatprep.mubr.f32.mxu0 0.0
        %4547 = vmatmul.mubr.f32.gmra.mrb[0].mxu0 %v4382
        %v4548 = vpop.f32.mrb[0].mxu0
        %v4549 = vadd.f32 %v2363, %v4548
        %v4550 = vpop.f32.mrb[0].mxu0
        %4551 = vmatprep.mubr.f32.mxu0 0.0
        %4552 = vmatmul.mubr.f32.gmra.mrb[0].mxu0 %v4384
        %v4553 = vpop.f32.mrb[0].mxu0
        %v4554 = vadd.f32 %v2364, %v4553
        %v4555 = vpop.f32.mrb[0].mxu0
        %4556 = vmatprep.mubr.f32.mxu0 0.0
        %4557 = vmatmul.mubr.f32.gmra.mrb[0].mxu0 %v4386
        %v4558 = vpop.f32.mrb[0].mxu0
        %v4559 = vadd.f32 %v2365, %v4558
        %v4560 = vpop.f32.mrb[0].mxu0
        %4561 = vmatprep.mubr.f32.mxu0 0.0
        %4562 = vmatmul.mubr.f32.gmra.mrb[0].mxu0 %v4388
        %v4563 = vpop.f32.mrb[0].mxu0
        %v4564 = vadd.f32 %v2366, %v4563
        %v4565 = vpop.f32.mrb[0].mxu0
        %4566 = vdwg.mxu0
        %4567 = vmax.xlane.f32.xlu0 %v4489
        %v4568 = vpop.xlane.xlu0 %4567
        %4569 = vmax.xlane.f32.xlu0 %v4494
        %v4570 = vpop.xlane.xlu0 %4569
        %4571 = vmax.xlane.f32.xlu0 %v4499
        %v4572 = vpop.xlane.xlu0 %4571
        %4573 = vmax.xlane.f32.xlu0 %v4504
        %v4574 = vpop.xlane.xlu0 %4573
        %4575 = vmax.xlane.f32.xlu0 %v4509
        %v4576 = vpop.xlane.xlu0 %4575
        %4577 = vmax.xlane.f32.xlu0 %v4514
        %v4578 = vpop.xlane.xlu0 %4577
        %4579 = vmax.xlane.f32.xlu0 %v4519
        %v4580 = vpop.xlane.xlu0 %4579
        %4581 = vmax.xlane.f32.xlu0 %v4524
        %v4582 = vpop.xlane.xlu0 %4581
        %4583 = vmax.xlane.f32.xlu0 %v4529
        %v4584 = vpop.xlane.xlu0 %4583
        %4585 = vmax.xlane.f32.xlu0 %v4534
        %v4586 = vpop.xlane.xlu0 %4585
        %4587 = vmax.xlane.f32.xlu0 %v4539
        %v4588 = vpop.xlane.xlu0 %4587
        %4589 = vmax.xlane.f32.xlu0 %v4544
        %v4590 = vpop.xlane.xlu0 %4589
        %4591 = vmax.xlane.f32.xlu0 %v4549
        %v4592 = vpop.xlane.xlu0 %4591
        %4593 = vmax.xlane.f32.xlu0 %v4554
        %v4594 = vpop.xlane.xlu0 %4593
        %4595 = vmax.xlane.f32.xlu0 %v4559
        %v4596 = vpop.xlane.xlu0 %4595
        %4597 = vmax.xlane.f32.xlu0 %v4564
        %v4598 = vpop.xlane.xlu0 %4597
        %v4599 = vsub.f32 %v4489, %v4568
        %v4600 = vsub.f32 %v4494, %v4570
        %v4601 = vsub.f32 %v4499, %v4572
        %v4602 = vsub.f32 %v4504, %v4574
        %v4603 = vsub.f32 %v4509, %v4576
        %v4604 = vsub.f32 %v4514, %v4578
        %v4605 = vsub.f32 %v4519, %v4580
        %v4606 = vsub.f32 %v4524, %v4582
        %v4607 = vsub.f32 %v4529, %v4584
        %v4608 = vsub.f32 %v4534, %v4586
        %v4609 = vsub.f32 %v4539, %v4588
        %v4610 = vsub.f32 %v4544, %v4590
        %v4611 = vsub.f32 %v4549, %v4592
        %v4612 = vsub.f32 %v4554, %v4594
        %v4613 = vsub.f32 %v4559, %v4596
        %v4614 = vsub.f32 %v4564, %v4598
        %v4615 = vmul.f32 %v4599, 1.442695
        %v4616 = vpow.pop %v4615
        %v4617 = vmul.f32 %v4600, 1.442695
        %v4618 = vpow.pop %v4617
        %v4619 = vmul.f32 %v4601, 1.442695
        %v4620 = vpow.pop %v4619
        %v4621 = vmul.f32 %v4602, 1.442695
        %v4622 = vpow.pop %v4621
        %v4623 = vmul.f32 %v4603, 1.442695
        %v4624 = vpow.pop %v4623
        %v4625 = vmul.f32 %v4604, 1.442695
        %v4626 = vpow.pop %v4625
        %v4627 = vmul.f32 %v4605, 1.442695
        %v4628 = vpow.pop %v4627
        %v4629 = vmul.f32 %v4606, 1.442695
        %v4630 = vpow.pop %v4629
        %v4631 = vmul.f32 %v4607, 1.442695
        %v4632 = vpow.pop %v4631
        %v4633 = vmul.f32 %v4608, 1.442695
        %v4634 = vpow.pop %v4633
        %v4635 = vmul.f32 %v4609, 1.442695
        %v4636 = vpow.pop %v4635
        %v4637 = vmul.f32 %v4610, 1.442695
        %v4638 = vpow.pop %v4637
        %v4639 = vmul.f32 %v4611, 1.442695
        %v4640 = vpow.pop %v4639
        %v4641 = vmul.f32 %v4612, 1.442695
        %v4642 = vpow.pop %v4641
        %v4643 = vmul.f32 %v4613, 1.442695
        %v4644 = vpow.pop %v4643
        %v4645 = vmul.f32 %v4614, 1.442695
        %v4646 = vpow.pop %v4645
        %4647 = vadd.xlane.f32.xlu0 %v4616
        %v4648 = vpop.xlane.xlu0 %4647
        %4649 = vadd.xlane.f32.xlu0 %v4618
        %v4650 = vpop.xlane.xlu0 %4649
        %4651 = vadd.xlane.f32.xlu0 %v4620
        %v4652 = vpop.xlane.xlu0 %4651
        %4653 = vadd.xlane.f32.xlu0 %v4622
        %v4654 = vpop.xlane.xlu0 %4653
        %4655 = vadd.xlane.f32.xlu0 %v4624
        %v4656 = vpop.xlane.xlu0 %4655
        %4657 = vadd.xlane.f32.xlu0 %v4626
        %v4658 = vpop.xlane.xlu0 %4657
        %4659 = vadd.xlane.f32.xlu0 %v4628
        %v4660 = vpop.xlane.xlu0 %4659
        %4661 = vadd.xlane.f32.xlu0 %v4630
        %v4662 = vpop.xlane.xlu0 %4661
        %4663 = vadd.xlane.f32.xlu0 %v4632
        %v4664 = vpop.xlane.xlu0 %4663
        %4665 = vadd.xlane.f32.xlu0 %v4634
        %v4666 = vpop.xlane.xlu0 %4665
        %4667 = vadd.xlane.f32.xlu0 %v4636
        %v4668 = vpop.xlane.xlu0 %4667
        %4669 = vadd.xlane.f32.xlu0 %v4638
        %v4670 = vpop.xlane.xlu0 %4669
        %4671 = vadd.xlane.f32.xlu0 %v4640
        %v4672 = vpop.xlane.xlu0 %4671
        %4673 = vadd.xlane.f32.xlu0 %v4642
        %v4674 = vpop.xlane.xlu0 %4673
        %4675 = vadd.xlane.f32.xlu0 %v4644
        %v4676 = vpop.xlane.xlu0 %4675
        %4677 = vadd.xlane.f32.xlu0 %v4646
        %v4678 = vpop.xlane.xlu0 %4677
        %v4679 = vrcp.pop %v4648
        %v4680 = vrcp.pop %v4650
        %v4681 = vrcp.pop %v4652
        %v4682 = vrcp.pop %v4654
        %v4683 = vrcp.pop %v4656
        %v4684 = vrcp.pop %v4658
        %v4685 = vrcp.pop %v4660
        %v4686 = vrcp.pop %v4662
        %v4687 = vrcp.pop %v4664
        %v4688 = vrcp.pop %v4666
        %v4689 = vrcp.pop %v4668
        %v4690 = vrcp.pop %v4670
        %v4691 = vrcp.pop %v4672
        %v4692 = vrcp.pop %v4674
        %v4693 = vrcp.pop %v4676
        %v4694 = vrcp.pop %v4678
        %v4695 = vmul.f32 %v4648, %v4679
        %v4696 = vmul.f32 %v4650, %v4680
        %v4697 = vmul.f32 %v4652, %v4681
        %v4698 = vmul.f32 %v4654, %v4682
        %v4699 = vmul.f32 %v4656, %v4683
        %v4700 = vmul.f32 %v4658, %v4684
        %v4701 = vmul.f32 %v4660, %v4685
        %v4702 = vmul.f32 %v4662, %v4686
        %v4703 = vmul.f32 %v4664, %v4687
        %v4704 = vmul.f32 %v4666, %v4688
        %v4705 = vmul.f32 %v4668, %v4689
        %v4706 = vmul.f32 %v4670, %v4690
        %v4707 = vmul.f32 %v4672, %v4691
        %v4708 = vmul.f32 %v4674, %v4692
        %v4709 = vmul.f32 %v4676, %v4693
        %v4710 = vmul.f32 %v4678, %v4694
        %v4711 = vsub.f32 2.0, %v4695
        %v4712 = vsub.f32 2.0, %v4696
        %v4713 = vsub.f32 2.0, %v4697
        %v4714 = vsub.f32 2.0, %v4698
        %v4715 = vsub.f32 2.0, %v4699
        %v4716 = vsub.f32 2.0, %v4700
        %v4717 = vsub.f32 2.0, %v4701
        %v4718 = vsub.f32 2.0, %v4702
        %v4719 = vsub.f32 2.0, %v4703
        %v4720 = vsub.f32 2.0, %v4704
        %v4721 = vsub.f32 2.0, %v4705
        %v4722 = vsub.f32 2.0, %v4706
        %v4723 = vsub.f32 2.0, %v4707
        %v4724 = vsub.f32 2.0, %v4708
        %v4725 = vsub.f32 2.0, %v4709
        %v4726 = vsub.f32 2.0, %v4710
        %v4727 = vmul.f32 %v4679, %v4711
        %v4728 = vmul.f32 %v4680, %v4712
        %v4729 = vmul.f32 %v4681, %v4713
        %v4730 = vmul.f32 %v4682, %v4714
        %v4731 = vmul.f32 %v4683, %v4715
        %v4732 = vmul.f32 %v4684, %v4716
        %v4733 = vmul.f32 %v4685, %v4717
        %v4734 = vmul.f32 %v4686, %v4718
        %v4735 = vmul.f32 %v4687, %v4719
        %v4736 = vmul.f32 %v4688, %v4720
        %v4737 = vmul.f32 %v4689, %v4721
        %v4738 = vmul.f32 %v4690, %v4722
        %v4739 = vmul.f32 %v4691, %v4723
        %v4740 = vmul.f32 %v4692, %v4724
        %v4741 = vmul.f32 %v4693, %v4725
        %v4742 = vmul.f32 %v4694, %v4726
        %v4743 = vmul.f32 %v4616, %v4727
        %v4744 = vmul.f32 %v4618, %v4728
        %v4745 = vmul.f32 %v4620, %v4729
        %v4746 = vmul.f32 %v4622, %v4730
        %v4747 = vmul.f32 %v4624, %v4731
        %v4748 = vmul.f32 %v4626, %v4732
        %v4749 = vmul.f32 %v4628, %v4733
        %v4750 = vmul.f32 %v4630, %v4734
        %v4751 = vmul.f32 %v4632, %v4735
        %v4752 = vmul.f32 %v4634, %v4736
        %v4753 = vmul.f32 %v4636, %v4737
        %v4754 = vmul.f32 %v4638, %v4738
        %v4755 = vmul.f32 %v4640, %v4739
        %v4756 = vmul.f32 %v4642, %v4740
        %v4757 = vmul.f32 %v4644, %v4741
        %v4758 = vmul.f32 %v4646, %v4742
        %4775 = vrot.lane.b32.xlu0 %v1934, 64
        %v4776 = vpop.permute.xlu0 %4775
        %4777 = vrot.lane.b32.xlu0 %v1940, 64
        %v4778 = vpop.permute.xlu0 %4777
        %4779 = vrot.lane.b32.xlu0 %v1946, 64
        %v4780 = vpop.permute.xlu0 %4779
        %4781 = vrot.lane.b32.xlu0 %v1952, 64
        %v4782 = vpop.permute.xlu0 %4781
        %4783 = vrot.lane.b32.xlu0 %v1958, 64
        %v4784 = vpop.permute.xlu0 %4783
        %4785 = vrot.lane.b32.xlu0 %v1964, 64
        %v4786 = vpop.permute.xlu0 %4785
        %4787 = vrot.lane.b32.xlu0 %v1970, 64
        %v4788 = vpop.permute.xlu0 %4787
        %4789 = vrot.lane.b32.xlu0 %v1976, 64
        %v4790 = vpop.permute.xlu0 %4789
        %4791 = vrot.lane.b32.xlu0 %v1982, 64
        %v4792 = vpop.permute.xlu0 %4791
        %4793 = vrot.lane.b32.xlu0 %v1988, 64
        %v4794 = vpop.permute.xlu0 %4793
        %4795 = vrot.lane.b32.xlu0 %v1994, 64
        %v4796 = vpop.permute.xlu0 %4795
        %4797 = vrot.lane.b32.xlu0 %v2000, 64
        %v4798 = vpop.permute.xlu0 %4797
        %4799 = vrot.lane.b32.xlu0 %v2006, 64
        %v4800 = vpop.permute.xlu0 %4799
        %4801 = vrot.lane.b32.xlu0 %v2012, 64
        %v4802 = vpop.permute.xlu0 %4801
        %4803 = vrot.lane.b32.xlu0 %v2018, 64
        %v4804 = vpop.permute.xlu0 %4803
        %4805 = vrot.lane.b32.xlu0 %v2024, 64
        %v4806 = vpop.permute.xlu0 %4805
        %4823 = vmatprep.subr.mxu0 0.0
        %4824 = vmatpush1.msra.mxu0 %v4776
        %4825 = vmatprep.subr.mxu0 0.0
        %4826 = vmatpush1.msra.mxu0 %v4778
        %4827 = vmatprep.subr.mxu0 0.0
        %4828 = vmatpush1.msra.mxu0 %v4780
        %4829 = vmatprep.subr.mxu0 0.0
        %4830 = vmatpush1.msra.mxu0 %v4782
        %4831 = vmatprep.subr.mxu0 0.0
        %4832 = vmatpush1.msra.mxu0 %v4784
        %4833 = vmatprep.subr.mxu0 0.0
        %4834 = vmatpush1.msra.mxu0 %v4786
        %4835 = vmatprep.subr.mxu0 0.0
        %4836 = vmatpush1.msra.mxu0 %v4788
        %4837 = vmatprep.subr.mxu0 0.0
        %4838 = vmatpush1.msra.mxu0 %v4790
        %4839 = vmatprep.subr.mxu0 0.0
        %4840 = vmatpush1.msra.mxu0 %v4792
        %4841 = vmatprep.subr.mxu0 0.0
        %4842 = vmatpush1.msra.mxu0 %v4794
        %4843 = vmatprep.subr.mxu0 0.0
        %4844 = vmatpush1.msra.mxu0 %v4796
        %4845 = vmatprep.subr.mxu0 0.0
        %4846 = vmatpush1.msra.mxu0 %v4798
        %4847 = vmatprep.subr.mxu0 0.0
        %4848 = vmatpush1.msra.mxu0 %v4800
        %4849 = vmatprep.subr.mxu0 0.0
        %4850 = vmatpush1.msra.mxu0 %v4802
        %4851 = vmatprep.subr.mxu0 0.0
        %4852 = vmatpush1.msra.mxu0 %v4804
        %4853 = vmatprep.subr.mxu0 0.0
        %4854 = vmatpush1.msra.mxu0 %v4806
        %4855 = vmatprep.subr.mxu0 0.0
        %4856 = vmatpush1.msra.mxu0 0.0
        %4857 = vmatprep.subr.mxu0 0.0
        %4858 = vmatpush1.msra.mxu0 0.0
        %4859 = vmatprep.subr.mxu0 0.0
        %4860 = vmatpush1.msra.mxu0 0.0
        %4861 = vmatprep.subr.mxu0 0.0
        %4862 = vmatpush1.msra.mxu0 0.0
        %4863 = vmatprep.subr.mxu0 0.0
        %4864 = vmatpush1.msra.mxu0 0.0
        %4865 = vmatprep.subr.mxu0 0.0
        %4866 = vmatpush1.msra.mxu0 0.0
        %4867 = vmatprep.subr.mxu0 0.0
        %4868 = vmatpush1.msra.mxu0 0.0
        %4869 = vmatprep.subr.mxu0 0.0
        %4870 = vmatpush1.msra.mxu0 0.0
        %4871 = vmatprep.subr.mxu0 0.0
        %4872 = vmatpush1.msra.mxu0 0.0
        %4873 = vmatprep.subr.mxu0 0.0
        %4874 = vmatpush1.msra.mxu0 0.0
        %4875 = vmatprep.subr.mxu0 0.0
        %4876 = vmatpush1.msra.mxu0 0.0
        %4877 = vmatprep.subr.mxu0 0.0
        %4878 = vmatpush1.msra.mxu0 0.0
        %4879 = vmatprep.subr.mxu0 0.0
        %4880 = vmatpush1.msra.mxu0 0.0
        %4881 = vmatprep.subr.mxu0 0.0
        %4882 = vmatpush1.msra.mxu0 0.0
        %4883 = vmatprep.subr.mxu0 0.0
        %4884 = vmatpush1.msra.mxu0 0.0
        %4885 = vmatprep.subr.mxu0 0.0
        %4886 = vmatpush1.msra.mxu0 0.0
        %4887 = vmatprep.mubr.f32.mxu0 0.0
        %4888 = vmatmul.mubr.f32.gmra.mrb[0].mxu0 %v4743
        %v4889 = vpop.f32.mrb[0].mxu0
        %v4890 = vadd.f32 0.0, %v4889
        %v4891 = vpop.f32.mrb[0].mxu0
        %4892 = vmatprep.mubr.f32.mxu0 0.0
        %4893 = vmatmul.mubr.f32.gmra.mrb[0].mxu0 %v4744
        %v4894 = vpop.f32.mrb[0].mxu0
        %v4895 = vadd.f32 0.0, %v4894
        %v4896 = vpop.f32.mrb[0].mxu0
        %4897 = vmatprep.mubr.f32.mxu0 0.0
        %4898 = vmatmul.mubr.f32.gmra.mrb[0].mxu0 %v4745
        %v4899 = vpop.f32.mrb[0].mxu0
        %v4900 = vadd.f32 0.0, %v4899
        %v4901 = vpop.f32.mrb[0].mxu0
        %4902 = vmatprep.mubr.f32.mxu0 0.0
        %4903 = vmatmul.mubr.f32.gmra.mrb[0].mxu0 %v4746
        %v4904 = vpop.f32.mrb[0].mxu0
        %v4905 = vadd.f32 0.0, %v4904
        %v4906 = vpop.f32.mrb[0].mxu0
        %4907 = vmatprep.mubr.f32.mxu0 0.0
        %4908 = vmatmul.mubr.f32.gmra.mrb[0].mxu0 %v4747
        %v4909 = vpop.f32.mrb[0].mxu0
        %v4910 = vadd.f32 0.0, %v4909
        %v4911 = vpop.f32.mrb[0].mxu0
        %4912 = vmatprep.mubr.f32.mxu0 0.0
        %4913 = vmatmul.mubr.f32.gmra.mrb[0].mxu0 %v4748
        %v4914 = vpop.f32.mrb[0].mxu0
        %v4915 = vadd.f32 0.0, %v4914
        %v4916 = vpop.f32.mrb[0].mxu0
        %4917 = vmatprep.mubr.f32.mxu0 0.0
        %4918 = vmatmul.mubr.f32.gmra.mrb[0].mxu0 %v4749
        %v4919 = vpop.f32.mrb[0].mxu0
        %v4920 = vadd.f32 0.0, %v4919
        %v4921 = vpop.f32.mrb[0].mxu0
        %4922 = vmatprep.mubr.f32.mxu0 0.0
        %4923 = vmatmul.mubr.f32.gmra.mrb[0].mxu0 %v4750
        %v4924 = vpop.f32.mrb[0].mxu0
        %v4925 = vadd.f32 0.0, %v4924
        %v4926 = vpop.f32.mrb[0].mxu0
        %4927 = vmatprep.mubr.f32.mxu0 0.0
        %4928 = vmatmul.mubr.f32.gmra.mrb[0].mxu0 %v4751
        %v4929 = vpop.f32.mrb[0].mxu0
        %v4930 = vadd.f32 0.0, %v4929
        %v4931 = vpop.f32.mrb[0].mxu0
        %4932 = vmatprep.mubr.f32.mxu0 0.0
        %4933 = vmatmul.mubr.f32.gmra.mrb[0].mxu0 %v4752
        %v4934 = vpop.f32.mrb[0].mxu0
        %v4935 = vadd.f32 0.0, %v4934
        %v4936 = vpop.f32.mrb[0].mxu0
        %4937 = vmatprep.mubr.f32.mxu0 0.0
        %4938 = vmatmul.mubr.f32.gmra.mrb[0].mxu0 %v4753
        %v4939 = vpop.f32.mrb[0].mxu0
        %v4940 = vadd.f32 0.0, %v4939
        %v4941 = vpop.f32.mrb[0].mxu0
        %4942 = vmatprep.mubr.f32.mxu0 0.0
        %4943 = vmatmul.mubr.f32.gmra.mrb[0].mxu0 %v4754
        %v4944 = vpop.f32.mrb[0].mxu0
        %v4945 = vadd.f32 0.0, %v4944
        %v4946 = vpop.f32.mrb[0].mxu0
        %4947 = vmatprep.mubr.f32.mxu0 0.0
        %4948 = vmatmul.mubr.f32.gmra.mrb[0].mxu0 %v4755
        %v4949 = vpop.f32.mrb[0].mxu0
        %v4950 = vadd.f32 0.0, %v4949
        %v4951 = vpop.f32.mrb[0].mxu0
        %4952 = vmatprep.mubr.f32.mxu0 0.0
        %4953 = vmatmul.mubr.f32.gmra.mrb[0].mxu0 %v4756
        %v4954 = vpop.f32.mrb[0].mxu0
        %v4955 = vadd.f32 0.0, %v4954
        %v4956 = vpop.f32.mrb[0].mxu0
        %4957 = vmatprep.mubr.f32.mxu0 0.0
        %4958 = vmatmul.mubr.f32.gmra.mrb[0].mxu0 %v4757
        %v4959 = vpop.f32.mrb[0].mxu0
        %v4960 = vadd.f32 0.0, %v4959
        %v4961 = vpop.f32.mrb[0].mxu0
        %4962 = vmatprep.mubr.f32.mxu0 0.0
        %4963 = vmatmul.mubr.f32.gmra.mrb[0].mxu0 %v4758
        %v4964 = vpop.f32.mrb[0].mxu0
        %v4965 = vadd.f32 0.0, %v4964
        %v4966 = vpop.f32.mrb[0].mxu0
        %4967 = vdwg.mxu0
        %4984 = vrot.lane.b32.xlu0 %v4890, 64
        %v4985 = vpop.permute.xlu0 %4984
        %4986 = vrot.lane.b32.xlu0 %v4895, 64
        %v4987 = vpop.permute.xlu0 %4986
        %4988 = vrot.lane.b32.xlu0 %v4900, 64
        %v4989 = vpop.permute.xlu0 %4988
        %4990 = vrot.lane.b32.xlu0 %v4905, 64
        %v4991 = vpop.permute.xlu0 %4990
        %4992 = vrot.lane.b32.xlu0 %v4910, 64
        %v4993 = vpop.permute.xlu0 %4992
        %4994 = vrot.lane.b32.xlu0 %v4915, 64
        %v4995 = vpop.permute.xlu0 %4994
        %4996 = vrot.lane.b32.xlu0 %v4920, 64
        %v4997 = vpop.permute.xlu0 %4996
        %4998 = vrot.lane.b32.xlu0 %v4925, 64
        %v4999 = vpop.permute.xlu0 %4998
        %5000 = vrot.lane.b32.xlu0 %v4930, 64
        %v5001 = vpop.permute.xlu0 %5000
        %5002 = vrot.lane.b32.xlu0 %v4935, 64
        %v5003 = vpop.permute.xlu0 %5002
        %5004 = vrot.lane.b32.xlu0 %v4940, 64
        %v5005 = vpop.permute.xlu0 %5004
        %5006 = vrot.lane.b32.xlu0 %v4945, 64
        %v5007 = vpop.permute.xlu0 %5006
        %5008 = vrot.lane.b32.xlu0 %v4950, 64
        %v5009 = vpop.permute.xlu0 %5008
        %5010 = vrot.lane.b32.xlu0 %v4955, 64
        %v5011 = vpop.permute.xlu0 %5010
        %5012 = vrot.lane.b32.xlu0 %v4960, 64
        %v5013 = vpop.permute.xlu0 %5012
        %5014 = vrot.lane.b32.xlu0 %v4965, 64
        %v5015 = vpop.permute.xlu0 %5014
        %v5032 = vsel %vm2367, %v4216, %v4985
        %v5033 = vsel %vm2367, %v4221, %v4987
        %v5034 = vsel %vm2367, %v4226, %v4989
        %v5035 = vsel %vm2367, %v4231, %v4991
        %v5036 = vsel %vm2367, %v4236, %v4993
        %v5037 = vsel %vm2367, %v4241, %v4995
        %v5038 = vsel %vm2367, %v4246, %v4997
        %v5039 = vsel %vm2367, %v4251, %v4999
        %v5040 = vsel %vm2367, %v4256, %v5001
        %v5041 = vsel %vm2367, %v4261, %v5003
        %v5042 = vsel %vm2367, %v4266, %v5005
        %v5043 = vsel %vm2367, %v4271, %v5007
        %v5044 = vsel %vm2367, %v4276, %v5009
        %v5045 = vsel %vm2367, %v4281, %v5011
        %v5046 = vsel %vm2367, %v4286, %v5013
        %v5047 = vsel %vm2367, %v4291, %v5015
        %5048 = vst [vmem:[#allocation2 + $0x8] sm:$0xff] %v5032
        %5049 = vst [vmem:[#allocation2 + $0x20] sm:$0xff] %v5033
        %5050 = vst [vmem:[#allocation2 + $0x38] sm:$0xff] %v5034
        %5051 = vst [vmem:[#allocation2 + $0x50] sm:$0xff] %v5035
        %5052 = vst [vmem:[#allocation2 + $0x68] sm:$0xff] %v5036
        %5053 = vst [vmem:[#allocation2 + $0x80] sm:$0xff] %v5037
        %5054 = vst [vmem:[#allocation2 + $0x98] sm:$0xff] %v5038
        %5055 = vst [vmem:[#allocation2 + $0xb0] sm:$0xff] %v5039
        %5056 = vst [vmem:[#allocation2 + $0xc8] sm:$0xff] %v5040
        %5057 = vst [vmem:[#allocation2 + $0xe0] sm:$0xff] %v5041
        %5058 = vst [vmem:[#allocation2 + $0xf8] sm:$0xff] %v5042
        %5059 = vst [vmem:[#allocation2 + $0x110] sm:$0xff] %v5043
        %5060 = vst [vmem:[#allocation2 + $0x128] sm:$0xff] %v5044
        %5061 = vst [vmem:[#allocation2 + $0x140] sm:$0xff] %v5045
        %5062 = vst [vmem:[#allocation2 + $0x158] sm:$0xff] %v5046
        %5063 = vst [vmem:[#allocation2 + $0x170] sm:$0xff] %v5047
        %v5065 = vsel %vm2367, %v1288, 0
        %v5068 = vsel %vm2367, %v1294, 0
        %v5071 = vsel %vm2367, %v1300, 0
        %v5074 = vsel %vm2367, %v1306, 0
        %v5077 = vsel %vm2367, %v1312, 0
        %v5080 = vsel %vm2367, %v1318, 0
        %v5083 = vsel %vm2367, %v1324, 0
        %v5086 = vsel %vm2367, %v1330, 0
        %v5089 = vsel %vm2367, %v1336, 0
        %v5092 = vsel %vm2367, %v1342, 0
        %v5095 = vsel %vm2367, %v1348, 0
        %v5098 = vsel %vm2367, %v1354, 0
        %v5101 = vsel %vm2367, %v1360, 0
        %v5104 = vsel %vm2367, %v1366, 0
        %v5107 = vsel %vm2367, %v1372, 0
        %v5110 = vsel %vm2367, %v1378, 0
        %v5113 = vsel %vm2367, %v1612, 0
        %v5116 = vsel %vm2367, %v1618, 0
        %v5119 = vsel %vm2367, %v1624, 0
        %v5122 = vsel %vm2367, %v1630, 0
        %v5125 = vsel %vm2367, %v1636, 0
        %v5128 = vsel %vm2367, %v1642, 0
        %v5131 = vsel %vm2367, %v1648, 0
        %v5134 = vsel %vm2367, %v1654, 0
        %v5137 = vsel %vm2367, %v1660, 0
        %v5140 = vsel %vm2367, %v1666, 0
        %v5143 = vsel %vm2367, %v1672, 0
        %v5146 = vsel %vm2367, %v1678, 0
        %v5149 = vsel %vm2367, %v1684, 0
        %v5152 = vsel %vm2367, %v1690, 0
        %v5155 = vsel %vm2367, %v1696, 0
        %v5158 = vsel %vm2367, %v1702, 0
        %5160 = vmatprep.subr.mxu0 0.0
        %5161 = vmatpush1.xpose.msra.mxu0 %v5113
        %5162 = vmatprep.subr.mxu0 0.0
        %5163 = vmatpush1.xpose.msra.mxu0 %v5116
        %5164 = vmatprep.subr.mxu0 0.0
        %5165 = vmatpush1.xpose.msra.mxu0 %v5119
        %5166 = vmatprep.subr.mxu0 0.0
        %5167 = vmatpush1.xpose.msra.mxu0 %v5122
        %5168 = vmatprep.subr.mxu0 0.0
        %5169 = vmatpush1.xpose.msra.mxu0 %v5125
        %5170 = vmatprep.subr.mxu0 0.0
        %5171 = vmatpush1.xpose.msra.mxu0 %v5128
        %5172 = vmatprep.subr.mxu0 0.0
        %5173 = vmatpush1.xpose.msra.mxu0 %v5131
        %5174 = vmatprep.subr.mxu0 0.0
        %5175 = vmatpush1.xpose.msra.mxu0 %v5134
        %5176 = vmatprep.subr.mxu0 0.0
        %5177 = vmatpush1.xpose.msra.mxu0 %v5137
        %5178 = vmatprep.subr.mxu0 0.0
        %5179 = vmatpush1.xpose.msra.mxu0 %v5140
        %5180 = vmatprep.subr.mxu0 0.0
        %5181 = vmatpush1.xpose.msra.mxu0 %v5143
        %5182 = vmatprep.subr.mxu0 0.0
        %5183 = vmatpush1.xpose.msra.mxu0 %v5146
        %5184 = vmatprep.subr.mxu0 0.0
        %5185 = vmatpush1.xpose.msra.mxu0 %v5149
        %5186 = vmatprep.subr.mxu0 0.0
        %5187 = vmatpush1.xpose.msra.mxu0 %v5152
        %5188 = vmatprep.subr.mxu0 0.0
        %5189 = vmatpush1.xpose.msra.mxu0 %v5155
        %5190 = vmatprep.subr.mxu0 0.0
        %5191 = vmatpush1.xpose.msra.mxu0 %v5158
        %5192 = vmatprep.subr.mxu0 0.0
        %5193 = vmatpush1.xpose.msra.mxu0 0.0
        %5194 = vmatprep.subr.mxu0 0.0
        %5195 = vmatpush1.xpose.msra.mxu0 0.0
        %5196 = vmatprep.subr.mxu0 0.0
        %5197 = vmatpush1.xpose.msra.mxu0 0.0
        %5198 = vmatprep.subr.mxu0 0.0
        %5199 = vmatpush1.xpose.msra.mxu0 0.0
        %5200 = vmatprep.subr.mxu0 0.0
        %5201 = vmatpush1.xpose.msra.mxu0 0.0
        %5202 = vmatprep.subr.mxu0 0.0
        %5203 = vmatpush1.xpose.msra.mxu0 0.0
        %5204 = vmatprep.subr.mxu0 0.0
        %5205 = vmatpush1.xpose.msra.mxu0 0.0
        %5206 = vmatprep.subr.mxu0 0.0
        %5207 = vmatpush1.xpose.msra.mxu0 0.0
        %5208 = vmatprep.subr.mxu0 0.0
        %5209 = vmatpush1.xpose.msra.mxu0 0.0
        %5210 = vmatprep.subr.mxu0 0.0
        %5211 = vmatpush1.xpose.msra.mxu0 0.0
        %5212 = vmatprep.subr.mxu0 0.0
        %5213 = vmatpush1.xpose.msra.mxu0 0.0
        %5214 = vmatprep.subr.mxu0 0.0
        %5215 = vmatpush1.xpose.msra.mxu0 0.0
        %5216 = vmatprep.subr.mxu0 0.0
        %5217 = vmatpush1.xpose.msra.mxu0 0.0
        %5218 = vmatprep.subr.mxu0 0.0
        %5219 = vmatpush1.xpose.msra.mxu0 0.0
        %5220 = vmatprep.subr.mxu0 0.0
        %5221 = vmatpush1.xpose.msra.mxu0 0.0
        %5222 = vmatprep.subr.mxu0 0.0
        %5223 = vmatpush1.xpose.msra.mxu0 0.0
        %5224 = vmatprep.mubr.f32.mxu0 0.0
        %5225 = vmatmul.mubr.f32.gmra.mrb[0].mxu0 %v5065
        %v5226 = vpop.f32.mrb[0].mxu0
        %v5227 = vadd.f32 %v2351, %v5226
        %v5228 = vpop.f32.mrb[0].mxu0
        %5229 = vmatprep.mubr.f32.mxu0 0.0
        %5230 = vmatmul.mubr.f32.gmra.mrb[0].mxu0 %v5068
        %v5231 = vpop.f32.mrb[0].mxu0
        %v5232 = vadd.f32 %v2352, %v5231
        %v5233 = vpop.f32.mrb[0].mxu0
        %5234 = vmatprep.mubr.f32.mxu0 0.0
        %5235 = vmatmul.mubr.f32.gmra.mrb[0].mxu0 %v5071
        %v5236 = vpop.f32.mrb[0].mxu0
        %v5237 = vadd.f32 %v2353, %v5236
        %v5238 = vpop.f32.mrb[0].mxu0
        %5239 = vmatprep.mubr.f32.mxu0 0.0
        %5240 = vmatmul.mubr.f32.gmra.mrb[0].mxu0 %v5074
        %v5241 = vpop.f32.mrb[0].mxu0
        %v5242 = vadd.f32 %v2354, %v5241
        %v5243 = vpop.f32.mrb[0].mxu0
        %5244 = vmatprep.mubr.f32.mxu0 0.0
        %5245 = vmatmul.mubr.f32.gmra.mrb[0].mxu0 %v5077
        %v5246 = vpop.f32.mrb[0].mxu0
        %v5247 = vadd.f32 %v2355, %v5246
        %v5248 = vpop.f32.mrb[0].mxu0
        %5249 = vmatprep.mubr.f32.mxu0 0.0
        %5250 = vmatmul.mubr.f32.gmra.mrb[0].mxu0 %v5080
        %v5251 = vpop.f32.mrb[0].mxu0
        %v5252 = vadd.f32 %v2356, %v5251
        %v5253 = vpop.f32.mrb[0].mxu0
        %5254 = vmatprep.mubr.f32.mxu0 0.0
        %5255 = vmatmul.mubr.f32.gmra.mrb[0].mxu0 %v5083
        %v5256 = vpop.f32.mrb[0].mxu0
        %v5257 = vadd.f32 %v2357, %v5256
        %v5258 = vpop.f32.mrb[0].mxu0
        %5259 = vmatprep.mubr.f32.mxu0 0.0
        %5260 = vmatmul.mubr.f32.gmra.mrb[0].mxu0 %v5086
        %v5261 = vpop.f32.mrb[0].mxu0
        %v5262 = vadd.f32 %v2358, %v5261
        %v5263 = vpop.f32.mrb[0].mxu0
        %5264 = vmatprep.mubr.f32.mxu0 0.0
        %5265 = vmatmul.mubr.f32.gmra.mrb[0].mxu0 %v5089
        %v5266 = vpop.f32.mrb[0].mxu0
        %v5267 = vadd.f32 %v2359, %v5266
        %v5268 = vpop.f32.mrb[0].mxu0
        %5269 = vmatprep.mubr.f32.mxu0 0.0
        %5270 = vmatmul.mubr.f32.gmra.mrb[0].mxu0 %v5092
        %v5271 = vpop.f32.mrb[0].mxu0
        %v5272 = vadd.f32 %v2360, %v5271
        %v5273 = vpop.f32.mrb[0].mxu0
        %5274 = vmatprep.mubr.f32.mxu0 0.0
        %5275 = vmatmul.mubr.f32.gmra.mrb[0].mxu0 %v5095
        %v5276 = vpop.f32.mrb[0].mxu0
        %v5277 = vadd.f32 %v2361, %v5276
        %v5278 = vpop.f32.mrb[0].mxu0
        %5279 = vmatprep.mubr.f32.mxu0 0.0
        %5280 = vmatmul.mubr.f32.gmra.mrb[0].mxu0 %v5098
        %v5281 = vpop.f32.mrb[0].mxu0
        %v5282 = vadd.f32 %v2362, %v5281
        %v5283 = vpop.f32.mrb[0].mxu0
        %5284 = vmatprep.mubr.f32.mxu0 0.0
        %5285 = vmatmul.mubr.f32.gmra.mrb[0].mxu0 %v5101
        %v5286 = vpop.f32.mrb[0].mxu0
        %v5287 = vadd.f32 %v2363, %v5286
        %v5288 = vpop.f32.mrb[0].mxu0
        %5289 = vmatprep.mubr.f32.mxu0 0.0
        %5290 = vmatmul.mubr.f32.gmra.mrb[0].mxu0 %v5104
        %v5291 = vpop.f32.mrb[0].mxu0
        %v5292 = vadd.f32 %v2364, %v5291
        %v5293 = vpop.f32.mrb[0].mxu0
        %5294 = vmatprep.mubr.f32.mxu0 0.0
        %5295 = vmatmul.mubr.f32.gmra.mrb[0].mxu0 %v5107
        %v5296 = vpop.f32.mrb[0].mxu0
        %v5297 = vadd.f32 %v2365, %v5296
        %v5298 = vpop.f32.mrb[0].mxu0
        %5299 = vmatprep.mubr.f32.mxu0 0.0
        %5300 = vmatmul.mubr.f32.gmra.mrb[0].mxu0 %v5110
        %v5301 = vpop.f32.mrb[0].mxu0
        %v5302 = vadd.f32 %v2366, %v5301
        %v5303 = vpop.f32.mrb[0].mxu0
        %5304 = vdwg.mxu0
        %5305 = vmax.xlane.f32.xlu0 %v5227
        %v5306 = vpop.xlane.xlu0 %5305
        %5307 = vmax.xlane.f32.xlu0 %v5232
        %v5308 = vpop.xlane.xlu0 %5307
        %5309 = vmax.xlane.f32.xlu0 %v5237
        %v5310 = vpop.xlane.xlu0 %5309
        %5311 = vmax.xlane.f32.xlu0 %v5242
        %v5312 = vpop.xlane.xlu0 %5311
        %5313 = vmax.xlane.f32.xlu0 %v5247
        %v5314 = vpop.xlane.xlu0 %5313
        %5315 = vmax.xlane.f32.xlu0 %v5252
        %v5316 = vpop.xlane.xlu0 %5315
        %5317 = vmax.xlane.f32.xlu0 %v5257
        %v5318 = vpop.xlane.xlu0 %5317
        %5319 = vmax.xlane.f32.xlu0 %v5262
        %v5320 = vpop.xlane.xlu0 %5319
        %5321 = vmax.xlane.f32.xlu0 %v5267
        %v5322 = vpop.xlane.xlu0 %5321
        %5323 = vmax.xlane.f32.xlu0 %v5272
        %v5324 = vpop.xlane.xlu0 %5323
        %5325 = vmax.xlane.f32.xlu0 %v5277
        %v5326 = vpop.xlane.xlu0 %5325
        %5327 = vmax.xlane.f32.xlu0 %v5282
        %v5328 = vpop.xlane.xlu0 %5327
        %5329 = vmax.xlane.f32.xlu0 %v5287
        %v5330 = vpop.xlane.xlu0 %5329
        %5331 = vmax.xlane.f32.xlu0 %v5292
        %v5332 = vpop.xlane.xlu0 %5331
        %5333 = vmax.xlane.f32.xlu0 %v5297
        %v5334 = vpop.xlane.xlu0 %5333
        %5335 = vmax.xlane.f32.xlu0 %v5302
        %v5336 = vpop.xlane.xlu0 %5335
        %v5337 = vsub.f32 %v5227, %v5306
        %v5338 = vsub.f32 %v5232, %v5308
        %v5339 = vsub.f32 %v5237, %v5310
        %v5340 = vsub.f32 %v5242, %v5312
        %v5341 = vsub.f32 %v5247, %v5314
        %v5342 = vsub.f32 %v5252, %v5316
        %v5343 = vsub.f32 %v5257, %v5318
        %v5344 = vsub.f32 %v5262, %v5320
        %v5345 = vsub.f32 %v5267, %v5322
        %v5346 = vsub.f32 %v5272, %v5324
        %v5347 = vsub.f32 %v5277, %v5326
        %v5348 = vsub.f32 %v5282, %v5328
        %v5349 = vsub.f32 %v5287, %v5330
        %v5350 = vsub.f32 %v5292, %v5332
        %v5351 = vsub.f32 %v5297, %v5334
        %v5352 = vsub.f32 %v5302, %v5336
        %v5353 = vmul.f32 %v5337, 1.442695
        %v5354 = vpow.pop %v5353
        %v5355 = vmul.f32 %v5338, 1.442695
        %v5356 = vpow.pop %v5355
        %v5357 = vmul.f32 %v5339, 1.442695
        %v5358 = vpow.pop %v5357
        %v5359 = vmul.f32 %v5340, 1.442695
        %v5360 = vpow.pop %v5359
        %v5361 = vmul.f32 %v5341, 1.442695
        %v5362 = vpow.pop %v5361
        %v5363 = vmul.f32 %v5342, 1.442695
        %v5364 = vpow.pop %v5363
        %v5365 = vmul.f32 %v5343, 1.442695
        %v5366 = vpow.pop %v5365
        %v5367 = vmul.f32 %v5344, 1.442695
        %v5368 = vpow.pop %v5367
        %v5369 = vmul.f32 %v5345, 1.442695
        %v5370 = vpow.pop %v5369
        %v5371 = vmul.f32 %v5346, 1.442695
        %v5372 = vpow.pop %v5371
        %v5373 = vmul.f32 %v5347, 1.442695
        %v5374 = vpow.pop %v5373
        %v5375 = vmul.f32 %v5348, 1.442695
        %v5376 = vpow.pop %v5375
        %v5377 = vmul.f32 %v5349, 1.442695
        %v5378 = vpow.pop %v5377
        %v5379 = vmul.f32 %v5350, 1.442695
        %v5380 = vpow.pop %v5379
        %v5381 = vmul.f32 %v5351, 1.442695
        %v5382 = vpow.pop %v5381
        %v5383 = vmul.f32 %v5352, 1.442695
        %v5384 = vpow.pop %v5383
        %5385 = vadd.xlane.f32.xlu0 %v5354
        %v5386 = vpop.xlane.xlu0 %5385
        %5387 = vadd.xlane.f32.xlu0 %v5356
        %v5388 = vpop.xlane.xlu0 %5387
        %5389 = vadd.xlane.f32.xlu0 %v5358
        %v5390 = vpop.xlane.xlu0 %5389
        %5391 = vadd.xlane.f32.xlu0 %v5360
        %v5392 = vpop.xlane.xlu0 %5391
        %5393 = vadd.xlane.f32.xlu0 %v5362
        %v5394 = vpop.xlane.xlu0 %5393
        %5395 = vadd.xlane.f32.xlu0 %v5364
        %v5396 = vpop.xlane.xlu0 %5395
        %5397 = vadd.xlane.f32.xlu0 %v5366
        %v5398 = vpop.xlane.xlu0 %5397
        %5399 = vadd.xlane.f32.xlu0 %v5368
        %v5400 = vpop.xlane.xlu0 %5399
        %5401 = vadd.xlane.f32.xlu0 %v5370
        %v5402 = vpop.xlane.xlu0 %5401
        %5403 = vadd.xlane.f32.xlu0 %v5372
        %v5404 = vpop.xlane.xlu0 %5403
        %5405 = vadd.xlane.f32.xlu0 %v5374
        %v5406 = vpop.xlane.xlu0 %5405
        %5407 = vadd.xlane.f32.xlu0 %v5376
        %v5408 = vpop.xlane.xlu0 %5407
        %5409 = vadd.xlane.f32.xlu0 %v5378
        %v5410 = vpop.xlane.xlu0 %5409
        %5411 = vadd.xlane.f32.xlu0 %v5380
        %v5412 = vpop.xlane.xlu0 %5411
        %5413 = vadd.xlane.f32.xlu0 %v5382
        %v5414 = vpop.xlane.xlu0 %5413
        %5415 = vadd.xlane.f32.xlu0 %v5384
        %v5416 = vpop.xlane.xlu0 %5415
        %v5417 = vrcp.pop %v5386
        %v5418 = vrcp.pop %v5388
        %v5419 = vrcp.pop %v5390
        %v5420 = vrcp.pop %v5392
        %v5421 = vrcp.pop %v5394
        %v5422 = vrcp.pop %v5396
        %v5423 = vrcp.pop %v5398
        %v5424 = vrcp.pop %v5400
        %v5425 = vrcp.pop %v5402
        %v5426 = vrcp.pop %v5404
        %v5427 = vrcp.pop %v5406
        %v5428 = vrcp.pop %v5408
        %v5429 = vrcp.pop %v5410
        %v5430 = vrcp.pop %v5412
        %v5431 = vrcp.pop %v5414
        %v5432 = vrcp.pop %v5416
        %v5433 = vmul.f32 %v5386, %v5417
        %v5434 = vmul.f32 %v5388, %v5418
        %v5435 = vmul.f32 %v5390, %v5419
        %v5436 = vmul.f32 %v5392, %v5420
        %v5437 = vmul.f32 %v5394, %v5421
        %v5438 = vmul.f32 %v5396, %v5422
        %v5439 = vmul.f32 %v5398, %v5423
        %v5440 = vmul.f32 %v5400, %v5424
        %v5441 = vmul.f32 %v5402, %v5425
        %v5442 = vmul.f32 %v5404, %v5426
        %v5443 = vmul.f32 %v5406, %v5427
        %v5444 = vmul.f32 %v5408, %v5428
        %v5445 = vmul.f32 %v5410, %v5429
        %v5446 = vmul.f32 %v5412, %v5430
        %v5447 = vmul.f32 %v5414, %v5431
        %v5448 = vmul.f32 %v5416, %v5432
        %v5449 = vsub.f32 2.0, %v5433
        %v5450 = vsub.f32 2.0, %v5434
        %v5451 = vsub.f32 2.0, %v5435
        %v5452 = vsub.f32 2.0, %v5436
        %v5453 = vsub.f32 2.0, %v5437
        %v5454 = vsub.f32 2.0, %v5438
        %v5455 = vsub.f32 2.0, %v5439
        %v5456 = vsub.f32 2.0, %v5440
        %v5457 = vsub.f32 2.0, %v5441
        %v5458 = vsub.f32 2.0, %v5442
        %v5459 = vsub.f32 2.0, %v5443
        %v5460 = vsub.f32 2.0, %v5444
        %v5461 = vsub.f32 2.0, %v5445
        %v5462 = vsub.f32 2.0, %v5446
        %v5463 = vsub.f32 2.0, %v5447
        %v5464 = vsub.f32 2.0, %v5448
        %v5465 = vmul.f32 %v5417, %v5449
        %v5466 = vmul.f32 %v5418, %v5450
        %v5467 = vmul.f32 %v5419, %v5451
        %v5468 = vmul.f32 %v5420, %v5452
        %v5469 = vmul.f32 %v5421, %v5453
        %v5470 = vmul.f32 %v5422, %v5454
        %v5471 = vmul.f32 %v5423, %v5455
        %v5472 = vmul.f32 %v5424, %v5456
        %v5473 = vmul.f32 %v5425, %v5457
        %v5474 = vmul.f32 %v5426, %v5458
        %v5475 = vmul.f32 %v5427, %v5459
        %v5476 = vmul.f32 %v5428, %v5460
        %v5477 = vmul.f32 %v5429, %v5461
        %v5478 = vmul.f32 %v5430, %v5462
        %v5479 = vmul.f32 %v5431, %v5463
        %v5480 = vmul.f32 %v5432, %v5464
        %v5481 = vmul.f32 %v5354, %v5465
        %v5482 = vmul.f32 %v5356, %v5466
        %v5483 = vmul.f32 %v5358, %v5467
        %v5484 = vmul.f32 %v5360, %v5468
        %v5485 = vmul.f32 %v5362, %v5469
        %v5486 = vmul.f32 %v5364, %v5470
        %v5487 = vmul.f32 %v5366, %v5471
        %v5488 = vmul.f32 %v5368, %v5472
        %v5489 = vmul.f32 %v5370, %v5473
        %v5490 = vmul.f32 %v5372, %v5474
        %v5491 = vmul.f32 %v5374, %v5475
        %v5492 = vmul.f32 %v5376, %v5476
        %v5493 = vmul.f32 %v5378, %v5477
        %v5494 = vmul.f32 %v5380, %v5478
        %v5495 = vmul.f32 %v5382, %v5479
        %v5496 = vmul.f32 %v5384, %v5480
        %5497 = vmatprep.subr.mxu0 0.0
        %5498 = vmatpush1.msra.mxu0 %v2238
        %5499 = vmatprep.subr.mxu0 0.0
        %5500 = vmatpush1.msra.mxu0 %v2243
        %5501 = vmatprep.subr.mxu0 0.0
        %5502 = vmatpush1.msra.mxu0 %v2248
        %5503 = vmatprep.subr.mxu0 0.0
        %5504 = vmatpush1.msra.mxu0 %v2253
        %5505 = vmatprep.subr.mxu0 0.0
        %5506 = vmatpush1.msra.mxu0 %v2258
        %5507 = vmatprep.subr.mxu0 0.0
        %5508 = vmatpush1.msra.mxu0 %v2263
        %5509 = vmatprep.subr.mxu0 0.0
        %5510 = vmatpush1.msra.mxu0 %v2268
        %5511 = vmatprep.subr.mxu0 0.0
        %5512 = vmatpush1.msra.mxu0 %v2273
        %5513 = vmatprep.subr.mxu0 0.0
        %5514 = vmatpush1.msra.mxu0 %v2278
        %5515 = vmatprep.subr.mxu0 0.0
        %5516 = vmatpush1.msra.mxu0 %v2283
        %5517 = vmatprep.subr.mxu0 0.0
        %5518 = vmatpush1.msra.mxu0 %v2288
        %5519 = vmatprep.subr.mxu0 0.0
        %5520 = vmatpush1.msra.mxu0 %v2293
        %5521 = vmatprep.subr.mxu0 0.0
        %5522 = vmatpush1.msra.mxu0 %v2298
        %5523 = vmatprep.subr.mxu0 0.0
        %5524 = vmatpush1.msra.mxu0 %v2303
        %5525 = vmatprep.subr.mxu0 0.0
        %5526 = vmatpush1.msra.mxu0 %v2308
        %5527 = vmatprep.subr.mxu0 0.0
        %5528 = vmatpush1.msra.mxu0 %v2313
        %5529 = vmatprep.subr.mxu0 0.0
        %5530 = vmatpush1.msra.mxu0 0.0
        %5531 = vmatprep.subr.mxu0 0.0
        %5532 = vmatpush1.msra.mxu0 0.0
        %5533 = vmatprep.subr.mxu0 0.0
        %5534 = vmatpush1.msra.mxu0 0.0
        %5535 = vmatprep.subr.mxu0 0.0
        %5536 = vmatpush1.msra.mxu0 0.0
        %5537 = vmatprep.subr.mxu0 0.0
        %5538 = vmatpush1.msra.mxu0 0.0
        %5539 = vmatprep.subr.mxu0 0.0
        %5540 = vmatpush1.msra.mxu0 0.0
        %5541 = vmatprep.subr.mxu0 0.0
        %5542 = vmatpush1.msra.mxu0 0.0
        %5543 = vmatprep.subr.mxu0 0.0
        %5544 = vmatpush1.msra.mxu0 0.0
        %5545 = vmatprep.subr.mxu0 0.0
        %5546 = vmatpush1.msra.mxu0 0.0
        %5547 = vmatprep.subr.mxu0 0.0
        %5548 = vmatpush1.msra.mxu0 0.0
        %5549 = vmatprep.subr.mxu0 0.0
        %5550 = vmatpush1.msra.mxu0 0.0
        %5551 = vmatprep.subr.mxu0 0.0
        %5552 = vmatpush1.msra.mxu0 0.0
        %5553 = vmatprep.subr.mxu0 0.0
        %5554 = vmatpush1.msra.mxu0 0.0
        %5555 = vmatprep.subr.mxu0 0.0
        %5556 = vmatpush1.msra.mxu0 0.0
        %5557 = vmatprep.subr.mxu0 0.0
        %5558 = vmatpush1.msra.mxu0 0.0
        %5559 = vmatprep.subr.mxu0 0.0
        %5560 = vmatpush1.msra.mxu0 0.0
        %5561 = vmatprep.mubr.f32.mxu0 0.0
        %5562 = vmatmul.mubr.f32.gmra.mrb[0].mxu0 %v5481
        %v5563 = vpop.f32.mrb[0].mxu0
        %v5564 = vadd.f32 0.0, %v5563
        %v5565 = vpop.f32.mrb[0].mxu0
        %5566 = vmatprep.mubr.f32.mxu0 0.0
        %5567 = vmatmul.mubr.f32.gmra.mrb[0].mxu0 %v5482
        %v5568 = vpop.f32.mrb[0].mxu0
        %v5569 = vadd.f32 0.0, %v5568
        %v5570 = vpop.f32.mrb[0].mxu0
        %5571 = vmatprep.mubr.f32.mxu0 0.0
        %5572 = vmatmul.mubr.f32.gmra.mrb[0].mxu0 %v5483
        %v5573 = vpop.f32.mrb[0].mxu0
        %v5574 = vadd.f32 0.0, %v5573
        %v5575 = vpop.f32.mrb[0].mxu0
        %5576 = vmatprep.mubr.f32.mxu0 0.0
        %5577 = vmatmul.mubr.f32.gmra.mrb[0].mxu0 %v5484
        %v5578 = vpop.f32.mrb[0].mxu0
        %v5579 = vadd.f32 0.0, %v5578
        %v5580 = vpop.f32.mrb[0].mxu0
        %5581 = vmatprep.mubr.f32.mxu0 0.0
        %5582 = vmatmul.mubr.f32.gmra.mrb[0].mxu0 %v5485
        %v5583 = vpop.f32.mrb[0].mxu0
        %v5584 = vadd.f32 0.0, %v5583
        %v5585 = vpop.f32.mrb[0].mxu0
        %5586 = vmatprep.mubr.f32.mxu0 0.0
        %5587 = vmatmul.mubr.f32.gmra.mrb[0].mxu0 %v5486
        %v5588 = vpop.f32.mrb[0].mxu0
        %v5589 = vadd.f32 0.0, %v5588
        %v5590 = vpop.f32.mrb[0].mxu0
        %5591 = vmatprep.mubr.f32.mxu0 0.0
        %5592 = vmatmul.mubr.f32.gmra.mrb[0].mxu0 %v5487
        %v5593 = vpop.f32.mrb[0].mxu0
        %v5594 = vadd.f32 0.0, %v5593
        %v5595 = vpop.f32.mrb[0].mxu0
        %5596 = vmatprep.mubr.f32.mxu0 0.0
        %5597 = vmatmul.mubr.f32.gmra.mrb[0].mxu0 %v5488
        %v5598 = vpop.f32.mrb[0].mxu0
        %v5599 = vadd.f32 0.0, %v5598
        %v5600 = vpop.f32.mrb[0].mxu0
        %5601 = vmatprep.mubr.f32.mxu0 0.0
        %5602 = vmatmul.mubr.f32.gmra.mrb[0].mxu0 %v5489
        %v5603 = vpop.f32.mrb[0].mxu0
        %v5604 = vadd.f32 0.0, %v5603
        %v5605 = vpop.f32.mrb[0].mxu0
        %5606 = vmatprep.mubr.f32.mxu0 0.0
        %5607 = vmatmul.mubr.f32.gmra.mrb[0].mxu0 %v5490
        %v5608 = vpop.f32.mrb[0].mxu0
        %v5609 = vadd.f32 0.0, %v5608
        %v5610 = vpop.f32.mrb[0].mxu0
        %5611 = vmatprep.mubr.f32.mxu0 0.0
        %5612 = vmatmul.mubr.f32.gmra.mrb[0].mxu0 %v5491
        %v5613 = vpop.f32.mrb[0].mxu0
        %v5614 = vadd.f32 0.0, %v5613
        %v5615 = vpop.f32.mrb[0].mxu0
        %5616 = vmatprep.mubr.f32.mxu0 0.0
        %5617 = vmatmul.mubr.f32.gmra.mrb[0].mxu0 %v5492
        %v5618 = vpop.f32.mrb[0].mxu0
        %v5619 = vadd.f32 0.0, %v5618
        %v5620 = vpop.f32.mrb[0].mxu0
        %5621 = vmatprep.mubr.f32.mxu0 0.0
        %5622 = vmatmul.mubr.f32.gmra.mrb[0].mxu0 %v5493
        %v5623 = vpop.f32.mrb[0].mxu0
        %v5624 = vadd.f32 0.0, %v5623
        %v5625 = vpop.f32.mrb[0].mxu0
        %5626 = vmatprep.mubr.f32.mxu0 0.0
        %5627 = vmatmul.mubr.f32.gmra.mrb[0].mxu0 %v5494
        %v5628 = vpop.f32.mrb[0].mxu0
        %v5629 = vadd.f32 0.0, %v5628
        %v5630 = vpop.f32.mrb[0].mxu0
        %5631 = vmatprep.mubr.f32.mxu0 0.0
        %5632 = vmatmul.mubr.f32.gmra.mrb[0].mxu0 %v5495
        %v5633 = vpop.f32.mrb[0].mxu0
        %v5634 = vadd.f32 0.0, %v5633
        %v5635 = vpop.f32.mrb[0].mxu0
        %5636 = vmatprep.mubr.f32.mxu0 0.0
        %5637 = vmatmul.mubr.f32.gmra.mrb[0].mxu0 %v5496
        %v5638 = vpop.f32.mrb[0].mxu0
        %v5639 = vadd.f32 0.0, %v5638
        %v5640 = vpop.f32.mrb[0].mxu0
        %5641 = vdwg.mxu0
        %5642 = vrot.lane.b32.xlu0 %v1288, 64
        %v5643 = vpop.permute.xlu0 %5642
        %5644 = vrot.lane.b32.xlu0 %v1294, 64
        %v5645 = vpop.permute.xlu0 %5644
        %5646 = vrot.lane.b32.xlu0 %v1300, 64
        %v5647 = vpop.permute.xlu0 %5646
        %5648 = vrot.lane.b32.xlu0 %v1306, 64
        %v5649 = vpop.permute.xlu0 %5648
        %5650 = vrot.lane.b32.xlu0 %v1312, 64
        %v5651 = vpop.permute.xlu0 %5650
        %5652 = vrot.lane.b32.xlu0 %v1318, 64
        %v5653 = vpop.permute.xlu0 %5652
        %5654 = vrot.lane.b32.xlu0 %v1324, 64
        %v5655 = vpop.permute.xlu0 %5654
        %5656 = vrot.lane.b32.xlu0 %v1330, 64
        %v5657 = vpop.permute.xlu0 %5656
        %5658 = vrot.lane.b32.xlu0 %v1336, 64
        %v5659 = vpop.permute.xlu0 %5658
        %5660 = vrot.lane.b32.xlu0 %v1342, 64
        %v5661 = vpop.permute.xlu0 %5660
        %5662 = vrot.lane.b32.xlu0 %v1348, 64
        %v5663 = vpop.permute.xlu0 %5662
        %5664 = vrot.lane.b32.xlu0 %v1354, 64
        %v5665 = vpop.permute.xlu0 %5664
        %5666 = vrot.lane.b32.xlu0 %v1360, 64
        %v5667 = vpop.permute.xlu0 %5666
        %5668 = vrot.lane.b32.xlu0 %v1366, 64
        %v5669 = vpop.permute.xlu0 %5668
        %5670 = vrot.lane.b32.xlu0 %v1372, 64
        %v5671 = vpop.permute.xlu0 %5670
        %5672 = vrot.lane.b32.xlu0 %v1378, 64
        %v5673 = vpop.permute.xlu0 %5672
        %5674 = vrot.lane.b32.xlu0 %v1612, 64
        %v5675 = vpop.permute.xlu0 %5674
        %5676 = vrot.lane.b32.xlu0 %v1618, 64
        %v5677 = vpop.permute.xlu0 %5676
        %5678 = vrot.lane.b32.xlu0 %v1624, 64
        %v5679 = vpop.permute.xlu0 %5678
        %5680 = vrot.lane.b32.xlu0 %v1630, 64
        %v5681 = vpop.permute.xlu0 %5680
        %5682 = vrot.lane.b32.xlu0 %v1636, 64
        %v5683 = vpop.permute.xlu0 %5682
        %5684 = vrot.lane.b32.xlu0 %v1642, 64
        %v5685 = vpop.permute.xlu0 %5684
        %5686 = vrot.lane.b32.xlu0 %v1648, 64
        %v5687 = vpop.permute.xlu0 %5686
        %5688 = vrot.lane.b32.xlu0 %v1654, 64
        %v5689 = vpop.permute.xlu0 %5688
        %5690 = vrot.lane.b32.xlu0 %v1660, 64
        %v5691 = vpop.permute.xlu0 %5690
        %5692 = vrot.lane.b32.xlu0 %v1666, 64
        %v5693 = vpop.permute.xlu0 %5692
        %5694 = vrot.lane.b32.xlu0 %v1672, 64
        %v5695 = vpop.permute.xlu0 %5694
        %5696 = vrot.lane.b32.xlu0 %v1678, 64
        %v5697 = vpop.permute.xlu0 %5696
        %5698 = vrot.lane.b32.xlu0 %v1684, 64
        %v5699 = vpop.permute.xlu0 %5698
        %5700 = vrot.lane.b32.xlu0 %v1690, 64
        %v5701 = vpop.permute.xlu0 %5700
        %5702 = vrot.lane.b32.xlu0 %v1696, 64
        %v5703 = vpop.permute.xlu0 %5702
        %5704 = vrot.lane.b32.xlu0 %v1702, 64
        %v5705 = vpop.permute.xlu0 %5704
        %v5706 = vsel %vm2367, %v5643, 0
        %v5708 = vsel %vm2367, %v5645, 0
        %v5710 = vsel %vm2367, %v5647, 0
        %v5712 = vsel %vm2367, %v5649, 0
        %v5714 = vsel %vm2367, %v5651, 0
        %v5716 = vsel %vm2367, %v5653, 0
        %v5718 = vsel %vm2367, %v5655, 0
        %v5720 = vsel %vm2367, %v5657, 0
        %v5722 = vsel %vm2367, %v5659, 0
        %v5724 = vsel %vm2367, %v5661, 0
        %v5726 = vsel %vm2367, %v5663, 0
        %v5728 = vsel %vm2367, %v5665, 0
        %v5730 = vsel %vm2367, %v5667, 0
        %v5732 = vsel %vm2367, %v5669, 0
        %v5734 = vsel %vm2367, %v5671, 0
        %v5736 = vsel %vm2367, %v5673, 0
        %v5738 = vsel %vm2367, %v5675, 0
        %v5740 = vsel %vm2367, %v5677, 0
        %v5742 = vsel %vm2367, %v5679, 0
        %v5744 = vsel %vm2367, %v5681, 0
        %v5746 = vsel %vm2367, %v5683, 0
        %v5748 = vsel %vm2367, %v5685, 0
        %v5750 = vsel %vm2367, %v5687, 0
        %v5752 = vsel %vm2367, %v5689, 0
        %v5754 = vsel %vm2367, %v5691, 0
        %v5756 = vsel %vm2367, %v5693, 0
        %v5758 = vsel %vm2367, %v5695, 0
        %v5760 = vsel %vm2367, %v5697, 0
        %v5762 = vsel %vm2367, %v5699, 0
        %v5764 = vsel %vm2367, %v5701, 0
        %v5766 = vsel %vm2367, %v5703, 0
        %v5768 = vsel %vm2367, %v5705, 0
        %5770 = vmatprep.subr.mxu0 0.0
        %5771 = vmatpush1.xpose.msra.mxu0 %v5738
        %5772 = vmatprep.subr.mxu0 0.0
        %5773 = vmatpush1.xpose.msra.mxu0 %v5740
        %5774 = vmatprep.subr.mxu0 0.0
        %5775 = vmatpush1.xpose.msra.mxu0 %v5742
        %5776 = vmatprep.subr.mxu0 0.0
        %5777 = vmatpush1.xpose.msra.mxu0 %v5744
        %5778 = vmatprep.subr.mxu0 0.0
        %5779 = vmatpush1.xpose.msra.mxu0 %v5746
        %5780 = vmatprep.subr.mxu0 0.0
        %5781 = vmatpush1.xpose.msra.mxu0 %v5748
        %5782 = vmatprep.subr.mxu0 0.0
        %5783 = vmatpush1.xpose.msra.mxu0 %v5750
        %5784 = vmatprep.subr.mxu0 0.0
        %5785 = vmatpush1.xpose.msra.mxu0 %v5752
        %5786 = vmatprep.subr.mxu0 0.0
        %5787 = vmatpush1.xpose.msra.mxu0 %v5754
        %5788 = vmatprep.subr.mxu0 0.0
        %5789 = vmatpush1.xpose.msra.mxu0 %v5756
        %5790 = vmatprep.subr.mxu0 0.0
        %5791 = vmatpush1.xpose.msra.mxu0 %v5758
        %5792 = vmatprep.subr.mxu0 0.0
        %5793 = vmatpush1.xpose.msra.mxu0 %v5760
        %5794 = vmatprep.subr.mxu0 0.0
        %5795 = vmatpush1.xpose.msra.mxu0 %v5762
        %5796 = vmatprep.subr.mxu0 0.0
        %5797 = vmatpush1.xpose.msra.mxu0 %v5764
        %5798 = vmatprep.subr.mxu0 0.0
        %5799 = vmatpush1.xpose.msra.mxu0 %v5766
        %5800 = vmatprep.subr.mxu0 0.0
        %5801 = vmatpush1.xpose.msra.mxu0 %v5768
        %5802 = vmatprep.subr.mxu0 0.0
        %5803 = vmatpush1.xpose.msra.mxu0 0.0
        %5804 = vmatprep.subr.mxu0 0.0
        %5805 = vmatpush1.xpose.msra.mxu0 0.0
        %5806 = vmatprep.subr.mxu0 0.0
        %5807 = vmatpush1.xpose.msra.mxu0 0.0
        %5808 = vmatprep.subr.mxu0 0.0
        %5809 = vmatpush1.xpose.msra.mxu0 0.0
        %5810 = vmatprep.subr.mxu0 0.0
        %5811 = vmatpush1.xpose.msra.mxu0 0.0
        %5812 = vmatprep.subr.mxu0 0.0
        %5813 = vmatpush1.xpose.msra.mxu0 0.0
        %5814 = vmatprep.subr.mxu0 0.0
        %5815 = vmatpush1.xpose.msra.mxu0 0.0
        %5816 = vmatprep.subr.mxu0 0.0
        %5817 = vmatpush1.xpose.msra.mxu0 0.0
        %5818 = vmatprep.subr.mxu0 0.0
        %5819 = vmatpush1.xpose.msra.mxu0 0.0
        %5820 = vmatprep.subr.mxu0 0.0
        %5821 = vmatpush1.xpose.msra.mxu0 0.0
        %5822 = vmatprep.subr.mxu0 0.0
        %5823 = vmatpush1.xpose.msra.mxu0 0.0
        %5824 = vmatprep.subr.mxu0 0.0
        %5825 = vmatpush1.xpose.msra.mxu0 0.0
        %5826 = vmatprep.subr.mxu0 0.0
        %5827 = vmatpush1.xpose.msra.mxu0 0.0
        %5828 = vmatprep.subr.mxu0 0.0
        %5829 = vmatpush1.xpose.msra.mxu0 0.0
        %5830 = vmatprep.subr.mxu0 0.0
        %5831 = vmatpush1.xpose.msra.mxu0 0.0
        %5832 = vmatprep.subr.mxu0 0.0
        %5833 = vmatpush1.xpose.msra.mxu0 0.0
        %5834 = vmatprep.mubr.f32.mxu0 0.0
        %5835 = vmatmul.mubr.f32.gmra.mrb[0].mxu0 %v5706
        %v5836 = vpop.f32.mrb[0].mxu0
        %v5837 = vadd.f32 %v2351, %v5836
        %v5838 = vpop.f32.mrb[0].mxu0
        %5839 = vmatprep.mubr.f32.mxu0 0.0
        %5840 = vmatmul.mubr.f32.gmra.mrb[0].mxu0 %v5708
        %v5841 = vpop.f32.mrb[0].mxu0
        %v5842 = vadd.f32 %v2352, %v5841
        %v5843 = vpop.f32.mrb[0].mxu0
        %5844 = vmatprep.mubr.f32.mxu0 0.0
        %5845 = vmatmul.mubr.f32.gmra.mrb[0].mxu0 %v5710
        %v5846 = vpop.f32.mrb[0].mxu0
        %v5847 = vadd.f32 %v2353, %v5846
        %v5848 = vpop.f32.mrb[0].mxu0
        %5849 = vmatprep.mubr.f32.mxu0 0.0
        %5850 = vmatmul.mubr.f32.gmra.mrb[0].mxu0 %v5712
        %v5851 = vpop.f32.mrb[0].mxu0
        %v5852 = vadd.f32 %v2354, %v5851
        %v5853 = vpop.f32.mrb[0].mxu0
        %5854 = vmatprep.mubr.f32.mxu0 0.0
        %5855 = vmatmul.mubr.f32.gmra.mrb[0].mxu0 %v5714
        %v5856 = vpop.f32.mrb[0].mxu0
        %v5857 = vadd.f32 %v2355, %v5856
        %v5858 = vpop.f32.mrb[0].mxu0
        %5859 = vmatprep.mubr.f32.mxu0 0.0
        %5860 = vmatmul.mubr.f32.gmra.mrb[0].mxu0 %v5716
        %v5861 = vpop.f32.mrb[0].mxu0
        %v5862 = vadd.f32 %v2356, %v5861
        %v5863 = vpop.f32.mrb[0].mxu0
        %5864 = vmatprep.mubr.f32.mxu0 0.0
        %5865 = vmatmul.mubr.f32.gmra.mrb[0].mxu0 %v5718
        %v5866 = vpop.f32.mrb[0].mxu0
        %v5867 = vadd.f32 %v2357, %v5866
        %v5868 = vpop.f32.mrb[0].mxu0
        %5869 = vmatprep.mubr.f32.mxu0 0.0
        %5870 = vmatmul.mubr.f32.gmra.mrb[0].mxu0 %v5720
        %v5871 = vpop.f32.mrb[0].mxu0
        %v5872 = vadd.f32 %v2358, %v5871
        %v5873 = vpop.f32.mrb[0].mxu0
        %5874 = vmatprep.mubr.f32.mxu0 0.0
        %5875 = vmatmul.mubr.f32.gmra.mrb[0].mxu0 %v5722
        %v5876 = vpop.f32.mrb[0].mxu0
        %v5877 = vadd.f32 %v2359, %v5876
        %v5878 = vpop.f32.mrb[0].mxu0
        %5879 = vmatprep.mubr.f32.mxu0 0.0
        %5880 = vmatmul.mubr.f32.gmra.mrb[0].mxu0 %v5724
        %v5881 = vpop.f32.mrb[0].mxu0
        %v5882 = vadd.f32 %v2360, %v5881
        %v5883 = vpop.f32.mrb[0].mxu0
        %5884 = vmatprep.mubr.f32.mxu0 0.0
        %5885 = vmatmul.mubr.f32.gmra.mrb[0].mxu0 %v5726
        %v5886 = vpop.f32.mrb[0].mxu0
        %v5887 = vadd.f32 %v2361, %v5886
        %v5888 = vpop.f32.mrb[0].mxu0
        %5889 = vmatprep.mubr.f32.mxu0 0.0
        %5890 = vmatmul.mubr.f32.gmra.mrb[0].mxu0 %v5728
        %v5891 = vpop.f32.mrb[0].mxu0
        %v5892 = vadd.f32 %v2362, %v5891
        %v5893 = vpop.f32.mrb[0].mxu0
        %5894 = vmatprep.mubr.f32.mxu0 0.0
        %5895 = vmatmul.mubr.f32.gmra.mrb[0].mxu0 %v5730
        %v5896 = vpop.f32.mrb[0].mxu0
        %v5897 = vadd.f32 %v2363, %v5896
        %v5898 = vpop.f32.mrb[0].mxu0
        %5899 = vmatprep.mubr.f32.mxu0 0.0
        %5900 = vmatmul.mubr.f32.gmra.mrb[0].mxu0 %v5732
        %v5901 = vpop.f32.mrb[0].mxu0
        %v5902 = vadd.f32 %v2364, %v5901
        %v5903 = vpop.f32.mrb[0].mxu0
        %5904 = vmatprep.mubr.f32.mxu0 0.0
        %5905 = vmatmul.mubr.f32.gmra.mrb[0].mxu0 %v5734
        %v5906 = vpop.f32.mrb[0].mxu0
        %v5907 = vadd.f32 %v2365, %v5906
        %v5908 = vpop.f32.mrb[0].mxu0
        %5909 = vmatprep.mubr.f32.mxu0 0.0
        %5910 = vmatmul.mubr.f32.gmra.mrb[0].mxu0 %v5736
        %v5911 = vpop.f32.mrb[0].mxu0
        %v5912 = vadd.f32 %v2366, %v5911
        %v5913 = vpop.f32.mrb[0].mxu0
        %5914 = vdwg.mxu0
        %5915 = vmax.xlane.f32.xlu0 %v5837
        %v5916 = vpop.xlane.xlu0 %5915
        %5917 = vmax.xlane.f32.xlu0 %v5842
        %v5918 = vpop.xlane.xlu0 %5917
        %5919 = vmax.xlane.f32.xlu0 %v5847
        %v5920 = vpop.xlane.xlu0 %5919
        %5921 = vmax.xlane.f32.xlu0 %v5852
        %v5922 = vpop.xlane.xlu0 %5921
        %5923 = vmax.xlane.f32.xlu0 %v5857
        %v5924 = vpop.xlane.xlu0 %5923
        %5925 = vmax.xlane.f32.xlu0 %v5862
        %v5926 = vpop.xlane.xlu0 %5925
        %5927 = vmax.xlane.f32.xlu0 %v5867
        %v5928 = vpop.xlane.xlu0 %5927
        %5929 = vmax.xlane.f32.xlu0 %v5872
        %v5930 = vpop.xlane.xlu0 %5929
        %5931 = vmax.xlane.f32.xlu0 %v5877
        %v5932 = vpop.xlane.xlu0 %5931
        %5933 = vmax.xlane.f32.xlu0 %v5882
        %v5934 = vpop.xlane.xlu0 %5933
        %5935 = vmax.xlane.f32.xlu0 %v5887
        %v5936 = vpop.xlane.xlu0 %5935
        %5937 = vmax.xlane.f32.xlu0 %v5892
        %v5938 = vpop.xlane.xlu0 %5937
        %5939 = vmax.xlane.f32.xlu0 %v5897
        %v5940 = vpop.xlane.xlu0 %5939
        %5941 = vmax.xlane.f32.xlu0 %v5902
        %v5942 = vpop.xlane.xlu0 %5941
        %5943 = vmax.xlane.f32.xlu0 %v5907
        %v5944 = vpop.xlane.xlu0 %5943
        %5945 = vmax.xlane.f32.xlu0 %v5912
        %v5946 = vpop.xlane.xlu0 %5945
        %v5947 = vsub.f32 %v5837, %v5916
        %v5948 = vsub.f32 %v5842, %v5918
        %v5949 = vsub.f32 %v5847, %v5920
        %v5950 = vsub.f32 %v5852, %v5922
        %v5951 = vsub.f32 %v5857, %v5924
        %v5952 = vsub.f32 %v5862, %v5926
        %v5953 = vsub.f32 %v5867, %v5928
        %v5954 = vsub.f32 %v5872, %v5930
        %v5955 = vsub.f32 %v5877, %v5932
        %v5956 = vsub.f32 %v5882, %v5934
        %v5957 = vsub.f32 %v5887, %v5936
        %v5958 = vsub.f32 %v5892, %v5938
        %v5959 = vsub.f32 %v5897, %v5940
        %v5960 = vsub.f32 %v5902, %v5942
        %v5961 = vsub.f32 %v5907, %v5944
        %v5962 = vsub.f32 %v5912, %v5946
        %v5963 = vmul.f32 %v5947, 1.442695
        %v5964 = vpow.pop %v5963
        %v5965 = vmul.f32 %v5948, 1.442695
        %v5966 = vpow.pop %v5965
        %v5967 = vmul.f32 %v5949, 1.442695
        %v5968 = vpow.pop %v5967
        %v5969 = vmul.f32 %v5950, 1.442695
        %v5970 = vpow.pop %v5969
        %v5971 = vmul.f32 %v5951, 1.442695
        %v5972 = vpow.pop %v5971
        %v5973 = vmul.f32 %v5952, 1.442695
        %v5974 = vpow.pop %v5973
        %v5975 = vmul.f32 %v5953, 1.442695
        %v5976 = vpow.pop %v5975
        %v5977 = vmul.f32 %v5954, 1.442695
        %v5978 = vpow.pop %v5977
        %v5979 = vmul.f32 %v5955, 1.442695
        %v5980 = vpow.pop %v5979
        %v5981 = vmul.f32 %v5956, 1.442695
        %v5982 = vpow.pop %v5981
        %v5983 = vmul.f32 %v5957, 1.442695
        %v5984 = vpow.pop %v5983
        %v5985 = vmul.f32 %v5958, 1.442695
        %v5986 = vpow.pop %v5985
        %v5987 = vmul.f32 %v5959, 1.442695
        %v5988 = vpow.pop %v5987
        %v5989 = vmul.f32 %v5960, 1.442695
        %v5990 = vpow.pop %v5989
        %v5991 = vmul.f32 %v5961, 1.442695
        %v5992 = vpow.pop %v5991
        %v5993 = vmul.f32 %v5962, 1.442695
        %v5994 = vpow.pop %v5993
        %5995 = vadd.xlane.f32.xlu0 %v5964
        %v5996 = vpop.xlane.xlu0 %5995
        %5997 = vadd.xlane.f32.xlu0 %v5966
        %v5998 = vpop.xlane.xlu0 %5997
        %5999 = vadd.xlane.f32.xlu0 %v5968
        %v6000 = vpop.xlane.xlu0 %5999
        %6001 = vadd.xlane.f32.xlu0 %v5970
        %v6002 = vpop.xlane.xlu0 %6001
        %6003 = vadd.xlane.f32.xlu0 %v5972
        %v6004 = vpop.xlane.xlu0 %6003
        %6005 = vadd.xlane.f32.xlu0 %v5974
        %v6006 = vpop.xlane.xlu0 %6005
        %6007 = vadd.xlane.f32.xlu0 %v5976
        %v6008 = vpop.xlane.xlu0 %6007
        %6009 = vadd.xlane.f32.xlu0 %v5978
        %v6010 = vpop.xlane.xlu0 %6009
        %6011 = vadd.xlane.f32.xlu0 %v5980
        %v6012 = vpop.xlane.xlu0 %6011
        %6013 = vadd.xlane.f32.xlu0 %v5982
        %v6014 = vpop.xlane.xlu0 %6013
        %6015 = vadd.xlane.f32.xlu0 %v5984
        %v6016 = vpop.xlane.xlu0 %6015
        %6017 = vadd.xlane.f32.xlu0 %v5986
        %v6018 = vpop.xlane.xlu0 %6017
        %6019 = vadd.xlane.f32.xlu0 %v5988
        %v6020 = vpop.xlane.xlu0 %6019
        %6021 = vadd.xlane.f32.xlu0 %v5990
        %v6022 = vpop.xlane.xlu0 %6021
        %6023 = vadd.xlane.f32.xlu0 %v5992
        %v6024 = vpop.xlane.xlu0 %6023
        %6025 = vadd.xlane.f32.xlu0 %v5994
        %v6026 = vpop.xlane.xlu0 %6025
        %v6027 = vrcp.pop %v5996
        %v6028 = vrcp.pop %v5998
        %v6029 = vrcp.pop %v6000
        %v6030 = vrcp.pop %v6002
        %v6031 = vrcp.pop %v6004
        %v6032 = vrcp.pop %v6006
        %v6033 = vrcp.pop %v6008
        %v6034 = vrcp.pop %v6010
        %v6035 = vrcp.pop %v6012
        %v6036 = vrcp.pop %v6014
        %v6037 = vrcp.pop %v6016
        %v6038 = vrcp.pop %v6018
        %v6039 = vrcp.pop %v6020
        %v6040 = vrcp.pop %v6022
        %v6041 = vrcp.pop %v6024
        %v6042 = vrcp.pop %v6026
        %v6043 = vmul.f32 %v5996, %v6027
        %v6044 = vmul.f32 %v5998, %v6028
        %v6045 = vmul.f32 %v6000, %v6029
        %v6046 = vmul.f32 %v6002, %v6030
        %v6047 = vmul.f32 %v6004, %v6031
        %v6048 = vmul.f32 %v6006, %v6032
        %v6049 = vmul.f32 %v6008, %v6033
        %v6050 = vmul.f32 %v6010, %v6034
        %v6051 = vmul.f32 %v6012, %v6035
        %v6052 = vmul.f32 %v6014, %v6036
        %v6053 = vmul.f32 %v6016, %v6037
        %v6054 = vmul.f32 %v6018, %v6038
        %v6055 = vmul.f32 %v6020, %v6039
        %v6056 = vmul.f32 %v6022, %v6040
        %v6057 = vmul.f32 %v6024, %v6041
        %v6058 = vmul.f32 %v6026, %v6042
        %v6059 = vsub.f32 2.0, %v6043
        %v6060 = vsub.f32 2.0, %v6044
        %v6061 = vsub.f32 2.0, %v6045
        %v6062 = vsub.f32 2.0, %v6046
        %v6063 = vsub.f32 2.0, %v6047
        %v6064 = vsub.f32 2.0, %v6048
        %v6065 = vsub.f32 2.0, %v6049
        %v6066 = vsub.f32 2.0, %v6050
        %v6067 = vsub.f32 2.0, %v6051
        %v6068 = vsub.f32 2.0, %v6052
        %v6069 = vsub.f32 2.0, %v6053
        %v6070 = vsub.f32 2.0, %v6054
        %v6071 = vsub.f32 2.0, %v6055
        %v6072 = vsub.f32 2.0, %v6056
        %v6073 = vsub.f32 2.0, %v6057
        %v6074 = vsub.f32 2.0, %v6058
        %v6075 = vmul.f32 %v6027, %v6059
        %v6076 = vmul.f32 %v6028, %v6060
        %v6077 = vmul.f32 %v6029, %v6061
        %v6078 = vmul.f32 %v6030, %v6062
        %v6079 = vmul.f32 %v6031, %v6063
        %v6080 = vmul.f32 %v6032, %v6064
        %v6081 = vmul.f32 %v6033, %v6065
        %v6082 = vmul.f32 %v6034, %v6066
        %v6083 = vmul.f32 %v6035, %v6067
        %v6084 = vmul.f32 %v6036, %v6068
        %v6085 = vmul.f32 %v6037, %v6069
        %v6086 = vmul.f32 %v6038, %v6070
        %v6087 = vmul.f32 %v6039, %v6071
        %v6088 = vmul.f32 %v6040, %v6072
        %v6089 = vmul.f32 %v6041, %v6073
        %v6090 = vmul.f32 %v6042, %v6074
        %v6091 = vmul.f32 %v5964, %v6075
        %v6092 = vmul.f32 %v5966, %v6076
        %v6093 = vmul.f32 %v5968, %v6077
        %v6094 = vmul.f32 %v5970, %v6078
        %v6095 = vmul.f32 %v5972, %v6079
        %v6096 = vmul.f32 %v5974, %v6080
        %v6097 = vmul.f32 %v5976, %v6081
        %v6098 = vmul.f32 %v5978, %v6082
        %v6099 = vmul.f32 %v5980, %v6083
        %v6100 = vmul.f32 %v5982, %v6084
        %v6101 = vmul.f32 %v5984, %v6085
        %v6102 = vmul.f32 %v5986, %v6086
        %v6103 = vmul.f32 %v5988, %v6087
        %v6104 = vmul.f32 %v5990, %v6088
        %v6105 = vmul.f32 %v5992, %v6089
        %v6106 = vmul.f32 %v5994, %v6090
        %6123 = vrot.lane.b32.xlu0 %v2238, 64
        %v6124 = vpop.permute.xlu0 %6123
        %6125 = vrot.lane.b32.xlu0 %v2243, 64
        %v6126 = vpop.permute.xlu0 %6125
        %6127 = vrot.lane.b32.xlu0 %v2248, 64
        %v6128 = vpop.permute.xlu0 %6127
        %6129 = vrot.lane.b32.xlu0 %v2253, 64
        %v6130 = vpop.permute.xlu0 %6129
        %6131 = vrot.lane.b32.xlu0 %v2258, 64
        %v6132 = vpop.permute.xlu0 %6131
        %6133 = vrot.lane.b32.xlu0 %v2263, 64
        %v6134 = vpop.permute.xlu0 %6133
        %6135 = vrot.lane.b32.xlu0 %v2268, 64
        %v6136 = vpop.permute.xlu0 %6135
        %6137 = vrot.lane.b32.xlu0 %v2273, 64
        %v6138 = vpop.permute.xlu0 %6137
        %6139 = vrot.lane.b32.xlu0 %v2278, 64
        %v6140 = vpop.permute.xlu0 %6139
        %6141 = vrot.lane.b32.xlu0 %v2283, 64
        %v6142 = vpop.permute.xlu0 %6141
        %6143 = vrot.lane.b32.xlu0 %v2288, 64
        %v6144 = vpop.permute.xlu0 %6143
        %6145 = vrot.lane.b32.xlu0 %v2293, 64
        %v6146 = vpop.permute.xlu0 %6145
        %6147 = vrot.lane.b32.xlu0 %v2298, 64
        %v6148 = vpop.permute.xlu0 %6147
        %6149 = vrot.lane.b32.xlu0 %v2303, 64
        %v6150 = vpop.permute.xlu0 %6149
        %6151 = vrot.lane.b32.xlu0 %v2308, 64
        %v6152 = vpop.permute.xlu0 %6151
        %6153 = vrot.lane.b32.xlu0 %v2313, 64
        %v6154 = vpop.permute.xlu0 %6153
        %6171 = vmatprep.subr.mxu0 0.0
        %6172 = vmatpush1.msra.mxu0 %v6124
        %6173 = vmatprep.subr.mxu0 0.0
        %6174 = vmatpush1.msra.mxu0 %v6126
        %6175 = vmatprep.subr.mxu0 0.0
        %6176 = vmatpush1.msra.mxu0 %v6128
        %6177 = vmatprep.subr.mxu0 0.0
        %6178 = vmatpush1.msra.mxu0 %v6130
        %6179 = vmatprep.subr.mxu0 0.0
        %6180 = vmatpush1.msra.mxu0 %v6132
        %6181 = vmatprep.subr.mxu0 0.0
        %6182 = vmatpush1.msra.mxu0 %v6134
        %6183 = vmatprep.subr.mxu0 0.0
        %6184 = vmatpush1.msra.mxu0 %v6136
        %6185 = vmatprep.subr.mxu0 0.0
        %6186 = vmatpush1.msra.mxu0 %v6138
        %6187 = vmatprep.subr.mxu0 0.0
        %6188 = vmatpush1.msra.mxu0 %v6140
        %6189 = vmatprep.subr.mxu0 0.0
        %6190 = vmatpush1.msra.mxu0 %v6142
        %6191 = vmatprep.subr.mxu0 0.0
        %6192 = vmatpush1.msra.mxu0 %v6144
        %6193 = vmatprep.subr.mxu0 0.0
        %6194 = vmatpush1.msra.mxu0 %v6146
        %6195 = vmatprep.subr.mxu0 0.0
        %6196 = vmatpush1.msra.mxu0 %v6148
        %6197 = vmatprep.subr.mxu0 0.0
        %6198 = vmatpush1.msra.mxu0 %v6150
        %6199 = vmatprep.subr.mxu0 0.0
        %6200 = vmatpush1.msra.mxu0 %v6152
        %6201 = vmatprep.subr.mxu0 0.0
        %6202 = vmatpush1.msra.mxu0 %v6154
        %6203 = vmatprep.subr.mxu0 0.0
        %6204 = vmatpush1.msra.mxu0 0.0
        %6205 = vmatprep.subr.mxu0 0.0
        %6206 = vmatpush1.msra.mxu0 0.0
        %6207 = vmatprep.subr.mxu0 0.0
        %6208 = vmatpush1.msra.mxu0 0.0
        %6209 = vmatprep.subr.mxu0 0.0
        %6210 = vmatpush1.msra.mxu0 0.0
        %6211 = vmatprep.subr.mxu0 0.0
        %6212 = vmatpush1.msra.mxu0 0.0
        %6213 = vmatprep.subr.mxu0 0.0
        %6214 = vmatpush1.msra.mxu0 0.0
        %6215 = vmatprep.subr.mxu0 0.0
        %6216 = vmatpush1.msra.mxu0 0.0
        %6217 = vmatprep.subr.mxu0 0.0
        %6218 = vmatpush1.msra.mxu0 0.0
        %6219 = vmatprep.subr.mxu0 0.0
        %6220 = vmatpush1.msra.mxu0 0.0
        %6221 = vmatprep.subr.mxu0 0.0
        %6222 = vmatpush1.msra.mxu0 0.0
        %6223 = vmatprep.subr.mxu0 0.0
        %6224 = vmatpush1.msra.mxu0 0.0
        %6225 = vmatprep.subr.mxu0 0.0
        %6226 = vmatpush1.msra.mxu0 0.0
        %6227 = vmatprep.subr.mxu0 0.0
        %6228 = vmatpush1.msra.mxu0 0.0
        %6229 = vmatprep.subr.mxu0 0.0
        %6230 = vmatpush1.msra.mxu0 0.0
        %6231 = vmatprep.subr.mxu0 0.0
        %6232 = vmatpush1.msra.mxu0 0.0
        %6233 = vmatprep.subr.mxu0 0.0
        %6234 = vmatpush1.msra.mxu0 0.0
        %6235 = vmatprep.mubr.f32.mxu0 0.0
        %6236 = vmatmul.mubr.f32.gmra.mrb[0].mxu0 %v6091
        %v6237 = vpop.f32.mrb[0].mxu0
        %v6238 = vadd.f32 0.0, %v6237
        %v6239 = vpop.f32.mrb[0].mxu0
        %6240 = vmatprep.mubr.f32.mxu0 0.0
        %6241 = vmatmul.mubr.f32.gmra.mrb[0].mxu0 %v6092
        %v6242 = vpop.f32.mrb[0].mxu0
        %v6243 = vadd.f32 0.0, %v6242
        %v6244 = vpop.f32.mrb[0].mxu0
        %6245 = vmatprep.mubr.f32.mxu0 0.0
        %6246 = vmatmul.mubr.f32.gmra.mrb[0].mxu0 %v6093
        %v6247 = vpop.f32.mrb[0].mxu0
        %v6248 = vadd.f32 0.0, %v6247
        %v6249 = vpop.f32.mrb[0].mxu0
        %6250 = vmatprep.mubr.f32.mxu0 0.0
        %6251 = vmatmul.mubr.f32.gmra.mrb[0].mxu0 %v6094
        %v6252 = vpop.f32.mrb[0].mxu0
        %v6253 = vadd.f32 0.0, %v6252
        %v6254 = vpop.f32.mrb[0].mxu0
        %6255 = vmatprep.mubr.f32.mxu0 0.0
        %6256 = vmatmul.mubr.f32.gmra.mrb[0].mxu0 %v6095
        %v6257 = vpop.f32.mrb[0].mxu0
        %v6258 = vadd.f32 0.0, %v6257
        %v6259 = vpop.f32.mrb[0].mxu0
        %6260 = vmatprep.mubr.f32.mxu0 0.0
        %6261 = vmatmul.mubr.f32.gmra.mrb[0].mxu0 %v6096
        %v6262 = vpop.f32.mrb[0].mxu0
        %v6263 = vadd.f32 0.0, %v6262
        %v6264 = vpop.f32.mrb[0].mxu0
        %6265 = vmatprep.mubr.f32.mxu0 0.0
        %6266 = vmatmul.mubr.f32.gmra.mrb[0].mxu0 %v6097
        %v6267 = vpop.f32.mrb[0].mxu0
        %v6268 = vadd.f32 0.0, %v6267
        %v6269 = vpop.f32.mrb[0].mxu0
        %6270 = vmatprep.mubr.f32.mxu0 0.0
        %6271 = vmatmul.mubr.f32.gmra.mrb[0].mxu0 %v6098
        %v6272 = vpop.f32.mrb[0].mxu0
        %v6273 = vadd.f32 0.0, %v6272
        %v6274 = vpop.f32.mrb[0].mxu0
        %6275 = vmatprep.mubr.f32.mxu0 0.0
        %6276 = vmatmul.mubr.f32.gmra.mrb[0].mxu0 %v6099
        %v6277 = vpop.f32.mrb[0].mxu0
        %v6278 = vadd.f32 0.0, %v6277
        %v6279 = vpop.f32.mrb[0].mxu0
        %6280 = vmatprep.mubr.f32.mxu0 0.0
        %6281 = vmatmul.mubr.f32.gmra.mrb[0].mxu0 %v6100
        %v6282 = vpop.f32.mrb[0].mxu0
        %v6283 = vadd.f32 0.0, %v6282
        %v6284 = vpop.f32.mrb[0].mxu0
        %6285 = vmatprep.mubr.f32.mxu0 0.0
        %6286 = vmatmul.mubr.f32.gmra.mrb[0].mxu0 %v6101
        %v6287 = vpop.f32.mrb[0].mxu0
        %v6288 = vadd.f32 0.0, %v6287
        %v6289 = vpop.f32.mrb[0].mxu0
        %6290 = vmatprep.mubr.f32.mxu0 0.0
        %6291 = vmatmul.mubr.f32.gmra.mrb[0].mxu0 %v6102
        %v6292 = vpop.f32.mrb[0].mxu0
        %v6293 = vadd.f32 0.0, %v6292
        %v6294 = vpop.f32.mrb[0].mxu0
        %6295 = vmatprep.mubr.f32.mxu0 0.0
        %6296 = vmatmul.mubr.f32.gmra.mrb[0].mxu0 %v6103
        %v6297 = vpop.f32.mrb[0].mxu0
        %v6298 = vadd.f32 0.0, %v6297
        %v6299 = vpop.f32.mrb[0].mxu0
        %6300 = vmatprep.mubr.f32.mxu0 0.0
        %6301 = vmatmul.mubr.f32.gmra.mrb[0].mxu0 %v6104
        %v6302 = vpop.f32.mrb[0].mxu0
        %v6303 = vadd.f32 0.0, %v6302
        %v6304 = vpop.f32.mrb[0].mxu0
        %6305 = vmatprep.mubr.f32.mxu0 0.0
        %6306 = vmatmul.mubr.f32.gmra.mrb[0].mxu0 %v6105
        %v6307 = vpop.f32.mrb[0].mxu0
        %v6308 = vadd.f32 0.0, %v6307
        %v6309 = vpop.f32.mrb[0].mxu0
        %6310 = vmatprep.mubr.f32.mxu0 0.0
        %6311 = vmatmul.mubr.f32.gmra.mrb[0].mxu0 %v6106
        %v6312 = vpop.f32.mrb[0].mxu0
        %v6313 = vadd.f32 0.0, %v6312
        %v6314 = vpop.f32.mrb[0].mxu0
        %6315 = vdwg.mxu0
        %6332 = vrot.lane.b32.xlu0 %v6238, 64
        %v6333 = vpop.permute.xlu0 %6332
        %6334 = vrot.lane.b32.xlu0 %v6243, 64
        %v6335 = vpop.permute.xlu0 %6334
        %6336 = vrot.lane.b32.xlu0 %v6248, 64
        %v6337 = vpop.permute.xlu0 %6336
        %6338 = vrot.lane.b32.xlu0 %v6253, 64
        %v6339 = vpop.permute.xlu0 %6338
        %6340 = vrot.lane.b32.xlu0 %v6258, 64
        %v6341 = vpop.permute.xlu0 %6340
        %6342 = vrot.lane.b32.xlu0 %v6263, 64
        %v6343 = vpop.permute.xlu0 %6342
        %6344 = vrot.lane.b32.xlu0 %v6268, 64
        %v6345 = vpop.permute.xlu0 %6344
        %6346 = vrot.lane.b32.xlu0 %v6273, 64
        %v6347 = vpop.permute.xlu0 %6346
        %6348 = vrot.lane.b32.xlu0 %v6278, 64
        %v6349 = vpop.permute.xlu0 %6348
        %6350 = vrot.lane.b32.xlu0 %v6283, 64
        %v6351 = vpop.permute.xlu0 %6350
        %6352 = vrot.lane.b32.xlu0 %v6288, 64
        %v6353 = vpop.permute.xlu0 %6352
        %6354 = vrot.lane.b32.xlu0 %v6293, 64
        %v6355 = vpop.permute.xlu0 %6354
        %6356 = vrot.lane.b32.xlu0 %v6298, 64
        %v6357 = vpop.permute.xlu0 %6356
        %6358 = vrot.lane.b32.xlu0 %v6303, 64
        %v6359 = vpop.permute.xlu0 %6358
        %6360 = vrot.lane.b32.xlu0 %v6308, 64
        %v6361 = vpop.permute.xlu0 %6360
        %6362 = vrot.lane.b32.xlu0 %v6313, 64
        %v6363 = vpop.permute.xlu0 %6362
        %v6380 = vsel %vm2367, %v5564, %v6333
        %v6381 = vsel %vm2367, %v5569, %v6335
        %v6382 = vsel %vm2367, %v5574, %v6337
        %v6383 = vsel %vm2367, %v5579, %v6339
        %v6384 = vsel %vm2367, %v5584, %v6341
        %v6385 = vsel %vm2367, %v5589, %v6343
        %v6386 = vsel %vm2367, %v5594, %v6345
        %v6387 = vsel %vm2367, %v5599, %v6347
        %v6388 = vsel %vm2367, %v5604, %v6349
        %v6389 = vsel %vm2367, %v5609, %v6351
        %v6390 = vsel %vm2367, %v5614, %v6353
        %v6391 = vsel %vm2367, %v5619, %v6355
        %v6392 = vsel %vm2367, %v5624, %v6357
        %v6393 = vsel %vm2367, %v5629, %v6359
        %v6394 = vsel %vm2367, %v5634, %v6361
        %v6395 = vsel %vm2367, %v5639, %v6363
        %6396 = vst [vmem:[#allocation2 + $0x10] sm:$0xff] %v6380
        %6397 = vst [vmem:[#allocation2 + $0x28] sm:$0xff] %v6381
        %6398 = vst [vmem:[#allocation2 + $0x40] sm:$0xff] %v6382
        %6399 = vst [vmem:[#allocation2 + $0x58] sm:$0xff] %v6383
        %6400 = vst [vmem:[#allocation2 + $0x70] sm:$0xff] %v6384
        %6401 = vst [vmem:[#allocation2 + $0x88] sm:$0xff] %v6385
        %6402 = vst [vmem:[#allocation2 + $0xa0] sm:$0xff] %v6386
        %6403 = vst [vmem:[#allocation2 + $0xb8] sm:$0xff] %v6387
        %6404 = vst [vmem:[#allocation2 + $0xd0] sm:$0xff] %v6388
        %6405 = vst [vmem:[#allocation2 + $0xe8] sm:$0xff] %v6389
        %6406 = vst [vmem:[#allocation2 + $0x100] sm:$0xff] %v6390
        %6407 = vst [vmem:[#allocation2 + $0x118] sm:$0xff] %v6391
        %6408 = vst [vmem:[#allocation2 + $0x130] sm:$0xff] %v6392
        %6409 = vst [vmem:[#allocation2 + $0x148] sm:$0xff] %v6393
        %6410 = vst [vmem:[#allocation2 + $0x160] sm:$0xff] %v6394
        %6411 = vst [vmem:[#allocation2 + $0x178] sm:$0xff] %v6395
        %v6412 = vld [vmem:[#allocation2] sm:$0xff]
        %v6413 = vld [vmem:[#allocation2 + $0x8] sm:$0xff]
        %v6414 = vld [vmem:[#allocation2 + $0x10] sm:$0xff]
        %v6415 = vld [vmem:[#allocation2 + $0x18] sm:$0xff]
        %v6416 = vld [vmem:[#allocation2 + $0x20] sm:$0xff]
        %v6417 = vld [vmem:[#allocation2 + $0x28] sm:$0xff]
        %v6418 = vld [vmem:[#allocation2 + $0x30] sm:$0xff]
        %v6419 = vld [vmem:[#allocation2 + $0x38] sm:$0xff]
        %v6420 = vld [vmem:[#allocation2 + $0x40] sm:$0xff]
        %v6421 = vld [vmem:[#allocation2 + $0x48] sm:$0xff]
        %v6422 = vld [vmem:[#allocation2 + $0x50] sm:$0xff]
        %v6423 = vld [vmem:[#allocation2 + $0x58] sm:$0xff]
        %v6424 = vld [vmem:[#allocation2 + $0x60] sm:$0xff]
        %v6425 = vld [vmem:[#allocation2 + $0x68] sm:$0xff]
        %v6426 = vld [vmem:[#allocation2 + $0x70] sm:$0xff]
        %v6427 = vld [vmem:[#allocation2 + $0x78] sm:$0xff]
        %v6428 = vld [vmem:[#allocation2 + $0x80] sm:$0xff]
        %v6429 = vld [vmem:[#allocation2 + $0x88] sm:$0xff]
        %v6430 = vld [vmem:[#allocation2 + $0x90] sm:$0xff]
        %v6431 = vld [vmem:[#allocation2 + $0x98] sm:$0xff]
        %v6432 = vld [vmem:[#allocation2 + $0xa0] sm:$0xff]
        %v6433 = vld [vmem:[#allocation2 + $0xa8] sm:$0xff]
        %v6434 = vld [vmem:[#allocation2 + $0xb0] sm:$0xff]
        %v6435 = vld [vmem:[#allocation2 + $0xb8] sm:$0xff]
        %v6436 = vld [vmem:[#allocation2 + $0xc0] sm:$0xff]
        %v6437 = vld [vmem:[#allocation2 + $0xc8] sm:$0xff]
        %v6438 = vld [vmem:[#allocation2 + $0xd0] sm:$0xff]
        %v6439 = vld [vmem:[#allocation2 + $0xd8] sm:$0xff]
        %v6440 = vld [vmem:[#allocation2 + $0xe0] sm:$0xff]
        %v6441 = vld [vmem:[#allocation2 + $0xe8] sm:$0xff]
        %v6442 = vld [vmem:[#allocation2 + $0xf0] sm:$0xff]
        %v6443 = vld [vmem:[#allocation2 + $0xf8] sm:$0xff]
        %v6444 = vld [vmem:[#allocation2 + $0x100] sm:$0xff]
        %v6445 = vld [vmem:[#allocation2 + $0x108] sm:$0xff]
        %v6446 = vld [vmem:[#allocation2 + $0x110] sm:$0xff]
        %v6447 = vld [vmem:[#allocation2 + $0x118] sm:$0xff]
        %v6448 = vld [vmem:[#allocation2 + $0x120] sm:$0xff]
        %v6449 = vld [vmem:[#allocation2 + $0x128] sm:$0xff]
        %v6450 = vld [vmem:[#allocation2 + $0x130] sm:$0xff]
        %v6451 = vld [vmem:[#allocation2 + $0x138] sm:$0xff]
        %v6452 = vld [vmem:[#allocation2 + $0x140] sm:$0xff]
        %v6453 = vld [vmem:[#allocation2 + $0x148] sm:$0xff]
        %v6454 = vld [vmem:[#allocation2 + $0x150] sm:$0xff]
        %v6455 = vld [vmem:[#allocation2 + $0x158] sm:$0xff]
        %v6456 = vld [vmem:[#allocation2 + $0x160] sm:$0xff]
        %v6457 = vld [vmem:[#allocation2 + $0x168] sm:$0xff]
        %v6458 = vld [vmem:[#allocation2 + $0x170] sm:$0xff]
        %v6459 = vld [vmem:[#allocation2 + $0x178] sm:$0xff]
        %v6460 = vld [vmem:[#allocation8] sm:$0xff]
        %v6461 = vld [vmem:[#allocation8 + $0x8] sm:$0xff]
        %v6462 = vld [vmem:[#allocation8 + $0x10] sm:$0xff]
        %v6463 = vld [vmem:[#allocation8 + $0x18] sm:$0xff]
        %v6464 = vld [vmem:[#allocation8 + $0x20] sm:$0xff]
        %v6465 = vld [vmem:[#allocation8 + $0x28] sm:$0xff]
        %v6466 = vld [vmem:[#allocation8 + $0x30] sm:$0xff]
        %v6467 = vld [vmem:[#allocation8 + $0x38] sm:$0xff]
        %v6468 = vld [vmem:[#allocation8 + $0x40] sm:$0xff]
        %v6469 = vld [vmem:[#allocation8 + $0x48] sm:$0xff]
        %v6470 = vld [vmem:[#allocation8 + $0x50] sm:$0xff]
        %v6471 = vld [vmem:[#allocation8 + $0x58] sm:$0xff]
        %v6472 = vld [vmem:[#allocation8 + $0x60] sm:$0xff]
        %v6473 = vld [vmem:[#allocation8 + $0x68] sm:$0xff]
        %v6474 = vld [vmem:[#allocation8 + $0x70] sm:$0xff]
        %v6475 = vld [vmem:[#allocation8 + $0x78] sm:$0xff]
        %v6476 = vld [vmem:[#allocation8 + $0x80] sm:$0xff]
        %v6477 = vld [vmem:[#allocation8 + $0x88] sm:$0xff]
        %v6478 = vld [vmem:[#allocation8 + $0x90] sm:$0xff]
        %v6479 = vld [vmem:[#allocation8 + $0x98] sm:$0xff]
        %v6480 = vld [vmem:[#allocation8 + $0xa0] sm:$0xff]
        %v6481 = vld [vmem:[#allocation8 + $0xa8] sm:$0xff]
        %v6482 = vld [vmem:[#allocation8 + $0xb0] sm:$0xff]
        %v6483 = vld [vmem:[#allocation8 + $0xb8] sm:$0xff]
        %v6484 = vld [vmem:[#allocation8 + $0xc0] sm:$0xff]
        %v6485 = vld [vmem:[#allocation8 + $0xc8] sm:$0xff]
        %v6486 = vld [vmem:[#allocation8 + $0xd0] sm:$0xff]
        %v6487 = vld [vmem:[#allocation8 + $0xd8] sm:$0xff]
        %v6488 = vld [vmem:[#allocation8 + $0xe0] sm:$0xff]
        %v6489 = vld [vmem:[#allocation8 + $0xe8] sm:$0xff]
        %v6490 = vld [vmem:[#allocation8 + $0xf0] sm:$0xff]
        %v6491 = vld [vmem:[#allocation8 + $0xf8] sm:$0xff]
        %v6492 = vld [vmem:[#allocation8 + $0x100] sm:$0xff]
        %v6493 = vld [vmem:[#allocation8 + $0x108] sm:$0xff]
        %v6494 = vld [vmem:[#allocation8 + $0x110] sm:$0xff]
        %v6495 = vld [vmem:[#allocation8 + $0x118] sm:$0xff]
        %v6496 = vld [vmem:[#allocation8 + $0x120] sm:$0xff]
        %v6497 = vld [vmem:[#allocation8 + $0x128] sm:$0xff]
        %v6498 = vld [vmem:[#allocation8 + $0x130] sm:$0xff]
        %v6499 = vld [vmem:[#allocation8 + $0x138] sm:$0xff]
        %v6500 = vld [vmem:[#allocation8 + $0x140] sm:$0xff]
        %v6501 = vld [vmem:[#allocation8 + $0x148] sm:$0xff]
        %v6502 = vld [vmem:[#allocation8 + $0x150] sm:$0xff]
        %v6503 = vld [vmem:[#allocation8 + $0x158] sm:$0xff]
        %v6504 = vld [vmem:[#allocation8 + $0x160] sm:$0xff]
        %v6505 = vld [vmem:[#allocation8 + $0x168] sm:$0xff]
        %v6506 = vld [vmem:[#allocation8 + $0x170] sm:$0xff]
        %v6507 = vld [vmem:[#allocation8 + $0x178] sm:$0xff]
        %v6508 = vld [vmem:[#allocation8 + $0x180] sm:$0xff]
        %v6509 = vld [vmem:[#allocation8 + $0x188] sm:$0xff]
        %v6510 = vld [vmem:[#allocation8 + $0x190] sm:$0xff]
        %v6511 = vld [vmem:[#allocation8 + $0x198] sm:$0xff]
        %v6512 = vld [vmem:[#allocation8 + $0x1a0] sm:$0xff]
        %v6513 = vld [vmem:[#allocation8 + $0x1a8] sm:$0xff]
        %v6514 = vld [vmem:[#allocation8 + $0x1b0] sm:$0xff]
        %v6515 = vld [vmem:[#allocation8 + $0x1b8] sm:$0xff]
        %v6516 = vld [vmem:[#allocation8 + $0x1c0] sm:$0xff]
        %v6517 = vld [vmem:[#allocation8 + $0x1c8] sm:$0xff]
        %v6518 = vld [vmem:[#allocation8 + $0x1d0] sm:$0xff]
        %v6519 = vld [vmem:[#allocation8 + $0x1d8] sm:$0xff]
        %v6520 = vld [vmem:[#allocation8 + $0x1e0] sm:$0xff]
        %v6521 = vld [vmem:[#allocation8 + $0x1e8] sm:$0xff]
        %v6522 = vld [vmem:[#allocation8 + $0x1f0] sm:$0xff]
        %v6523 = vld [vmem:[#allocation8 + $0x1f8] sm:$0xff]
        %v6524 = vld [vmem:[#allocation8 + $0x200] sm:$0xff]
        %v6525 = vld [vmem:[#allocation8 + $0x208] sm:$0xff]
        %v6526 = vld [vmem:[#allocation8 + $0x210] sm:$0xff]
        %v6527 = vld [vmem:[#allocation8 + $0x218] sm:$0xff]
        %v6528 = vld [vmem:[#allocation8 + $0x220] sm:$0xff]
        %v6529 = vld [vmem:[#allocation8 + $0x228] sm:$0xff]
        %v6530 = vld [vmem:[#allocation8 + $0x230] sm:$0xff]
        %v6531 = vld [vmem:[#allocation8 + $0x238] sm:$0xff]
        %v6532 = vld [vmem:[#allocation8 + $0x240] sm:$0xff]
        %v6533 = vld [vmem:[#allocation8 + $0x248] sm:$0xff]
        %v6534 = vld [vmem:[#allocation8 + $0x250] sm:$0xff]
        %v6535 = vld [vmem:[#allocation8 + $0x258] sm:$0xff]
        %v6536 = vld [vmem:[#allocation8 + $0x260] sm:$0xff]
        %v6537 = vld [vmem:[#allocation8 + $0x268] sm:$0xff]
        %v6538 = vld [vmem:[#allocation8 + $0x270] sm:$0xff]
        %v6539 = vld [vmem:[#allocation8 + $0x278] sm:$0xff]
        %v6540 = vld [vmem:[#allocation8 + $0x280] sm:$0xff]
        %v6541 = vld [vmem:[#allocation8 + $0x288] sm:$0xff]
        %v6542 = vld [vmem:[#allocation8 + $0x290] sm:$0xff]
        %v6543 = vld [vmem:[#allocation8 + $0x298] sm:$0xff]
        %v6544 = vld [vmem:[#allocation8 + $0x2a0] sm:$0xff]
        %v6545 = vld [vmem:[#allocation8 + $0x2a8] sm:$0xff]
        %v6546 = vld [vmem:[#allocation8 + $0x2b0] sm:$0xff]
        %v6547 = vld [vmem:[#allocation8 + $0x2b8] sm:$0xff]
        %v6548 = vld [vmem:[#allocation8 + $0x2c0] sm:$0xff]
        %v6549 = vld [vmem:[#allocation8 + $0x2c8] sm:$0xff]
        %v6550 = vld [vmem:[#allocation8 + $0x2d0] sm:$0xff]
        %v6551 = vld [vmem:[#allocation8 + $0x2d8] sm:$0xff]
        %v6552 = vld [vmem:[#allocation8 + $0x2e0] sm:$0xff]
        %v6553 = vld [vmem:[#allocation8 + $0x2e8] sm:$0xff]
        %v6554 = vld [vmem:[#allocation8 + $0x2f0] sm:$0xff]
        %v6555 = vld [vmem:[#allocation8 + $0x2f8] sm:$0xff]
        %v6556 = vld [vmem:[#allocation8 + $0x300] sm:$0xff]
        %v6557 = vld [vmem:[#allocation8 + $0x308] sm:$0xff]
        %v6558 = vld [vmem:[#allocation8 + $0x310] sm:$0xff]
        %v6559 = vld [vmem:[#allocation8 + $0x318] sm:$0xff]
        %v6560 = vld [vmem:[#allocation8 + $0x320] sm:$0xff]
        %v6561 = vld [vmem:[#allocation8 + $0x328] sm:$0xff]
        %v6562 = vld [vmem:[#allocation8 + $0x330] sm:$0xff]
        %v6563 = vld [vmem:[#allocation8 + $0x338] sm:$0xff]
        %v6564 = vld [vmem:[#allocation8 + $0x340] sm:$0xff]
        %v6565 = vld [vmem:[#allocation8 + $0x348] sm:$0xff]
        %v6566 = vld [vmem:[#allocation8 + $0x350] sm:$0xff]
        %v6567 = vld [vmem:[#allocation8 + $0x358] sm:$0xff]
        %v6568 = vld [vmem:[#allocation8 + $0x360] sm:$0xff]
        %v6569 = vld [vmem:[#allocation8 + $0x368] sm:$0xff]
        %v6570 = vld [vmem:[#allocation8 + $0x370] sm:$0xff]
        %v6571 = vld [vmem:[#allocation8 + $0x378] sm:$0xff]
        %v6572 = vld [vmem:[#allocation8 + $0x380] sm:$0xff]
        %v6573 = vld [vmem:[#allocation8 + $0x388] sm:$0xff]
        %v6574 = vld [vmem:[#allocation8 + $0x390] sm:$0xff]
        %v6575 = vld [vmem:[#allocation8 + $0x398] sm:$0xff]
        %v6576 = vld [vmem:[#allocation8 + $0x3a0] sm:$0xff]
        %v6577 = vld [vmem:[#allocation8 + $0x3a8] sm:$0xff]
        %v6578 = vld [vmem:[#allocation8 + $0x3b0] sm:$0xff]
        %v6579 = vld [vmem:[#allocation8 + $0x3b8] sm:$0xff]
        %v6580 = vld [vmem:[#allocation8 + $0x3c0] sm:$0xff]
        %v6581 = vld [vmem:[#allocation8 + $0x3c8] sm:$0xff]
        %v6582 = vld [vmem:[#allocation8 + $0x3d0] sm:$0xff]
        %v6583 = vld [vmem:[#allocation8 + $0x3d8] sm:$0xff]
        %v6584 = vld [vmem:[#allocation8 + $0x3e0] sm:$0xff]
        %v6585 = vld [vmem:[#allocation8 + $0x3e8] sm:$0xff]
        %v6586 = vld [vmem:[#allocation8 + $0x3f0] sm:$0xff]
        %v6587 = vld [vmem:[#allocation8 + $0x3f8] sm:$0xff]
        %v6588 = vld [vmem:[#allocation8 + $0x400] sm:$0xff]
        %v6589 = vld [vmem:[#allocation8 + $0x408] sm:$0xff]
        %v6590 = vld [vmem:[#allocation8 + $0x410] sm:$0xff]
        %v6591 = vld [vmem:[#allocation8 + $0x418] sm:$0xff]
        %v6592 = vld [vmem:[#allocation8 + $0x420] sm:$0xff]
        %v6593 = vld [vmem:[#allocation8 + $0x428] sm:$0xff]
        %v6594 = vld [vmem:[#allocation8 + $0x430] sm:$0xff]
        %v6595 = vld [vmem:[#allocation8 + $0x438] sm:$0xff]
        %v6596 = vld [vmem:[#allocation8 + $0x440] sm:$0xff]
        %v6597 = vld [vmem:[#allocation8 + $0x448] sm:$0xff]
        %v6598 = vld [vmem:[#allocation8 + $0x450] sm:$0xff]
        %v6599 = vld [vmem:[#allocation8 + $0x458] sm:$0xff]
        %v6600 = vld [vmem:[#allocation8 + $0x460] sm:$0xff]
        %v6601 = vld [vmem:[#allocation8 + $0x468] sm:$0xff]
        %v6602 = vld [vmem:[#allocation8 + $0x470] sm:$0xff]
        %v6603 = vld [vmem:[#allocation8 + $0x478] sm:$0xff]
        %v6604 = vld [vmem:[#allocation9] sm:$0x7]
        %v6606 = vlaneseq
        %v6607 = vshrl.u32 %v6606, 7
        %v6608 = vsub.s32 0, %v6607
        %v6609 = vrot.slane %v6604, %v6608
        %v6610 = vlaneseq
        %v6611 = vshrl.u32 %v6610, 7
        %v6612 = vsub.s32 1, %v6611
        %v6613 = vrot.slane %v6604, %v6612
        %v6614 = vlaneseq
        %v6615 = vshrl.u32 %v6614, 7
        %v6616 = vsub.s32 2, %v6615
        %v6617 = vrot.slane %v6604, %v6616
        %6621 = vmatprep.subr.mxu0 %v6461
        %6622 = vmatpush1.msra.mxu0 %v6460
        %6623 = vmatprep.subr.mxu0 %v6464
        %6624 = vmatpush1.msra.mxu0 %v6463
        %6625 = vmatprep.subr.mxu0 %v6467
        %6626 = vmatpush1.msra.mxu0 %v6466
        %6627 = vmatprep.subr.mxu0 %v6470
        %6628 = vmatpush1.msra.mxu0 %v6469
        %6629 = vmatprep.subr.mxu0 %v6473
        %6630 = vmatpush1.msra.mxu0 %v6472
        %6631 = vmatprep.subr.mxu0 %v6476
        %6632 = vmatpush1.msra.mxu0 %v6475
        %6633 = vmatprep.subr.mxu0 %v6479
        %6634 = vmatpush1.msra.mxu0 %v6478
        %6635 = vmatprep.subr.mxu0 %v6482
        %6636 = vmatpush1.msra.mxu0 %v6481
        %6637 = vmatprep.subr.mxu0 %v6485
        %6638 = vmatpush1.msra.mxu0 %v6484
        %6639 = vmatprep.subr.mxu0 %v6488
        %6640 = vmatpush1.msra.mxu0 %v6487
        %6641 = vmatprep.subr.mxu0 %v6491
        %6642 = vmatpush1.msra.mxu0 %v6490
        %6643 = vmatprep.subr.mxu0 %v6494
        %6644 = vmatpush1.msra.mxu0 %v6493
        %6645 = vmatprep.subr.mxu0 %v6497
        %6646 = vmatpush1.msra.mxu0 %v6496
        %6647 = vmatprep.subr.mxu0 %v6500
        %6648 = vmatpush1.msra.mxu0 %v6499
        %6649 = vmatprep.subr.mxu0 %v6503
        %6650 = vmatpush1.msra.mxu0 %v6502
        %6651 = vmatprep.subr.mxu0 %v6506
        %6652 = vmatpush1.msra.mxu0 %v6505
        %6653 = vmatprep.subr.mxu0 %v6509
        %6654 = vmatpush1.msra.mxu0 %v6508
        %6655 = vmatprep.subr.mxu0 %v6512
        %6656 = vmatpush1.msra.mxu0 %v6511
        %6657 = vmatprep.subr.mxu0 %v6515
        %6658 = vmatpush1.msra.mxu0 %v6514
        %6659 = vmatprep.subr.mxu0 %v6518
        %6660 = vmatpush1.msra.mxu0 %v6517
        %6661 = vmatprep.subr.mxu0 %v6521
        %6662 = vmatpush1.msra.mxu0 %v6520
        %6663 = vmatprep.subr.mxu0 %v6524
        %6664 = vmatpush1.msra.mxu0 %v6523
        %6665 = vmatprep.subr.mxu0 %v6527
        %6666 = vmatpush1.msra.mxu0 %v6526
        %6667 = vmatprep.subr.mxu0 %v6530
        %6668 = vmatpush1.msra.mxu0 %v6529
        %6669 = vmatprep.subr.mxu0 %v6533
        %6670 = vmatpush1.msra.mxu0 %v6532
        %6671 = vmatprep.subr.mxu0 %v6536
        %6672 = vmatpush1.msra.mxu0 %v6535
        %6673 = vmatprep.subr.mxu0 %v6539
        %6674 = vmatpush1.msra.mxu0 %v6538
        %6675 = vmatprep.subr.mxu0 %v6542
        %6676 = vmatpush1.msra.mxu0 %v6541
        %6677 = vmatprep.subr.mxu0 %v6545
        %6678 = vmatpush1.msra.mxu0 %v6544
        %6679 = vmatprep.subr.mxu0 %v6548
        %6680 = vmatpush1.msra.mxu0 %v6547
        %6681 = vmatprep.subr.mxu0 %v6551
        %6682 = vmatpush1.msra.mxu0 %v6550
        %6683 = vmatprep.subr.mxu0 %v6554
        %6684 = vmatpush1.msra.mxu0 %v6553
        %6685 = vmatprep.mubr.f32.mxu0 %v6413
        %6686 = vmatmul.mubr.f32.gmra.mrb[0].mxu0 %v6412
        %v6687 = vpop.f32.mrb[0].mxu0
        %v6688 = vadd.f32 %v6609, %v6687
        %v6689 = vpop.f32.mrb[0].mxu0
        %v6690 = vadd.f32 %v6613, %v6689
        %6691 = vmatprep.mubr.f32.mxu0 %v6416
        %6692 = vmatmul.mubr.f32.gmra.mrb[0].mxu0 %v6415
        %v6693 = vpop.f32.mrb[0].mxu0
        %v6694 = vadd.f32 %v6609, %v6693
        %v6695 = vpop.f32.mrb[0].mxu0
        %v6696 = vadd.f32 %v6613, %v6695
        %6697 = vmatprep.mubr.f32.mxu0 %v6419
        %6698 = vmatmul.mubr.f32.gmra.mrb[0].mxu0 %v6418
        %v6699 = vpop.f32.mrb[0].mxu0
        %v6700 = vadd.f32 %v6609, %v6699
        %v6701 = vpop.f32.mrb[0].mxu0
        %v6702 = vadd.f32 %v6613, %v6701
        %6703 = vmatprep.mubr.f32.mxu0 %v6422
        %6704 = vmatmul.mubr.f32.gmra.mrb[0].mxu0 %v6421
        %v6705 = vpop.f32.mrb[0].mxu0
        %v6706 = vadd.f32 %v6609, %v6705
        %v6707 = vpop.f32.mrb[0].mxu0
        %v6708 = vadd.f32 %v6613, %v6707
        %6709 = vmatprep.mubr.f32.mxu0 %v6425
        %6710 = vmatmul.mubr.f32.gmra.mrb[0].mxu0 %v6424
        %v6711 = vpop.f32.mrb[0].mxu0
        %v6712 = vadd.f32 %v6609, %v6711
        %v6713 = vpop.f32.mrb[0].mxu0
        %v6714 = vadd.f32 %v6613, %v6713
        %6715 = vmatprep.mubr.f32.mxu0 %v6428
        %6716 = vmatmul.mubr.f32.gmra.mrb[0].mxu0 %v6427
        %v6717 = vpop.f32.mrb[0].mxu0
        %v6718 = vadd.f32 %v6609, %v6717
        %v6719 = vpop.f32.mrb[0].mxu0
        %v6720 = vadd.f32 %v6613, %v6719
        %6721 = vmatprep.mubr.f32.mxu0 %v6431
        %6722 = vmatmul.mubr.f32.gmra.mrb[0].mxu0 %v6430
        %v6723 = vpop.f32.mrb[0].mxu0
        %v6724 = vadd.f32 %v6609, %v6723
        %v6725 = vpop.f32.mrb[0].mxu0
        %v6726 = vadd.f32 %v6613, %v6725
        %6727 = vmatprep.mubr.f32.mxu0 %v6434
        %6728 = vmatmul.mubr.f32.gmra.mrb[0].mxu0 %v6433
        %v6729 = vpop.f32.mrb[0].mxu0
        %v6730 = vadd.f32 %v6609, %v6729
        %v6731 = vpop.f32.mrb[0].mxu0
        %v6732 = vadd.f32 %v6613, %v6731
        %6733 = vmatprep.mubr.f32.mxu0 %v6437
        %6734 = vmatmul.mubr.f32.gmra.mrb[0].mxu0 %v6436
        %v6735 = vpop.f32.mrb[0].mxu0
        %v6736 = vadd.f32 %v6609, %v6735
        %v6737 = vpop.f32.mrb[0].mxu0
        %v6738 = vadd.f32 %v6613, %v6737
        %6739 = vmatprep.mubr.f32.mxu0 %v6440
        %6740 = vmatmul.mubr.f32.gmra.mrb[0].mxu0 %v6439
        %v6741 = vpop.f32.mrb[0].mxu0
        %v6742 = vadd.f32 %v6609, %v6741
        %v6743 = vpop.f32.mrb[0].mxu0
        %v6744 = vadd.f32 %v6613, %v6743
        %6745 = vmatprep.mubr.f32.mxu0 %v6443
        %6746 = vmatmul.mubr.f32.gmra.mrb[0].mxu0 %v6442
        %v6747 = vpop.f32.mrb[0].mxu0
        %v6748 = vadd.f32 %v6609, %v6747
        %v6749 = vpop.f32.mrb[0].mxu0
        %v6750 = vadd.f32 %v6613, %v6749
        %6751 = vmatprep.mubr.f32.mxu0 %v6446
        %6752 = vmatmul.mubr.f32.gmra.mrb[0].mxu0 %v6445
        %v6753 = vpop.f32.mrb[0].mxu0
        %v6754 = vadd.f32 %v6609, %v6753
        %v6755 = vpop.f32.mrb[0].mxu0
        %v6756 = vadd.f32 %v6613, %v6755
        %6757 = vmatprep.mubr.f32.mxu0 %v6449
        %6758 = vmatmul.mubr.f32.gmra.mrb[0].mxu0 %v6448
        %v6759 = vpop.f32.mrb[0].mxu0
        %v6760 = vadd.f32 %v6609, %v6759
        %v6761 = vpop.f32.mrb[0].mxu0
        %v6762 = vadd.f32 %v6613, %v6761
        %6763 = vmatprep.mubr.f32.mxu0 %v6452
        %6764 = vmatmul.mubr.f32.gmra.mrb[0].mxu0 %v6451
        %v6765 = vpop.f32.mrb[0].mxu0
        %v6766 = vadd.f32 %v6609, %v6765
        %v6767 = vpop.f32.mrb[0].mxu0
        %v6768 = vadd.f32 %v6613, %v6767
        %6769 = vmatprep.mubr.f32.mxu0 %v6455
        %6770 = vmatmul.mubr.f32.gmra.mrb[0].mxu0 %v6454
        %v6771 = vpop.f32.mrb[0].mxu0
        %v6772 = vadd.f32 %v6609, %v6771
        %v6773 = vpop.f32.mrb[0].mxu0
        %v6774 = vadd.f32 %v6613, %v6773
        %6775 = vmatprep.mubr.f32.mxu0 %v6458
        %6776 = vmatmul.mubr.f32.gmra.mrb[0].mxu0 %v6457
        %v6777 = vpop.f32.mrb[0].mxu0
        %v6778 = vadd.f32 %v6609, %v6777
        %v6779 = vpop.f32.mrb[0].mxu0
        %v6780 = vadd.f32 %v6613, %v6779
        %6781 = vdwg.mxu0
        %6782 = vmatprep.subr.mxu0 %v6557
        %6783 = vmatpush1.msra.mxu0 %v6556
        %6784 = vmatprep.subr.mxu0 %v6560
        %6785 = vmatpush1.msra.mxu0 %v6559
        %6786 = vmatprep.subr.mxu0 %v6563
        %6787 = vmatpush1.msra.mxu0 %v6562
        %6788 = vmatprep.subr.mxu0 %v6566
        %6789 = vmatpush1.msra.mxu0 %v6565
        %6790 = vmatprep.subr.mxu0 %v6569
        %6791 = vmatpush1.msra.mxu0 %v6568
        %6792 = vmatprep.subr.mxu0 %v6572
        %6793 = vmatpush1.msra.mxu0 %v6571
        %6794 = vmatprep.subr.mxu0 %v6575
        %6795 = vmatpush1.msra.mxu0 %v6574
        %6796 = vmatprep.subr.mxu0 %v6578
        %6797 = vmatpush1.msra.mxu0 %v6577
        %6798 = vmatprep.subr.mxu0 %v6581
        %6799 = vmatpush1.msra.mxu0 %v6580
        %6800 = vmatprep.subr.mxu0 %v6584
        %6801 = vmatpush1.msra.mxu0 %v6583
        %6802 = vmatprep.subr.mxu0 %v6587
        %6803 = vmatpush1.msra.mxu0 %v6586
        %6804 = vmatprep.subr.mxu0 %v6590
        %6805 = vmatpush1.msra.mxu0 %v6589
        %6806 = vmatprep.subr.mxu0 %v6593
        %6807 = vmatpush1.msra.mxu0 %v6592
        %6808 = vmatprep.subr.mxu0 %v6596
        %6809 = vmatpush1.msra.mxu0 %v6595
        %6810 = vmatprep.subr.mxu0 %v6599
        %6811 = vmatpush1.msra.mxu0 %v6598
        %6812 = vmatprep.subr.mxu0 %v6602
        %6813 = vmatpush1.msra.mxu0 %v6601
        %6814 = vmatprep.subr.mxu0 0.0
        %6815 = vmatpush1.msra.mxu0 0.0
        %6816 = vmatprep.subr.mxu0 0.0
        %6817 = vmatpush1.msra.mxu0 0.0
        %6818 = vmatprep.subr.mxu0 0.0
        %6819 = vmatpush1.msra.mxu0 0.0
        %6820 = vmatprep.subr.mxu0 0.0
        %6821 = vmatpush1.msra.mxu0 0.0
        %6822 = vmatprep.subr.mxu0 0.0
        %6823 = vmatpush1.msra.mxu0 0.0
        %6824 = vmatprep.subr.mxu0 0.0
        %6825 = vmatpush1.msra.mxu0 0.0
        %6826 = vmatprep.subr.mxu0 0.0
        %6827 = vmatpush1.msra.mxu0 0.0
        %6828 = vmatprep.subr.mxu0 0.0
        %6829 = vmatpush1.msra.mxu0 0.0
        %6830 = vmatprep.subr.mxu0 0.0
        %6831 = vmatpush1.msra.mxu0 0.0
        %6832 = vmatprep.subr.mxu0 0.0
        %6833 = vmatpush1.msra.mxu0 0.0
        %6834 = vmatprep.subr.mxu0 0.0
        %6835 = vmatpush1.msra.mxu0 0.0
        %6836 = vmatprep.subr.mxu0 0.0
        %6837 = vmatpush1.msra.mxu0 0.0
        %6838 = vmatprep.subr.mxu0 0.0
        %6839 = vmatpush1.msra.mxu0 0.0
        %6840 = vmatprep.subr.mxu0 0.0
        %6841 = vmatpush1.msra.mxu0 0.0
        %6842 = vmatprep.subr.mxu0 0.0
        %6843 = vmatpush1.msra.mxu0 0.0
        %6844 = vmatprep.subr.mxu0 0.0
        %6845 = vmatpush1.msra.mxu0 0.0
        %6846 = vmatprep.mubr.f32.mxu0 0.0
        %6847 = vmatmul.mubr.f32.gmra.mrb[0].mxu0 %v6414
        %v6848 = vpop.f32.mrb[0].mxu0
        %v6849 = vadd.f32 %v6688, %v6848
        %v6850 = vpop.f32.mrb[0].mxu0
        %v6851 = vadd.f32 %v6690, %v6850
        %6852 = vmatprep.mubr.f32.mxu0 0.0
        %6853 = vmatmul.mubr.f32.gmra.mrb[0].mxu0 %v6417
        %v6854 = vpop.f32.mrb[0].mxu0
        %v6855 = vadd.f32 %v6694, %v6854
        %v6856 = vpop.f32.mrb[0].mxu0
        %v6857 = vadd.f32 %v6696, %v6856
        %6858 = vmatprep.mubr.f32.mxu0 0.0
        %6859 = vmatmul.mubr.f32.gmra.mrb[0].mxu0 %v6420
        %v6860 = vpop.f32.mrb[0].mxu0
        %v6861 = vadd.f32 %v6700, %v6860
        %v6862 = vpop.f32.mrb[0].mxu0
        %v6863 = vadd.f32 %v6702, %v6862
        %6864 = vmatprep.mubr.f32.mxu0 0.0
        %6865 = vmatmul.mubr.f32.gmra.mrb[0].mxu0 %v6423
        %v6866 = vpop.f32.mrb[0].mxu0
        %v6867 = vadd.f32 %v6706, %v6866
        %v6868 = vpop.f32.mrb[0].mxu0
        %v6869 = vadd.f32 %v6708, %v6868
        %6870 = vmatprep.mubr.f32.mxu0 0.0
        %6871 = vmatmul.mubr.f32.gmra.mrb[0].mxu0 %v6426
        %v6872 = vpop.f32.mrb[0].mxu0
        %v6873 = vadd.f32 %v6712, %v6872
        %v6874 = vpop.f32.mrb[0].mxu0
        %v6875 = vadd.f32 %v6714, %v6874
        %6876 = vmatprep.mubr.f32.mxu0 0.0
        %6877 = vmatmul.mubr.f32.gmra.mrb[0].mxu0 %v6429
        %v6878 = vpop.f32.mrb[0].mxu0
        %v6879 = vadd.f32 %v6718, %v6878
        %v6880 = vpop.f32.mrb[0].mxu0
        %v6881 = vadd.f32 %v6720, %v6880
        %6882 = vmatprep.mubr.f32.mxu0 0.0
        %6883 = vmatmul.mubr.f32.gmra.mrb[0].mxu0 %v6432
        %v6884 = vpop.f32.mrb[0].mxu0
        %v6885 = vadd.f32 %v6724, %v6884
        %v6886 = vpop.f32.mrb[0].mxu0
        %v6887 = vadd.f32 %v6726, %v6886
        %6888 = vmatprep.mubr.f32.mxu0 0.0
        %6889 = vmatmul.mubr.f32.gmra.mrb[0].mxu0 %v6435
        %v6890 = vpop.f32.mrb[0].mxu0
        %v6891 = vadd.f32 %v6730, %v6890
        %v6892 = vpop.f32.mrb[0].mxu0
        %v6893 = vadd.f32 %v6732, %v6892
        %6894 = vmatprep.mubr.f32.mxu0 0.0
        %6895 = vmatmul.mubr.f32.gmra.mrb[0].mxu0 %v6438
        %v6896 = vpop.f32.mrb[0].mxu0
        %v6897 = vadd.f32 %v6736, %v6896
        %v6898 = vpop.f32.mrb[0].mxu0
        %v6899 = vadd.f32 %v6738, %v6898
        %6900 = vmatprep.mubr.f32.mxu0 0.0
        %6901 = vmatmul.mubr.f32.gmra.mrb[0].mxu0 %v6441
        %v6902 = vpop.f32.mrb[0].mxu0
        %v6903 = vadd.f32 %v6742, %v6902
        %v6904 = vpop.f32.mrb[0].mxu0
        %v6905 = vadd.f32 %v6744, %v6904
        %6906 = vmatprep.mubr.f32.mxu0 0.0
        %6907 = vmatmul.mubr.f32.gmra.mrb[0].mxu0 %v6444
        %v6908 = vpop.f32.mrb[0].mxu0
        %v6909 = vadd.f32 %v6748, %v6908
        %v6910 = vpop.f32.mrb[0].mxu0
        %v6911 = vadd.f32 %v6750, %v6910
        %6912 = vmatprep.mubr.f32.mxu0 0.0
        %6913 = vmatmul.mubr.f32.gmra.mrb[0].mxu0 %v6447
        %v6914 = vpop.f32.mrb[0].mxu0
        %v6915 = vadd.f32 %v6754, %v6914
        %v6916 = vpop.f32.mrb[0].mxu0
        %v6917 = vadd.f32 %v6756, %v6916
        %6918 = vmatprep.mubr.f32.mxu0 0.0
        %6919 = vmatmul.mubr.f32.gmra.mrb[0].mxu0 %v6450
        %v6920 = vpop.f32.mrb[0].mxu0
        %v6921 = vadd.f32 %v6760, %v6920
        %v6922 = vpop.f32.mrb[0].mxu0
        %v6923 = vadd.f32 %v6762, %v6922
        %6924 = vmatprep.mubr.f32.mxu0 0.0
        %6925 = vmatmul.mubr.f32.gmra.mrb[0].mxu0 %v6453
        %v6926 = vpop.f32.mrb[0].mxu0
        %v6927 = vadd.f32 %v6766, %v6926
        %v6928 = vpop.f32.mrb[0].mxu0
        %v6929 = vadd.f32 %v6768, %v6928
        %6930 = vmatprep.mubr.f32.mxu0 0.0
        %6931 = vmatmul.mubr.f32.gmra.mrb[0].mxu0 %v6456
        %v6932 = vpop.f32.mrb[0].mxu0
        %v6933 = vadd.f32 %v6772, %v6932
        %v6934 = vpop.f32.mrb[0].mxu0
        %v6935 = vadd.f32 %v6774, %v6934
        %6936 = vmatprep.mubr.f32.mxu0 0.0
        %6937 = vmatmul.mubr.f32.gmra.mrb[0].mxu0 %v6459
        %v6938 = vpop.f32.mrb[0].mxu0
        %v6939 = vadd.f32 %v6778, %v6938
        %v6940 = vpop.f32.mrb[0].mxu0
        %v6941 = vadd.f32 %v6780, %v6940
        %6942 = vdwg.mxu0
        %6943 = vmatprep.subr.mxu0 0.0
        %6944 = vmatpush1.msra.mxu0 %v6462
        %6945 = vmatprep.subr.mxu0 0.0
        %6946 = vmatpush1.msra.mxu0 %v6465
        %6947 = vmatprep.subr.mxu0 0.0
        %6948 = vmatpush1.msra.mxu0 %v6468
        %6949 = vmatprep.subr.mxu0 0.0
        %6950 = vmatpush1.msra.mxu0 %v6471
        %6951 = vmatprep.subr.mxu0 0.0
        %6952 = vmatpush1.msra.mxu0 %v6474
        %6953 = vmatprep.subr.mxu0 0.0
        %6954 = vmatpush1.msra.mxu0 %v6477
        %6955 = vmatprep.subr.mxu0 0.0
        %6956 = vmatpush1.msra.mxu0 %v6480
        %6957 = vmatprep.subr.mxu0 0.0
        %6958 = vmatpush1.msra.mxu0 %v6483
        %6959 = vmatprep.subr.mxu0 0.0
        %6960 = vmatpush1.msra.mxu0 %v6486
        %6961 = vmatprep.subr.mxu0 0.0
        %6962 = vmatpush1.msra.mxu0 %v6489
        %6963 = vmatprep.subr.mxu0 0.0
        %6964 = vmatpush1.msra.mxu0 %v6492
        %6965 = vmatprep.subr.mxu0 0.0
        %6966 = vmatpush1.msra.mxu0 %v6495
        %6967 = vmatprep.subr.mxu0 0.0
        %6968 = vmatpush1.msra.mxu0 %v6498
        %6969 = vmatprep.subr.mxu0 0.0
        %6970 = vmatpush1.msra.mxu0 %v6501
        %6971 = vmatprep.subr.mxu0 0.0
        %6972 = vmatpush1.msra.mxu0 %v6504
        %6973 = vmatprep.subr.mxu0 0.0
        %6974 = vmatpush1.msra.mxu0 %v6507
        %6975 = vmatprep.subr.mxu0 0.0
        %6976 = vmatpush1.msra.mxu0 %v6510
        %6977 = vmatprep.subr.mxu0 0.0
        %6978 = vmatpush1.msra.mxu0 %v6513
        %6979 = vmatprep.subr.mxu0 0.0
        %6980 = vmatpush1.msra.mxu0 %v6516
        %6981 = vmatprep.subr.mxu0 0.0
        %6982 = vmatpush1.msra.mxu0 %v6519
        %6983 = vmatprep.subr.mxu0 0.0
        %6984 = vmatpush1.msra.mxu0 %v6522
        %6985 = vmatprep.subr.mxu0 0.0
        %6986 = vmatpush1.msra.mxu0 %v6525
        %6987 = vmatprep.subr.mxu0 0.0
        %6988 = vmatpush1.msra.mxu0 %v6528
        %6989 = vmatprep.subr.mxu0 0.0
        %6990 = vmatpush1.msra.mxu0 %v6531
        %6991 = vmatprep.subr.mxu0 0.0
        %6992 = vmatpush1.msra.mxu0 %v6534
        %6993 = vmatprep.subr.mxu0 0.0
        %6994 = vmatpush1.msra.mxu0 %v6537
        %6995 = vmatprep.subr.mxu0 0.0
        %6996 = vmatpush1.msra.mxu0 %v6540
        %6997 = vmatprep.subr.mxu0 0.0
        %6998 = vmatpush1.msra.mxu0 %v6543
        %6999 = vmatprep.subr.mxu0 0.0
        %7000 = vmatpush1.msra.mxu0 %v6546
        %7001 = vmatprep.subr.mxu0 0.0
        %7002 = vmatpush1.msra.mxu0 %v6549
        %7003 = vmatprep.subr.mxu0 0.0
        %7004 = vmatpush1.msra.mxu0 %v6552
        %7005 = vmatprep.subr.mxu0 0.0
        %7006 = vmatpush1.msra.mxu0 %v6555
        %7007 = vmatprep.mubr.f32.mxu0 %v6413
        %7008 = vmatmul.mubr.f32.gmra.mrb[0].mxu0 %v6412
        %v7009 = vpop.f32.mrb[0].mxu0
        %v7010 = vadd.f32 %v6617, %v7009
        %v7011 = vpop.f32.mrb[0].mxu0
        %7012 = vmatprep.mubr.f32.mxu0 %v6416
        %7013 = vmatmul.mubr.f32.gmra.mrb[0].mxu0 %v6415
        %v7014 = vpop.f32.mrb[0].mxu0
        %v7015 = vadd.f32 %v6617, %v7014
        %v7016 = vpop.f32.mrb[0].mxu0
        %7017 = vmatprep.mubr.f32.mxu0 %v6419
        %7018 = vmatmul.mubr.f32.gmra.mrb[0].mxu0 %v6418
        %v7019 = vpop.f32.mrb[0].mxu0
        %v7020 = vadd.f32 %v6617, %v7019
        %v7021 = vpop.f32.mrb[0].mxu0
        %7022 = vmatprep.mubr.f32.mxu0 %v6422
        %7023 = vmatmul.mubr.f32.gmra.mrb[0].mxu0 %v6421
        %v7024 = vpop.f32.mrb[0].mxu0
        %v7025 = vadd.f32 %v6617, %v7024
        %v7026 = vpop.f32.mrb[0].mxu0
        %7027 = vmatprep.mubr.f32.mxu0 %v6425
        %7028 = vmatmul.mubr.f32.gmra.mrb[0].mxu0 %v6424
        %v7029 = vpop.f32.mrb[0].mxu0
        %v7030 = vadd.f32 %v6617, %v7029
        %v7031 = vpop.f32.mrb[0].mxu0
        %7032 = vmatprep.mubr.f32.mxu0 %v6428
        %7033 = vmatmul.mubr.f32.gmra.mrb[0].mxu0 %v6427
        %v7034 = vpop.f32.mrb[0].mxu0
        %v7035 = vadd.f32 %v6617, %v7034
        %v7036 = vpop.f32.mrb[0].mxu0
        %7037 = vmatprep.mubr.f32.mxu0 %v6431
        %7038 = vmatmul.mubr.f32.gmra.mrb[0].mxu0 %v6430
        %v7039 = vpop.f32.mrb[0].mxu0
        %v7040 = vadd.f32 %v6617, %v7039
        %v7041 = vpop.f32.mrb[0].mxu0
        %7042 = vmatprep.mubr.f32.mxu0 %v6434
        %7043 = vmatmul.mubr.f32.gmra.mrb[0].mxu0 %v6433
        %v7044 = vpop.f32.mrb[0].mxu0
        %v7045 = vadd.f32 %v6617, %v7044
        %v7046 = vpop.f32.mrb[0].mxu0
        %7047 = vmatprep.mubr.f32.mxu0 %v6437
        %7048 = vmatmul.mubr.f32.gmra.mrb[0].mxu0 %v6436
        %v7049 = vpop.f32.mrb[0].mxu0
        %v7050 = vadd.f32 %v6617, %v7049
        %v7051 = vpop.f32.mrb[0].mxu0
        %7052 = vmatprep.mubr.f32.mxu0 %v6440
        %7053 = vmatmul.mubr.f32.gmra.mrb[0].mxu0 %v6439
        %v7054 = vpop.f32.mrb[0].mxu0
        %v7055 = vadd.f32 %v6617, %v7054
        %v7056 = vpop.f32.mrb[0].mxu0
        %7057 = vmatprep.mubr.f32.mxu0 %v6443
        %7058 = vmatmul.mubr.f32.gmra.mrb[0].mxu0 %v6442
        %v7059 = vpop.f32.mrb[0].mxu0
        %v7060 = vadd.f32 %v6617, %v7059
        %v7061 = vpop.f32.mrb[0].mxu0
        %7062 = vmatprep.mubr.f32.mxu0 %v6446
        %7063 = vmatmul.mubr.f32.gmra.mrb[0].mxu0 %v6445
        %v7064 = vpop.f32.mrb[0].mxu0
        %v7065 = vadd.f32 %v6617, %v7064
        %v7066 = vpop.f32.mrb[0].mxu0
        %7067 = vmatprep.mubr.f32.mxu0 %v6449
        %7068 = vmatmul.mubr.f32.gmra.mrb[0].mxu0 %v6448
        %v7069 = vpop.f32.mrb[0].mxu0
        %v7070 = vadd.f32 %v6617, %v7069
        %v7071 = vpop.f32.mrb[0].mxu0
        %7072 = vmatprep.mubr.f32.mxu0 %v6452
        %7073 = vmatmul.mubr.f32.gmra.mrb[0].mxu0 %v6451
        %v7074 = vpop.f32.mrb[0].mxu0
        %v7075 = vadd.f32 %v6617, %v7074
        %v7076 = vpop.f32.mrb[0].mxu0
        %7077 = vmatprep.mubr.f32.mxu0 %v6455
        %7078 = vmatmul.mubr.f32.gmra.mrb[0].mxu0 %v6454
        %v7079 = vpop.f32.mrb[0].mxu0
        %v7080 = vadd.f32 %v6617, %v7079
        %v7081 = vpop.f32.mrb[0].mxu0
        %7082 = vmatprep.mubr.f32.mxu0 %v6458
        %7083 = vmatmul.mubr.f32.gmra.mrb[0].mxu0 %v6457
        %v7084 = vpop.f32.mrb[0].mxu0
        %v7085 = vadd.f32 %v6617, %v7084
        %v7086 = vpop.f32.mrb[0].mxu0
        %7087 = vdwg.mxu0
        %7088 = vmatprep.subr.mxu0 0.0
        %7089 = vmatpush1.msra.mxu0 %v6558
        %7090 = vmatprep.subr.mxu0 0.0
        %7091 = vmatpush1.msra.mxu0 %v6561
        %7092 = vmatprep.subr.mxu0 0.0
        %7093 = vmatpush1.msra.mxu0 %v6564
        %7094 = vmatprep.subr.mxu0 0.0
        %7095 = vmatpush1.msra.mxu0 %v6567
        %7096 = vmatprep.subr.mxu0 0.0
        %7097 = vmatpush1.msra.mxu0 %v6570
        %7098 = vmatprep.subr.mxu0 0.0
        %7099 = vmatpush1.msra.mxu0 %v6573
        %7100 = vmatprep.subr.mxu0 0.0
        %7101 = vmatpush1.msra.mxu0 %v6576
        %7102 = vmatprep.subr.mxu0 0.0
        %7103 = vmatpush1.msra.mxu0 %v6579
        %7104 = vmatprep.subr.mxu0 0.0
        %7105 = vmatpush1.msra.mxu0 %v6582
        %7106 = vmatprep.subr.mxu0 0.0
        %7107 = vmatpush1.msra.mxu0 %v6585
        %7108 = vmatprep.subr.mxu0 0.0
        %7109 = vmatpush1.msra.mxu0 %v6588
        %7110 = vmatprep.subr.mxu0 0.0
        %7111 = vmatpush1.msra.mxu0 %v6591
        %7112 = vmatprep.subr.mxu0 0.0
        %7113 = vmatpush1.msra.mxu0 %v6594
        %7114 = vmatprep.subr.mxu0 0.0
        %7115 = vmatpush1.msra.mxu0 %v6597
        %7116 = vmatprep.subr.mxu0 0.0
        %7117 = vmatpush1.msra.mxu0 %v6600
        %7118 = vmatprep.subr.mxu0 0.0
        %7119 = vmatpush1.msra.mxu0 %v6603
        %7120 = vmatprep.subr.mxu0 0.0
        %7121 = vmatpush1.msra.mxu0 0.0
        %7122 = vmatprep.subr.mxu0 0.0
        %7123 = vmatpush1.msra.mxu0 0.0
        %7124 = vmatprep.subr.mxu0 0.0
        %7125 = vmatpush1.msra.mxu0 0.0
        %7126 = vmatprep.subr.mxu0 0.0
        %7127 = vmatpush1.msra.mxu0 0.0
        %7128 = vmatprep.subr.mxu0 0.0
        %7129 = vmatpush1.msra.mxu0 0.0
        %7130 = vmatprep.subr.mxu0 0.0
        %7131 = vmatpush1.msra.mxu0 0.0
        %7132 = vmatprep.subr.mxu0 0.0
        %7133 = vmatpush1.msra.mxu0 0.0
        %7134 = vmatprep.subr.mxu0 0.0
        %7135 = vmatpush1.msra.mxu0 0.0
        %7136 = vmatprep.subr.mxu0 0.0
        %7137 = vmatpush1.msra.mxu0 0.0
        %7138 = vmatprep.subr.mxu0 0.0
        %7139 = vmatpush1.msra.mxu0 0.0
        %7140 = vmatprep.subr.mxu0 0.0
        %7141 = vmatpush1.msra.mxu0 0.0
        %7142 = vmatprep.subr.mxu0 0.0
        %7143 = vmatpush1.msra.mxu0 0.0
        %7144 = vmatprep.subr.mxu0 0.0
        %7145 = vmatpush1.msra.mxu0 0.0
        %7146 = vmatprep.subr.mxu0 0.0
        %7147 = vmatpush1.msra.mxu0 0.0
        %7148 = vmatprep.subr.mxu0 0.0
        %7149 = vmatpush1.msra.mxu0 0.0
        %7150 = vmatprep.subr.mxu0 0.0
        %7151 = vmatpush1.msra.mxu0 0.0
        %7152 = vmatprep.mubr.f32.mxu0 0.0
        %7153 = vmatmul.mubr.f32.gmra.mrb[0].mxu0 %v6414
        %v7154 = vpop.f32.mrb[0].mxu0
        %v7155 = vadd.f32 %v7010, %v7154
        %v7156 = vpop.f32.mrb[0].mxu0
        %7157 = vmatprep.mubr.f32.mxu0 0.0
        %7158 = vmatmul.mubr.f32.gmra.mrb[0].mxu0 %v6417
        %v7159 = vpop.f32.mrb[0].mxu0
        %v7160 = vadd.f32 %v7015, %v7159
        %v7161 = vpop.f32.mrb[0].mxu0
        %7162 = vmatprep.mubr.f32.mxu0 0.0
        %7163 = vmatmul.mubr.f32.gmra.mrb[0].mxu0 %v6420
        %v7164 = vpop.f32.mrb[0].mxu0
        %v7165 = vadd.f32 %v7020, %v7164
        %v7166 = vpop.f32.mrb[0].mxu0
        %7167 = vmatprep.mubr.f32.mxu0 0.0
        %7168 = vmatmul.mubr.f32.gmra.mrb[0].mxu0 %v6423
        %v7169 = vpop.f32.mrb[0].mxu0
        %v7170 = vadd.f32 %v7025, %v7169
        %v7171 = vpop.f32.mrb[0].mxu0
        %7172 = vmatprep.mubr.f32.mxu0 0.0
        %7173 = vmatmul.mubr.f32.gmra.mrb[0].mxu0 %v6426
        %v7174 = vpop.f32.mrb[0].mxu0
        %v7175 = vadd.f32 %v7030, %v7174
        %v7176 = vpop.f32.mrb[0].mxu0
        %7177 = vmatprep.mubr.f32.mxu0 0.0
        %7178 = vmatmul.mubr.f32.gmra.mrb[0].mxu0 %v6429
        %v7179 = vpop.f32.mrb[0].mxu0
        %v7180 = vadd.f32 %v7035, %v7179
        %v7181 = vpop.f32.mrb[0].mxu0
        %7182 = vmatprep.mubr.f32.mxu0 0.0
        %7183 = vmatmul.mubr.f32.gmra.mrb[0].mxu0 %v6432
        %v7184 = vpop.f32.mrb[0].mxu0
        %v7185 = vadd.f32 %v7040, %v7184
        %v7186 = vpop.f32.mrb[0].mxu0
        %7187 = vmatprep.mubr.f32.mxu0 0.0
        %7188 = vmatmul.mubr.f32.gmra.mrb[0].mxu0 %v6435
        %v7189 = vpop.f32.mrb[0].mxu0
        %v7190 = vadd.f32 %v7045, %v7189
        %v7191 = vpop.f32.mrb[0].mxu0
        %7192 = vmatprep.mubr.f32.mxu0 0.0
        %7193 = vmatmul.mubr.f32.gmra.mrb[0].mxu0 %v6438
        %v7194 = vpop.f32.mrb[0].mxu0
        %v7195 = vadd.f32 %v7050, %v7194
        %v7196 = vpop.f32.mrb[0].mxu0
        %7197 = vmatprep.mubr.f32.mxu0 0.0
        %7198 = vmatmul.mubr.f32.gmra.mrb[0].mxu0 %v6441
        %v7199 = vpop.f32.mrb[0].mxu0
        %v7200 = vadd.f32 %v7055, %v7199
        %v7201 = vpop.f32.mrb[0].mxu0
        %7202 = vmatprep.mubr.f32.mxu0 0.0
        %7203 = vmatmul.mubr.f32.gmra.mrb[0].mxu0 %v6444
        %v7204 = vpop.f32.mrb[0].mxu0
        %v7205 = vadd.f32 %v7060, %v7204
        %v7206 = vpop.f32.mrb[0].mxu0
        %7207 = vmatprep.mubr.f32.mxu0 0.0
        %7208 = vmatmul.mubr.f32.gmra.mrb[0].mxu0 %v6447
        %v7209 = vpop.f32.mrb[0].mxu0
        %v7210 = vadd.f32 %v7065, %v7209
        %v7211 = vpop.f32.mrb[0].mxu0
        %7212 = vmatprep.mubr.f32.mxu0 0.0
        %7213 = vmatmul.mubr.f32.gmra.mrb[0].mxu0 %v6450
        %v7214 = vpop.f32.mrb[0].mxu0
        %v7215 = vadd.f32 %v7070, %v7214
        %v7216 = vpop.f32.mrb[0].mxu0
        %7217 = vmatprep.mubr.f32.mxu0 0.0
        %7218 = vmatmul.mubr.f32.gmra.mrb[0].mxu0 %v6453
        %v7219 = vpop.f32.mrb[0].mxu0
        %v7220 = vadd.f32 %v7075, %v7219
        %v7221 = vpop.f32.mrb[0].mxu0
        %7222 = vmatprep.mubr.f32.mxu0 0.0
        %7223 = vmatmul.mubr.f32.gmra.mrb[0].mxu0 %v6456
        %v7224 = vpop.f32.mrb[0].mxu0
        %v7225 = vadd.f32 %v7080, %v7224
        %v7226 = vpop.f32.mrb[0].mxu0
        %7227 = vmatprep.mubr.f32.mxu0 0.0
        %7228 = vmatmul.mubr.f32.gmra.mrb[0].mxu0 %v6459
        %v7229 = vpop.f32.mrb[0].mxu0
        %v7230 = vadd.f32 %v7085, %v7229
        %v7231 = vpop.f32.mrb[0].mxu0
        %7232 = vdwg.mxu0
        %7233 = vst [vmem:[%s257] sm:$0xff] %v6849
        %7234 = vst [vmem:[%s257 + $0x8] sm:$0xff] %v6851
        %7235 = vst [vmem:[%s257 + $0x10] sm:$0xff] %v7155
        %7236 = vst [vmem:[%s257 + $0x18] sm:$0xff] %v6855
        %7237 = vst [vmem:[%s257 + $0x20] sm:$0xff] %v6857
        %7238 = vst [vmem:[%s257 + $0x28] sm:$0xff] %v7160
        %7239 = vst [vmem:[%s257 + $0x30] sm:$0xff] %v6861
        %7240 = vst [vmem:[%s257 + $0x38] sm:$0xff] %v6863
        %7241 = vst [vmem:[%s257 + $0x40] sm:$0xff] %v7165
        %7242 = vst [vmem:[%s257 + $0x48] sm:$0xff] %v6867
        %7243 = vst [vmem:[%s257 + $0x50] sm:$0xff] %v6869
        %7244 = vst [vmem:[%s257 + $0x58] sm:$0xff] %v7170
        %7245 = vst [vmem:[%s257 + $0x60] sm:$0xff] %v6873
        %7246 = vst [vmem:[%s257 + $0x68] sm:$0xff] %v6875
        %7247 = vst [vmem:[%s257 + $0x70] sm:$0xff] %v7175
        %7248 = vst [vmem:[%s257 + $0x78] sm:$0xff] %v6879
        %7249 = vst [vmem:[%s257 + $0x80] sm:$0xff] %v6881
        %7250 = vst [vmem:[%s257 + $0x88] sm:$0xff] %v7180
        %7251 = vst [vmem:[%s257 + $0x90] sm:$0xff] %v6885
        %7252 = vst [vmem:[%s257 + $0x98] sm:$0xff] %v6887
        %7253 = vst [vmem:[%s257 + $0xa0] sm:$0xff] %v7185
        %7254 = vst [vmem:[%s257 + $0xa8] sm:$0xff] %v6891
        %7255 = vst [vmem:[%s257 + $0xb0] sm:$0xff] %v6893
        %7256 = vst [vmem:[%s257 + $0xb8] sm:$0xff] %v7190
        %7257 = vst [vmem:[%s257 + $0xc0] sm:$0xff] %v6897
        %7258 = vst [vmem:[%s257 + $0xc8] sm:$0xff] %v6899
        %7259 = vst [vmem:[%s257 + $0xd0] sm:$0xff] %v7195
        %7260 = vst [vmem:[%s257 + $0xd8] sm:$0xff] %v6903
        %7261 = vst [vmem:[%s257 + $0xe0] sm:$0xff] %v6905
        %7262 = vst [vmem:[%s257 + $0xe8] sm:$0xff] %v7200
        %7263 = vst [vmem:[%s257 + $0xf0] sm:$0xff] %v6909
        %7264 = vst [vmem:[%s257 + $0xf8] sm:$0xff] %v6911
        %7265 = vst [vmem:[%s257 + $0x100] sm:$0xff] %v7205
        %7266 = vst [vmem:[%s257 + $0x108] sm:$0xff] %v6915
        %7267 = vst [vmem:[%s257 + $0x110] sm:$0xff] %v6917
        %7268 = vst [vmem:[%s257 + $0x118] sm:$0xff] %v7210
        %7269 = vst [vmem:[%s257 + $0x120] sm:$0xff] %v6921
        %7270 = vst [vmem:[%s257 + $0x128] sm:$0xff] %v6923
        %7271 = vst [vmem:[%s257 + $0x130] sm:$0xff] %v7215
        %7272 = vst [vmem:[%s257 + $0x138] sm:$0xff] %v6927
        %7273 = vst [vmem:[%s257 + $0x140] sm:$0xff] %v6929
        %7274 = vst [vmem:[%s257 + $0x148] sm:$0xff] %v7220
        %7275 = vst [vmem:[%s257 + $0x150] sm:$0xff] %v6933
        %7276 = vst [vmem:[%s257 + $0x158] sm:$0xff] %v6935
        %7277 = vst [vmem:[%s257 + $0x160] sm:$0xff] %v7225
        %7278 = vst [vmem:[%s257 + $0x168] sm:$0xff] %v6939
        %7279 = vst [vmem:[%s257 + $0x170] sm:$0xff] %v6941
        %7280 = vst [vmem:[%s257 + $0x178] sm:$0xff] %v7230
        %s7281 = sand.u32 %s120, 1
        %s7282 = scalar_lea.sflag [#allocation5], %s7281
        %s7283 = sand.u32 %s120, 1
        %s7284 = smul.addr %s7283, 384
        %s7285 = scalar_lea.vmem [#allocation11], %s7284
        // Predicated region
        $region53: #{tpu_custom_call.1} parent=35 // pred_check
          %p7286 = pneg %p130
        $region54: #{tpu_custom_call.1} parent=35 // pred_check_branch
          %7288 = sbr.rel (%p7286) target = $region56
        $region55: #{tpu_custom_call.1} parent=35 // pred_region
          %s7290 = ssub.s32 6144, 6144
          %7291 = vsyncadd %s7282, %s7290
          %s7292 = smul.addr %s23, 48
          %s7293 = smul.addr %s7292, 128
          %s7294 = scalar_lea.hbm %s4, %s7293
          %s7295 = sshll.u32 %s7285, 4
          %s7296 = int_to_ptr.vmem [resolvable:$true] %s7295
          %7301 = dma.vmem_to_hbm [thread:$0]  %s7296, 6144, %s7294, %s7282, 384, 384, 24
        $region56: #{tpu_custom_call.1} parent=35 // pred_fallthru
          _
      $region36: #{tpu_custom_call.1} parent=5 // pred_fallthru
        _
      %p7302 = scmp.le.s32.totalorder 2, %s18
      // Predicated region
      $region57: #{tpu_custom_call.1} parent=5 // pred_check
        %p7303 = pneg %p7302
      $region58: #{tpu_custom_call.1} parent=5 // pred_check_branch
        %7305 = sbr.rel (%p7303) target = $region60
      $region59: #{tpu_custom_call.1} parent=5 // pred_region
        %s7306 = ssub.s32 %s18, 2
        // Predicated region
        $region61: #{tpu_custom_call.1} parent=59 // pred_check
          %p7307 = pneg %p136
        $region62: #{tpu_custom_call.1} parent=59 // pred_check_branch
          %7309 = sbr.rel (%p7307) target = $region64
        $region63: #{tpu_custom_call.1} parent=59 // pred_region
          %s7310 = sand.u32 %s121, 1
          %s7311 = scalar_lea.sflag [#allocation5], %s7310
          %s7312 = sand.u32 %s121, 1
          %s7313 = smul.addr %s7312, 384
          %s7314 = scalar_lea.vmem [#allocation11], %s7313
          %7315 = dma.done %s7311, 6144
        $region64: #{tpu_custom_call.1} parent=59 // pred_fallthru
          _
      $region60: #{tpu_custom_call.1} parent=5 // pred_fallthru
        _
    $region6: #{tpu_custom_call.1} parent=1 // loop_footer
      %s22 = sadd.s32 1, %s18
    $region7: #{tpu_custom_call.1} parent=1 // loop_footer_branch
      %17 = sbr.rel target = $region3
    $region8: #{tpu_custom_call.1} parent=1 // loop_exit
      _
    %7316 = vsyncpa [#allocation4], 1
    %s7317 = scalar_lea.sflag [#allocation4], 1
    %7318 = vsyncpa %s7317, 1
    %7319 = vsyncpa [#allocation7], 1
    %7320 = vsyncpa [#allocation10], 1
    %7321 = vsyncpa [#allocation5], 1
    %s7322 = scalar_lea.sflag [#allocation5], 1
    %7323 = vsyncpa %s7322, 1

</llo_original>
